<compile_context>
chip_gen: v5e
topology: v5e:2x2
jax: 0.10.0
libtpu: 0.0.40
codegen_flags: <defaults>
</compile_context>

<pallas_src>
import functools
import math

import jax
import jax.numpy as jnp
from jax.experimental import pallas as pl
from jax.experimental.pallas import tpu as pltpu

_BN_EPS = 1e-3
_VMEM_LIMIT = 32 * 1024 * 1024


# ----------------------------- helpers -------------------------------------

def _round_up(x, m):
    return ((x + m - 1) // m) * m


def _cp(c):
    """Padded channel size (>=128, multiple of 128)."""
    return max(128, _round_up(c, 128))


def _pick_tile(dim, max_tile, align):
    """(tile, padded_dim): full block if it fits; else the largest divisor tile
    > max_tile/2, else pad the dim up to a multiple of max_tile (review fix)."""
    p = _round_up(dim, align)
    if p <= max_tile:
        return p, p
    for t in range(max_tile, max_tile // 2, -align):
        if p % t == 0:
            return t, p
    return max_tile, _round_up(p, max_tile)


def _apply_act(x, act):
    if act == "relu":
        return jnp.maximum(x, 0.0)
    if act == "silu":
        return x * jax.nn.sigmoid(x)
    if act == "sigmoid":
        return jax.nn.sigmoid(x)
    return x  # "linear"


def _tf_same_pad(size, k, s):
    out = -(-size // s)  # ceil
    pad = max((out - 1) * s + k - size, 0)
    return pad // 2, pad - pad // 2


def _pad_spatial_flat(x, stride):
    """TF-SAME spatial zero pad (+1 extra bottom row so the flattened 3x3 tap
    slices never run off the end), returned flattened as (B, L, C)."""
    B, H, W, C = x.shape
    pt, pb = _tf_same_pad(H, 3, stride)
    pleft, pright = _tf_same_pad(W, 3, stride)
    xp = jnp.pad(x, ((0, 0), (pt, pb + 1), (pleft, pright), (0, 0)))
    Hp = H + pt + pb
    Wp = W + pleft + pright
    Hf, Wf = Hp - 2, Wp - 2
    x_flat = xp.reshape(B, xp.shape[1] * Wp, C)
    return x_flat, Wp, Hf, Wf


# ----------------------------- matmul kernels -------------------------------

def _matmul_kernel_acc(a_ref, b_ref, bias_ref, *rest, act, has_res):
    if has_res:
        r_ref, o_ref, acc_ref = rest
    else:
        o_ref, acc_ref = rest
    k = pl.program_id(2)

    @pl.when(k == 0)
    def _():
        acc_ref[...] = jnp.zeros_like(acc_ref)

    acc_ref[...] += jnp.dot(a_ref[...], b_ref[...],
                            preferred_element_type=jnp.float32)

    @pl.when(k == pl.num_programs(2) - 1)
    def _():
        res = _apply_act(acc_ref[...] + bias_ref[...], act)
        if has_res:
            res = res + r_ref[...].astype(jnp.float32)
        o_ref[...] = res.astype(o_ref.dtype)


def _matmul_kernel_single(a_ref, b_ref, bias_ref, *rest, act, has_res):
    # single K block: no accumulator scratch (review fix)
    if has_res:
        r_ref, o_ref = rest
    else:
        (o_ref,) = rest
    out = jnp.dot(a_ref[...], b_ref[...], preferred_element_type=jnp.float32)
    out = _apply_act(out + bias_ref[...], act)
    if has_res:
        out = out + r_ref[...].astype(jnp.float32)
    o_ref[...] = out.astype(o_ref.dtype)


def matmul_bias_act(a, w, bias, act="linear", residual=None):
    """out = act(a @ w + bias) [+ residual]; bf16 operands, f32 accumulate.
    Weights/bias arrive pre-padded (128 multiples); only M may need padding."""
    M, K = a.shape
    N = w.shape[1]
    tm, Mp = _pick_tile(M, 512, 8)
    tn, Np = _pick_tile(N, 256, 128)
    tk, Kp = _pick_tile(K, 512, 128)

    a_p = a if (Mp == M and Kp == K) else jnp.pad(a, ((0, Mp - M), (0, Kp - K)))
    w_p = w if (Kp == K and Np == N) else jnp.pad(w, ((0, Kp - K), (0, Np - N)))
    b_p = bias if Np == N else jnp.pad(bias, ((0, 0), (0, Np - N)))

    has_res = residual is not None
    if has_res:
        r_p = residual if (Mp == M and Np == N) else jnp.pad(
            residual, ((0, Mp - M), (0, Np - N)))

    if Kp == tk:
        grid = (Mp // tm, Np // tn)
        in_specs = [
            pl.BlockSpec((tm, tk), lambda i, j: (i, 0)),
            pl.BlockSpec((tk, tn), lambda i, j: (0, j)),
            pl.BlockSpec((1, tn), lambda i, j: (0, j)),
        ]
        if has_res:
            in_specs.append(pl.BlockSpec((tm, tn), lambda i, j: (i, j)))
        out_specs = pl.BlockSpec((tm, tn), lambda i, j: (i, j))
        scratch = []
        kernel = functools.partial(_matmul_kernel_single, act=act, has_res=has_res)
        dims = ("parallel", "parallel")
    else:
        grid = (Mp // tm, Np // tn, Kp // tk)
        in_specs = [
            pl.BlockSpec((tm, tk), lambda i, j, k: (i, k)),
            pl.BlockSpec((tk, tn), lambda i, j, k: (k, j)),
            pl.BlockSpec((1, tn), lambda i, j, k: (0, j)),
        ]
        if has_res:
            in_specs.append(pl.BlockSpec((tm, tn), lambda i, j, k: (i, j)))
        out_specs = pl.BlockSpec((tm, tn), lambda i, j, k: (i, j))
        scratch = [pltpu.VMEM((tm, tn), jnp.float32)]
        kernel = functools.partial(_matmul_kernel_acc, act=act, has_res=has_res)
        dims = ("parallel", "parallel", "arbitrary")

    args = [a_p, w_p, b_p] + ([r_p] if has_res else [])
    out = pl.pallas_call(
        kernel,
        out_shape=jax.ShapeDtypeStruct((Mp, Np), jnp.bfloat16),
        grid_spec=pltpu.PrefetchScalarGridSpec(
            num_scalar_prefetch=0, grid=grid,
            in_specs=in_specs, out_specs=out_specs, scratch_shapes=scratch),
        compiler_params=pltpu.CompilerParams(
            dimension_semantics=dims, vmem_limit_bytes=_VMEM_LIMIT),
    )(*args)
    return out[:M, :N]


# --------------------- 3x3 conv (in-kernel tap accumulation) ----------------

def _conv3x3_kernel(x_ref, w_ref, b_ref, o_ref, *, act, wp):
    # x: (B, Lpad, Cin) bf16 flattened padded rows; w: (9, Cin, Cout) bf16.
    # 9 taps = static contiguous slices of the VMEM-resident input (no im2col).
    B, lout, cout = o_ref.shape
    for b in range(B):
        acc = jnp.zeros((lout, cout), jnp.float32)
        for t in range(9):
            off = (t // 3) * wp + (t % 3)
            acc = acc + jnp.dot(x_ref[b, off:off + lout, :], w_ref[t],
                                preferred_element_type=jnp.float32)
        o_ref[b] = _apply_act(acc + b_ref[...], act).astype(o_ref.dtype)


def conv3x3(x, p, stride, act="silu", residual=None):
    B, H, W, C = x.shape
    x_flat, Wp, Hf, Wf = _pad_spatial_flat(x, stride)
    lout = Hf * Wp
    coutp = p["w"].shape[2]
    out = pl.pallas_call(
        functools.partial(_conv3x3_kernel, act=act, wp=Wp),
        out_shape=jax.ShapeDtypeStruct((B, lout, coutp), jnp.bfloat16),
        compiler_params=pltpu.CompilerParams(vmem_limit_bytes=_VMEM_LIMIT),
    )(x_flat, p["w"], p["b"])
    out = out.reshape(B, Hf, Wp, coutp)[:, :, :Wf, :]
    if stride == 2:
        out = out[:, ::2, ::2, :]          # stride-1 compute + cheap subsample
    if residual is not None:               # unused in this config (in != out)
        out = out + residual
    return out


def _dwconv3x3_kernel(x_ref, w_ref, b_ref, o_ref, *, act, wp):
    # depthwise 3x3: 9 VPU FMAs on shifted slices of the VMEM-resident input.
    B, lout, C = o_ref.shape
    acc = jnp.zeros((B, lout, C), jnp.float32)
    wv = w_ref[...].astype(jnp.float32)                 # (9, C)
    for t in range(9):
        off = (t // 3) * wp + (t % 3)
        acc = acc + x_ref[:, off:off + lout, :].astype(jnp.float32) * wv[t:t + 1]
    o_ref[...] = _apply_act(acc + b_ref[...], act).astype(o_ref.dtype)


def dwconv3x3(x, p, stride, act="silu"):
    B, H, W, C = x.shape
    x_flat, Wp, Hf, Wf = _pad_spatial_flat(x, stride)
    lout = Hf * Wp
    out = pl.pallas_call(
        functools.partial(_dwconv3x3_kernel, act=act, wp=Wp),
        out_shape=jax.ShapeDtypeStruct((B, lout, C), jnp.bfloat16),
        compiler_params=pltpu.CompilerParams(vmem_limit_bytes=_VMEM_LIMIT),
    )(x_flat, p["w"], p["b"])
    out = out.reshape(B, Hf, Wp, C)[:, :, :Wf, :]
    if stride == 2:
        out = out[:, ::2, ::2, :]
    return out


# --------------------- fused MBConv (IR) block, stride 1 --------------------

def _ir_fused_kernel(x_ref, wpw_ref, bpw_ref, wdw_ref, bdw_ref,
                     wse1_ref, bse1_ref, wse2_ref, bse2_ref,
                     wpwl_ref, bpwl_ref, *rest, has_res, h, w):
    # conv_pw -> zero-pad -> dw3x3 -> masked global pool -> SE FCs -> gate ->
    # conv_pwl -> residual, all with the activation resident in VMEM.
    if has_res:
        r_ref, o_ref, pad_ref = rest
    else:
        o_ref, pad_ref = rest
    B = x_ref.shape[0]
    cmid = wpw_ref.shape[1]
    wp2 = w + 2
    lout = h * wp2
    inv_hw = 1.0 / (h * w)

    pad_ref[...] = jnp.zeros_like(pad_ref)
    wdw = wdw_ref[...].astype(jnp.float32)              # (9, Cmid)
    col = jax.lax.broadcasted_iota(jnp.int32, (lout, 1), 0) % wp2
    valid = (col < w).astype(jnp.float32)                # masks the 2 pad columns

    for b in range(B):
        # 1x1 expand
        pw = _apply_act(jnp.dot(x_ref[b], wpw_ref[...],
                                preferred_element_type=jnp.float32)
                        + bpw_ref[...], "silu")          # (h*w, Cmid) f32
        pwb = pw.astype(jnp.bfloat16)
        # scatter rows into the zero-padded flattened scratch
        for r in range(h):
            start = (r + 1) * wp2 + 1
            pad_ref[b, start:start + w, :] = pwb[r * w:(r + 1) * w, :]
        # 3x3 depthwise, stride 1
        acc = jnp.zeros((lout, cmid), jnp.float32)
        for t in range(9):
            off = (t // 3) * wp2 + (t % 3)
            acc = acc + pad_ref[b, off:off + lout, :].astype(jnp.float32) * wdw[t:t + 1]
        y = _apply_act(acc + bdw_ref[...], "silu")       # (lout, Cmid) f32
        # squeeze-excite (masked global average pool, fused FCs)
        pooled = jnp.sum(y * valid, axis=0, keepdims=True) * inv_hw   # (1, Cmid)
        rse = _apply_act(jnp.dot(pooled.astype(jnp.bfloat16), wse1_ref[...],
                                 preferred_element_type=jnp.float32)
                         + bse1_ref[...], "silu")
        g = _apply_act(jnp.dot(rse.astype(jnp.bfloat16), wse2_ref[...],
                               preferred_element_type=jnp.float32)
                       + bse2_ref[...], "sigmoid")       # (1, Cmid)
        # gate-scaled 1x1 project + residual
        z = (y * g).astype(jnp.bfloat16)
        out = jnp.dot(z, wpwl_ref[...], preferred_element_type=jnp.float32) + bpwl_ref[...]
        if has_res:
            out = out + r_ref[b].astype(jnp.float32)
        o_ref[b] = out.astype(o_ref.dtype)


def ir_block_fused(x, blk, residual=None):
    B, H, W, _ = x.shape
    cmidp = blk["conv_pw"]["w"].shape[1]
    coutp = blk["conv_pwl"]["w"].shape[1]
    wp2 = W + 2
    lout = H * wp2
    lpad = (H + 3) * wp2
    x_flat = x.reshape(B, H * W, x.shape[3])
    has_res = residual is not None
    args = [x_flat,
            blk["conv_pw"]["w"], blk["conv_pw"]["b"],
            blk["conv_dw"]["w"], blk["conv_dw"]["b"],
            blk["se_reduce"]["w"], blk["se_reduce"]["b"],
            blk["se_expand"]["w"], blk["se_expand"]["b"],
            blk["conv_pwl"]["w"], blk["conv_pwl"]["b"]]
    if has_res:
        res_flat = jnp.pad(residual, ((0, 0), (0, 0), (0, 2), (0, 0))
                           ).reshape(B, lout, coutp)
        args.append(res_flat)
    out = pl.pallas_call(
        functools.partial(_ir_fused_kernel, has_res=has_res, h=H, w=W),
        out_shape=jax.ShapeDtypeStruct((B, lout, coutp), jnp.bfloat16),
        scratch_shapes=[pltpu.VMEM((B, lpad, cmidp), jnp.bfloat16)],
        compiler_params=pltpu.CompilerParams(vmem_limit_bytes=_VMEM_LIMIT),
    )(*args)
    return out.reshape(B, H, wp2, coutp)[:, :, :W, :]


# --------------------- fused SE + pwl tail (strided IR blocks) --------------

def _se_pwl_tail_kernel(y_ref, wse1_ref, bse1_ref, wse2_ref, bse2_ref,
                        wpwl_ref, bpwl_ref, o_ref, *, inv_hw):
    B = y_ref.shape[0]
    for b in range(B):
        y = y_ref[b].astype(jnp.float32)                 # (HW, Cmid)
        pooled = jnp.sum(y, axis=0, keepdims=True) * inv_hw
        rse = _apply_act(jnp.dot(pooled.astype(jnp.bfloat16), wse1_ref[...],
                                 preferred_element_type=jnp.float32)
                         + bse1_ref[...], "silu")
        g = _apply_act(jnp.dot(rse.astype(jnp.bfloat16), wse2_ref[...],
                               preferred_element_type=jnp.float32)
                       + bse2_ref[...], "sigmoid")
        z = (y * g).astype(jnp.bfloat16)
        o_ref[b] = (jnp.dot(z, wpwl_ref[...], preferred_element_type=jnp.float32)
                    + bpwl_ref[...]).astype(o_ref.dtype)


def se_pwl_tail(y, blk):
    B, H, W, cmid = y.shape
    coutp = blk["conv_pwl"]["w"].shape[1]
    out = pl.pallas_call(
        functools.partial(_se_pwl_tail_kernel, inv_hw=1.0 / (H * W)),
        out_shape=jax.ShapeDtypeStruct((B, H * W, coutp), jnp.bfloat16),
        compiler_params=pltpu.CompilerParams(vmem_limit_bytes=_VMEM_LIMIT),
    )(y.reshape(B, H * W, cmid),
      blk["se_reduce"]["w"], blk["se_reduce"]["b"],
      blk["se_expand"]["w"], blk["se_expand"]["b"],
      blk["conv_pwl"]["w"], blk["conv_pwl"]["b"])
    return out.reshape(B, H, W, coutp)


# --------------------- fused conv_head + pool + classifier tail -------------

def _head_tail_kernel(x_ref, wh_ref, bh_ref, wc_ref, bc_ref, wp_ref, bp_ref,
                      wo_ref, bo_ref, o_ref, *, inv_hw):
    B = x_ref.shape[0]
    for b in range(B):
        h = _apply_act(jnp.dot(x_ref[b], wh_ref[...],
                               preferred_element_type=jnp.float32)
                       + bh_ref[...], "silu")            # (HW, 1280)
        pooled = jnp.sum(h, axis=0, keepdims=True) * inv_hw
        f = jnp.dot(pooled.astype(jnp.bfloat16), wc_ref[...],
                    preferred_element_type=jnp.float32) + bc_ref[...]
        g = jnp.maximum(jnp.dot(f.astype(jnp.bfloat16), wp_ref[...],
                                preferred_element_type=jnp.float32) + bp_ref[...],
                        0.0)
        o_ref[b] = jnp.dot(g.astype(jnp.bfloat16), wo_ref[...],
                           preferred_element_type=jnp.float32) + bo_ref[...]


def head_tail(x, params):
    B, H, W, cin = x.shape
    out = pl.pallas_call(
        functools.partial(_head_tail_kernel, inv_hw=1.0 / (H * W)),
        out_shape=jax.ShapeDtypeStruct((B, 1, 128), jnp.float32),
        compiler_params=pltpu.CompilerParams(vmem_limit_bytes=_VMEM_LIMIT),
    )(x.reshape(B, H * W, cin),
      params["conv_head"]["w"], params["conv_head"]["b"],
      params["classifier"]["w"], params["classifier"]["b"],
      params["preFinal"]["w"], params["preFinal"]["b"],
      params["outlayer"]["w"], params["outlayer"]["b"])
    return out.reshape(B, 128)[:, :10]


# ----------------------------- parameters ----------------------------------

# tf_efficientnetv2_b0 stage configuration (w=d=1.0)
# (block_type, repeats, kernel, stride, expand_ratio, out_ch, se_ratio)
STAGES = [
    ("cn", 1, 3, 1, 1, 16, 0.0),
    ("er", 2, 3, 2, 4, 32, 0.0),
    ("er", 2, 3, 2, 4, 48, 0.0),
    ("ir", 3, 3, 2, 4, 96, 0.25),
    ("ir", 5, 3, 1, 6, 112, 0.25),
    ("ir", 8, 3, 2, 6, 192, 0.25),
]
STEM_CH = 32
NUM_FEATURES = 1280


def build_params(key):
    """All weights pre-padded to 128-lane multiples and pre-cast to bf16 once
    (review fix: no per-call pad/convert/slice glue)."""
    it = iter(jax.random.split(key, 256))
    bn_scale = 1.0 / math.sqrt(1.0 + _BN_EPS)  # BN folded: gamma=1, beta=0, mean=0, var=1

    def conv3_p(cin, cout):
        cinp, coutp = _cp(cin), _cp(cout)
        w = jax.random.normal(next(it), (3, 3, cin, cout), jnp.float32)
        w = w * math.sqrt(2.0 / (9 * cin)) * bn_scale
        wp = jnp.zeros((9, cinp, coutp), jnp.float32
                       ).at[:, :cin, :cout].set(w.reshape(9, cin, cout))
        return {"w": wp.astype(jnp.bfloat16), "b": jnp.zeros((1, coutp), jnp.float32)}

    def conv1_p(cin, cout, use_bn=True):
        cinp, coutp = _cp(cin), _cp(cout)
        s = math.sqrt(2.0 / cin) * (bn_scale if use_bn else 1.0)
        w = jax.random.normal(next(it), (cin, cout), jnp.float32) * s
        wp = jnp.zeros((cinp, coutp), jnp.float32).at[:cin, :cout].set(w)
        return {"w": wp.astype(jnp.bfloat16), "b": jnp.zeros((1, coutp), jnp.float32)}

    def dw_p(c):
        cpad = _cp(c)
        w = jax.random.normal(next(it), (9, c), jnp.float32)
        w = w * math.sqrt(2.0 / 9.0) * bn_scale
        wp = jnp.zeros((9, cpad), jnp.float32).at[:, :c].set(w)
        return {"w": wp.astype(jnp.bfloat16), "b": jnp.zeros((1, cpad), jnp.float32)}

    def fc_p(cin, cout):
        return conv1_p(cin, cout, use_bn=False)

    params = {"stem": conv3_p(3, STEM_CH), "blocks": []}
    c = STEM_CH
    for (btype, reps, k, s, e, cout, se) in STAGES:
        for r in range(reps):
            stride = s if r == 0 else 1
            blk = {"type": btype, "stride": stride, "in": c, "out": cout}
            if btype == "cn":          # ConvBnAct
                blk["conv"] = conv3_p(c, cout)
            elif btype == "er":        # EdgeResidual / FusedMBConv
                mid = c * e
                blk["conv_exp"] = conv3_p(c, mid)
                blk["conv_pwl"] = conv1_p(mid, cout)
            else:                      # InvertedResidual (MBConv + SE)
                mid = c * e
                rd = max(1, int(c * se))
                blk["conv_pw"] = conv1_p(c, mid)
                blk["conv_dw"] = dw_p(mid)
                blk["se_reduce"] = fc_p(mid, rd)
                blk["se_expand"] = fc_p(rd, mid)
                blk["conv_pwl"] = conv1_p(mid, cout)
            params["blocks"].append(blk)
            c = cout
    params["conv_head"] = conv1_p(c, NUM_FEATURES)
    params["classifier"] = fc_p(NUM_FEATURES, 64)   # timm num_classes=64
    params["preFinal"] = fc_p(64, 32)
    params["outlayer"] = fc_p(32, 10)
    return params


# ----------------------------- forward pass --------------------------------

def efficientnet_forward(params, x_nchw):
    x = jnp.transpose(x_nchw.astype(jnp.float32), (0, 2, 3, 1))
    B, H, W, C = x.shape
    x = jnp.pad(x, ((0, 0), (0, 0), (0, 0), (0, _cp(C) - C))).astype(jnp.bfloat16)

    x = conv3x3(x, params["stem"], stride=2, act="silu")
    for blk in params["blocks"]:
        has_res = blk["stride"] == 1 and blk["in"] == blk["out"]
        shortcut = x if has_res else None
        if blk["type"] == "cn":
            x = conv3x3(x, blk["conv"], blk["stride"], act="silu", residual=shortcut)
        elif blk["type"] == "er":
            y = conv3x3(x, blk["conv_exp"], blk["stride"], act="silu")
            Bo, Ho, Wo, cm = y.shape
            res2 = None if shortcut is None else shortcut.reshape(Bo * Ho * Wo, -1)
            out2 = matmul_bias_act(y.reshape(Bo * Ho * Wo, cm),
                                   blk["conv_pwl"]["w"], blk["conv_pwl"]["b"],
                                   act="linear", residual=res2)
            x = out2.reshape(Bo, Ho, Wo, -1)
        else:  # inverted residual with squeeze-excite
            if blk["stride"] == 1:
                x = ir_block_fused(x, blk, residual=shortcut)
            else:
                Bo, Hi, Wi, cin = x.shape
                y2 = matmul_bias_act(x.reshape(Bo * Hi * Wi, cin),
                                     blk["conv_pw"]["w"], blk["conv_pw"]["b"],
                                     act="silu")
                y = y2.reshape(Bo, Hi, Wi, -1)
                y = dwconv3x3(y, blk["conv_dw"], blk["stride"], act="silu")
                x = se_pwl_tail(y, blk)

    # conv_head + global pool + classifier + preFinal + ReLU + outlayer (fused)
    return head_tail(x, params)


if __name__ == "__main__":
    key = jax.random.PRNGKey(0)
    k_params, k_x = jax.random.split(key)
    params = build_params(k_params)
    x = jax.random.normal(k_x, (2, 3, 16, 16), jnp.float32)  # NCHW, like PyTorch
    out = efficientnet_forward(params, x)
    out = jax.block_until_ready(out)
    assert out.shape == (2, 10), out.shape
    assert bool(jnp.all(jnp.isfinite(out)))
    print("KERNEL_OK")
</pallas_src>

<mosaic_0001>
module attributes {stable_mosaic.version = 11 : i64} {
  func.func @_conv3x3_kernel(%arg0: memref<2x306x128xbf16, #tpu.memory_space<vmem>>, %arg1: memref<9x128x128xbf16, #tpu.memory_space<vmem>>, %arg2: memref<1x128xf32, #tpu.memory_space<vmem>>, %arg3: memref<2x255x128xbf16, #tpu.memory_space<vmem>>) attributes {dimension_semantics = [], scalar_prefetch = 0 : i64, scratch_operands = 0 : i64, tpu.core_type = #tpu.core_type<tc>} {
    %cst = arith.constant 0.000000e+00 : f32
    %0 = vector.broadcast %cst : f32 to vector<255x128xf32>
    %c0 = arith.constant 0 : index
    %c0_0 = arith.constant 0 : index
    %c0_1 = arith.constant 0 : index
    %1 = vector.load %arg0[%c0, %c0_0, %c0_1] : memref<2x306x128xbf16, #tpu.memory_space<vmem>>, vector<1x255x128xbf16>
    %2 = vector.shape_cast %1 : vector<1x255x128xbf16> to vector<255x128xbf16>
    %c0_2 = arith.constant 0 : index
    %c0_3 = arith.constant 0 : index
    %c0_4 = arith.constant 0 : index
    %3 = vector.load %arg1[%c0_2, %c0_3, %c0_4] : memref<9x128x128xbf16, #tpu.memory_space<vmem>>, vector<1x128x128xbf16>
    %4 = vector.shape_cast %3 : vector<1x128x128xbf16> to vector<128x128xbf16>
    %cst_5 = arith.constant dense<0.000000e+00> : vector<255x128xf32>
    %5 = tpu.matmul %2, %4, %cst_5 {dimension_numbers = #tpu.dot_dimension_numbers<[1], [0], [0], [1], [0, 0, 1, 1], [], []>} : vector<255x128xbf16>, vector<128x128xbf16>, vector<255x128xf32> -> vector<255x128xf32>
    %6 = arith.addf %0, %5 : vector<255x128xf32>
    %c0_6 = arith.constant 0 : index
    %c1 = arith.constant 1 : index
    %c0_7 = arith.constant 0 : index
    %7 = vector.load %arg0[%c0_6, %c1, %c0_7] : memref<2x306x128xbf16, #tpu.memory_space<vmem>>, vector<1x255x128xbf16>
    %8 = vector.shape_cast %7 : vector<1x255x128xbf16> to vector<255x128xbf16>
    %c1_8 = arith.constant 1 : index
    %c0_9 = arith.constant 0 : index
    %c0_10 = arith.constant 0 : index
    %9 = vector.load %arg1[%c1_8, %c0_9, %c0_10] : memref<9x128x128xbf16, #tpu.memory_space<vmem>>, vector<1x128x128xbf16>
    %10 = vector.shape_cast %9 : vector<1x128x128xbf16> to vector<128x128xbf16>
    %cst_11 = arith.constant dense<0.000000e+00> : vector<255x128xf32>
    %11 = tpu.matmul %8, %10, %cst_11 {dimension_numbers = #tpu.dot_dimension_numbers<[1], [0], [0], [1], [0, 0, 1, 1], [], []>} : vector<255x128xbf16>, vector<128x128xbf16>, vector<255x128xf32> -> vector<255x128xf32>
    %12 = arith.addf %6, %11 : vector<255x128xf32>
    %c0_12 = arith.constant 0 : index
    %c2 = arith.constant 2 : index
    %c0_13 = arith.constant 0 : index
    %13 = vector.load %arg0[%c0_12, %c2, %c0_13] : memref<2x306x128xbf16, #tpu.memory_space<vmem>>, vector<1x255x128xbf16>
    %14 = vector.shape_cast %13 : vector<1x255x128xbf16> to vector<255x128xbf16>
    %c2_14 = arith.constant 2 : index
    %c0_15 = arith.constant 0 : index
    %c0_16 = arith.constant 0 : index
    %15 = vector.load %arg1[%c2_14, %c0_15, %c0_16] : memref<9x128x128xbf16, #tpu.memory_space<vmem>>, vector<1x128x128xbf16>
    %16 = vector.shape_cast %15 : vector<1x128x128xbf16> to vector<128x128xbf16>
    %cst_17 = arith.constant dense<0.000000e+00> : vector<255x128xf32>
    %17 = tpu.matmul %14, %16, %cst_17 {dimension_numbers = #tpu.dot_dimension_numbers<[1], [0], [0], [1], [0, 0, 1, 1], [], []>} : vector<255x128xbf16>, vector<128x128xbf16>, vector<255x128xf32> -> vector<255x128xf32>
    %18 = arith.addf %12, %17 : vector<255x128xf32>
    %c0_18 = arith.constant 0 : index
    %c17 = arith.constant 17 : index
    %c0_19 = arith.constant 0 : index
    %19 = vector.load %arg0[%c0_18, %c17, %c0_19] : memref<2x306x128xbf16, #tpu.memory_space<vmem>>, vector<1x255x128xbf16>
    %20 = vector.shape_cast %19 : vector<1x255x128xbf16> to vector<255x128xbf16>
    %c3 = arith.constant 3 : index
    %c0_20 = arith.constant 0 : index
    %c0_21 = arith.constant 0 : index
    %21 = vector.load %arg1[%c3, %c0_20, %c0_21] : memref<9x128x128xbf16, #tpu.memory_space<vmem>>, vector<1x128x128xbf16>
    %22 = vector.shape_cast %21 : vector<1x128x128xbf16> to vector<128x128xbf16>
    %cst_22 = arith.constant dense<0.000000e+00> : vector<255x128xf32>
    %23 = tpu.matmul %20, %22, %cst_22 {dimension_numbers = #tpu.dot_dimension_numbers<[1], [0], [0], [1], [0, 0, 1, 1], [], []>} : vector<255x128xbf16>, vector<128x128xbf16>, vector<255x128xf32> -> vector<255x128xf32>
    %24 = arith.addf %18, %23 : vector<255x128xf32>
    %c0_23 = arith.constant 0 : index
    %c18 = arith.constant 18 : index
    %c0_24 = arith.constant 0 : index
    %25 = vector.load %arg0[%c0_23, %c18, %c0_24] : memref<2x306x128xbf16, #tpu.memory_space<vmem>>, vector<1x255x128xbf16>
    %26 = vector.shape_cast %25 : vector<1x255x128xbf16> to vector<255x128xbf16>
    %c4 = arith.constant 4 : index
    %c0_25 = arith.constant 0 : index
    %c0_26 = arith.constant 0 : index
    %27 = vector.load %arg1[%c4, %c0_25, %c0_26] : memref<9x128x128xbf16, #tpu.memory_space<vmem>>, vector<1x128x128xbf16>
    %28 = vector.shape_cast %27 : vector<1x128x128xbf16> to vector<128x128xbf16>
    %cst_27 = arith.constant dense<0.000000e+00> : vector<255x128xf32>
    %29 = tpu.matmul %26, %28, %cst_27 {dimension_numbers = #tpu.dot_dimension_numbers<[1], [0], [0], [1], [0, 0, 1, 1], [], []>} : vector<255x128xbf16>, vector<128x128xbf16>, vector<255x128xf32> -> vector<255x128xf32>
    %30 = arith.addf %24, %29 : vector<255x128xf32>
    %c0_28 = arith.constant 0 : index
    %c19 = arith.constant 19 : index
    %c0_29 = arith.constant 0 : index
    %31 = vector.load %arg0[%c0_28, %c19, %c0_29] : memref<2x306x128xbf16, #tpu.memory_space<vmem>>, vector<1x255x128xbf16>
    %32 = vector.shape_cast %31 : vector<1x255x128xbf16> to vector<255x128xbf16>
    %c5 = arith.constant 5 : index
    %c0_30 = arith.constant 0 : index
    %c0_31 = arith.constant 0 : index
    %33 = vector.load %arg1[%c5, %c0_30, %c0_31] : memref<9x128x128xbf16, #tpu.memory_space<vmem>>, vector<1x128x128xbf16>
    %34 = vector.shape_cast %33 : vector<1x128x128xbf16> to vector<128x128xbf16>
    %cst_32 = arith.constant dense<0.000000e+00> : vector<255x128xf32>
    %35 = tpu.matmul %32, %34, %cst_32 {dimension_numbers = #tpu.dot_dimension_numbers<[1], [0], [0], [1], [0, 0, 1, 1], [], []>} : vector<255x128xbf16>, vector<128x128xbf16>, vector<255x128xf32> -> vector<255x128xf32>
    %36 = arith.addf %30, %35 : vector<255x128xf32>
    %c0_33 = arith.constant 0 : index
    %c34 = arith.constant 34 : index
    %c0_34 = arith.constant 0 : index
    %37 = vector.load %arg0[%c0_33, %c34, %c0_34] : memref<2x306x128xbf16, #tpu.memory_space<vmem>>, vector<1x255x128xbf16>
    %38 = vector.shape_cast %37 : vector<1x255x128xbf16> to vector<255x128xbf16>
    %c6 = arith.constant 6 : index
    %c0_35 = arith.constant 0 : index
    %c0_36 = arith.constant 0 : index
    %39 = vector.load %arg1[%c6, %c0_35, %c0_36] : memref<9x128x128xbf16, #tpu.memory_space<vmem>>, vector<1x128x128xbf16>
    %40 = vector.shape_cast %39 : vector<1x128x128xbf16> to vector<128x128xbf16>
    %cst_37 = arith.constant dense<0.000000e+00> : vector<255x128xf32>
    %41 = tpu.matmul %38, %40, %cst_37 {dimension_numbers = #tpu.dot_dimension_numbers<[1], [0], [0], [1], [0, 0, 1, 1], [], []>} : vector<255x128xbf16>, vector<128x128xbf16>, vector<255x128xf32> -> vector<255x128xf32>
    %42 = arith.addf %36, %41 : vector<255x128xf32>
    %c0_38 = arith.constant 0 : index
    %c35 = arith.constant 35 : index
    %c0_39 = arith.constant 0 : index
    %43 = vector.load %arg0[%c0_38, %c35, %c0_39] : memref<2x306x128xbf16, #tpu.memory_space<vmem>>, vector<1x255x128xbf16>
    %44 = vector.shape_cast %43 : vector<1x255x128xbf16> to vector<255x128xbf16>
    %c7 = arith.constant 7 : index
    %c0_40 = arith.constant 0 : index
    %c0_41 = arith.constant 0 : index
    %45 = vector.load %arg1[%c7, %c0_40, %c0_41] : memref<9x128x128xbf16, #tpu.memory_space<vmem>>, vector<1x128x128xbf16>
    %46 = vector.shape_cast %45 : vector<1x128x128xbf16> to vector<128x128xbf16>
    %cst_42 = arith.constant dense<0.000000e+00> : vector<255x128xf32>
    %47 = tpu.matmul %44, %46, %cst_42 {dimension_numbers = #tpu.dot_dimension_numbers<[1], [0], [0], [1], [0, 0, 1, 1], [], []>} : vector<255x128xbf16>, vector<128x128xbf16>, vector<255x128xf32> -> vector<255x128xf32>
    %48 = arith.addf %42, %47 : vector<255x128xf32>
    %c0_43 = arith.constant 0 : index
    %c36 = arith.constant 36 : index
    %c0_44 = arith.constant 0 : index
    %49 = vector.load %arg0[%c0_43, %c36, %c0_44] : memref<2x306x128xbf16, #tpu.memory_space<vmem>>, vector<1x255x128xbf16>
    %50 = vector.shape_cast %49 : vector<1x255x128xbf16> to vector<255x128xbf16>
    %c8 = arith.constant 8 : index
    %c0_45 = arith.constant 0 : index
    %c0_46 = arith.constant 0 : index
    %51 = vector.load %arg1[%c8, %c0_45, %c0_46] : memref<9x128x128xbf16, #tpu.memory_space<vmem>>, vector<1x128x128xbf16>
    %52 = vector.shape_cast %51 : vector<1x128x128xbf16> to vector<128x128xbf16>
    %cst_47 = arith.constant dense<0.000000e+00> : vector<255x128xf32>
    %53 = tpu.matmul %50, %52, %cst_47 {dimension_numbers = #tpu.dot_dimension_numbers<[1], [0], [0], [1], [0, 0, 1, 1], [], []>} : vector<255x128xbf16>, vector<128x128xbf16>, vector<255x128xf32> -> vector<255x128xf32>
    %54 = arith.addf %48, %53 : vector<255x128xf32>
    %c0_48 = arith.constant 0 : index
    %c0_49 = arith.constant 0 : index
    %55 = vector.load %arg2[%c0_48, %c0_49] : memref<1x128xf32, #tpu.memory_space<vmem>>, vector<1x128xf32>
    %56 = vector.broadcast %55 : vector<1x128xf32> to vector<255x128xf32>
    %57 = arith.addf %54, %56 : vector<255x128xf32>
    %58 = arith.negf %57 : vector<255x128xf32>
    %59 = math.exp %58 : vector<255x128xf32>
    %cst_50 = arith.constant 1.000000e+00 : f32
    %60 = vector.broadcast %cst_50 : f32 to vector<255x128xf32>
    %61 = arith.addf %60, %59 : vector<255x128xf32>
    %62 = arith.divf %60, %61 : vector<255x128xf32>
    %63 = arith.mulf %57, %62 : vector<255x128xf32>
    %64 = arith.truncf %63 : vector<255x128xf32> to vector<255x128xbf16>
    %c0_51 = arith.constant 0 : index
    %c0_52 = arith.constant 0 : index
    %c0_53 = arith.constant 0 : index
    %65 = vector.load %arg3[%c0_51, %c0_52, %c0_53] : memref<2x255x128xbf16, #tpu.memory_space<vmem>>, vector<1x255x128xbf16>
    %66 = vector.shape_cast %65 : vector<1x255x128xbf16> to vector<255x128xbf16>
    %67 = vector.shape_cast %64 : vector<255x128xbf16> to vector<1x255x128xbf16>
    tpu.vector_store %arg3[%c0_51, %c0_52, %c0_53], %67 {strides = array<i32>} : memref<2x255x128xbf16, #tpu.memory_space<vmem>>, vector<1x255x128xbf16>,
    %cst_54 = arith.constant 0.000000e+00 : f32
    %68 = vector.broadcast %cst_54 : f32 to vector<255x128xf32>
    %c1_55 = arith.constant 1 : index
    %c0_56 = arith.constant 0 : index
    %c0_57 = arith.constant 0 : index
    %69 = vector.load %arg0[%c1_55, %c0_56, %c0_57] : memref<2x306x128xbf16, #tpu.memory_space<vmem>>, vector<1x255x128xbf16>
    %70 = vector.shape_cast %69 : vector<1x255x128xbf16> to vector<255x128xbf16>
    %c0_58 = arith.constant 0 : index
    %c0_59 = arith.constant 0 : index
    %c0_60 = arith.constant 0 : index
    %71 = vector.load %arg1[%c0_58, %c0_59, %c0_60] : memref<9x128x128xbf16, #tpu.memory_space<vmem>>, vector<1x128x128xbf16>
    %72 = vector.shape_cast %71 : vector<1x128x128xbf16> to vector<128x128xbf16>
    %cst_61 = arith.constant dense<0.000000e+00> : vector<255x128xf32>
    %73 = tpu.matmul %70, %72, %cst_61 {dimension_numbers = #tpu.dot_dimension_numbers<[1], [0], [0], [1], [0, 0, 1, 1], [], []>} : vector<255x128xbf16>, vector<128x128xbf16>, vector<255x128xf32> -> vector<255x128xf32>
    %74 = arith.addf %68, %73 : vector<255x128xf32>
    %c1_62 = arith.constant 1 : index
    %c1_63 = arith.constant 1 : index
    %c0_64 = arith.constant 0 : index
    %75 = vector.load %arg0[%c1_62, %c1_63, %c0_64] : memref<2x306x128xbf16, #tpu.memory_space<vmem>>, vector<1x255x128xbf16>
    %76 = vector.shape_cast %75 : vector<1x255x128xbf16> to vector<255x128xbf16>
    %c1_65 = arith.constant 1 : index
    %c0_66 = arith.constant 0 : index
    %c0_67 = arith.constant 0 : index
    %77 = vector.load %arg1[%c1_65, %c0_66, %c0_67] : memref<9x128x128xbf16, #tpu.memory_space<vmem>>, vector<1x128x128xbf16>
    %78 = vector.shape_cast %77 : vector<1x128x128xbf16> to vector<128x128xbf16>
    %cst_68 = arith.constant dense<0.000000e+00> : vector<255x128xf32>
    %79 = tpu.matmul %76, %78, %cst_68 {dimension_numbers = #tpu.dot_dimension_numbers<[1], [0], [0], [1], [0, 0, 1, 1], [], []>} : vector<255x128xbf16>, vector<128x128xbf16>, vector<255x128xf32> -> vector<255x128xf32>
    %80 = arith.addf %74, %79 : vector<255x128xf32>
    %c1_69 = arith.constant 1 : index
    %c2_70 = arith.constant 2 : index
    %c0_71 = arith.constant 0 : index
    %81 = vector.load %arg0[%c1_69, %c2_70, %c0_71] : memref<2x306x128xbf16, #tpu.memory_space<vmem>>, vector<1x255x128xbf16>
    %82 = vector.shape_cast %81 : vector<1x255x128xbf16> to vector<255x128xbf16>
    %c2_72 = arith.constant 2 : index
    %c0_73 = arith.constant 0 : index
    %c0_74 = arith.constant 0 : index
    %83 = vector.load %arg1[%c2_72, %c0_73, %c0_74] : memref<9x128x128xbf16, #tpu.memory_space<vmem>>, vector<1x128x128xbf16>
    %84 = vector.shape_cast %83 : vector<1x128x128xbf16> to vector<128x128xbf16>
    %cst_75 = arith.constant dense<0.000000e+00> : vector<255x128xf32>
    %85 = tpu.matmul %82, %84, %cst_75 {dimension_numbers = #tpu.dot_dimension_numbers<[1], [0], [0], [1], [0, 0, 1, 1], [], []>} : vector<255x128xbf16>, vector<128x128xbf16>, vector<255x128xf32> -> vector<255x128xf32>
    %86 = arith.addf %80, %85 : vector<255x128xf32>
    %c1_76 = arith.constant 1 : index
    %c17_77 = arith.constant 17 : index
    %c0_78 = arith.constant 0 : index
    %87 = vector.load %arg0[%c1_76, %c17_77, %c0_78] : memref<2x306x128xbf16, #tpu.memory_space<vmem>>, vector<1x255x128xbf16>
    %88 = vector.shape_cast %87 : vector<1x255x128xbf16> to vector<255x128xbf16>
    %c3_79 = arith.constant 3 : index
    %c0_80 = arith.constant 0 : index
    %c0_81 = arith.constant 0 : index
    %89 = vector.load %arg1[%c3_79, %c0_80, %c0_81] : memref<9x128x128xbf16, #tpu.memory_space<vmem>>, vector<1x128x128xbf16>
    %90 = vector.shape_cast %89 : vector<1x128x128xbf16> to vector<128x128xbf16>
    %cst_82 = arith.constant dense<0.000000e+00> : vector<255x128xf32>
    %91 = tpu.matmul %88, %90, %cst_82 {dimension_numbers = #tpu.dot_dimension_numbers<[1], [0], [0], [1], [0, 0, 1, 1], [], []>} : vector<255x128xbf16>, vector<128x128xbf16>, vector<255x128xf32> -> vector<255x128xf32>
    %92 = arith.addf %86, %91 : vector<255x128xf32>
    %c1_83 = arith.constant 1 : index
    %c18_84 = arith.constant 18 : index
    %c0_85 = arith.constant 0 : index
    %93 = vector.load %arg0[%c1_83, %c18_84, %c0_85] : memref<2x306x128xbf16, #tpu.memory_space<vmem>>, vector<1x255x128xbf16>
    %94 = vector.shape_cast %93 : vector<1x255x128xbf16> to vector<255x128xbf16>
    %c4_86 = arith.constant 4 : index
    %c0_87 = arith.constant 0 : index
    %c0_88 = arith.constant 0 : index
    %95 = vector.load %arg1[%c4_86, %c0_87, %c0_88] : memref<9x128x128xbf16, #tpu.memory_space<vmem>>, vector<1x128x128xbf16>
    %96 = vector.shape_cast %95 : vector<1x128x128xbf16> to vector<128x128xbf16>
    %cst_89 = arith.constant dense<0.000000e+00> : vector<255x128xf32>
    %97 = tpu.matmul %94, %96, %cst_89 {dimension_numbers = #tpu.dot_dimension_numbers<[1], [0], [0], [1], [0, 0, 1, 1], [], []>} : vector<255x128xbf16>, vector<128x128xbf16>, vector<255x128xf32> -> vector<255x128xf32>
    %98 = arith.addf %92, %97 : vector<255x128xf32>
    %c1_90 = arith.constant 1 : index
    %c19_91 = arith.constant 19 : index
    %c0_92 = arith.constant 0 : index
    %99 = vector.load %arg0[%c1_90, %c19_91, %c0_92] : memref<2x306x128xbf16, #tpu.memory_space<vmem>>, vector<1x255x128xbf16>
    %100 = vector.shape_cast %99 : vector<1x255x128xbf16> to vector<255x128xbf16>
    %c5_93 = arith.constant 5 : index
    %c0_94 = arith.constant 0 : index
    %c0_95 = arith.constant 0 : index
    %101 = vector.load %arg1[%c5_93, %c0_94, %c0_95] : memref<9x128x128xbf16, #tpu.memory_space<vmem>>, vector<1x128x128xbf16>
    %102 = vector.shape_cast %101 : vector<1x128x128xbf16> to vector<128x128xbf16>
    %cst_96 = arith.constant dense<0.000000e+00> : vector<255x128xf32>
    %103 = tpu.matmul %100, %102, %cst_96 {dimension_numbers = #tpu.dot_dimension_numbers<[1], [0], [0], [1], [0, 0, 1, 1], [], []>} : vector<255x128xbf16>, vector<128x128xbf16>, vector<255x128xf32> -> vector<255x128xf32>
    %104 = arith.addf %98, %103 : vector<255x128xf32>
    %c1_97 = arith.constant 1 : index
    %c34_98 = arith.constant 34 : index
    %c0_99 = arith.constant 0 : index
    %105 = vector.load %arg0[%c1_97, %c34_98, %c0_99] : memref<2x306x128xbf16, #tpu.memory_space<vmem>>, vector<1x255x128xbf16>
    %106 = vector.shape_cast %105 : vector<1x255x128xbf16> to vector<255x128xbf16>
    %c6_100 = arith.constant 6 : index
    %c0_101 = arith.constant 0 : index
    %c0_102 = arith.constant 0 : index
    %107 = vector.load %arg1[%c6_100, %c0_101, %c0_102] : memref<9x128x128xbf16, #tpu.memory_space<vmem>>, vector<1x128x128xbf16>
    %108 = vector.shape_cast %107 : vector<1x128x128xbf16> to vector<128x128xbf16>
    %cst_103 = arith.constant dense<0.000000e+00> : vector<255x128xf32>
    %109 = tpu.matmul %106, %108, %cst_103 {dimension_numbers = #tpu.dot_dimension_numbers<[1], [0], [0], [1], [0, 0, 1, 1], [], []>} : vector<255x128xbf16>, vector<128x128xbf16>, vector<255x128xf32> -> vector<255x128xf32>
    %110 = arith.addf %104, %109 : vector<255x128xf32>
    %c1_104 = arith.constant 1 : index
    %c35_105 = arith.constant 35 : index
    %c0_106 = arith.constant 0 : index
    %111 = vector.load %arg0[%c1_104, %c35_105, %c0_106] : memref<2x306x128xbf16, #tpu.memory_space<vmem>>, vector<1x255x128xbf16>
    %112 = vector.shape_cast %111 : vector<1x255x128xbf16> to vector<255x128xbf16>
    %c7_107 = arith.constant 7 : index
    %c0_108 = arith.constant 0 : index
    %c0_109 = arith.constant 0 : index
    %113 = vector.load %arg1[%c7_107, %c0_108, %c0_109] : memref<9x128x128xbf16, #tpu.memory_space<vmem>>, vector<1x128x128xbf16>
    %114 = vector.shape_cast %113 : vector<1x128x128xbf16> to vector<128x128xbf16>
    %cst_110 = arith.constant dense<0.000000e+00> : vector<255x128xf32>
    %115 = tpu.matmul %112, %114, %cst_110 {dimension_numbers = #tpu.dot_dimension_numbers<[1], [0], [0], [1], [0, 0, 1, 1], [], []>} : vector<255x128xbf16>, vector<128x128xbf16>, vector<255x128xf32> -> vector<255x128xf32>
    %116 = arith.addf %110, %115 : vector<255x128xf32>
    %c1_111 = arith.constant 1 : index
    %c36_112 = arith.constant 36 : index
    %c0_113 = arith.constant 0 : index
    %117 = vector.load %arg0[%c1_111, %c36_112, %c0_113] : memref<2x306x128xbf16, #tpu.memory_space<vmem>>, vector<1x255x128xbf16>
    %118 = vector.shape_cast %117 : vector<1x255x128xbf16> to vector<255x128xbf16>
    %c8_114 = arith.constant 8 : index
    %c0_115 = arith.constant 0 : index
    %c0_116 = arith.constant 0 : index
    %119 = vector.load %arg1[%c8_114, %c0_115, %c0_116] : memref<9x128x128xbf16, #tpu.memory_space<vmem>>, vector<1x128x128xbf16>
    %120 = vector.shape_cast %119 : vector<1x128x128xbf16> to vector<128x128xbf16>
    %cst_117 = arith.constant dense<0.000000e+00> : vector<255x128xf32>
    %121 = tpu.matmul %118, %120, %cst_117 {dimension_numbers = #tpu.dot_dimension_numbers<[1], [0], [0], [1], [0, 0, 1, 1], [], []>} : vector<255x128xbf16>, vector<128x128xbf16>, vector<255x128xf32> -> vector<255x128xf32>
    %122 = arith.addf %116, %121 : vector<255x128xf32>
    %c0_118 = arith.constant 0 : index
    %c0_119 = arith.constant 0 : index
    %123 = vector.load %arg2[%c0_118, %c0_119] : memref<1x128xf32, #tpu.memory_space<vmem>>, vector<1x128xf32>
    %124 = vector.broadcast %123 : vector<1x128xf32> to vector<255x128xf32>
    %125 = arith.addf %122, %124 : vector<255x128xf32>
    %126 = arith.negf %125 : vector<255x128xf32>
    %127 = math.exp %126 : vector<255x128xf32>
    %cst_120 = arith.constant 1.000000e+00 : f32
    %128 = vector.broadcast %cst_120 : f32 to vector<255x128xf32>
    %129 = arith.addf %128, %127 : vector<255x128xf32>
    %130 = arith.divf %128, %129 : vector<255x128xf32>
    %131 = arith.mulf %125, %130 : vector<255x128xf32>
    %132 = arith.truncf %131 : vector<255x128xf32> to vector<255x128xbf16>
    %c1_121 = arith.constant 1 : index
    %c0_122 = arith.constant 0 : index
    %c0_123 = arith.constant 0 : index
    %133 = vector.load %arg3[%c1_121, %c0_122, %c0_123] : memref<2x255x128xbf16, #tpu.memory_space<vmem>>, vector<1x255x128xbf16>
    %134 = vector.shape_cast %133 : vector<1x255x128xbf16> to vector<255x128xbf16>
    %135 = vector.shape_cast %132 : vector<255x128xbf16> to vector<1x255x128xbf16>
    tpu.vector_store %arg3[%c1_121, %c0_122, %c0_123], %135 {strides = array<i32>} : memref<2x255x128xbf16, #tpu.memory_space<vmem>>, vector<1x255x128xbf16>,
    return
  }
}

</mosaic_0001>

<llo_original>
// kernel: tpu_custom_call.1
$region0: #{tpu_custom_call.1}
  #allocation0 [shape = 'u32[]', space=smem, size = 0x4, offset = 0x4, fixed_abs, tag = 'smem constant byte address 0x4 - core index']
  #allocation1 [shape = 'u32[72,128]{1,0:T(1,128)}', space=vmem, size = 0x9000, scoped, tag = 'internal scratch']
  %s0 = inlined_call_operand.vmem [shape: bf16[2,306,128], index: 0, kind: input, shape index: {}]
  %s1 = inlined_call_operand.vmem [shape: bf16[9,128,128], index: 1, kind: input, shape index: {}]
  %s2 = inlined_call_operand.vmem [shape: f32[1,128], index: 2, kind: input, shape index: {}]
  %s3 = inlined_call_operand.vmem [shape: bf16[2,255,128], index: 3, kind: output, shape index: {}]
  %s4 = sld [smem:[#allocation0]]
  $region22: #{tpu_custom_call.1} parent=0
    _
  %s6 = ssub.s32 1, %s4
  %s7 = scalar_select 0, %s6, %s4
  // Predicated region
  $region2: #{tpu_custom_call.1} parent=0 // pred_check
    _
  $region3: #{tpu_custom_call.1} parent=0 // pred_check_branch
    %9 = sbr.rel (0) target = $region5
  $region4: #{tpu_custom_call.1} parent=0 // pred_region
    _
  $region5: #{tpu_custom_call.1} parent=0 // pred_fallthru
    _
  // Predicated region
  $region6: #{tpu_custom_call.1} parent=0 // pred_check
    _
  $region7: #{tpu_custom_call.1} parent=0 // pred_check_branch
    %11 = sbr.rel (0) target = $region9
  $region8: #{tpu_custom_call.1} parent=0 // pred_region
    _
  $region9: #{tpu_custom_call.1} parent=0 // pred_fallthru
    _
  // Predicated region
  $region10: #{tpu_custom_call.1} parent=0 // pred_check
    _
  $region11: #{tpu_custom_call.1} parent=0 // pred_check_branch
    %13 = sbr.rel (0) target = $region13
  $region12: #{tpu_custom_call.1} parent=0 // pred_region
    _
  $region13: #{tpu_custom_call.1} parent=0 // pred_fallthru
    _
  %v14 = vld [vmem:[%s0] sm:$0xf]
  %v15 = vld [vmem:[%s0 + $0x4] sm:$0xf]
  %v16 = vld [vmem:[%s0 + $0x8] sm:$0xf]
  %v17 = vld [vmem:[%s0 + $0xc] sm:$0xf]
  %v18 = vld [vmem:[%s0 + $0x10] sm:$0xf]
  %v19 = vld [vmem:[%s0 + $0x14] sm:$0xf]
  %v20 = vld [vmem:[%s0 + $0x18] sm:$0xf]
  %v21 = vld [vmem:[%s0 + $0x1c] sm:$0xf]
  %v22 = vld [vmem:[%s0 + $0x20] sm:$0xf]
  %v23 = vld [vmem:[%s0 + $0x24] sm:$0xf]
  %v24 = vld [vmem:[%s0 + $0x28] sm:$0xf]
  %v25 = vld [vmem:[%s0 + $0x2c] sm:$0xf]
  %v26 = vld [vmem:[%s0 + $0x30] sm:$0xf]
  %v27 = vld [vmem:[%s0 + $0x34] sm:$0xf]
  %v28 = vld [vmem:[%s0 + $0x38] sm:$0xf]
  %v29 = vld [vmem:[%s0 + $0x3c] sm:$0xf]
  %v30 = vld [vmem:[%s0 + $0x40] sm:$0xf]
  %v31 = vld [vmem:[%s0 + $0x44] sm:$0xf]
  %v32 = vld [vmem:[%s0 + $0x48] sm:$0xf]
  %v33 = vld [vmem:[%s0 + $0x4c] sm:$0xf]
  %v34 = vld [vmem:[%s0 + $0x50] sm:$0xf]
  %v35 = vld [vmem:[%s0 + $0x54] sm:$0xf]
  %v36 = vld [vmem:[%s0 + $0x58] sm:$0xf]
  %v37 = vld [vmem:[%s0 + $0x5c] sm:$0xf]
  %v38 = vld [vmem:[%s0 + $0x60] sm:$0xf]
  %v39 = vld [vmem:[%s0 + $0x64] sm:$0xf]
  %v40 = vld [vmem:[%s0 + $0x68] sm:$0xf]
  %v41 = vld [vmem:[%s0 + $0x6c] sm:$0xf]
  %v42 = vld [vmem:[%s0 + $0x70] sm:$0xf]
  %v43 = vld [vmem:[%s0 + $0x74] sm:$0xf]
  %v44 = vld [vmem:[%s0 + $0x78] sm:$0xf]
  %v45 = vld [vmem:[%s0 + $0x7c] sm:$0xf]
  %v46 = vld [vmem:[%s1] sm:$0xf]
  %v47 = vld [vmem:[%s1 + $0x4] sm:$0xf]
  %v48 = vld [vmem:[%s1 + $0x8] sm:$0xf]
  %v49 = vld [vmem:[%s1 + $0xc] sm:$0xf]
  %v50 = vld [vmem:[%s1 + $0x10] sm:$0xf]
  %v51 = vld [vmem:[%s1 + $0x14] sm:$0xf]
  %v52 = vld [vmem:[%s1 + $0x18] sm:$0xf]
  %v53 = vld [vmem:[%s1 + $0x1c] sm:$0xf]
  %v54 = vld [vmem:[%s1 + $0x20] sm:$0xf]
  %v55 = vld [vmem:[%s1 + $0x24] sm:$0xf]
  %v56 = vld [vmem:[%s1 + $0x28] sm:$0xf]
  %v57 = vld [vmem:[%s1 + $0x2c] sm:$0xf]
  %v58 = vld [vmem:[%s1 + $0x30] sm:$0xf]
  %v59 = vld [vmem:[%s1 + $0x34] sm:$0xf]
  %v60 = vld [vmem:[%s1 + $0x38] sm:$0xf]
  %v61 = vld [vmem:[%s1 + $0x3c] sm:$0xf]
  %s62 = scalar_lea.vmem %s1, 64
  %v63 = vld [vmem:[%s62] sm:$0xf]
  %v64 = vld [vmem:[%s62 + $0x4] sm:$0xf]
  %v65 = vld [vmem:[%s62 + $0x8] sm:$0xf]
  %v66 = vld [vmem:[%s62 + $0xc] sm:$0xf]
  %v67 = vld [vmem:[%s62 + $0x10] sm:$0xf]
  %v68 = vld [vmem:[%s62 + $0x14] sm:$0xf]
  %v69 = vld [vmem:[%s62 + $0x18] sm:$0xf]
  %v70 = vld [vmem:[%s62 + $0x1c] sm:$0xf]
  %v71 = vld [vmem:[%s62 + $0x20] sm:$0xf]
  %v72 = vld [vmem:[%s62 + $0x24] sm:$0xf]
  %v73 = vld [vmem:[%s62 + $0x28] sm:$0xf]
  %v74 = vld [vmem:[%s62 + $0x2c] sm:$0xf]
  %v75 = vld [vmem:[%s62 + $0x30] sm:$0xf]
  %v76 = vld [vmem:[%s62 + $0x34] sm:$0xf]
  %v77 = vld [vmem:[%s62 + $0x38] sm:$0xf]
  %v78 = vld [vmem:[%s62 + $0x3c] sm:$0xf]
  %v111 = vunpack.c.l.b16 %v14
  %v112 = vunpack.c.l.b16 %v15
  %v113 = vunpack.c.l.b16 %v16
  %v114 = vunpack.c.l.b16 %v17
  %v115 = vunpack.c.l.b16 %v18
  %v116 = vunpack.c.l.b16 %v19
  %v117 = vunpack.c.l.b16 %v20
  %v118 = vunpack.c.l.b16 %v21
  %v119 = vunpack.c.l.b16 %v22
  %v120 = vunpack.c.l.b16 %v23
  %v121 = vunpack.c.l.b16 %v24
  %v122 = vunpack.c.l.b16 %v25
  %v123 = vunpack.c.l.b16 %v26
  %v124 = vunpack.c.l.b16 %v27
  %v125 = vunpack.c.l.b16 %v28
  %v126 = vunpack.c.l.b16 %v29
  %v127 = vunpack.c.l.b16 %v30
  %v128 = vunpack.c.l.b16 %v31
  %v129 = vunpack.c.l.b16 %v32
  %v130 = vunpack.c.l.b16 %v33
  %v131 = vunpack.c.l.b16 %v34
  %v132 = vunpack.c.l.b16 %v35
  %v133 = vunpack.c.l.b16 %v36
  %v134 = vunpack.c.l.b16 %v37
  %v135 = vunpack.c.l.b16 %v38
  %v136 = vunpack.c.l.b16 %v39
  %v137 = vunpack.c.l.b16 %v40
  %v138 = vunpack.c.l.b16 %v41
  %v139 = vunpack.c.l.b16 %v42
  %v140 = vunpack.c.l.b16 %v43
  %v141 = vunpack.c.l.b16 %v44
  %v142 = vunpack.c.l.b16 %v45
  %v143 = vpack.c.b16 %v112, %v111
  %v144 = vpack.c.b16 %v114, %v113
  %v145 = vpack.c.b16 %v116, %v115
  %v146 = vpack.c.b16 %v118, %v117
  %v147 = vpack.c.b16 %v120, %v119
  %v148 = vpack.c.b16 %v122, %v121
  %v149 = vpack.c.b16 %v124, %v123
  %v150 = vpack.c.b16 %v126, %v125
  %v151 = vpack.c.b16 %v128, %v127
  %v152 = vpack.c.b16 %v130, %v129
  %v153 = vpack.c.b16 %v132, %v131
  %v154 = vpack.c.b16 %v134, %v133
  %v155 = vpack.c.b16 %v136, %v135
  %v156 = vpack.c.b16 %v138, %v137
  %v157 = vpack.c.b16 %v140, %v139
  %v158 = vpack.c.b16 %v142, %v141
  %vm159 = vsmask.f32 7424
  %v161 = vshrl.u32 %v143, 16
  %v163 = vshll.u32 %v143, 16
  %v165 = vrot.slane %v163, 1
  %v166 = vor.u32 %v161, %v165
  %v168 = vshll.u32 %v144, 16
  %v170 = vrot.slane %v168, 1
  %v171 = vsel %vm159, %v166, %v170
  %v172 = vshrl.u32 %v144, 16
  %v174 = vor.u32 %v172, %v170
  %v176 = vshll.u32 %v145, 16
  %v178 = vrot.slane %v176, 1
  %v179 = vsel %vm159, %v174, %v178
  %v180 = vshrl.u32 %v145, 16
  %v182 = vor.u32 %v180, %v178
  %v184 = vshll.u32 %v146, 16
  %v186 = vrot.slane %v184, 1
  %v187 = vsel %vm159, %v182, %v186
  %v188 = vshrl.u32 %v146, 16
  %v190 = vor.u32 %v188, %v186
  %v192 = vshll.u32 %v147, 16
  %v194 = vrot.slane %v192, 1
  %v195 = vsel %vm159, %v190, %v194
  %v196 = vshrl.u32 %v147, 16
  %v198 = vor.u32 %v196, %v194
  %v200 = vshll.u32 %v148, 16
  %v202 = vrot.slane %v200, 1
  %v203 = vsel %vm159, %v198, %v202
  %v204 = vshrl.u32 %v148, 16
  %v206 = vor.u32 %v204, %v202
  %v208 = vshll.u32 %v149, 16
  %v210 = vrot.slane %v208, 1
  %v211 = vsel %vm159, %v206, %v210
  %v212 = vshrl.u32 %v149, 16
  %v214 = vor.u32 %v212, %v210
  %v216 = vshll.u32 %v150, 16
  %v218 = vrot.slane %v216, 1
  %v219 = vsel %vm159, %v214, %v218
  %v220 = vshrl.u32 %v150, 16
  %v222 = vor.u32 %v220, %v218
  %v224 = vshll.u32 %v151, 16
  %v226 = vrot.slane %v224, 1
  %v227 = vsel %vm159, %v222, %v226
  %v228 = vshrl.u32 %v151, 16
  %v230 = vor.u32 %v228, %v226
  %v232 = vshll.u32 %v152, 16
  %v234 = vrot.slane %v232, 1
  %v235 = vsel %vm159, %v230, %v234
  %v236 = vshrl.u32 %v152, 16
  %v238 = vor.u32 %v236, %v234
  %v240 = vshll.u32 %v153, 16
  %v242 = vrot.slane %v240, 1
  %v243 = vsel %vm159, %v238, %v242
  %v244 = vshrl.u32 %v153, 16
  %v246 = vor.u32 %v244, %v242
  %v248 = vshll.u32 %v154, 16
  %v250 = vrot.slane %v248, 1
  %v251 = vsel %vm159, %v246, %v250
  %v252 = vshrl.u32 %v154, 16
  %v254 = vor.u32 %v252, %v250
  %v256 = vshll.u32 %v155, 16
  %v258 = vrot.slane %v256, 1
  %v259 = vsel %vm159, %v254, %v258
  %v260 = vshrl.u32 %v155, 16
  %v262 = vor.u32 %v260, %v258
  %v264 = vshll.u32 %v156, 16
  %v266 = vrot.slane %v264, 1
  %v267 = vsel %vm159, %v262, %v266
  %v268 = vshrl.u32 %v156, 16
  %v270 = vor.u32 %v268, %v266
  %v272 = vshll.u32 %v157, 16
  %v274 = vrot.slane %v272, 1
  %v275 = vsel %vm159, %v270, %v274
  %v276 = vshrl.u32 %v157, 16
  %v278 = vor.u32 %v276, %v274
  %v280 = vshll.u32 %v158, 16
  %v282 = vrot.slane %v280, 1
  %v283 = vsel %vm159, %v278, %v282
  %v284 = vshrl.u32 %v158, 16
  %v286 = vor.u32 %v284, %v282
  %v319 = vunpack.c.l.b16 %v63
  %v320 = vunpack.c.l.b16 %v64
  %v321 = vunpack.c.l.b16 %v65
  %v322 = vunpack.c.l.b16 %v66
  %v323 = vunpack.c.l.b16 %v67
  %v324 = vunpack.c.l.b16 %v68
  %v325 = vunpack.c.l.b16 %v69
  %v326 = vunpack.c.l.b16 %v70
  %v327 = vunpack.c.l.b16 %v71
  %v328 = vunpack.c.l.b16 %v72
  %v329 = vunpack.c.l.b16 %v73
  %v330 = vunpack.c.l.b16 %v74
  %v331 = vunpack.c.l.b16 %v75
  %v332 = vunpack.c.l.b16 %v76
  %v333 = vunpack.c.l.b16 %v77
  %v334 = vunpack.c.l.b16 %v78
  %v335 = vpack.c.b16 %v320, %v319
  %v336 = vpack.c.b16 %v322, %v321
  %v337 = vpack.c.b16 %v324, %v323
  %v338 = vpack.c.b16 %v326, %v325
  %v339 = vpack.c.b16 %v328, %v327
  %v340 = vpack.c.b16 %v330, %v329
  %v341 = vpack.c.b16 %v332, %v331
  %v342 = vpack.c.b16 %v334, %v333
  %351 = vmatpush.bf16.msra.mxu0 %v342
  %352 = vmatpush.bf16.msra.mxu0 %v341
  %353 = vmatpush.bf16.msra.mxu0 %v340
  %354 = vmatpush.bf16.msra.mxu0 %v339
  %355 = vmatpush.bf16.msra.mxu0 %v338
  %356 = vmatpush.bf16.msra.mxu0 %v337
  %357 = vmatpush.bf16.msra.mxu0 %v336
  %358 = vmatpush.bf16.msra.mxu0 %v335
  %359 = vmatmul.bf16.gmra.mxu0 %v171
  %v360 = vpop.f32.mrf.mxu0
  %v361 = vadd.f32 0.0, %v360
  %v362 = vpop.f32.mrf.mxu0
  %v363 = vadd.f32 0.0, %v362
  %364 = vmatmul.bf16.gmra.mxu0 %v179
  %v365 = vpop.f32.mrf.mxu0
  %v366 = vadd.f32 0.0, %v365
  %v367 = vpop.f32.mrf.mxu0
  %v368 = vadd.f32 0.0, %v367
  %369 = vmatmul.bf16.gmra.mxu0 %v187
  %v370 = vpop.f32.mrf.mxu0
  %v371 = vadd.f32 0.0, %v370
  %v372 = vpop.f32.mrf.mxu0
  %v373 = vadd.f32 0.0, %v372
  %374 = vmatmul.bf16.gmra.mxu0 %v195
  %v375 = vpop.f32.mrf.mxu0
  %v376 = vadd.f32 0.0, %v375
  %v377 = vpop.f32.mrf.mxu0
  %v378 = vadd.f32 0.0, %v377
  %379 = vmatmul.bf16.gmra.mxu0 %v203
  %v380 = vpop.f32.mrf.mxu0
  %v381 = vadd.f32 0.0, %v380
  %v382 = vpop.f32.mrf.mxu0
  %v383 = vadd.f32 0.0, %v382
  %384 = vmatmul.bf16.gmra.mxu0 %v211
  %v385 = vpop.f32.mrf.mxu0
  %v386 = vadd.f32 0.0, %v385
  %v387 = vpop.f32.mrf.mxu0
  %v388 = vadd.f32 0.0, %v387
  %389 = vmatmul.bf16.gmra.mxu0 %v219
  %v390 = vpop.f32.mrf.mxu0
  %v391 = vadd.f32 0.0, %v390
  %v392 = vpop.f32.mrf.mxu0
  %v393 = vadd.f32 0.0, %v392
  %394 = vmatmul.bf16.gmra.mxu0 %v227
  %v395 = vpop.f32.mrf.mxu0
  %v396 = vadd.f32 0.0, %v395
  %v397 = vpop.f32.mrf.mxu0
  %v398 = vadd.f32 0.0, %v397
  %399 = vmatmul.bf16.gmra.mxu0 %v235
  %v400 = vpop.f32.mrf.mxu0
  %v401 = vadd.f32 0.0, %v400
  %v402 = vpop.f32.mrf.mxu0
  %v403 = vadd.f32 0.0, %v402
  %404 = vmatmul.bf16.gmra.mxu0 %v243
  %v405 = vpop.f32.mrf.mxu0
  %v406 = vadd.f32 0.0, %v405
  %v407 = vpop.f32.mrf.mxu0
  %v408 = vadd.f32 0.0, %v407
  %409 = vmatmul.bf16.gmra.mxu0 %v251
  %v410 = vpop.f32.mrf.mxu0
  %v411 = vadd.f32 0.0, %v410
  %v412 = vpop.f32.mrf.mxu0
  %v413 = vadd.f32 0.0, %v412
  %414 = vmatmul.bf16.gmra.mxu0 %v259
  %v415 = vpop.f32.mrf.mxu0
  %v416 = vadd.f32 0.0, %v415
  %v417 = vpop.f32.mrf.mxu0
  %v418 = vadd.f32 0.0, %v417
  %419 = vmatmul.bf16.gmra.mxu0 %v267
  %v420 = vpop.f32.mrf.mxu0
  %v421 = vadd.f32 0.0, %v420
  %v422 = vpop.f32.mrf.mxu0
  %v423 = vadd.f32 0.0, %v422
  %424 = vmatmul.bf16.gmra.mxu0 %v275
  %v425 = vpop.f32.mrf.mxu0
  %v426 = vadd.f32 0.0, %v425
  %v427 = vpop.f32.mrf.mxu0
  %v428 = vadd.f32 0.0, %v427
  %429 = vmatmul.bf16.gmra.mxu0 %v283
  %v430 = vpop.f32.mrf.mxu0
  %v431 = vadd.f32 0.0, %v430
  %v432 = vpop.f32.mrf.mxu0
  %v433 = vadd.f32 0.0, %v432
  %434 = vmatmul.bf16.gmra.mxu0 %v286
  %v435 = vpop.f32.mrf.mxu0
  %v436 = vadd.f32 0.0, %v435
  %v437 = vpop.f32.mrf.mxu0
  %v438 = vadd.f32 0.0, %v437
  %439 = vdwg.mxu0
  %v472 = vunpack.c.l.b16 %v46
  %v473 = vunpack.c.l.b16 %v47
  %v474 = vunpack.c.l.b16 %v48
  %v475 = vunpack.c.l.b16 %v49
  %v476 = vunpack.c.l.b16 %v50
  %v477 = vunpack.c.l.b16 %v51
  %v478 = vunpack.c.l.b16 %v52
  %v479 = vunpack.c.l.b16 %v53
  %v480 = vunpack.c.l.b16 %v54
  %v481 = vunpack.c.l.b16 %v55
  %v482 = vunpack.c.l.b16 %v56
  %v483 = vunpack.c.l.b16 %v57
  %v484 = vunpack.c.l.b16 %v58
  %v485 = vunpack.c.l.b16 %v59
  %v486 = vunpack.c.l.b16 %v60
  %v487 = vunpack.c.l.b16 %v61
  %v488 = vpack.c.b16 %v473, %v472
  %v489 = vpack.c.b16 %v475, %v474
  %v490 = vpack.c.b16 %v477, %v476
  %v491 = vpack.c.b16 %v479, %v478
  %v492 = vpack.c.b16 %v481, %v480
  %v493 = vpack.c.b16 %v483, %v482
  %v494 = vpack.c.b16 %v485, %v484
  %v495 = vpack.c.b16 %v487, %v486
  %504 = vmatpush.bf16.msra.mxu0 %v495
  %505 = vmatpush.bf16.msra.mxu0 %v494
  %506 = vmatpush.bf16.msra.mxu0 %v493
  %507 = vmatpush.bf16.msra.mxu0 %v492
  %508 = vmatpush.bf16.msra.mxu0 %v491
  %509 = vmatpush.bf16.msra.mxu0 %v490
  %510 = vmatpush.bf16.msra.mxu0 %v489
  %511 = vmatpush.bf16.msra.mxu0 %v488
  %512 = vmatmul.bf16.gmra.mxu0 %v143
  %v513 = vpop.f32.mrf.mxu0
  %v514 = vadd.f32 %v361, %v513
  %v515 = vpop.f32.mrf.mxu0
  %v516 = vadd.f32 %v363, %v515
  %517 = vmatmul.bf16.gmra.mxu0 %v144
  %v518 = vpop.f32.mrf.mxu0
  %v519 = vadd.f32 %v366, %v518
  %v520 = vpop.f32.mrf.mxu0
  %v521 = vadd.f32 %v368, %v520
  %522 = vmatmul.bf16.gmra.mxu0 %v145
  %v523 = vpop.f32.mrf.mxu0
  %v524 = vadd.f32 %v371, %v523
  %v525 = vpop.f32.mrf.mxu0
  %v526 = vadd.f32 %v373, %v525
  %527 = vmatmul.bf16.gmra.mxu0 %v146
  %v528 = vpop.f32.mrf.mxu0
  %v529 = vadd.f32 %v376, %v528
  %v530 = vpop.f32.mrf.mxu0
  %v531 = vadd.f32 %v378, %v530
  %532 = vmatmul.bf16.gmra.mxu0 %v147
  %v533 = vpop.f32.mrf.mxu0
  %v534 = vadd.f32 %v381, %v533
  %v535 = vpop.f32.mrf.mxu0
  %v536 = vadd.f32 %v383, %v535
  %537 = vmatmul.bf16.gmra.mxu0 %v148
  %v538 = vpop.f32.mrf.mxu0
  %v539 = vadd.f32 %v386, %v538
  %v540 = vpop.f32.mrf.mxu0
  %v541 = vadd.f32 %v388, %v540
  %542 = vmatmul.bf16.gmra.mxu0 %v149
  %v543 = vpop.f32.mrf.mxu0
  %v544 = vadd.f32 %v391, %v543
  %v545 = vpop.f32.mrf.mxu0
  %v546 = vadd.f32 %v393, %v545
  %547 = vmatmul.bf16.gmra.mxu0 %v150
  %v548 = vpop.f32.mrf.mxu0
  %v549 = vadd.f32 %v396, %v548
  %v550 = vpop.f32.mrf.mxu0
  %v551 = vadd.f32 %v398, %v550
  %552 = vmatmul.bf16.gmra.mxu0 %v151
  %v553 = vpop.f32.mrf.mxu0
  %v554 = vadd.f32 %v401, %v553
  %v555 = vpop.f32.mrf.mxu0
  %v556 = vadd.f32 %v403, %v555
  %557 = vmatmul.bf16.gmra.mxu0 %v152
  %v558 = vpop.f32.mrf.mxu0
  %v559 = vadd.f32 %v406, %v558
  %v560 = vpop.f32.mrf.mxu0
  %v561 = vadd.f32 %v408, %v560
  %562 = vmatmul.bf16.gmra.mxu0 %v153
  %v563 = vpop.f32.mrf.mxu0
  %v564 = vadd.f32 %v411, %v563
  %v565 = vpop.f32.mrf.mxu0
  %v566 = vadd.f32 %v413, %v565
  %567 = vmatmul.bf16.gmra.mxu0 %v154
  %v568 = vpop.f32.mrf.mxu0
  %v569 = vadd.f32 %v416, %v568
  %v570 = vpop.f32.mrf.mxu0
  %v571 = vadd.f32 %v418, %v570
  %572 = vmatmul.bf16.gmra.mxu0 %v155
  %v573 = vpop.f32.mrf.mxu0
  %v574 = vadd.f32 %v421, %v573
  %v575 = vpop.f32.mrf.mxu0
  %v576 = vadd.f32 %v423, %v575
  %577 = vmatmul.bf16.gmra.mxu0 %v156
  %v578 = vpop.f32.mrf.mxu0
  %v579 = vadd.f32 %v426, %v578
  %v580 = vpop.f32.mrf.mxu0
  %v581 = vadd.f32 %v428, %v580
  %582 = vmatmul.bf16.gmra.mxu0 %v157
  %v583 = vpop.f32.mrf.mxu0
  %v584 = vadd.f32 %v431, %v583
  %v585 = vpop.f32.mrf.mxu0
  %v586 = vadd.f32 %v433, %v585
  %587 = vmatmul.bf16.gmra.mxu0 %v158
  %v588 = vpop.f32.mrf.mxu0
  %v589 = vadd.f32 %v436, %v588
  %v590 = vpop.f32.mrf.mxu0
  %v591 = vadd.f32 %v438, %v590
  %592 = vdwg.mxu0
  %v593 = vld [vmem:[%s0] sm:$0xe]
  %v594 = vld [vmem:[%s0 + $0x4] sm:$0xf]
  %v595 = vld [vmem:[%s0 + $0x8] sm:$0xf]
  %v596 = vld [vmem:[%s0 + $0xc] sm:$0xf]
  %v597 = vld [vmem:[%s0 + $0x10] sm:$0xf]
  %v598 = vld [vmem:[%s0 + $0x14] sm:$0xf]
  %v599 = vld [vmem:[%s0 + $0x18] sm:$0xf]
  %v600 = vld [vmem:[%s0 + $0x1c] sm:$0xf]
  %v601 = vld [vmem:[%s0 + $0x20] sm:$0xf]
  %v602 = vld [vmem:[%s0 + $0x24] sm:$0xf]
  %v603 = vld [vmem:[%s0 + $0x28] sm:$0xf]
  %v604 = vld [vmem:[%s0 + $0x2c] sm:$0xf]
  %v605 = vld [vmem:[%s0 + $0x30] sm:$0xf]
  %v606 = vld [vmem:[%s0 + $0x34] sm:$0xf]
  %v607 = vld [vmem:[%s0 + $0x38] sm:$0xf]
  %v608 = vld [vmem:[%s0 + $0x3c] sm:$0xf]
  %v609 = vld [vmem:[%s0 + $0x40] sm:$0xf]
  %v610 = vld [vmem:[%s0 + $0x44] sm:$0xf]
  %v611 = vld [vmem:[%s0 + $0x48] sm:$0xf]
  %v612 = vld [vmem:[%s0 + $0x4c] sm:$0xf]
  %v613 = vld [vmem:[%s0 + $0x50] sm:$0xf]
  %v614 = vld [vmem:[%s0 + $0x54] sm:$0xf]
  %v615 = vld [vmem:[%s0 + $0x58] sm:$0xf]
  %v616 = vld [vmem:[%s0 + $0x5c] sm:$0xf]
  %v617 = vld [vmem:[%s0 + $0x60] sm:$0xf]
  %v618 = vld [vmem:[%s0 + $0x64] sm:$0xf]
  %v619 = vld [vmem:[%s0 + $0x68] sm:$0xf]
  %v620 = vld [vmem:[%s0 + $0x6c] sm:$0xf]
  %v621 = vld [vmem:[%s0 + $0x70] sm:$0xf]
  %v622 = vld [vmem:[%s0 + $0x74] sm:$0xf]
  %v623 = vld [vmem:[%s0 + $0x78] sm:$0xf]
  %v624 = vld [vmem:[%s0 + $0x7c] sm:$0xf]
  %v625 = vld [vmem:[%s0 + $0x80] sm:$0x1]
  %s626 = scalar_lea.vmem %s1, 128
  %v627 = vld [vmem:[%s626] sm:$0xf]
  %v628 = vld [vmem:[%s626 + $0x4] sm:$0xf]
  %v629 = vld [vmem:[%s626 + $0x8] sm:$0xf]
  %v630 = vld [vmem:[%s626 + $0xc] sm:$0xf]
  %v631 = vld [vmem:[%s626 + $0x10] sm:$0xf]
  %v632 = vld [vmem:[%s626 + $0x14] sm:$0xf]
  %v633 = vld [vmem:[%s626 + $0x18] sm:$0xf]
  %v634 = vld [vmem:[%s626 + $0x1c] sm:$0xf]
  %v635 = vld [vmem:[%s626 + $0x20] sm:$0xf]
  %v636 = vld [vmem:[%s626 + $0x24] sm:$0xf]
  %v637 = vld [vmem:[%s626 + $0x28] sm:$0xf]
  %v638 = vld [vmem:[%s626 + $0x2c] sm:$0xf]
  %v639 = vld [vmem:[%s626 + $0x30] sm:$0xf]
  %v640 = vld [vmem:[%s626 + $0x34] sm:$0xf]
  %v641 = vld [vmem:[%s626 + $0x38] sm:$0xf]
  %v642 = vld [vmem:[%s626 + $0x3c] sm:$0xf]
  %v676 = vunpack.c.l.b16 %v593
  %v677 = vunpack.c.l.b16 %v594
  %v678 = vunpack.c.l.b16 %v595
  %v679 = vunpack.c.l.b16 %v596
  %v680 = vunpack.c.l.b16 %v597
  %v681 = vunpack.c.l.b16 %v598
  %v682 = vunpack.c.l.b16 %v599
  %v683 = vunpack.c.l.b16 %v600
  %v684 = vunpack.c.l.b16 %v601
  %v685 = vunpack.c.l.b16 %v602
  %v686 = vunpack.c.l.b16 %v603
  %v687 = vunpack.c.l.b16 %v604
  %v688 = vunpack.c.l.b16 %v605
  %v689 = vunpack.c.l.b16 %v606
  %v690 = vunpack.c.l.b16 %v607
  %v691 = vunpack.c.l.b16 %v608
  %v692 = vunpack.c.l.b16 %v609
  %v693 = vunpack.c.l.b16 %v610
  %v694 = vunpack.c.l.b16 %v611
  %v695 = vunpack.c.l.b16 %v612
  %v696 = vunpack.c.l.b16 %v613
  %v697 = vunpack.c.l.b16 %v614
  %v698 = vunpack.c.l.b16 %v615
  %v699 = vunpack.c.l.b16 %v616
  %v700 = vunpack.c.l.b16 %v617
  %v701 = vunpack.c.l.b16 %v618
  %v702 = vunpack.c.l.b16 %v619
  %v703 = vunpack.c.l.b16 %v620
  %v704 = vunpack.c.l.b16 %v621
  %v705 = vunpack.c.l.b16 %v622
  %v706 = vunpack.c.l.b16 %v623
  %v707 = vunpack.c.l.b16 %v624
  %v708 = vunpack.c.l.b16 %v625
  %v709 = vpack.c.b16 %v677, %v676
  %v710 = vpack.c.b16 %v679, %v678
  %v711 = vpack.c.b16 %v681, %v680
  %v712 = vpack.c.b16 %v683, %v682
  %v713 = vpack.c.b16 %v685, %v684
  %v714 = vpack.c.b16 %v687, %v686
  %v715 = vpack.c.b16 %v689, %v688
  %v716 = vpack.c.b16 %v691, %v690
  %v717 = vpack.c.b16 %v693, %v692
  %v718 = vpack.c.b16 %v695, %v694
  %v719 = vpack.c.b16 %v697, %v696
  %v720 = vpack.c.b16 %v699, %v698
  %v721 = vpack.c.b16 %v701, %v700
  %v722 = vpack.c.b16 %v703, %v702
  %v723 = vpack.c.b16 %v705, %v704
  %v724 = vpack.c.b16 %v707, %v706
  %v725 = vpack.c.b16 %v708, %v708
  %vm726 = vcmask 1046528
  %v727 = vrot.slane %v709, 1
  %v728 = vrot.slane %v710, 1
  %v729 = vsel %vm726, %v727, %v728
  %v730 = vrot.slane %v711, 1
  %v731 = vsel %vm726, %v728, %v730
  %v732 = vrot.slane %v712, 1
  %v733 = vsel %vm726, %v730, %v732
  %v734 = vrot.slane %v713, 1
  %v735 = vsel %vm726, %v732, %v734
  %v736 = vrot.slane %v714, 1
  %v737 = vsel %vm726, %v734, %v736
  %v738 = vrot.slane %v715, 1
  %v739 = vsel %vm726, %v736, %v738
  %v740 = vrot.slane %v716, 1
  %v741 = vsel %vm726, %v738, %v740
  %v742 = vrot.slane %v717, 1
  %v743 = vsel %vm726, %v740, %v742
  %v744 = vrot.slane %v718, 1
  %v745 = vsel %vm726, %v742, %v744
  %v746 = vrot.slane %v719, 1
  %v747 = vsel %vm726, %v744, %v746
  %v748 = vrot.slane %v720, 1
  %v749 = vsel %vm726, %v746, %v748
  %v750 = vrot.slane %v721, 1
  %v751 = vsel %vm726, %v748, %v750
  %v752 = vrot.slane %v722, 1
  %v753 = vsel %vm726, %v750, %v752
  %v754 = vrot.slane %v723, 1
  %v755 = vsel %vm726, %v752, %v754
  %v756 = vrot.slane %v724, 1
  %v757 = vsel %vm726, %v754, %v756
  %v758 = vrot.slane %v725, 1
  %v759 = vsel %vm726, %v756, %v758
  %v792 = vunpack.c.l.b16 %v627
  %v793 = vunpack.c.l.b16 %v628
  %v794 = vunpack.c.l.b16 %v629
  %v795 = vunpack.c.l.b16 %v630
  %v796 = vunpack.c.l.b16 %v631
  %v797 = vunpack.c.l.b16 %v632
  %v798 = vunpack.c.l.b16 %v633
  %v799 = vunpack.c.l.b16 %v634
  %v800 = vunpack.c.l.b16 %v635
  %v801 = vunpack.c.l.b16 %v636
  %v802 = vunpack.c.l.b16 %v637
  %v803 = vunpack.c.l.b16 %v638
  %v804 = vunpack.c.l.b16 %v639
  %v805 = vunpack.c.l.b16 %v640
  %v806 = vunpack.c.l.b16 %v641
  %v807 = vunpack.c.l.b16 %v642
  %v808 = vpack.c.b16 %v793, %v792
  %v809 = vpack.c.b16 %v795, %v794
  %v810 = vpack.c.b16 %v797, %v796
  %v811 = vpack.c.b16 %v799, %v798
  %v812 = vpack.c.b16 %v801, %v800
  %v813 = vpack.c.b16 %v803, %v802
  %v814 = vpack.c.b16 %v805, %v804
  %v815 = vpack.c.b16 %v807, %v806
  %824 = vmatpush.bf16.msra.mxu0 %v815
  %825 = vmatpush.bf16.msra.mxu0 %v814
  %826 = vmatpush.bf16.msra.mxu0 %v813
  %827 = vmatpush.bf16.msra.mxu0 %v812
  %828 = vmatpush.bf16.msra.mxu0 %v811
  %829 = vmatpush.bf16.msra.mxu0 %v810
  %830 = vmatpush.bf16.msra.mxu0 %v809
  %831 = vmatpush.bf16.msra.mxu0 %v808
  %832 = vmatmul.bf16.gmra.mxu0 %v729
  %v833 = vpop.f32.mrf.mxu0
  %v834 = vadd.f32 0.0, %v833
  %v835 = vpop.f32.mrf.mxu0
  %v836 = vadd.f32 0.0, %v835
  %837 = vmatmul.bf16.gmra.mxu0 %v731
  %v838 = vpop.f32.mrf.mxu0
  %v839 = vadd.f32 0.0, %v838
  %v840 = vpop.f32.mrf.mxu0
  %v841 = vadd.f32 0.0, %v840
  %842 = vmatmul.bf16.gmra.mxu0 %v733
  %v843 = vpop.f32.mrf.mxu0
  %v844 = vadd.f32 0.0, %v843
  %v845 = vpop.f32.mrf.mxu0
  %v846 = vadd.f32 0.0, %v845
  %847 = vmatmul.bf16.gmra.mxu0 %v735
  %v848 = vpop.f32.mrf.mxu0
  %v849 = vadd.f32 0.0, %v848
  %v850 = vpop.f32.mrf.mxu0
  %v851 = vadd.f32 0.0, %v850
  %852 = vmatmul.bf16.gmra.mxu0 %v737
  %v853 = vpop.f32.mrf.mxu0
  %v854 = vadd.f32 0.0, %v853
  %v855 = vpop.f32.mrf.mxu0
  %v856 = vadd.f32 0.0, %v855
  %857 = vmatmul.bf16.gmra.mxu0 %v739
  %v858 = vpop.f32.mrf.mxu0
  %v859 = vadd.f32 0.0, %v858
  %v860 = vpop.f32.mrf.mxu0
  %v861 = vadd.f32 0.0, %v860
  %862 = vmatmul.bf16.gmra.mxu0 %v741
  %v863 = vpop.f32.mrf.mxu0
  %v864 = vadd.f32 0.0, %v863
  %v865 = vpop.f32.mrf.mxu0
  %v866 = vadd.f32 0.0, %v865
  %867 = vmatmul.bf16.gmra.mxu0 %v743
  %v868 = vpop.f32.mrf.mxu0
  %v869 = vadd.f32 0.0, %v868
  %v870 = vpop.f32.mrf.mxu0
  %v871 = vadd.f32 0.0, %v870
  %872 = vmatmul.bf16.gmra.mxu0 %v745
  %v873 = vpop.f32.mrf.mxu0
  %v874 = vadd.f32 0.0, %v873
  %v875 = vpop.f32.mrf.mxu0
  %v876 = vadd.f32 0.0, %v875
  %877 = vmatmul.bf16.gmra.mxu0 %v747
  %v878 = vpop.f32.mrf.mxu0
  %v879 = vadd.f32 0.0, %v878
  %v880 = vpop.f32.mrf.mxu0
  %v881 = vadd.f32 0.0, %v880
  %882 = vmatmul.bf16.gmra.mxu0 %v749
  %v883 = vpop.f32.mrf.mxu0
  %v884 = vadd.f32 0.0, %v883
  %v885 = vpop.f32.mrf.mxu0
  %v886 = vadd.f32 0.0, %v885
  %887 = vmatmul.bf16.gmra.mxu0 %v751
  %v888 = vpop.f32.mrf.mxu0
  %v889 = vadd.f32 0.0, %v888
  %v890 = vpop.f32.mrf.mxu0
  %v891 = vadd.f32 0.0, %v890
  %892 = vmatmul.bf16.gmra.mxu0 %v753
  %v893 = vpop.f32.mrf.mxu0
  %v894 = vadd.f32 0.0, %v893
  %v895 = vpop.f32.mrf.mxu0
  %v896 = vadd.f32 0.0, %v895
  %897 = vmatmul.bf16.gmra.mxu0 %v755
  %v898 = vpop.f32.mrf.mxu0
  %v899 = vadd.f32 0.0, %v898
  %v900 = vpop.f32.mrf.mxu0
  %v901 = vadd.f32 0.0, %v900
  %902 = vmatmul.bf16.gmra.mxu0 %v757
  %v903 = vpop.f32.mrf.mxu0
  %v904 = vadd.f32 0.0, %v903
  %v905 = vpop.f32.mrf.mxu0
  %v906 = vadd.f32 0.0, %v905
  %907 = vmatmul.bf16.gmra.mxu0 %v759
  %v908 = vpop.f32.mrf.mxu0
  %v909 = vadd.f32 0.0, %v908
  %v910 = vpop.f32.mrf.mxu0
  %v911 = vadd.f32 0.0, %v910
  %912 = vdwg.mxu0
  %v913 = vadd.f32 %v514, %v834
  %v914 = vadd.f32 %v516, %v836
  %v915 = vadd.f32 %v519, %v839
  %v916 = vadd.f32 %v521, %v841
  %v917 = vadd.f32 %v524, %v844
  %v918 = vadd.f32 %v526, %v846
  %v919 = vadd.f32 %v529, %v849
  %v920 = vadd.f32 %v531, %v851
  %v921 = vadd.f32 %v534, %v854
  %v922 = vadd.f32 %v536, %v856
  %v923 = vadd.f32 %v539, %v859
  %v924 = vadd.f32 %v541, %v861
  %v925 = vadd.f32 %v544, %v864
  %v926 = vadd.f32 %v546, %v866
  %v927 = vadd.f32 %v549, %v869
  %v928 = vadd.f32 %v551, %v871
  %v929 = vadd.f32 %v554, %v874
  %v930 = vadd.f32 %v556, %v876
  %v931 = vadd.f32 %v559, %v879
  %v932 = vadd.f32 %v561, %v881
  %v933 = vadd.f32 %v564, %v884
  %v934 = vadd.f32 %v566, %v886
  %v935 = vadd.f32 %v569, %v889
  %v936 = vadd.f32 %v571, %v891
  %v937 = vadd.f32 %v574, %v894
  %v938 = vadd.f32 %v576, %v896
  %v939 = vadd.f32 %v579, %v899
  %v940 = vadd.f32 %v581, %v901
  %v941 = vadd.f32 %v584, %v904
  %v942 = vadd.f32 %v586, %v906
  %v943 = vadd.f32 %v589, %v909
  %v944 = vadd.f32 %v591, %v911
  %v945 = vld [vmem:[%s0 + $0x8] sm:$0xf]
  %v946 = vld [vmem:[%s0 + $0xc] sm:$0xf]
  %v947 = vld [vmem:[%s0 + $0x10] sm:$0xf]
  %v948 = vld [vmem:[%s0 + $0x14] sm:$0xf]
  %v949 = vld [vmem:[%s0 + $0x18] sm:$0xf]
  %v950 = vld [vmem:[%s0 + $0x1c] sm:$0xf]
  %v951 = vld [vmem:[%s0 + $0x20] sm:$0xf]
  %v952 = vld [vmem:[%s0 + $0x24] sm:$0xf]
  %v953 = vld [vmem:[%s0 + $0x28] sm:$0xf]
  %v954 = vld [vmem:[%s0 + $0x2c] sm:$0xf]
  %v955 = vld [vmem:[%s0 + $0x30] sm:$0xf]
  %v956 = vld [vmem:[%s0 + $0x34] sm:$0xf]
  %v957 = vld [vmem:[%s0 + $0x38] sm:$0xf]
  %v958 = vld [vmem:[%s0 + $0x3c] sm:$0xf]
  %v959 = vld [vmem:[%s0 + $0x40] sm:$0xf]
  %v960 = vld [vmem:[%s0 + $0x44] sm:$0xf]
  %v961 = vld [vmem:[%s0 + $0x48] sm:$0xf]
  %v962 = vld [vmem:[%s0 + $0x4c] sm:$0xf]
  %v963 = vld [vmem:[%s0 + $0x50] sm:$0xf]
  %v964 = vld [vmem:[%s0 + $0x54] sm:$0xf]
  %v965 = vld [vmem:[%s0 + $0x58] sm:$0xf]
  %v966 = vld [vmem:[%s0 + $0x5c] sm:$0xf]
  %v967 = vld [vmem:[%s0 + $0x60] sm:$0xf]
  %v968 = vld [vmem:[%s0 + $0x64] sm:$0xf]
  %v969 = vld [vmem:[%s0 + $0x68] sm:$0xf]
  %v970 = vld [vmem:[%s0 + $0x6c] sm:$0xf]
  %v971 = vld [vmem:[%s0 + $0x70] sm:$0xf]
  %v972 = vld [vmem:[%s0 + $0x74] sm:$0xf]
  %v973 = vld [vmem:[%s0 + $0x78] sm:$0xf]
  %v974 = vld [vmem:[%s0 + $0x7c] sm:$0xf]
  %v975 = vld [vmem:[%s0 + $0x80] sm:$0xf]
  %v976 = vld [vmem:[%s0 + $0x84] sm:$0xf]
  %s977 = scalar_lea.vmem %s1, 192
  %v978 = vld [vmem:[%s977] sm:$0xf]
  %v979 = vld [vmem:[%s977 + $0x4] sm:$0xf]
  %v980 = vld [vmem:[%s977 + $0x8] sm:$0xf]
  %v981 = vld [vmem:[%s977 + $0xc] sm:$0xf]
  %v982 = vld [vmem:[%s977 + $0x10] sm:$0xf]
  %v983 = vld [vmem:[%s977 + $0x14] sm:$0xf]
  %v984 = vld [vmem:[%s977 + $0x18] sm:$0xf]
  %v985 = vld [vmem:[%s977 + $0x1c] sm:$0xf]
  %v986 = vld [vmem:[%s977 + $0x20] sm:$0xf]
  %v987 = vld [vmem:[%s977 + $0x24] sm:$0xf]
  %v988 = vld [vmem:[%s977 + $0x28] sm:$0xf]
  %v989 = vld [vmem:[%s977 + $0x2c] sm:$0xf]
  %v990 = vld [vmem:[%s977 + $0x30] sm:$0xf]
  %v991 = vld [vmem:[%s977 + $0x34] sm:$0xf]
  %v992 = vld [vmem:[%s977 + $0x38] sm:$0xf]
  %v993 = vld [vmem:[%s977 + $0x3c] sm:$0xf]
  %v1026 = vunpack.c.l.b16 %v945
  %v1027 = vunpack.c.l.b16 %v946
  %v1028 = vunpack.c.l.b16 %v947
  %v1029 = vunpack.c.l.b16 %v948
  %v1030 = vunpack.c.l.b16 %v949
  %v1031 = vunpack.c.l.b16 %v950
  %v1032 = vunpack.c.l.b16 %v951
  %v1033 = vunpack.c.l.b16 %v952
  %v1034 = vunpack.c.l.b16 %v953
  %v1035 = vunpack.c.l.b16 %v954
  %v1036 = vunpack.c.l.b16 %v955
  %v1037 = vunpack.c.l.b16 %v956
  %v1038 = vunpack.c.l.b16 %v957
  %v1039 = vunpack.c.l.b16 %v958
  %v1040 = vunpack.c.l.b16 %v959
  %v1041 = vunpack.c.l.b16 %v960
  %v1042 = vunpack.c.l.b16 %v961
  %v1043 = vunpack.c.l.b16 %v962
  %v1044 = vunpack.c.l.b16 %v963
  %v1045 = vunpack.c.l.b16 %v964
  %v1046 = vunpack.c.l.b16 %v965
  %v1047 = vunpack.c.l.b16 %v966
  %v1048 = vunpack.c.l.b16 %v967
  %v1049 = vunpack.c.l.b16 %v968
  %v1050 = vunpack.c.l.b16 %v969
  %v1051 = vunpack.c.l.b16 %v970
  %v1052 = vunpack.c.l.b16 %v971
  %v1053 = vunpack.c.l.b16 %v972
  %v1054 = vunpack.c.l.b16 %v973
  %v1055 = vunpack.c.l.b16 %v974
  %v1056 = vunpack.c.l.b16 %v975
  %v1057 = vunpack.c.l.b16 %v976
  %v1058 = vpack.c.b16 %v1027, %v1026
  %v1059 = vpack.c.b16 %v1029, %v1028
  %v1060 = vpack.c.b16 %v1031, %v1030
  %v1061 = vpack.c.b16 %v1033, %v1032
  %v1062 = vpack.c.b16 %v1035, %v1034
  %v1063 = vpack.c.b16 %v1037, %v1036
  %v1064 = vpack.c.b16 %v1039, %v1038
  %v1065 = vpack.c.b16 %v1041, %v1040
  %v1066 = vpack.c.b16 %v1043, %v1042
  %v1067 = vpack.c.b16 %v1045, %v1044
  %v1068 = vpack.c.b16 %v1047, %v1046
  %v1069 = vpack.c.b16 %v1049, %v1048
  %v1070 = vpack.c.b16 %v1051, %v1050
  %v1071 = vpack.c.b16 %v1053, %v1052
  %v1072 = vpack.c.b16 %v1055, %v1054
  %v1073 = vpack.c.b16 %v1057, %v1056
  %v1075 = vshrl.u32 %v1058, 16
  %v1077 = vshll.u32 %v1058, 16
  %v1079 = vrot.slane %v1077, 1
  %v1080 = vor.u32 %v1075, %v1079
  %v1082 = vshll.u32 %v1059, 16
  %v1084 = vrot.slane %v1082, 1
  %v1085 = vsel %vm159, %v1080, %v1084
  %v1086 = vshrl.u32 %v1059, 16
  %v1088 = vor.u32 %v1086, %v1084
  %v1090 = vshll.u32 %v1060, 16
  %v1092 = vrot.slane %v1090, 1
  %v1093 = vsel %vm159, %v1088, %v1092
  %v1094 = vshrl.u32 %v1060, 16
  %v1096 = vor.u32 %v1094, %v1092
  %v1098 = vshll.u32 %v1061, 16
  %v1100 = vrot.slane %v1098, 1
  %v1101 = vsel %vm159, %v1096, %v1100
  %v1102 = vshrl.u32 %v1061, 16
  %v1104 = vor.u32 %v1102, %v1100
  %v1106 = vshll.u32 %v1062, 16
  %v1108 = vrot.slane %v1106, 1
  %v1109 = vsel %vm159, %v1104, %v1108
  %v1110 = vshrl.u32 %v1062, 16
  %v1112 = vor.u32 %v1110, %v1108
  %v1114 = vshll.u32 %v1063, 16
  %v1116 = vrot.slane %v1114, 1
  %v1117 = vsel %vm159, %v1112, %v1116
  %v1118 = vshrl.u32 %v1063, 16
  %v1120 = vor.u32 %v1118, %v1116
  %v1122 = vshll.u32 %v1064, 16
  %v1124 = vrot.slane %v1122, 1
  %v1125 = vsel %vm159, %v1120, %v1124
  %v1126 = vshrl.u32 %v1064, 16
  %v1128 = vor.u32 %v1126, %v1124
  %v1130 = vshll.u32 %v1065, 16
  %v1132 = vrot.slane %v1130, 1
  %v1133 = vsel %vm159, %v1128, %v1132
  %v1134 = vshrl.u32 %v1065, 16
  %v1136 = vor.u32 %v1134, %v1132
  %v1138 = vshll.u32 %v1066, 16
  %v1140 = vrot.slane %v1138, 1
  %v1141 = vsel %vm159, %v1136, %v1140
  %v1142 = vshrl.u32 %v1066, 16
  %v1144 = vor.u32 %v1142, %v1140
  %v1146 = vshll.u32 %v1067, 16
  %v1148 = vrot.slane %v1146, 1
  %v1149 = vsel %vm159, %v1144, %v1148
  %v1150 = vshrl.u32 %v1067, 16
  %v1152 = vor.u32 %v1150, %v1148
  %v1154 = vshll.u32 %v1068, 16
  %v1156 = vrot.slane %v1154, 1
  %v1157 = vsel %vm159, %v1152, %v1156
  %v1158 = vshrl.u32 %v1068, 16
  %v1160 = vor.u32 %v1158, %v1156
  %v1162 = vshll.u32 %v1069, 16
  %v1164 = vrot.slane %v1162, 1
  %v1165 = vsel %vm159, %v1160, %v1164
  %v1166 = vshrl.u32 %v1069, 16
  %v1168 = vor.u32 %v1166, %v1164
  %v1170 = vshll.u32 %v1070, 16
  %v1172 = vrot.slane %v1170, 1
  %v1173 = vsel %vm159, %v1168, %v1172
  %v1174 = vshrl.u32 %v1070, 16
  %v1176 = vor.u32 %v1174, %v1172
  %v1178 = vshll.u32 %v1071, 16
  %v1180 = vrot.slane %v1178, 1
  %v1181 = vsel %vm159, %v1176, %v1180
  %v1182 = vshrl.u32 %v1071, 16
  %v1184 = vor.u32 %v1182, %v1180
  %v1186 = vshll.u32 %v1072, 16
  %v1188 = vrot.slane %v1186, 1
  %v1189 = vsel %vm159, %v1184, %v1188
  %v1190 = vshrl.u32 %v1072, 16
  %v1192 = vor.u32 %v1190, %v1188
  %v1194 = vshll.u32 %v1073, 16
  %v1196 = vrot.slane %v1194, 1
  %v1197 = vsel %vm159, %v1192, %v1196
  %v1198 = vshrl.u32 %v1073, 16
  %v1200 = vor.u32 %v1198, %v1196
  %v1233 = vunpack.c.l.b16 %v978
  %v1234 = vunpack.c.l.b16 %v979
  %v1235 = vunpack.c.l.b16 %v980
  %v1236 = vunpack.c.l.b16 %v981
  %v1237 = vunpack.c.l.b16 %v982
  %v1238 = vunpack.c.l.b16 %v983
  %v1239 = vunpack.c.l.b16 %v984
  %v1240 = vunpack.c.l.b16 %v985
  %v1241 = vunpack.c.l.b16 %v986
  %v1242 = vunpack.c.l.b16 %v987
  %v1243 = vunpack.c.l.b16 %v988
  %v1244 = vunpack.c.l.b16 %v989
  %v1245 = vunpack.c.l.b16 %v990
  %v1246 = vunpack.c.l.b16 %v991
  %v1247 = vunpack.c.l.b16 %v992
  %v1248 = vunpack.c.l.b16 %v993
  %v1249 = vpack.c.b16 %v1234, %v1233
  %v1250 = vpack.c.b16 %v1236, %v1235
  %v1251 = vpack.c.b16 %v1238, %v1237
  %v1252 = vpack.c.b16 %v1240, %v1239
  %v1253 = vpack.c.b16 %v1242, %v1241
  %v1254 = vpack.c.b16 %v1244, %v1243
  %v1255 = vpack.c.b16 %v1246, %v1245
  %v1256 = vpack.c.b16 %v1248, %v1247
  %1265 = vmatpush.bf16.msra.mxu0 %v1256
  %1266 = vmatpush.bf16.msra.mxu0 %v1255
  %1267 = vmatpush.bf16.msra.mxu0 %v1254
  %1268 = vmatpush.bf16.msra.mxu0 %v1253
  %1269 = vmatpush.bf16.msra.mxu0 %v1252
  %1270 = vmatpush.bf16.msra.mxu0 %v1251
  %1271 = vmatpush.bf16.msra.mxu0 %v1250
  %1272 = vmatpush.bf16.msra.mxu0 %v1249
  %1273 = vmatmul.bf16.gmra.mxu0 %v1085
  %v1274 = vpop.f32.mrf.mxu0
  %v1275 = vadd.f32 0.0, %v1274
  %v1276 = vpop.f32.mrf.mxu0
  %v1277 = vadd.f32 0.0, %v1276
  %1278 = vmatmul.bf16.gmra.mxu0 %v1093
  %v1279 = vpop.f32.mrf.mxu0
  %v1280 = vadd.f32 0.0, %v1279
  %v1281 = vpop.f32.mrf.mxu0
  %v1282 = vadd.f32 0.0, %v1281
  %1283 = vmatmul.bf16.gmra.mxu0 %v1101
  %v1284 = vpop.f32.mrf.mxu0
  %v1285 = vadd.f32 0.0, %v1284
  %v1286 = vpop.f32.mrf.mxu0
  %v1287 = vadd.f32 0.0, %v1286
  %1288 = vmatmul.bf16.gmra.mxu0 %v1109
  %v1289 = vpop.f32.mrf.mxu0
  %v1290 = vadd.f32 0.0, %v1289
  %v1291 = vpop.f32.mrf.mxu0
  %v1292 = vadd.f32 0.0, %v1291
  %1293 = vmatmul.bf16.gmra.mxu0 %v1117
  %v1294 = vpop.f32.mrf.mxu0
  %v1295 = vadd.f32 0.0, %v1294
  %v1296 = vpop.f32.mrf.mxu0
  %v1297 = vadd.f32 0.0, %v1296
  %1298 = vmatmul.bf16.gmra.mxu0 %v1125
  %v1299 = vpop.f32.mrf.mxu0
  %v1300 = vadd.f32 0.0, %v1299
  %v1301 = vpop.f32.mrf.mxu0
  %v1302 = vadd.f32 0.0, %v1301
  %1303 = vmatmul.bf16.gmra.mxu0 %v1133
  %v1304 = vpop.f32.mrf.mxu0
  %v1305 = vadd.f32 0.0, %v1304
  %v1306 = vpop.f32.mrf.mxu0
  %v1307 = vadd.f32 0.0, %v1306
  %1308 = vmatmul.bf16.gmra.mxu0 %v1141
  %v1309 = vpop.f32.mrf.mxu0
  %v1310 = vadd.f32 0.0, %v1309
  %v1311 = vpop.f32.mrf.mxu0
  %v1312 = vadd.f32 0.0, %v1311
  %1313 = vmatmul.bf16.gmra.mxu0 %v1149
  %v1314 = vpop.f32.mrf.mxu0
  %v1315 = vadd.f32 0.0, %v1314
  %v1316 = vpop.f32.mrf.mxu0
  %v1317 = vadd.f32 0.0, %v1316
  %1318 = vmatmul.bf16.gmra.mxu0 %v1157
  %v1319 = vpop.f32.mrf.mxu0
  %v1320 = vadd.f32 0.0, %v1319
  %v1321 = vpop.f32.mrf.mxu0
  %v1322 = vadd.f32 0.0, %v1321
  %1323 = vmatmul.bf16.gmra.mxu0 %v1165
  %v1324 = vpop.f32.mrf.mxu0
  %v1325 = vadd.f32 0.0, %v1324
  %v1326 = vpop.f32.mrf.mxu0
  %v1327 = vadd.f32 0.0, %v1326
  %1328 = vmatmul.bf16.gmra.mxu0 %v1173
  %v1329 = vpop.f32.mrf.mxu0
  %v1330 = vadd.f32 0.0, %v1329
  %v1331 = vpop.f32.mrf.mxu0
  %v1332 = vadd.f32 0.0, %v1331
  %1333 = vmatmul.bf16.gmra.mxu0 %v1181
  %v1334 = vpop.f32.mrf.mxu0
  %v1335 = vadd.f32 0.0, %v1334
  %v1336 = vpop.f32.mrf.mxu0
  %v1337 = vadd.f32 0.0, %v1336
  %1338 = vmatmul.bf16.gmra.mxu0 %v1189
  %v1339 = vpop.f32.mrf.mxu0
  %v1340 = vadd.f32 0.0, %v1339
  %v1341 = vpop.f32.mrf.mxu0
  %v1342 = vadd.f32 0.0, %v1341
  %1343 = vmatmul.bf16.gmra.mxu0 %v1197
  %v1344 = vpop.f32.mrf.mxu0
  %v1345 = vadd.f32 0.0, %v1344
  %v1346 = vpop.f32.mrf.mxu0
  %v1347 = vadd.f32 0.0, %v1346
  %1348 = vmatmul.bf16.gmra.mxu0 %v1200
  %v1349 = vpop.f32.mrf.mxu0
  %v1350 = vadd.f32 0.0, %v1349
  %v1351 = vpop.f32.mrf.mxu0
  %v1352 = vadd.f32 0.0, %v1351
  %1353 = vdwg.mxu0
  %v1354 = vadd.f32 %v913, %v1275
  %v1355 = vadd.f32 %v914, %v1277
  %v1356 = vadd.f32 %v915, %v1280
  %v1357 = vadd.f32 %v916, %v1282
  %v1358 = vadd.f32 %v917, %v1285
  %v1359 = vadd.f32 %v918, %v1287
  %v1360 = vadd.f32 %v919, %v1290
  %v1361 = vadd.f32 %v920, %v1292
  %v1362 = vadd.f32 %v921, %v1295
  %v1363 = vadd.f32 %v922, %v1297
  %v1364 = vadd.f32 %v923, %v1300
  %v1365 = vadd.f32 %v924, %v1302
  %v1366 = vadd.f32 %v925, %v1305
  %v1367 = vadd.f32 %v926, %v1307
  %v1368 = vadd.f32 %v927, %v1310
  %v1369 = vadd.f32 %v928, %v1312
  %v1370 = vadd.f32 %v929, %v1315
  %v1371 = vadd.f32 %v930, %v1317
  %v1372 = vadd.f32 %v931, %v1320
  %v1373 = vadd.f32 %v932, %v1322
  %v1374 = vadd.f32 %v933, %v1325
  %v1375 = vadd.f32 %v934, %v1327
  %v1376 = vadd.f32 %v935, %v1330
  %v1377 = vadd.f32 %v936, %v1332
  %v1378 = vadd.f32 %v937, %v1335
  %v1379 = vadd.f32 %v938, %v1337
  %v1380 = vadd.f32 %v939, %v1340
  %v1381 = vadd.f32 %v940, %v1342
  %v1382 = vadd.f32 %v941, %v1345
  %v1383 = vadd.f32 %v942, %v1347
  %v1384 = vadd.f32 %v943, %v1350
  %v1385 = vadd.f32 %v944, %v1352
  %v1386 = vld [vmem:[%s0 + $0x8] sm:$0xe]
  %v1387 = vld [vmem:[%s0 + $0xc] sm:$0xf]
  %v1388 = vld [vmem:[%s0 + $0x10] sm:$0xf]
  %v1389 = vld [vmem:[%s0 + $0x14] sm:$0xf]
  %v1390 = vld [vmem:[%s0 + $0x18] sm:$0xf]
  %v1391 = vld [vmem:[%s0 + $0x1c] sm:$0xf]
  %v1392 = vld [vmem:[%s0 + $0x20] sm:$0xf]
  %v1393 = vld [vmem:[%s0 + $0x24] sm:$0xf]
  %v1394 = vld [vmem:[%s0 + $0x28] sm:$0xf]
  %v1395 = vld [vmem:[%s0 + $0x2c] sm:$0xf]
  %v1396 = vld [vmem:[%s0 + $0x30] sm:$0xf]
  %v1397 = vld [vmem:[%s0 + $0x34] sm:$0xf]
  %v1398 = vld [vmem:[%s0 + $0x38] sm:$0xf]
  %v1399 = vld [vmem:[%s0 + $0x3c] sm:$0xf]
  %v1400 = vld [vmem:[%s0 + $0x40] sm:$0xf]
  %v1401 = vld [vmem:[%s0 + $0x44] sm:$0xf]
  %v1402 = vld [vmem:[%s0 + $0x48] sm:$0xf]
  %v1403 = vld [vmem:[%s0 + $0x4c] sm:$0xf]
  %v1404 = vld [vmem:[%s0 + $0x50] sm:$0xf]
  %v1405 = vld [vmem:[%s0 + $0x54] sm:$0xf]
  %v1406 = vld [vmem:[%s0 + $0x58] sm:$0xf]
  %v1407 = vld [vmem:[%s0 + $0x5c] sm:$0xf]
  %v1408 = vld [vmem:[%s0 + $0x60] sm:$0xf]
  %v1409 = vld [vmem:[%s0 + $0x64] sm:$0xf]
  %v1410 = vld [vmem:[%s0 + $0x68] sm:$0xf]
  %v1411 = vld [vmem:[%s0 + $0x6c] sm:$0xf]
  %v1412 = vld [vmem:[%s0 + $0x70] sm:$0xf]
  %v1413 = vld [vmem:[%s0 + $0x74] sm:$0xf]
  %v1414 = vld [vmem:[%s0 + $0x78] sm:$0xf]
  %v1415 = vld [vmem:[%s0 + $0x7c] sm:$0xf]
  %v1416 = vld [vmem:[%s0 + $0x80] sm:$0xf]
  %v1417 = vld [vmem:[%s0 + $0x84] sm:$0xf]
  %v1418 = vld [vmem:[%s0 + $0x88] sm:$0x1]
  %s1419 = scalar_lea.vmem %s1, 256
  %v1420 = vld [vmem:[%s1419] sm:$0xf]
  %v1421 = vld [vmem:[%s1419 + $0x4] sm:$0xf]
  %v1422 = vld [vmem:[%s1419 + $0x8] sm:$0xf]
  %v1423 = vld [vmem:[%s1419 + $0xc] sm:$0xf]
  %v1424 = vld [vmem:[%s1419 + $0x10] sm:$0xf]
  %v1425 = vld [vmem:[%s1419 + $0x14] sm:$0xf]
  %v1426 = vld [vmem:[%s1419 + $0x18] sm:$0xf]
  %v1427 = vld [vmem:[%s1419 + $0x1c] sm:$0xf]
  %v1428 = vld [vmem:[%s1419 + $0x20] sm:$0xf]
  %v1429 = vld [vmem:[%s1419 + $0x24] sm:$0xf]
  %v1430 = vld [vmem:[%s1419 + $0x28] sm:$0xf]
  %v1431 = vld [vmem:[%s1419 + $0x2c] sm:$0xf]
  %v1432 = vld [vmem:[%s1419 + $0x30] sm:$0xf]
  %v1433 = vld [vmem:[%s1419 + $0x34] sm:$0xf]
  %v1434 = vld [vmem:[%s1419 + $0x38] sm:$0xf]
  %v1435 = vld [vmem:[%s1419 + $0x3c] sm:$0xf]
  %v1469 = vunpack.c.l.b16 %v1386
  %v1470 = vunpack.c.l.b16 %v1387
  %v1471 = vunpack.c.l.b16 %v1388
  %v1472 = vunpack.c.l.b16 %v1389
  %v1473 = vunpack.c.l.b16 %v1390
  %v1474 = vunpack.c.l.b16 %v1391
  %v1475 = vunpack.c.l.b16 %v1392
  %v1476 = vunpack.c.l.b16 %v1393
  %v1477 = vunpack.c.l.b16 %v1394
  %v1478 = vunpack.c.l.b16 %v1395
  %v1479 = vunpack.c.l.b16 %v1396
  %v1480 = vunpack.c.l.b16 %v1397
  %v1481 = vunpack.c.l.b16 %v1398
  %v1482 = vunpack.c.l.b16 %v1399
  %v1483 = vunpack.c.l.b16 %v1400
  %v1484 = vunpack.c.l.b16 %v1401
  %v1485 = vunpack.c.l.b16 %v1402
  %v1486 = vunpack.c.l.b16 %v1403
  %v1487 = vunpack.c.l.b16 %v1404
  %v1488 = vunpack.c.l.b16 %v1405
  %v1489 = vunpack.c.l.b16 %v1406
  %v1490 = vunpack.c.l.b16 %v1407
  %v1491 = vunpack.c.l.b16 %v1408
  %v1492 = vunpack.c.l.b16 %v1409
  %v1493 = vunpack.c.l.b16 %v1410
  %v1494 = vunpack.c.l.b16 %v1411
  %v1495 = vunpack.c.l.b16 %v1412
  %v1496 = vunpack.c.l.b16 %v1413
  %v1497 = vunpack.c.l.b16 %v1414
  %v1498 = vunpack.c.l.b16 %v1415
  %v1499 = vunpack.c.l.b16 %v1416
  %v1500 = vunpack.c.l.b16 %v1417
  %v1501 = vunpack.c.l.b16 %v1418
  %v1502 = vpack.c.b16 %v1470, %v1469
  %v1503 = vpack.c.b16 %v1472, %v1471
  %v1504 = vpack.c.b16 %v1474, %v1473
  %v1505 = vpack.c.b16 %v1476, %v1475
  %v1506 = vpack.c.b16 %v1478, %v1477
  %v1507 = vpack.c.b16 %v1480, %v1479
  %v1508 = vpack.c.b16 %v1482, %v1481
  %v1509 = vpack.c.b16 %v1484, %v1483
  %v1510 = vpack.c.b16 %v1486, %v1485
  %v1511 = vpack.c.b16 %v1488, %v1487
  %v1512 = vpack.c.b16 %v1490, %v1489
  %v1513 = vpack.c.b16 %v1492, %v1491
  %v1514 = vpack.c.b16 %v1494, %v1493
  %v1515 = vpack.c.b16 %v1496, %v1495
  %v1516 = vpack.c.b16 %v1498, %v1497
  %v1517 = vpack.c.b16 %v1500, %v1499
  %v1518 = vpack.c.b16 %v1501, %v1501
  %v1519 = vrot.slane %v1502, 1
  %v1520 = vrot.slane %v1503, 1
  %v1521 = vsel %vm726, %v1519, %v1520
  %v1522 = vrot.slane %v1504, 1
  %v1523 = vsel %vm726, %v1520, %v1522
  %v1524 = vrot.slane %v1505, 1
  %v1525 = vsel %vm726, %v1522, %v1524
  %v1526 = vrot.slane %v1506, 1
  %v1527 = vsel %vm726, %v1524, %v1526
  %v1528 = vrot.slane %v1507, 1
  %v1529 = vsel %vm726, %v1526, %v1528
  %v1530 = vrot.slane %v1508, 1
  %v1531 = vsel %vm726, %v1528, %v1530
  %v1532 = vrot.slane %v1509, 1
  %v1533 = vsel %vm726, %v1530, %v1532
  %v1534 = vrot.slane %v1510, 1
  %v1535 = vsel %vm726, %v1532, %v1534
  %v1536 = vrot.slane %v1511, 1
  %v1537 = vsel %vm726, %v1534, %v1536
  %v1538 = vrot.slane %v1512, 1
  %v1539 = vsel %vm726, %v1536, %v1538
  %v1540 = vrot.slane %v1513, 1
  %v1541 = vsel %vm726, %v1538, %v1540
  %v1542 = vrot.slane %v1514, 1
  %v1543 = vsel %vm726, %v1540, %v1542
  %v1544 = vrot.slane %v1515, 1
  %v1545 = vsel %vm726, %v1542, %v1544
  %v1546 = vrot.slane %v1516, 1
  %v1547 = vsel %vm726, %v1544, %v1546
  %v1548 = vrot.slane %v1517, 1
  %v1549 = vsel %vm726, %v1546, %v1548
  %v1550 = vrot.slane %v1518, 1
  %v1551 = vsel %vm726, %v1548, %v1550
  %v1584 = vunpack.c.l.b16 %v1420
  %v1585 = vunpack.c.l.b16 %v1421
  %v1586 = vunpack.c.l.b16 %v1422
  %v1587 = vunpack.c.l.b16 %v1423
  %v1588 = vunpack.c.l.b16 %v1424
  %v1589 = vunpack.c.l.b16 %v1425
  %v1590 = vunpack.c.l.b16 %v1426
  %v1591 = vunpack.c.l.b16 %v1427
  %v1592 = vunpack.c.l.b16 %v1428
  %v1593 = vunpack.c.l.b16 %v1429
  %v1594 = vunpack.c.l.b16 %v1430
  %v1595 = vunpack.c.l.b16 %v1431
  %v1596 = vunpack.c.l.b16 %v1432
  %v1597 = vunpack.c.l.b16 %v1433
  %v1598 = vunpack.c.l.b16 %v1434
  %v1599 = vunpack.c.l.b16 %v1435
  %v1600 = vpack.c.b16 %v1585, %v1584
  %v1601 = vpack.c.b16 %v1587, %v1586
  %v1602 = vpack.c.b16 %v1589, %v1588
  %v1603 = vpack.c.b16 %v1591, %v1590
  %v1604 = vpack.c.b16 %v1593, %v1592
  %v1605 = vpack.c.b16 %v1595, %v1594
  %v1606 = vpack.c.b16 %v1597, %v1596
  %v1607 = vpack.c.b16 %v1599, %v1598
  %1616 = vmatpush.bf16.msra.mxu0 %v1607
  %1617 = vmatpush.bf16.msra.mxu0 %v1606
  %1618 = vmatpush.bf16.msra.mxu0 %v1605
  %1619 = vmatpush.bf16.msra.mxu0 %v1604
  %1620 = vmatpush.bf16.msra.mxu0 %v1603
  %1621 = vmatpush.bf16.msra.mxu0 %v1602
  %1622 = vmatpush.bf16.msra.mxu0 %v1601
  %1623 = vmatpush.bf16.msra.mxu0 %v1600
  %1624 = vmatmul.bf16.gmra.mxu0 %v1521
  %v1625 = vpop.f32.mrf.mxu0
  %v1626 = vadd.f32 0.0, %v1625
  %v1627 = vpop.f32.mrf.mxu0
  %v1628 = vadd.f32 0.0, %v1627
  %1629 = vmatmul.bf16.gmra.mxu0 %v1523
  %v1630 = vpop.f32.mrf.mxu0
  %v1631 = vadd.f32 0.0, %v1630
  %v1632 = vpop.f32.mrf.mxu0
  %v1633 = vadd.f32 0.0, %v1632
  %1634 = vmatmul.bf16.gmra.mxu0 %v1525
  %v1635 = vpop.f32.mrf.mxu0
  %v1636 = vadd.f32 0.0, %v1635
  %v1637 = vpop.f32.mrf.mxu0
  %v1638 = vadd.f32 0.0, %v1637
  %1639 = vmatmul.bf16.gmra.mxu0 %v1527
  %v1640 = vpop.f32.mrf.mxu0
  %v1641 = vadd.f32 0.0, %v1640
  %v1642 = vpop.f32.mrf.mxu0
  %v1643 = vadd.f32 0.0, %v1642
  %1644 = vmatmul.bf16.gmra.mxu0 %v1529
  %v1645 = vpop.f32.mrf.mxu0
  %v1646 = vadd.f32 0.0, %v1645
  %v1647 = vpop.f32.mrf.mxu0
  %v1648 = vadd.f32 0.0, %v1647
  %1649 = vmatmul.bf16.gmra.mxu0 %v1531
  %v1650 = vpop.f32.mrf.mxu0
  %v1651 = vadd.f32 0.0, %v1650
  %v1652 = vpop.f32.mrf.mxu0
  %v1653 = vadd.f32 0.0, %v1652
  %1654 = vmatmul.bf16.gmra.mxu0 %v1533
  %v1655 = vpop.f32.mrf.mxu0
  %v1656 = vadd.f32 0.0, %v1655
  %v1657 = vpop.f32.mrf.mxu0
  %v1658 = vadd.f32 0.0, %v1657
  %1659 = vmatmul.bf16.gmra.mxu0 %v1535
  %v1660 = vpop.f32.mrf.mxu0
  %v1661 = vadd.f32 0.0, %v1660
  %v1662 = vpop.f32.mrf.mxu0
  %v1663 = vadd.f32 0.0, %v1662
  %1664 = vmatmul.bf16.gmra.mxu0 %v1537
  %v1665 = vpop.f32.mrf.mxu0
  %v1666 = vadd.f32 0.0, %v1665
  %v1667 = vpop.f32.mrf.mxu0
  %v1668 = vadd.f32 0.0, %v1667
  %1669 = vmatmul.bf16.gmra.mxu0 %v1539
  %v1670 = vpop.f32.mrf.mxu0
  %v1671 = vadd.f32 0.0, %v1670
  %v1672 = vpop.f32.mrf.mxu0
  %v1673 = vadd.f32 0.0, %v1672
  %1674 = vmatmul.bf16.gmra.mxu0 %v1541
  %v1675 = vpop.f32.mrf.mxu0
  %v1676 = vadd.f32 0.0, %v1675
  %v1677 = vpop.f32.mrf.mxu0
  %v1678 = vadd.f32 0.0, %v1677
  %1679 = vmatmul.bf16.gmra.mxu0 %v1543
  %v1680 = vpop.f32.mrf.mxu0
  %v1681 = vadd.f32 0.0, %v1680
  %v1682 = vpop.f32.mrf.mxu0
  %v1683 = vadd.f32 0.0, %v1682
  %1684 = vmatmul.bf16.gmra.mxu0 %v1545
  %v1685 = vpop.f32.mrf.mxu0
  %v1686 = vadd.f32 0.0, %v1685
  %v1687 = vpop.f32.mrf.mxu0
  %v1688 = vadd.f32 0.0, %v1687
  %1689 = vmatmul.bf16.gmra.mxu0 %v1547
  %v1690 = vpop.f32.mrf.mxu0
  %v1691 = vadd.f32 0.0, %v1690
  %v1692 = vpop.f32.mrf.mxu0
  %v1693 = vadd.f32 0.0, %v1692
  %1694 = vmatmul.bf16.gmra.mxu0 %v1549
  %v1695 = vpop.f32.mrf.mxu0
  %v1696 = vadd.f32 0.0, %v1695
  %v1697 = vpop.f32.mrf.mxu0
  %v1698 = vadd.f32 0.0, %v1697
  %1699 = vmatmul.bf16.gmra.mxu0 %v1551
  %v1700 = vpop.f32.mrf.mxu0
  %v1701 = vadd.f32 0.0, %v1700
  %v1702 = vpop.f32.mrf.mxu0
  %v1703 = vadd.f32 0.0, %v1702
  %1704 = vdwg.mxu0
  %v1705 = vadd.f32 %v1354, %v1626
  %v1706 = vadd.f32 %v1355, %v1628
  %v1707 = vadd.f32 %v1356, %v1631
  %v1708 = vadd.f32 %v1357, %v1633
  %v1709 = vadd.f32 %v1358, %v1636
  %v1710 = vadd.f32 %v1359, %v1638
  %v1711 = vadd.f32 %v1360, %v1641
  %v1712 = vadd.f32 %v1361, %v1643
  %v1713 = vadd.f32 %v1362, %v1646
  %v1714 = vadd.f32 %v1363, %v1648
  %v1715 = vadd.f32 %v1364, %v1651
  %v1716 = vadd.f32 %v1365, %v1653
  %v1717 = vadd.f32 %v1366, %v1656
  %v1718 = vadd.f32 %v1367, %v1658
  %v1719 = vadd.f32 %v1368, %v1661
  %v1720 = vadd.f32 %v1369, %v1663
  %v1721 = vadd.f32 %v1370, %v1666
  %v1722 = vadd.f32 %v1371, %v1668
  %v1723 = vadd.f32 %v1372, %v1671
  %v1724 = vadd.f32 %v1373, %v1673
  %v1725 = vadd.f32 %v1374, %v1676
  %v1726 = vadd.f32 %v1375, %v1678
  %v1727 = vadd.f32 %v1376, %v1681
  %v1728 = vadd.f32 %v1377, %v1683
  %v1729 = vadd.f32 %v1378, %v1686
  %v1730 = vadd.f32 %v1379, %v1688
  %v1731 = vadd.f32 %v1380, %v1691
  %v1732 = vadd.f32 %v1381, %v1693
  %v1733 = vadd.f32 %v1382, %v1696
  %v1734 = vadd.f32 %v1383, %v1698
  %v1735 = vadd.f32 %v1384, %v1701
  %v1736 = vadd.f32 %v1385, %v1703
  %s1737 = scalar_lea.vmem %s1, 320
  %v1738 = vld [vmem:[%s1737] sm:$0xf]
  %v1739 = vld [vmem:[%s1737 + $0x4] sm:$0xf]
  %v1740 = vld [vmem:[%s1737 + $0x8] sm:$0xf]
  %v1741 = vld [vmem:[%s1737 + $0xc] sm:$0xf]
  %v1742 = vld [vmem:[%s1737 + $0x10] sm:$0xf]
  %v1743 = vld [vmem:[%s1737 + $0x14] sm:$0xf]
  %v1744 = vld [vmem:[%s1737 + $0x18] sm:$0xf]
  %v1745 = vld [vmem:[%s1737 + $0x1c] sm:$0xf]
  %v1746 = vld [vmem:[%s1737 + $0x20] sm:$0xf]
  %v1747 = vld [vmem:[%s1737 + $0x24] sm:$0xf]
  %v1748 = vld [vmem:[%s1737 + $0x28] sm:$0xf]
  %v1749 = vld [vmem:[%s1737 + $0x2c] sm:$0xf]
  %v1750 = vld [vmem:[%s1737 + $0x30] sm:$0xf]
  %v1751 = vld [vmem:[%s1737 + $0x34] sm:$0xf]
  %v1752 = vld [vmem:[%s1737 + $0x38] sm:$0xf]
  %v1753 = vld [vmem:[%s1737 + $0x3c] sm:$0xf]
  %vm1754 = vsmask.f32 6400
  %v1756 = vshrl.u32 %v1502, 16
  %v1758 = vrot.slane %v1756, 1
  %v1759 = vshll.u32 %v1502, 16
  %v1761 = vrot.slane %v1759, 2
  %v1762 = vor.u32 %v1758, %v1761
  %v1764 = vshrl.u32 %v1503, 16
  %v1766 = vrot.slane %v1764, 1
  %v1767 = vshll.u32 %v1503, 16
  %v1769 = vrot.slane %v1767, 2
  %v1770 = vor.u32 %v1766, %v1769
  %v1771 = vsel %vm1754, %v1762, %v1770
  %v1773 = vshrl.u32 %v1504, 16
  %v1775 = vrot.slane %v1773, 1
  %v1776 = vshll.u32 %v1504, 16
  %v1778 = vrot.slane %v1776, 2
  %v1779 = vor.u32 %v1775, %v1778
  %v1780 = vsel %vm1754, %v1770, %v1779
  %v1782 = vshrl.u32 %v1505, 16
  %v1784 = vrot.slane %v1782, 1
  %v1785 = vshll.u32 %v1505, 16
  %v1787 = vrot.slane %v1785, 2
  %v1788 = vor.u32 %v1784, %v1787
  %v1789 = vsel %vm1754, %v1779, %v1788
  %v1791 = vshrl.u32 %v1506, 16
  %v1793 = vrot.slane %v1791, 1
  %v1794 = vshll.u32 %v1506, 16
  %v1796 = vrot.slane %v1794, 2
  %v1797 = vor.u32 %v1793, %v1796
  %v1798 = vsel %vm1754, %v1788, %v1797
  %v1800 = vshrl.u32 %v1507, 16
  %v1802 = vrot.slane %v1800, 1
  %v1803 = vshll.u32 %v1507, 16
  %v1805 = vrot.slane %v1803, 2
  %v1806 = vor.u32 %v1802, %v1805
  %v1807 = vsel %vm1754, %v1797, %v1806
  %v1809 = vshrl.u32 %v1508, 16
  %v1811 = vrot.slane %v1809, 1
  %v1812 = vshll.u32 %v1508, 16
  %v1814 = vrot.slane %v1812, 2
  %v1815 = vor.u32 %v1811, %v1814
  %v1816 = vsel %vm1754, %v1806, %v1815
  %v1818 = vshrl.u32 %v1509, 16
  %v1820 = vrot.slane %v1818, 1
  %v1821 = vshll.u32 %v1509, 16
  %v1823 = vrot.slane %v1821, 2
  %v1824 = vor.u32 %v1820, %v1823
  %v1825 = vsel %vm1754, %v1815, %v1824
  %v1827 = vshrl.u32 %v1510, 16
  %v1829 = vrot.slane %v1827, 1
  %v1830 = vshll.u32 %v1510, 16
  %v1832 = vrot.slane %v1830, 2
  %v1833 = vor.u32 %v1829, %v1832
  %v1834 = vsel %vm1754, %v1824, %v1833
  %v1836 = vshrl.u32 %v1511, 16
  %v1838 = vrot.slane %v1836, 1
  %v1839 = vshll.u32 %v1511, 16
  %v1841 = vrot.slane %v1839, 2
  %v1842 = vor.u32 %v1838, %v1841
  %v1843 = vsel %vm1754, %v1833, %v1842
  %v1845 = vshrl.u32 %v1512, 16
  %v1847 = vrot.slane %v1845, 1
  %v1848 = vshll.u32 %v1512, 16
  %v1850 = vrot.slane %v1848, 2
  %v1851 = vor.u32 %v1847, %v1850
  %v1852 = vsel %vm1754, %v1842, %v1851
  %v1854 = vshrl.u32 %v1513, 16
  %v1856 = vrot.slane %v1854, 1
  %v1857 = vshll.u32 %v1513, 16
  %v1859 = vrot.slane %v1857, 2
  %v1860 = vor.u32 %v1856, %v1859
  %v1861 = vsel %vm1754, %v1851, %v1860
  %v1863 = vshrl.u32 %v1514, 16
  %v1865 = vrot.slane %v1863, 1
  %v1866 = vshll.u32 %v1514, 16
  %v1868 = vrot.slane %v1866, 2
  %v1869 = vor.u32 %v1865, %v1868
  %v1870 = vsel %vm1754, %v1860, %v1869
  %v1872 = vshrl.u32 %v1515, 16
  %v1874 = vrot.slane %v1872, 1
  %v1875 = vshll.u32 %v1515, 16
  %v1877 = vrot.slane %v1875, 2
  %v1878 = vor.u32 %v1874, %v1877
  %v1879 = vsel %vm1754, %v1869, %v1878
  %v1881 = vshrl.u32 %v1516, 16
  %v1883 = vrot.slane %v1881, 1
  %v1884 = vshll.u32 %v1516, 16
  %v1886 = vrot.slane %v1884, 2
  %v1887 = vor.u32 %v1883, %v1886
  %v1888 = vsel %vm1754, %v1878, %v1887
  %v1890 = vshrl.u32 %v1517, 16
  %v1892 = vrot.slane %v1890, 1
  %v1893 = vshll.u32 %v1517, 16
  %v1895 = vrot.slane %v1893, 2
  %v1896 = vor.u32 %v1892, %v1895
  %v1897 = vsel %vm1754, %v1887, %v1896
  %v1899 = vshrl.u32 %v1518, 16
  %v1901 = vrot.slane %v1899, 1
  %v1902 = vshll.u32 %v1518, 16
  %v1904 = vrot.slane %v1902, 2
  %v1905 = vor.u32 %v1901, %v1904
  %v1906 = vsel %vm1754, %v1896, %v1905
  %v1939 = vunpack.c.l.b16 %v1738
  %v1940 = vunpack.c.l.b16 %v1739
  %v1941 = vunpack.c.l.b16 %v1740
  %v1942 = vunpack.c.l.b16 %v1741
  %v1943 = vunpack.c.l.b16 %v1742
  %v1944 = vunpack.c.l.b16 %v1743
  %v1945 = vunpack.c.l.b16 %v1744
  %v1946 = vunpack.c.l.b16 %v1745
  %v1947 = vunpack.c.l.b16 %v1746
  %v1948 = vunpack.c.l.b16 %v1747
  %v1949 = vunpack.c.l.b16 %v1748
  %v1950 = vunpack.c.l.b16 %v1749
  %v1951 = vunpack.c.l.b16 %v1750
  %v1952 = vunpack.c.l.b16 %v1751
  %v1953 = vunpack.c.l.b16 %v1752
  %v1954 = vunpack.c.l.b16 %v1753
  %v1955 = vpack.c.b16 %v1940, %v1939
  %v1956 = vpack.c.b16 %v1942, %v1941
  %v1957 = vpack.c.b16 %v1944, %v1943
  %v1958 = vpack.c.b16 %v1946, %v1945
  %v1959 = vpack.c.b16 %v1948, %v1947
  %v1960 = vpack.c.b16 %v1950, %v1949
  %v1961 = vpack.c.b16 %v1952, %v1951
  %v1962 = vpack.c.b16 %v1954, %v1953
  %1971 = vmatpush.bf16.msra.mxu0 %v1962
  %1972 = vmatpush.bf16.msra.mxu0 %v1961
  %1973 = vmatpush.bf16.msra.mxu0 %v1960
  %1974 = vmatpush.bf16.msra.mxu0 %v1959
  %1975 = vmatpush.bf16.msra.mxu0 %v1958
  %1976 = vmatpush.bf16.msra.mxu0 %v1957
  %1977 = vmatpush.bf16.msra.mxu0 %v1956
  %1978 = vmatpush.bf16.msra.mxu0 %v1955
  %1979 = vmatmul.bf16.gmra.mxu0 %v1771
  %v1980 = vpop.f32.mrf.mxu0
  %v1981 = vadd.f32 0.0, %v1980
  %v1982 = vpop.f32.mrf.mxu0
  %v1983 = vadd.f32 0.0, %v1982
  %1984 = vmatmul.bf16.gmra.mxu0 %v1780
  %v1985 = vpop.f32.mrf.mxu0
  %v1986 = vadd.f32 0.0, %v1985
  %v1987 = vpop.f32.mrf.mxu0
  %v1988 = vadd.f32 0.0, %v1987
  %1989 = vmatmul.bf16.gmra.mxu0 %v1789
  %v1990 = vpop.f32.mrf.mxu0
  %v1991 = vadd.f32 0.0, %v1990
  %v1992 = vpop.f32.mrf.mxu0
  %v1993 = vadd.f32 0.0, %v1992
  %1994 = vmatmul.bf16.gmra.mxu0 %v1798
  %v1995 = vpop.f32.mrf.mxu0
  %v1996 = vadd.f32 0.0, %v1995
  %v1997 = vpop.f32.mrf.mxu0
  %v1998 = vadd.f32 0.0, %v1997
  %1999 = vmatmul.bf16.gmra.mxu0 %v1807
  %v2000 = vpop.f32.mrf.mxu0
  %v2001 = vadd.f32 0.0, %v2000
  %v2002 = vpop.f32.mrf.mxu0
  %v2003 = vadd.f32 0.0, %v2002
  %2004 = vmatmul.bf16.gmra.mxu0 %v1816
  %v2005 = vpop.f32.mrf.mxu0
  %v2006 = vadd.f32 0.0, %v2005
  %v2007 = vpop.f32.mrf.mxu0
  %v2008 = vadd.f32 0.0, %v2007
  %2009 = vmatmul.bf16.gmra.mxu0 %v1825
  %v2010 = vpop.f32.mrf.mxu0
  %v2011 = vadd.f32 0.0, %v2010
  %v2012 = vpop.f32.mrf.mxu0
  %v2013 = vadd.f32 0.0, %v2012
  %2014 = vmatmul.bf16.gmra.mxu0 %v1834
  %v2015 = vpop.f32.mrf.mxu0
  %v2016 = vadd.f32 0.0, %v2015
  %v2017 = vpop.f32.mrf.mxu0
  %v2018 = vadd.f32 0.0, %v2017
  %2019 = vmatmul.bf16.gmra.mxu0 %v1843
  %v2020 = vpop.f32.mrf.mxu0
  %v2021 = vadd.f32 0.0, %v2020
  %v2022 = vpop.f32.mrf.mxu0
  %v2023 = vadd.f32 0.0, %v2022
  %2024 = vmatmul.bf16.gmra.mxu0 %v1852
  %v2025 = vpop.f32.mrf.mxu0
  %v2026 = vadd.f32 0.0, %v2025
  %v2027 = vpop.f32.mrf.mxu0
  %v2028 = vadd.f32 0.0, %v2027
  %2029 = vmatmul.bf16.gmra.mxu0 %v1861
  %v2030 = vpop.f32.mrf.mxu0
  %v2031 = vadd.f32 0.0, %v2030
  %v2032 = vpop.f32.mrf.mxu0
  %v2033 = vadd.f32 0.0, %v2032
  %2034 = vmatmul.bf16.gmra.mxu0 %v1870
  %v2035 = vpop.f32.mrf.mxu0
  %v2036 = vadd.f32 0.0, %v2035
  %v2037 = vpop.f32.mrf.mxu0
  %v2038 = vadd.f32 0.0, %v2037
  %2039 = vmatmul.bf16.gmra.mxu0 %v1879
  %v2040 = vpop.f32.mrf.mxu0
  %v2041 = vadd.f32 0.0, %v2040
  %v2042 = vpop.f32.mrf.mxu0
  %v2043 = vadd.f32 0.0, %v2042
  %2044 = vmatmul.bf16.gmra.mxu0 %v1888
  %v2045 = vpop.f32.mrf.mxu0
  %v2046 = vadd.f32 0.0, %v2045
  %v2047 = vpop.f32.mrf.mxu0
  %v2048 = vadd.f32 0.0, %v2047
  %2049 = vmatmul.bf16.gmra.mxu0 %v1897
  %v2050 = vpop.f32.mrf.mxu0
  %v2051 = vadd.f32 0.0, %v2050
  %v2052 = vpop.f32.mrf.mxu0
  %v2053 = vadd.f32 0.0, %v2052
  %2054 = vmatmul.bf16.gmra.mxu0 %v1906
  %v2055 = vpop.f32.mrf.mxu0
  %v2056 = vadd.f32 0.0, %v2055
  %v2057 = vpop.f32.mrf.mxu0
  %v2058 = vadd.f32 0.0, %v2057
  %2059 = vdwg.mxu0
  %v2060 = vadd.f32 %v1705, %v1981
  %v2061 = vadd.f32 %v1706, %v1983
  %v2062 = vadd.f32 %v1707, %v1986
  %v2063 = vadd.f32 %v1708, %v1988
  %v2064 = vadd.f32 %v1709, %v1991
  %v2065 = vadd.f32 %v1710, %v1993
  %v2066 = vadd.f32 %v1711, %v1996
  %v2067 = vadd.f32 %v1712, %v1998
  %v2068 = vadd.f32 %v1713, %v2001
  %v2069 = vadd.f32 %v1714, %v2003
  %v2070 = vadd.f32 %v1715, %v2006
  %v2071 = vadd.f32 %v1716, %v2008
  %v2072 = vadd.f32 %v1717, %v2011
  %v2073 = vadd.f32 %v1718, %v2013
  %v2074 = vadd.f32 %v1719, %v2016
  %v2075 = vadd.f32 %v1720, %v2018
  %v2076 = vadd.f32 %v1721, %v2021
  %v2077 = vadd.f32 %v1722, %v2023
  %v2078 = vadd.f32 %v1723, %v2026
  %v2079 = vadd.f32 %v1724, %v2028
  %v2080 = vadd.f32 %v1725, %v2031
  %v2081 = vadd.f32 %v1726, %v2033
  %v2082 = vadd.f32 %v1727, %v2036
  %v2083 = vadd.f32 %v1728, %v2038
  %v2084 = vadd.f32 %v1729, %v2041
  %v2085 = vadd.f32 %v1730, %v2043
  %v2086 = vadd.f32 %v1731, %v2046
  %v2087 = vadd.f32 %v1732, %v2048
  %v2088 = vadd.f32 %v1733, %v2051
  %v2089 = vadd.f32 %v1734, %v2053
  %v2090 = vadd.f32 %v1735, %v2056
  %v2091 = vadd.f32 %v1736, %v2058
  %v2092 = vld [vmem:[%s0 + $0x10] sm:$0xe]
  %v2093 = vld [vmem:[%s0 + $0x14] sm:$0xf]
  %v2094 = vld [vmem:[%s0 + $0x18] sm:$0xf]
  %v2095 = vld [vmem:[%s0 + $0x1c] sm:$0xf]
  %v2096 = vld [vmem:[%s0 + $0x20] sm:$0xf]
  %v2097 = vld [vmem:[%s0 + $0x24] sm:$0xf]
  %v2098 = vld [vmem:[%s0 + $0x28] sm:$0xf]
  %v2099 = vld [vmem:[%s0 + $0x2c] sm:$0xf]
  %v2100 = vld [vmem:[%s0 + $0x30] sm:$0xf]
  %v2101 = vld [vmem:[%s0 + $0x34] sm:$0xf]
  %v2102 = vld [vmem:[%s0 + $0x38] sm:$0xf]
  %v2103 = vld [vmem:[%s0 + $0x3c] sm:$0xf]
  %v2104 = vld [vmem:[%s0 + $0x40] sm:$0xf]
  %v2105 = vld [vmem:[%s0 + $0x44] sm:$0xf]
  %v2106 = vld [vmem:[%s0 + $0x48] sm:$0xf]
  %v2107 = vld [vmem:[%s0 + $0x4c] sm:$0xf]
  %v2108 = vld [vmem:[%s0 + $0x50] sm:$0xf]
  %v2109 = vld [vmem:[%s0 + $0x54] sm:$0xf]
  %v2110 = vld [vmem:[%s0 + $0x58] sm:$0xf]
  %v2111 = vld [vmem:[%s0 + $0x5c] sm:$0xf]
  %v2112 = vld [vmem:[%s0 + $0x60] sm:$0xf]
  %v2113 = vld [vmem:[%s0 + $0x64] sm:$0xf]
  %v2114 = vld [vmem:[%s0 + $0x68] sm:$0xf]
  %v2115 = vld [vmem:[%s0 + $0x6c] sm:$0xf]
  %v2116 = vld [vmem:[%s0 + $0x70] sm:$0xf]
  %v2117 = vld [vmem:[%s0 + $0x74] sm:$0xf]
  %v2118 = vld [vmem:[%s0 + $0x78] sm:$0xf]
  %v2119 = vld [vmem:[%s0 + $0x7c] sm:$0xf]
  %v2120 = vld [vmem:[%s0 + $0x80] sm:$0xf]
  %v2121 = vld [vmem:[%s0 + $0x84] sm:$0xf]
  %v2122 = vld [vmem:[%s0 + $0x88] sm:$0xf]
  %v2123 = vld [vmem:[%s0 + $0x8c] sm:$0xf]
  %v2124 = vld [vmem:[%s0 + $0x90] sm:$0x1]
  %s2125 = scalar_lea.vmem %s1, 384
  %v2126 = vld [vmem:[%s2125] sm:$0xf]
  %v2127 = vld [vmem:[%s2125 + $0x4] sm:$0xf]
  %v2128 = vld [vmem:[%s2125 + $0x8] sm:$0xf]
  %v2129 = vld [vmem:[%s2125 + $0xc] sm:$0xf]
  %v2130 = vld [vmem:[%s2125 + $0x10] sm:$0xf]
  %v2131 = vld [vmem:[%s2125 + $0x14] sm:$0xf]
  %v2132 = vld [vmem:[%s2125 + $0x18] sm:$0xf]
  %v2133 = vld [vmem:[%s2125 + $0x1c] sm:$0xf]
  %v2134 = vld [vmem:[%s2125 + $0x20] sm:$0xf]
  %v2135 = vld [vmem:[%s2125 + $0x24] sm:$0xf]
  %v2136 = vld [vmem:[%s2125 + $0x28] sm:$0xf]
  %v2137 = vld [vmem:[%s2125 + $0x2c] sm:$0xf]
  %v2138 = vld [vmem:[%s2125 + $0x30] sm:$0xf]
  %v2139 = vld [vmem:[%s2125 + $0x34] sm:$0xf]
  %v2140 = vld [vmem:[%s2125 + $0x38] sm:$0xf]
  %v2141 = vld [vmem:[%s2125 + $0x3c] sm:$0xf]
  %v2175 = vunpack.c.l.b16 %v2092
  %v2176 = vunpack.c.l.b16 %v2093
  %v2177 = vunpack.c.l.b16 %v2094
  %v2178 = vunpack.c.l.b16 %v2095
  %v2179 = vunpack.c.l.b16 %v2096
  %v2180 = vunpack.c.l.b16 %v2097
  %v2181 = vunpack.c.l.b16 %v2098
  %v2182 = vunpack.c.l.b16 %v2099
  %v2183 = vunpack.c.l.b16 %v2100
  %v2184 = vunpack.c.l.b16 %v2101
  %v2185 = vunpack.c.l.b16 %v2102
  %v2186 = vunpack.c.l.b16 %v2103
  %v2187 = vunpack.c.l.b16 %v2104
  %v2188 = vunpack.c.l.b16 %v2105
  %v2189 = vunpack.c.l.b16 %v2106
  %v2190 = vunpack.c.l.b16 %v2107
  %v2191 = vunpack.c.l.b16 %v2108
  %v2192 = vunpack.c.l.b16 %v2109
  %v2193 = vunpack.c.l.b16 %v2110
  %v2194 = vunpack.c.l.b16 %v2111
  %v2195 = vunpack.c.l.b16 %v2112
  %v2196 = vunpack.c.l.b16 %v2113
  %v2197 = vunpack.c.l.b16 %v2114
  %v2198 = vunpack.c.l.b16 %v2115
  %v2199 = vunpack.c.l.b16 %v2116
  %v2200 = vunpack.c.l.b16 %v2117
  %v2201 = vunpack.c.l.b16 %v2118
  %v2202 = vunpack.c.l.b16 %v2119
  %v2203 = vunpack.c.l.b16 %v2120
  %v2204 = vunpack.c.l.b16 %v2121
  %v2205 = vunpack.c.l.b16 %v2122
  %v2206 = vunpack.c.l.b16 %v2123
  %v2207 = vunpack.c.l.b16 %v2124
  %v2208 = vpack.c.b16 %v2176, %v2175
  %v2209 = vpack.c.b16 %v2178, %v2177
  %v2210 = vpack.c.b16 %v2180, %v2179
  %v2211 = vpack.c.b16 %v2182, %v2181
  %v2212 = vpack.c.b16 %v2184, %v2183
  %v2213 = vpack.c.b16 %v2186, %v2185
  %v2214 = vpack.c.b16 %v2188, %v2187
  %v2215 = vpack.c.b16 %v2190, %v2189
  %v2216 = vpack.c.b16 %v2192, %v2191
  %v2217 = vpack.c.b16 %v2194, %v2193
  %v2218 = vpack.c.b16 %v2196, %v2195
  %v2219 = vpack.c.b16 %v2198, %v2197
  %v2220 = vpack.c.b16 %v2200, %v2199
  %v2221 = vpack.c.b16 %v2202, %v2201
  %v2222 = vpack.c.b16 %v2204, %v2203
  %v2223 = vpack.c.b16 %v2206, %v2205
  %v2224 = vpack.c.b16 %v2207, %v2207
  %v2225 = vrot.slane %v2208, 1
  %v2226 = vrot.slane %v2209, 1
  %v2227 = vsel %vm726, %v2225, %v2226
  %v2228 = vrot.slane %v2210, 1
  %v2229 = vsel %vm726, %v2226, %v2228
  %v2230 = vrot.slane %v2211, 1
  %v2231 = vsel %vm726, %v2228, %v2230
  %v2232 = vrot.slane %v2212, 1
  %v2233 = vsel %vm726, %v2230, %v2232
  %v2234 = vrot.slane %v2213, 1
  %v2235 = vsel %vm726, %v2232, %v2234
  %v2236 = vrot.slane %v2214, 1
  %v2237 = vsel %vm726, %v2234, %v2236
  %v2238 = vrot.slane %v2215, 1
  %v2239 = vsel %vm726, %v2236, %v2238
  %v2240 = vrot.slane %v2216, 1
  %v2241 = vsel %vm726, %v2238, %v2240
  %v2242 = vrot.slane %v2217, 1
  %v2243 = vsel %vm726, %v2240, %v2242
  %v2244 = vrot.slane %v2218, 1
  %v2245 = vsel %vm726, %v2242, %v2244
  %v2246 = vrot.slane %v2219, 1
  %v2247 = vsel %vm726, %v2244, %v2246
  %v2248 = vrot.slane %v2220, 1
  %v2249 = vsel %vm726, %v2246, %v2248
  %v2250 = vrot.slane %v2221, 1
  %v2251 = vsel %vm726, %v2248, %v2250
  %v2252 = vrot.slane %v2222, 1
  %v2253 = vsel %vm726, %v2250, %v2252
  %v2254 = vrot.slane %v2223, 1
  %v2255 = vsel %vm726, %v2252, %v2254
  %v2256 = vrot.slane %v2224, 1
  %v2257 = vsel %vm726, %v2254, %v2256
  %v2290 = vunpack.c.l.b16 %v2126
  %v2291 = vunpack.c.l.b16 %v2127
  %v2292 = vunpack.c.l.b16 %v2128
  %v2293 = vunpack.c.l.b16 %v2129
  %v2294 = vunpack.c.l.b16 %v2130
  %v2295 = vunpack.c.l.b16 %v2131
  %v2296 = vunpack.c.l.b16 %v2132
  %v2297 = vunpack.c.l.b16 %v2133
  %v2298 = vunpack.c.l.b16 %v2134
  %v2299 = vunpack.c.l.b16 %v2135
  %v2300 = vunpack.c.l.b16 %v2136
  %v2301 = vunpack.c.l.b16 %v2137
  %v2302 = vunpack.c.l.b16 %v2138
  %v2303 = vunpack.c.l.b16 %v2139
  %v2304 = vunpack.c.l.b16 %v2140
  %v2305 = vunpack.c.l.b16 %v2141
  %v2306 = vpack.c.b16 %v2291, %v2290
  %v2307 = vpack.c.b16 %v2293, %v2292
  %v2308 = vpack.c.b16 %v2295, %v2294
  %v2309 = vpack.c.b16 %v2297, %v2296
  %v2310 = vpack.c.b16 %v2299, %v2298
  %v2311 = vpack.c.b16 %v2301, %v2300
  %v2312 = vpack.c.b16 %v2303, %v2302
  %v2313 = vpack.c.b16 %v2305, %v2304
  %2322 = vmatpush.bf16.msra.mxu0 %v2313
  %2323 = vmatpush.bf16.msra.mxu0 %v2312
  %2324 = vmatpush.bf16.msra.mxu0 %v2311
  %2325 = vmatpush.bf16.msra.mxu0 %v2310
  %2326 = vmatpush.bf16.msra.mxu0 %v2309
  %2327 = vmatpush.bf16.msra.mxu0 %v2308
  %2328 = vmatpush.bf16.msra.mxu0 %v2307
  %2329 = vmatpush.bf16.msra.mxu0 %v2306
  %2330 = vmatmul.bf16.gmra.mxu0 %v2227
  %v2331 = vpop.f32.mrf.mxu0
  %v2332 = vadd.f32 0.0, %v2331
  %v2333 = vpop.f32.mrf.mxu0
  %v2334 = vadd.f32 0.0, %v2333
  %2335 = vmatmul.bf16.gmra.mxu0 %v2229
  %v2336 = vpop.f32.mrf.mxu0
  %v2337 = vadd.f32 0.0, %v2336
  %v2338 = vpop.f32.mrf.mxu0
  %v2339 = vadd.f32 0.0, %v2338
  %2340 = vmatmul.bf16.gmra.mxu0 %v2231
  %v2341 = vpop.f32.mrf.mxu0
  %v2342 = vadd.f32 0.0, %v2341
  %v2343 = vpop.f32.mrf.mxu0
  %v2344 = vadd.f32 0.0, %v2343
  %2345 = vmatmul.bf16.gmra.mxu0 %v2233
  %v2346 = vpop.f32.mrf.mxu0
  %v2347 = vadd.f32 0.0, %v2346
  %v2348 = vpop.f32.mrf.mxu0
  %v2349 = vadd.f32 0.0, %v2348
  %2350 = vmatmul.bf16.gmra.mxu0 %v2235
  %v2351 = vpop.f32.mrf.mxu0
  %v2352 = vadd.f32 0.0, %v2351
  %v2353 = vpop.f32.mrf.mxu0
  %v2354 = vadd.f32 0.0, %v2353
  %2355 = vmatmul.bf16.gmra.mxu0 %v2237
  %v2356 = vpop.f32.mrf.mxu0
  %v2357 = vadd.f32 0.0, %v2356
  %v2358 = vpop.f32.mrf.mxu0
  %v2359 = vadd.f32 0.0, %v2358
  %2360 = vmatmul.bf16.gmra.mxu0 %v2239
  %v2361 = vpop.f32.mrf.mxu0
  %v2362 = vadd.f32 0.0, %v2361
  %v2363 = vpop.f32.mrf.mxu0
  %v2364 = vadd.f32 0.0, %v2363
  %2365 = vmatmul.bf16.gmra.mxu0 %v2241
  %v2366 = vpop.f32.mrf.mxu0
  %v2367 = vadd.f32 0.0, %v2366
  %v2368 = vpop.f32.mrf.mxu0
  %v2369 = vadd.f32 0.0, %v2368
  %2370 = vmatmul.bf16.gmra.mxu0 %v2243
  %v2371 = vpop.f32.mrf.mxu0
  %v2372 = vadd.f32 0.0, %v2371
  %v2373 = vpop.f32.mrf.mxu0
  %v2374 = vadd.f32 0.0, %v2373
  %2375 = vmatmul.bf16.gmra.mxu0 %v2245
  %v2376 = vpop.f32.mrf.mxu0
  %v2377 = vadd.f32 0.0, %v2376
  %v2378 = vpop.f32.mrf.mxu0
  %v2379 = vadd.f32 0.0, %v2378
  %2380 = vmatmul.bf16.gmra.mxu0 %v2247
  %v2381 = vpop.f32.mrf.mxu0
  %v2382 = vadd.f32 0.0, %v2381
  %v2383 = vpop.f32.mrf.mxu0
  %v2384 = vadd.f32 0.0, %v2383
  %2385 = vmatmul.bf16.gmra.mxu0 %v2249
  %v2386 = vpop.f32.mrf.mxu0
  %v2387 = vadd.f32 0.0, %v2386
  %v2388 = vpop.f32.mrf.mxu0
  %v2389 = vadd.f32 0.0, %v2388
  %2390 = vmatmul.bf16.gmra.mxu0 %v2251
  %v2391 = vpop.f32.mrf.mxu0
  %v2392 = vadd.f32 0.0, %v2391
  %v2393 = vpop.f32.mrf.mxu0
  %v2394 = vadd.f32 0.0, %v2393
  %2395 = vmatmul.bf16.gmra.mxu0 %v2253
  %v2396 = vpop.f32.mrf.mxu0
  %v2397 = vadd.f32 0.0, %v2396
  %v2398 = vpop.f32.mrf.mxu0
  %v2399 = vadd.f32 0.0, %v2398
  %2400 = vmatmul.bf16.gmra.mxu0 %v2255
  %v2401 = vpop.f32.mrf.mxu0
  %v2402 = vadd.f32 0.0, %v2401
  %v2403 = vpop.f32.mrf.mxu0
  %v2404 = vadd.f32 0.0, %v2403
  %2405 = vmatmul.bf16.gmra.mxu0 %v2257
  %v2406 = vpop.f32.mrf.mxu0
  %v2407 = vadd.f32 0.0, %v2406
  %v2408 = vpop.f32.mrf.mxu0
  %v2409 = vadd.f32 0.0, %v2408
  %2410 = vdwg.mxu0
  %v2411 = vadd.f32 %v2060, %v2332
  %v2412 = vadd.f32 %v2061, %v2334
  %v2413 = vadd.f32 %v2062, %v2337
  %v2414 = vadd.f32 %v2063, %v2339
  %v2415 = vadd.f32 %v2064, %v2342
  %v2416 = vadd.f32 %v2065, %v2344
  %v2417 = vadd.f32 %v2066, %v2347
  %v2418 = vadd.f32 %v2067, %v2349
  %v2419 = vadd.f32 %v2068, %v2352
  %v2420 = vadd.f32 %v2069, %v2354
  %v2421 = vadd.f32 %v2070, %v2357
  %v2422 = vadd.f32 %v2071, %v2359
  %v2423 = vadd.f32 %v2072, %v2362
  %v2424 = vadd.f32 %v2073, %v2364
  %v2425 = vadd.f32 %v2074, %v2367
  %v2426 = vadd.f32 %v2075, %v2369
  %v2427 = vadd.f32 %v2076, %v2372
  %v2428 = vadd.f32 %v2077, %v2374
  %v2429 = vadd.f32 %v2078, %v2377
  %v2430 = vadd.f32 %v2079, %v2379
  %v2431 = vadd.f32 %v2080, %v2382
  %v2432 = vadd.f32 %v2081, %v2384
  %v2433 = vadd.f32 %v2082, %v2387
  %v2434 = vadd.f32 %v2083, %v2389
  %v2435 = vadd.f32 %v2084, %v2392
  %v2436 = vadd.f32 %v2085, %v2394
  %v2437 = vadd.f32 %v2086, %v2397
  %v2438 = vadd.f32 %v2087, %v2399
  %v2439 = vadd.f32 %v2088, %v2402
  %v2440 = vadd.f32 %v2089, %v2404
  %v2441 = vadd.f32 %v2090, %v2407
  %v2442 = vadd.f32 %v2091, %v2409
  %s2443 = scalar_lea.vmem %s1, 448
  %v2444 = vld [vmem:[%s2443] sm:$0xf]
  %v2445 = vld [vmem:[%s2443 + $0x4] sm:$0xf]
  %v2446 = vld [vmem:[%s2443 + $0x8] sm:$0xf]
  %v2447 = vld [vmem:[%s2443 + $0xc] sm:$0xf]
  %v2448 = vld [vmem:[%s2443 + $0x10] sm:$0xf]
  %v2449 = vld [vmem:[%s2443 + $0x14] sm:$0xf]
  %v2450 = vld [vmem:[%s2443 + $0x18] sm:$0xf]
  %v2451 = vld [vmem:[%s2443 + $0x1c] sm:$0xf]
  %v2452 = vld [vmem:[%s2443 + $0x20] sm:$0xf]
  %v2453 = vld [vmem:[%s2443 + $0x24] sm:$0xf]
  %v2454 = vld [vmem:[%s2443 + $0x28] sm:$0xf]
  %v2455 = vld [vmem:[%s2443 + $0x2c] sm:$0xf]
  %v2456 = vld [vmem:[%s2443 + $0x30] sm:$0xf]
  %v2457 = vld [vmem:[%s2443 + $0x34] sm:$0xf]
  %v2458 = vld [vmem:[%s2443 + $0x38] sm:$0xf]
  %v2459 = vld [vmem:[%s2443 + $0x3c] sm:$0xf]
  %v2461 = vshrl.u32 %v2208, 16
  %v2463 = vrot.slane %v2461, 1
  %v2464 = vshll.u32 %v2208, 16
  %v2466 = vrot.slane %v2464, 2
  %v2467 = vor.u32 %v2463, %v2466
  %v2469 = vshrl.u32 %v2209, 16
  %v2471 = vrot.slane %v2469, 1
  %v2472 = vshll.u32 %v2209, 16
  %v2474 = vrot.slane %v2472, 2
  %v2475 = vor.u32 %v2471, %v2474
  %v2476 = vsel %vm1754, %v2467, %v2475
  %v2478 = vshrl.u32 %v2210, 16
  %v2480 = vrot.slane %v2478, 1
  %v2481 = vshll.u32 %v2210, 16
  %v2483 = vrot.slane %v2481, 2
  %v2484 = vor.u32 %v2480, %v2483
  %v2485 = vsel %vm1754, %v2475, %v2484
  %v2487 = vshrl.u32 %v2211, 16
  %v2489 = vrot.slane %v2487, 1
  %v2490 = vshll.u32 %v2211, 16
  %v2492 = vrot.slane %v2490, 2
  %v2493 = vor.u32 %v2489, %v2492
  %v2494 = vsel %vm1754, %v2484, %v2493
  %v2496 = vshrl.u32 %v2212, 16
  %v2498 = vrot.slane %v2496, 1
  %v2499 = vshll.u32 %v2212, 16
  %v2501 = vrot.slane %v2499, 2
  %v2502 = vor.u32 %v2498, %v2501
  %v2503 = vsel %vm1754, %v2493, %v2502
  %v2505 = vshrl.u32 %v2213, 16
  %v2507 = vrot.slane %v2505, 1
  %v2508 = vshll.u32 %v2213, 16
  %v2510 = vrot.slane %v2508, 2
  %v2511 = vor.u32 %v2507, %v2510
  %v2512 = vsel %vm1754, %v2502, %v2511
  %v2514 = vshrl.u32 %v2214, 16
  %v2516 = vrot.slane %v2514, 1
  %v2517 = vshll.u32 %v2214, 16
  %v2519 = vrot.slane %v2517, 2
  %v2520 = vor.u32 %v2516, %v2519
  %v2521 = vsel %vm1754, %v2511, %v2520
  %v2523 = vshrl.u32 %v2215, 16
  %v2525 = vrot.slane %v2523, 1
  %v2526 = vshll.u32 %v2215, 16
  %v2528 = vrot.slane %v2526, 2
  %v2529 = vor.u32 %v2525, %v2528
  %v2530 = vsel %vm1754, %v2520, %v2529
  %v2532 = vshrl.u32 %v2216, 16
  %v2534 = vrot.slane %v2532, 1
  %v2535 = vshll.u32 %v2216, 16
  %v2537 = vrot.slane %v2535, 2
  %v2538 = vor.u32 %v2534, %v2537
  %v2539 = vsel %vm1754, %v2529, %v2538
  %v2541 = vshrl.u32 %v2217, 16
  %v2543 = vrot.slane %v2541, 1
  %v2544 = vshll.u32 %v2217, 16
  %v2546 = vrot.slane %v2544, 2
  %v2547 = vor.u32 %v2543, %v2546
  %v2548 = vsel %vm1754, %v2538, %v2547
  %v2550 = vshrl.u32 %v2218, 16
  %v2552 = vrot.slane %v2550, 1
  %v2553 = vshll.u32 %v2218, 16
  %v2555 = vrot.slane %v2553, 2
  %v2556 = vor.u32 %v2552, %v2555
  %v2557 = vsel %vm1754, %v2547, %v2556
  %v2559 = vshrl.u32 %v2219, 16
  %v2561 = vrot.slane %v2559, 1
  %v2562 = vshll.u32 %v2219, 16
  %v2564 = vrot.slane %v2562, 2
  %v2565 = vor.u32 %v2561, %v2564
  %v2566 = vsel %vm1754, %v2556, %v2565
  %v2568 = vshrl.u32 %v2220, 16
  %v2570 = vrot.slane %v2568, 1
  %v2571 = vshll.u32 %v2220, 16
  %v2573 = vrot.slane %v2571, 2
  %v2574 = vor.u32 %v2570, %v2573
  %v2575 = vsel %vm1754, %v2565, %v2574
  %v2577 = vshrl.u32 %v2221, 16
  %v2579 = vrot.slane %v2577, 1
  %v2580 = vshll.u32 %v2221, 16
  %v2582 = vrot.slane %v2580, 2
  %v2583 = vor.u32 %v2579, %v2582
  %v2584 = vsel %vm1754, %v2574, %v2583
  %v2586 = vshrl.u32 %v2222, 16
  %v2588 = vrot.slane %v2586, 1
  %v2589 = vshll.u32 %v2222, 16
  %v2591 = vrot.slane %v2589, 2
  %v2592 = vor.u32 %v2588, %v2591
  %v2593 = vsel %vm1754, %v2583, %v2592
  %v2595 = vshrl.u32 %v2223, 16
  %v2597 = vrot.slane %v2595, 1
  %v2598 = vshll.u32 %v2223, 16
  %v2600 = vrot.slane %v2598, 2
  %v2601 = vor.u32 %v2597, %v2600
  %v2602 = vsel %vm1754, %v2592, %v2601
  %v2604 = vshrl.u32 %v2224, 16
  %v2606 = vrot.slane %v2604, 1
  %v2607 = vshll.u32 %v2224, 16
  %v2609 = vrot.slane %v2607, 2
  %v2610 = vor.u32 %v2606, %v2609
  %v2611 = vsel %vm1754, %v2601, %v2610
  %v2644 = vunpack.c.l.b16 %v2444
  %v2645 = vunpack.c.l.b16 %v2445
  %v2646 = vunpack.c.l.b16 %v2446
  %v2647 = vunpack.c.l.b16 %v2447
  %v2648 = vunpack.c.l.b16 %v2448
  %v2649 = vunpack.c.l.b16 %v2449
  %v2650 = vunpack.c.l.b16 %v2450
  %v2651 = vunpack.c.l.b16 %v2451
  %v2652 = vunpack.c.l.b16 %v2452
  %v2653 = vunpack.c.l.b16 %v2453
  %v2654 = vunpack.c.l.b16 %v2454
  %v2655 = vunpack.c.l.b16 %v2455
  %v2656 = vunpack.c.l.b16 %v2456
  %v2657 = vunpack.c.l.b16 %v2457
  %v2658 = vunpack.c.l.b16 %v2458
  %v2659 = vunpack.c.l.b16 %v2459
  %v2660 = vpack.c.b16 %v2645, %v2644
  %v2661 = vpack.c.b16 %v2647, %v2646
  %v2662 = vpack.c.b16 %v2649, %v2648
  %v2663 = vpack.c.b16 %v2651, %v2650
  %v2664 = vpack.c.b16 %v2653, %v2652
  %v2665 = vpack.c.b16 %v2655, %v2654
  %v2666 = vpack.c.b16 %v2657, %v2656
  %v2667 = vpack.c.b16 %v2659, %v2658
  %2676 = vmatpush.bf16.msra.mxu0 %v2667
  %2677 = vmatpush.bf16.msra.mxu0 %v2666
  %2678 = vmatpush.bf16.msra.mxu0 %v2665
  %2679 = vmatpush.bf16.msra.mxu0 %v2664
  %2680 = vmatpush.bf16.msra.mxu0 %v2663
  %2681 = vmatpush.bf16.msra.mxu0 %v2662
  %2682 = vmatpush.bf16.msra.mxu0 %v2661
  %2683 = vmatpush.bf16.msra.mxu0 %v2660
  %2684 = vmatmul.bf16.gmra.mxu0 %v2476
  %v2685 = vpop.f32.mrf.mxu0
  %v2686 = vadd.f32 0.0, %v2685
  %v2687 = vpop.f32.mrf.mxu0
  %v2688 = vadd.f32 0.0, %v2687
  %2689 = vmatmul.bf16.gmra.mxu0 %v2485
  %v2690 = vpop.f32.mrf.mxu0
  %v2691 = vadd.f32 0.0, %v2690
  %v2692 = vpop.f32.mrf.mxu0
  %v2693 = vadd.f32 0.0, %v2692
  %2694 = vmatmul.bf16.gmra.mxu0 %v2494
  %v2695 = vpop.f32.mrf.mxu0
  %v2696 = vadd.f32 0.0, %v2695
  %v2697 = vpop.f32.mrf.mxu0
  %v2698 = vadd.f32 0.0, %v2697
  %2699 = vmatmul.bf16.gmra.mxu0 %v2503
  %v2700 = vpop.f32.mrf.mxu0
  %v2701 = vadd.f32 0.0, %v2700
  %v2702 = vpop.f32.mrf.mxu0
  %v2703 = vadd.f32 0.0, %v2702
  %2704 = vmatmul.bf16.gmra.mxu0 %v2512
  %v2705 = vpop.f32.mrf.mxu0
  %v2706 = vadd.f32 0.0, %v2705
  %v2707 = vpop.f32.mrf.mxu0
  %v2708 = vadd.f32 0.0, %v2707
  %2709 = vmatmul.bf16.gmra.mxu0 %v2521
  %v2710 = vpop.f32.mrf.mxu0
  %v2711 = vadd.f32 0.0, %v2710
  %v2712 = vpop.f32.mrf.mxu0
  %v2713 = vadd.f32 0.0, %v2712
  %2714 = vmatmul.bf16.gmra.mxu0 %v2530
  %v2715 = vpop.f32.mrf.mxu0
  %v2716 = vadd.f32 0.0, %v2715
  %v2717 = vpop.f32.mrf.mxu0
  %v2718 = vadd.f32 0.0, %v2717
  %2719 = vmatmul.bf16.gmra.mxu0 %v2539
  %v2720 = vpop.f32.mrf.mxu0
  %v2721 = vadd.f32 0.0, %v2720
  %v2722 = vpop.f32.mrf.mxu0
  %v2723 = vadd.f32 0.0, %v2722
  %2724 = vmatmul.bf16.gmra.mxu0 %v2548
  %v2725 = vpop.f32.mrf.mxu0
  %v2726 = vadd.f32 0.0, %v2725
  %v2727 = vpop.f32.mrf.mxu0
  %v2728 = vadd.f32 0.0, %v2727
  %2729 = vmatmul.bf16.gmra.mxu0 %v2557
  %v2730 = vpop.f32.mrf.mxu0
  %v2731 = vadd.f32 0.0, %v2730
  %v2732 = vpop.f32.mrf.mxu0
  %v2733 = vadd.f32 0.0, %v2732
  %2734 = vmatmul.bf16.gmra.mxu0 %v2566
  %v2735 = vpop.f32.mrf.mxu0
  %v2736 = vadd.f32 0.0, %v2735
  %v2737 = vpop.f32.mrf.mxu0
  %v2738 = vadd.f32 0.0, %v2737
  %2739 = vmatmul.bf16.gmra.mxu0 %v2575
  %v2740 = vpop.f32.mrf.mxu0
  %v2741 = vadd.f32 0.0, %v2740
  %v2742 = vpop.f32.mrf.mxu0
  %v2743 = vadd.f32 0.0, %v2742
  %2744 = vmatmul.bf16.gmra.mxu0 %v2584
  %v2745 = vpop.f32.mrf.mxu0
  %v2746 = vadd.f32 0.0, %v2745
  %v2747 = vpop.f32.mrf.mxu0
  %v2748 = vadd.f32 0.0, %v2747
  %2749 = vmatmul.bf16.gmra.mxu0 %v2593
  %v2750 = vpop.f32.mrf.mxu0
  %v2751 = vadd.f32 0.0, %v2750
  %v2752 = vpop.f32.mrf.mxu0
  %v2753 = vadd.f32 0.0, %v2752
  %2754 = vmatmul.bf16.gmra.mxu0 %v2602
  %v2755 = vpop.f32.mrf.mxu0
  %v2756 = vadd.f32 0.0, %v2755
  %v2757 = vpop.f32.mrf.mxu0
  %v2758 = vadd.f32 0.0, %v2757
  %2759 = vmatmul.bf16.gmra.mxu0 %v2611
  %v2760 = vpop.f32.mrf.mxu0
  %v2761 = vadd.f32 0.0, %v2760
  %v2762 = vpop.f32.mrf.mxu0
  %v2763 = vadd.f32 0.0, %v2762
  %2764 = vdwg.mxu0
  %v2765 = vadd.f32 %v2411, %v2686
  %v2766 = vadd.f32 %v2412, %v2688
  %v2767 = vadd.f32 %v2413, %v2691
  %v2768 = vadd.f32 %v2414, %v2693
  %v2769 = vadd.f32 %v2415, %v2696
  %v2770 = vadd.f32 %v2416, %v2698
  %v2771 = vadd.f32 %v2417, %v2701
  %v2772 = vadd.f32 %v2418, %v2703
  %v2773 = vadd.f32 %v2419, %v2706
  %v2774 = vadd.f32 %v2420, %v2708
  %v2775 = vadd.f32 %v2421, %v2711
  %v2776 = vadd.f32 %v2422, %v2713
  %v2777 = vadd.f32 %v2423, %v2716
  %v2778 = vadd.f32 %v2424, %v2718
  %v2779 = vadd.f32 %v2425, %v2721
  %v2780 = vadd.f32 %v2426, %v2723
  %v2781 = vadd.f32 %v2427, %v2726
  %v2782 = vadd.f32 %v2428, %v2728
  %v2783 = vadd.f32 %v2429, %v2731
  %v2784 = vadd.f32 %v2430, %v2733
  %v2785 = vadd.f32 %v2431, %v2736
  %v2786 = vadd.f32 %v2432, %v2738
  %v2787 = vadd.f32 %v2433, %v2741
  %v2788 = vadd.f32 %v2434, %v2743
  %v2789 = vadd.f32 %v2435, %v2746
  %v2790 = vadd.f32 %v2436, %v2748
  %v2791 = vadd.f32 %v2437, %v2751
  %v2792 = vadd.f32 %v2438, %v2753
  %v2793 = vadd.f32 %v2439, %v2756
  %v2794 = vadd.f32 %v2440, %v2758
  %v2795 = vadd.f32 %v2441, %v2761
  %v2796 = vadd.f32 %v2442, %v2763
  %v2797 = vld [vmem:[%s0 + $0x10] sm:$0xc]
  %v2798 = vld [vmem:[%s0 + $0x90] sm:$0x3]
  %s2799 = scalar_lea.vmem %s1, 512
  %v2800 = vld [vmem:[%s2799] sm:$0xf]
  %v2801 = vld [vmem:[%s2799 + $0x4] sm:$0xf]
  %v2802 = vld [vmem:[%s2799 + $0x8] sm:$0xf]
  %v2803 = vld [vmem:[%s2799 + $0xc] sm:$0xf]
  %v2804 = vld [vmem:[%s2799 + $0x10] sm:$0xf]
  %v2805 = vld [vmem:[%s2799 + $0x14] sm:$0xf]
  %v2806 = vld [vmem:[%s2799 + $0x18] sm:$0xf]
  %v2807 = vld [vmem:[%s2799 + $0x1c] sm:$0xf]
  %v2808 = vld [vmem:[%s2799 + $0x20] sm:$0xf]
  %v2809 = vld [vmem:[%s2799 + $0x24] sm:$0xf]
  %v2810 = vld [vmem:[%s2799 + $0x28] sm:$0xf]
  %v2811 = vld [vmem:[%s2799 + $0x2c] sm:$0xf]
  %v2812 = vld [vmem:[%s2799 + $0x30] sm:$0xf]
  %v2813 = vld [vmem:[%s2799 + $0x34] sm:$0xf]
  %v2814 = vld [vmem:[%s2799 + $0x38] sm:$0xf]
  %v2815 = vld [vmem:[%s2799 + $0x3c] sm:$0xf]
  %v2818 = vunpack.c.l.b16 %v2797
  %v2819 = vunpack.c.l.b16 %v2798
  %v2820 = vpack.c.b16 %v2176, %v2818
  %v2821 = vpack.c.b16 %v2819, %v2819
  %vm2822 = vcmask 1045504
  %v2823 = vrot.slane %v2820, 2
  %v2824 = vrot.slane %v2209, 2
  %v2825 = vsel %vm2822, %v2823, %v2824
  %v2826 = vrot.slane %v2210, 2
  %v2827 = vsel %vm2822, %v2824, %v2826
  %v2828 = vrot.slane %v2211, 2
  %v2829 = vsel %vm2822, %v2826, %v2828
  %v2830 = vrot.slane %v2212, 2
  %v2831 = vsel %vm2822, %v2828, %v2830
  %v2832 = vrot.slane %v2213, 2
  %v2833 = vsel %vm2822, %v2830, %v2832
  %v2834 = vrot.slane %v2214, 2
  %v2835 = vsel %vm2822, %v2832, %v2834
  %v2836 = vrot.slane %v2215, 2
  %v2837 = vsel %vm2822, %v2834, %v2836
  %v2838 = vrot.slane %v2216, 2
  %v2839 = vsel %vm2822, %v2836, %v2838
  %v2840 = vrot.slane %v2217, 2
  %v2841 = vsel %vm2822, %v2838, %v2840
  %v2842 = vrot.slane %v2218, 2
  %v2843 = vsel %vm2822, %v2840, %v2842
  %v2844 = vrot.slane %v2219, 2
  %v2845 = vsel %vm2822, %v2842, %v2844
  %v2846 = vrot.slane %v2220, 2
  %v2847 = vsel %vm2822, %v2844, %v2846
  %v2848 = vrot.slane %v2221, 2
  %v2849 = vsel %vm2822, %v2846, %v2848
  %v2850 = vrot.slane %v2222, 2
  %v2851 = vsel %vm2822, %v2848, %v2850
  %v2852 = vrot.slane %v2223, 2
  %v2853 = vsel %vm2822, %v2850, %v2852
  %v2854 = vrot.slane %v2821, 2
  %v2855 = vsel %vm2822, %v2852, %v2854
  %v2888 = vunpack.c.l.b16 %v2800
  %v2889 = vunpack.c.l.b16 %v2801
  %v2890 = vunpack.c.l.b16 %v2802
  %v2891 = vunpack.c.l.b16 %v2803
  %v2892 = vunpack.c.l.b16 %v2804
  %v2893 = vunpack.c.l.b16 %v2805
  %v2894 = vunpack.c.l.b16 %v2806
  %v2895 = vunpack.c.l.b16 %v2807
  %v2896 = vunpack.c.l.b16 %v2808
  %v2897 = vunpack.c.l.b16 %v2809
  %v2898 = vunpack.c.l.b16 %v2810
  %v2899 = vunpack.c.l.b16 %v2811
  %v2900 = vunpack.c.l.b16 %v2812
  %v2901 = vunpack.c.l.b16 %v2813
  %v2902 = vunpack.c.l.b16 %v2814
  %v2903 = vunpack.c.l.b16 %v2815
  %v2904 = vpack.c.b16 %v2889, %v2888
  %v2905 = vpack.c.b16 %v2891, %v2890
  %v2906 = vpack.c.b16 %v2893, %v2892
  %v2907 = vpack.c.b16 %v2895, %v2894
  %v2908 = vpack.c.b16 %v2897, %v2896
  %v2909 = vpack.c.b16 %v2899, %v2898
  %v2910 = vpack.c.b16 %v2901, %v2900
  %v2911 = vpack.c.b16 %v2903, %v2902
  %2920 = vmatpush.bf16.msra.mxu0 %v2911
  %2921 = vmatpush.bf16.msra.mxu0 %v2910
  %2922 = vmatpush.bf16.msra.mxu0 %v2909
  %2923 = vmatpush.bf16.msra.mxu0 %v2908
  %2924 = vmatpush.bf16.msra.mxu0 %v2907
  %2925 = vmatpush.bf16.msra.mxu0 %v2906
  %2926 = vmatpush.bf16.msra.mxu0 %v2905
  %2927 = vmatpush.bf16.msra.mxu0 %v2904
  %2928 = vmatmul.bf16.gmra.mxu0 %v2825
  %v2929 = vpop.f32.mrf.mxu0
  %v2930 = vadd.f32 0.0, %v2929
  %v2931 = vpop.f32.mrf.mxu0
  %v2932 = vadd.f32 0.0, %v2931
  %2933 = vmatmul.bf16.gmra.mxu0 %v2827
  %v2934 = vpop.f32.mrf.mxu0
  %v2935 = vadd.f32 0.0, %v2934
  %v2936 = vpop.f32.mrf.mxu0
  %v2937 = vadd.f32 0.0, %v2936
  %2938 = vmatmul.bf16.gmra.mxu0 %v2829
  %v2939 = vpop.f32.mrf.mxu0
  %v2940 = vadd.f32 0.0, %v2939
  %v2941 = vpop.f32.mrf.mxu0
  %v2942 = vadd.f32 0.0, %v2941
  %2943 = vmatmul.bf16.gmra.mxu0 %v2831
  %v2944 = vpop.f32.mrf.mxu0
  %v2945 = vadd.f32 0.0, %v2944
  %v2946 = vpop.f32.mrf.mxu0
  %v2947 = vadd.f32 0.0, %v2946
  %2948 = vmatmul.bf16.gmra.mxu0 %v2833
  %v2949 = vpop.f32.mrf.mxu0
  %v2950 = vadd.f32 0.0, %v2949
  %v2951 = vpop.f32.mrf.mxu0
  %v2952 = vadd.f32 0.0, %v2951
  %2953 = vmatmul.bf16.gmra.mxu0 %v2835
  %v2954 = vpop.f32.mrf.mxu0
  %v2955 = vadd.f32 0.0, %v2954
  %v2956 = vpop.f32.mrf.mxu0
  %v2957 = vadd.f32 0.0, %v2956
  %2958 = vmatmul.bf16.gmra.mxu0 %v2837
  %v2959 = vpop.f32.mrf.mxu0
  %v2960 = vadd.f32 0.0, %v2959
  %v2961 = vpop.f32.mrf.mxu0
  %v2962 = vadd.f32 0.0, %v2961
  %2963 = vmatmul.bf16.gmra.mxu0 %v2839
  %v2964 = vpop.f32.mrf.mxu0
  %v2965 = vadd.f32 0.0, %v2964
  %v2966 = vpop.f32.mrf.mxu0
  %v2967 = vadd.f32 0.0, %v2966
  %2968 = vmatmul.bf16.gmra.mxu0 %v2841
  %v2969 = vpop.f32.mrf.mxu0
  %v2970 = vadd.f32 0.0, %v2969
  %v2971 = vpop.f32.mrf.mxu0
  %v2972 = vadd.f32 0.0, %v2971
  %2973 = vmatmul.bf16.gmra.mxu0 %v2843
  %v2974 = vpop.f32.mrf.mxu0
  %v2975 = vadd.f32 0.0, %v2974
  %v2976 = vpop.f32.mrf.mxu0
  %v2977 = vadd.f32 0.0, %v2976
  %2978 = vmatmul.bf16.gmra.mxu0 %v2845
  %v2979 = vpop.f32.mrf.mxu0
  %v2980 = vadd.f32 0.0, %v2979
  %v2981 = vpop.f32.mrf.mxu0
  %v2982 = vadd.f32 0.0, %v2981
  %2983 = vmatmul.bf16.gmra.mxu0 %v2847
  %v2984 = vpop.f32.mrf.mxu0
  %v2985 = vadd.f32 0.0, %v2984
  %v2986 = vpop.f32.mrf.mxu0
  %v2987 = vadd.f32 0.0, %v2986
  %2988 = vmatmul.bf16.gmra.mxu0 %v2849
  %v2989 = vpop.f32.mrf.mxu0
  %v2990 = vadd.f32 0.0, %v2989
  %v2991 = vpop.f32.mrf.mxu0
  %v2992 = vadd.f32 0.0, %v2991
  %2993 = vmatmul.bf16.gmra.mxu0 %v2851
  %v2994 = vpop.f32.mrf.mxu0
  %v2995 = vadd.f32 0.0, %v2994
  %v2996 = vpop.f32.mrf.mxu0
  %v2997 = vadd.f32 0.0, %v2996
  %2998 = vmatmul.bf16.gmra.mxu0 %v2853
  %v2999 = vpop.f32.mrf.mxu0
  %v3000 = vadd.f32 0.0, %v2999
  %v3001 = vpop.f32.mrf.mxu0
  %v3002 = vadd.f32 0.0, %v3001
  %3003 = vmatmul.bf16.gmra.mxu0 %v2855
  %v3004 = vpop.f32.mrf.mxu0
  %v3005 = vadd.f32 0.0, %v3004
  %v3006 = vpop.f32.mrf.mxu0
  %v3007 = vadd.f32 0.0, %v3006
  %3008 = vdwg.mxu0
  %v3009 = vadd.f32 %v2765, %v2930
  %v3010 = vadd.f32 %v2766, %v2932
  %v3011 = vadd.f32 %v2767, %v2935
  %v3012 = vadd.f32 %v2768, %v2937
  %v3013 = vadd.f32 %v2769, %v2940
  %v3014 = vadd.f32 %v2770, %v2942
  %v3015 = vadd.f32 %v2771, %v2945
  %v3016 = vadd.f32 %v2772, %v2947
  %v3017 = vadd.f32 %v2773, %v2950
  %v3018 = vadd.f32 %v2774, %v2952
  %v3019 = vadd.f32 %v2775, %v2955
  %v3020 = vadd.f32 %v2776, %v2957
  %v3021 = vadd.f32 %v2777, %v2960
  %v3022 = vadd.f32 %v2778, %v2962
  %v3023 = vadd.f32 %v2779, %v2965
  %v3024 = vadd.f32 %v2780, %v2967
  %v3025 = vadd.f32 %v2781, %v2970
  %v3026 = vadd.f32 %v2782, %v2972
  %v3027 = vadd.f32 %v2783, %v2975
  %v3028 = vadd.f32 %v2784, %v2977
  %v3029 = vadd.f32 %v2785, %v2980
  %v3030 = vadd.f32 %v2786, %v2982
  %v3031 = vadd.f32 %v2787, %v2985
  %v3032 = vadd.f32 %v2788, %v2987
  %v3033 = vadd.f32 %v2789, %v2990
  %v3034 = vadd.f32 %v2790, %v2992
  %v3035 = vadd.f32 %v2791, %v2995
  %v3036 = vadd.f32 %v2792, %v2997
  %v3037 = vadd.f32 %v2793, %v3000
  %v3038 = vadd.f32 %v2794, %v3002
  %v3039 = vadd.f32 %v2795, %v3005
  %v3040 = vadd.f32 %v2796, %v3007
  %v3041 = vld [vmem:[%s2] sm:$0x1]
  %v3043 = vperm.slane %v3041, 0
  %v3045 = vadd.f32 %v3009, %v3043
  %v3046 = vadd.f32 %v3010, %v3043
  %v3047 = vadd.f32 %v3011, %v3043
  %v3048 = vadd.f32 %v3012, %v3043
  %v3049 = vadd.f32 %v3013, %v3043
  %v3050 = vadd.f32 %v3014, %v3043
  %v3051 = vadd.f32 %v3015, %v3043
  %v3052 = vadd.f32 %v3016, %v3043
  %v3053 = vadd.f32 %v3017, %v3043
  %v3054 = vadd.f32 %v3018, %v3043
  %v3055 = vadd.f32 %v3019, %v3043
  %v3056 = vadd.f32 %v3020, %v3043
  %v3057 = vadd.f32 %v3021, %v3043
  %v3058 = vadd.f32 %v3022, %v3043
  %v3059 = vadd.f32 %v3023, %v3043
  %v3060 = vadd.f32 %v3024, %v3043
  %v3061 = vadd.f32 %v3025, %v3043
  %v3062 = vadd.f32 %v3026, %v3043
  %v3063 = vadd.f32 %v3027, %v3043
  %v3064 = vadd.f32 %v3028, %v3043
  %v3065 = vadd.f32 %v3029, %v3043
  %v3066 = vadd.f32 %v3030, %v3043
  %v3067 = vadd.f32 %v3031, %v3043
  %v3068 = vadd.f32 %v3032, %v3043
  %v3069 = vadd.f32 %v3033, %v3043
  %v3070 = vadd.f32 %v3034, %v3043
  %v3071 = vadd.f32 %v3035, %v3043
  %v3072 = vadd.f32 %v3036, %v3043
  %v3073 = vadd.f32 %v3037, %v3043
  %v3074 = vadd.f32 %v3038, %v3043
  %v3075 = vadd.f32 %v3039, %v3043
  %v3076 = vadd.f32 %v3040, %v3043
  %v3077 = vxor.u32 %v3045, 2147483648
  %v3078 = vxor.u32 %v3046, 2147483648
  %v3079 = vxor.u32 %v3047, 2147483648
  %v3080 = vxor.u32 %v3048, 2147483648
  %v3081 = vxor.u32 %v3049, 2147483648
  %v3082 = vxor.u32 %v3050, 2147483648
  %v3083 = vxor.u32 %v3051, 2147483648
  %v3084 = vxor.u32 %v3052, 2147483648
  %v3085 = vxor.u32 %v3053, 2147483648
  %v3086 = vxor.u32 %v3054, 2147483648
  %v3087 = vxor.u32 %v3055, 2147483648
  %v3088 = vxor.u32 %v3056, 2147483648
  %v3089 = vxor.u32 %v3057, 2147483648
  %v3090 = vxor.u32 %v3058, 2147483648
  %v3091 = vxor.u32 %v3059, 2147483648
  %v3092 = vxor.u32 %v3060, 2147483648
  %v3093 = vxor.u32 %v3061, 2147483648
  %v3094 = vxor.u32 %v3062, 2147483648
  %v3095 = vxor.u32 %v3063, 2147483648
  %v3096 = vxor.u32 %v3064, 2147483648
  %v3097 = vxor.u32 %v3065, 2147483648
  %v3098 = vxor.u32 %v3066, 2147483648
  %v3099 = vxor.u32 %v3067, 2147483648
  %v3100 = vxor.u32 %v3068, 2147483648
  %v3101 = vxor.u32 %v3069, 2147483648
  %v3102 = vxor.u32 %v3070, 2147483648
  %v3103 = vxor.u32 %v3071, 2147483648
  %v3104 = vxor.u32 %v3072, 2147483648
  %v3105 = vxor.u32 %v3073, 2147483648
  %v3106 = vxor.u32 %v3074, 2147483648
  %v3107 = vxor.u32 %v3075, 2147483648
  %v3108 = vxor.u32 %v3076, 2147483648
  %v3109 = vmul.f32 %v3077, 1.442695
  %v3110 = vpow.pop %v3109
  %v3111 = vmul.f32 %v3078, 1.442695
  %v3112 = vpow.pop %v3111
  %v3113 = vmul.f32 %v3079, 1.442695
  %v3114 = vpow.pop %v3113
  %v3115 = vmul.f32 %v3080, 1.442695
  %v3116 = vpow.pop %v3115
  %v3117 = vmul.f32 %v3081, 1.442695
  %v3118 = vpow.pop %v3117
  %v3119 = vmul.f32 %v3082, 1.442695
  %v3120 = vpow.pop %v3119
  %v3121 = vmul.f32 %v3083, 1.442695
  %v3122 = vpow.pop %v3121
  %v3123 = vmul.f32 %v3084, 1.442695
  %v3124 = vpow.pop %v3123
  %v3125 = vmul.f32 %v3085, 1.442695
  %v3126 = vpow.pop %v3125
  %v3127 = vmul.f32 %v3086, 1.442695
  %v3128 = vpow.pop %v3127
  %v3129 = vmul.f32 %v3087, 1.442695
  %v3130 = vpow.pop %v3129
  %v3131 = vmul.f32 %v3088, 1.442695
  %v3132 = vpow.pop %v3131
  %v3133 = vmul.f32 %v3089, 1.442695
  %v3134 = vpow.pop %v3133
  %v3135 = vmul.f32 %v3090, 1.442695
  %v3136 = vpow.pop %v3135
  %v3137 = vmul.f32 %v3091, 1.442695
  %v3138 = vpow.pop %v3137
  %v3139 = vmul.f32 %v3092, 1.442695
  %v3140 = vpow.pop %v3139
  %v3141 = vmul.f32 %v3093, 1.442695
  %v3142 = vpow.pop %v3141
  %v3143 = vmul.f32 %v3094, 1.442695
  %v3144 = vpow.pop %v3143
  %v3145 = vmul.f32 %v3095, 1.442695
  %v3146 = vpow.pop %v3145
  %v3147 = vmul.f32 %v3096, 1.442695
  %v3148 = vpow.pop %v3147
  %v3149 = vmul.f32 %v3097, 1.442695
  %v3150 = vpow.pop %v3149
  %v3151 = vmul.f32 %v3098, 1.442695
  %v3152 = vpow.pop %v3151
  %v3153 = vmul.f32 %v3099, 1.442695
  %v3154 = vpow.pop %v3153
  %v3155 = vmul.f32 %v3100, 1.442695
  %v3156 = vpow.pop %v3155
  %v3157 = vmul.f32 %v3101, 1.442695
  %v3158 = vpow.pop %v3157
  %v3159 = vmul.f32 %v3102, 1.442695
  %v3160 = vpow.pop %v3159
  %v3161 = vmul.f32 %v3103, 1.442695
  %v3162 = vpow.pop %v3161
  %v3163 = vmul.f32 %v3104, 1.442695
  %v3164 = vpow.pop %v3163
  %v3165 = vmul.f32 %v3105, 1.442695
  %v3166 = vpow.pop %v3165
  %v3167 = vmul.f32 %v3106, 1.442695
  %v3168 = vpow.pop %v3167
  %v3169 = vmul.f32 %v3107, 1.442695
  %v3170 = vpow.pop %v3169
  %v3171 = vmul.f32 %v3108, 1.442695
  %v3172 = vpow.pop %v3171
  %v3173 = vadd.f32 %v3110, 1.0
  %v3174 = vadd.f32 %v3112, 1.0
  %v3175 = vadd.f32 %v3114, 1.0
  %v3176 = vadd.f32 %v3116, 1.0
  %v3177 = vadd.f32 %v3118, 1.0
  %v3178 = vadd.f32 %v3120, 1.0
  %v3179 = vadd.f32 %v3122, 1.0
  %v3180 = vadd.f32 %v3124, 1.0
  %v3181 = vadd.f32 %v3126, 1.0
  %v3182 = vadd.f32 %v3128, 1.0
  %v3183 = vadd.f32 %v3130, 1.0
  %v3184 = vadd.f32 %v3132, 1.0
  %v3185 = vadd.f32 %v3134, 1.0
  %v3186 = vadd.f32 %v3136, 1.0
  %v3187 = vadd.f32 %v3138, 1.0
  %v3188 = vadd.f32 %v3140, 1.0
  %v3189 = vadd.f32 %v3142, 1.0
  %v3190 = vadd.f32 %v3144, 1.0
  %v3191 = vadd.f32 %v3146, 1.0
  %v3192 = vadd.f32 %v3148, 1.0
  %v3193 = vadd.f32 %v3150, 1.0
  %v3194 = vadd.f32 %v3152, 1.0
  %v3195 = vadd.f32 %v3154, 1.0
  %v3196 = vadd.f32 %v3156, 1.0
  %v3197 = vadd.f32 %v3158, 1.0
  %v3198 = vadd.f32 %v3160, 1.0
  %v3199 = vadd.f32 %v3162, 1.0
  %v3200 = vadd.f32 %v3164, 1.0
  %v3201 = vadd.f32 %v3166, 1.0
  %v3202 = vadd.f32 %v3168, 1.0
  %v3203 = vadd.f32 %v3170, 1.0
  %v3204 = vadd.f32 %v3172, 1.0
  %v3205 = vrcp.pop %v3173
  %v3206 = vmul.f32 %v3173, %v3205
  %v3207 = vsub.f32 1.0, %v3206
  %v3208 = vmul.f32 %v3205, %v3207
  %v3209 = vadd.f32 %v3205, %v3208
  %vm3210 = vweird.f32 %v3173
  %vm3211 = vweird.f32 %v3205
  %vm3212 = vmor %vm3210, %vm3211
  %v3213 = vsel %vm3212, %v3205, %v3209
  %v3214 = vand.u32 2147483647, %v3173
  %vm3215 = vcmp.eq.f32.partialorder %v3214, 8.507059e+37
  %v3216 = vand.u32 %v3173, 2147483648
  %v3217 = vor.u32 1.1754944e-38, %v3216
  %v3218 = vsel %vm3215, %v3217, %v3213
  %v3219 = vmul.f32 1.0, %v3218
  %v3220 = vrcp.pop %v3174
  %v3221 = vmul.f32 %v3174, %v3220
  %v3222 = vsub.f32 1.0, %v3221
  %v3223 = vmul.f32 %v3220, %v3222
  %v3224 = vadd.f32 %v3220, %v3223
  %vm3225 = vweird.f32 %v3174
  %vm3226 = vweird.f32 %v3220
  %vm3227 = vmor %vm3225, %vm3226
  %v3228 = vsel %vm3227, %v3220, %v3224
  %v3229 = vand.u32 2147483647, %v3174
  %vm3230 = vcmp.eq.f32.partialorder %v3229, 8.507059e+37
  %v3231 = vand.u32 %v3174, 2147483648
  %v3232 = vor.u32 1.1754944e-38, %v3231
  %v3233 = vsel %vm3230, %v3232, %v3228
  %v3234 = vmul.f32 1.0, %v3233
  %v3235 = vrcp.pop %v3175
  %v3236 = vmul.f32 %v3175, %v3235
  %v3237 = vsub.f32 1.0, %v3236
  %v3238 = vmul.f32 %v3235, %v3237
  %v3239 = vadd.f32 %v3235, %v3238
  %vm3240 = vweird.f32 %v3175
  %vm3241 = vweird.f32 %v3235
  %vm3242 = vmor %vm3240, %vm3241
  %v3243 = vsel %vm3242, %v3235, %v3239
  %v3244 = vand.u32 2147483647, %v3175
  %vm3245 = vcmp.eq.f32.partialorder %v3244, 8.507059e+37
  %v3246 = vand.u32 %v3175, 2147483648
  %v3247 = vor.u32 1.1754944e-38, %v3246
  %v3248 = vsel %vm3245, %v3247, %v3243
  %v3249 = vmul.f32 1.0, %v3248
  %v3250 = vrcp.pop %v3176
  %v3251 = vmul.f32 %v3176, %v3250
  %v3252 = vsub.f32 1.0, %v3251
  %v3253 = vmul.f32 %v3250, %v3252
  %v3254 = vadd.f32 %v3250, %v3253
  %vm3255 = vweird.f32 %v3176
  %vm3256 = vweird.f32 %v3250
  %vm3257 = vmor %vm3255, %vm3256
  %v3258 = vsel %vm3257, %v3250, %v3254
  %v3259 = vand.u32 2147483647, %v3176
  %vm3260 = vcmp.eq.f32.partialorder %v3259, 8.507059e+37
  %v3261 = vand.u32 %v3176, 2147483648
  %v3262 = vor.u32 1.1754944e-38, %v3261
  %v3263 = vsel %vm3260, %v3262, %v3258
  %v3264 = vmul.f32 1.0, %v3263
  %v3265 = vrcp.pop %v3177
  %v3266 = vmul.f32 %v3177, %v3265
  %v3267 = vsub.f32 1.0, %v3266
  %v3268 = vmul.f32 %v3265, %v3267
  %v3269 = vadd.f32 %v3265, %v3268
  %vm3270 = vweird.f32 %v3177
  %vm3271 = vweird.f32 %v3265
  %vm3272 = vmor %vm3270, %vm3271
  %v3273 = vsel %vm3272, %v3265, %v3269
  %v3274 = vand.u32 2147483647, %v3177
  %vm3275 = vcmp.eq.f32.partialorder %v3274, 8.507059e+37
  %v3276 = vand.u32 %v3177, 2147483648
  %v3277 = vor.u32 1.1754944e-38, %v3276
  %v3278 = vsel %vm3275, %v3277, %v3273
  %v3279 = vmul.f32 1.0, %v3278
  %v3280 = vrcp.pop %v3178
  %v3281 = vmul.f32 %v3178, %v3280
  %v3282 = vsub.f32 1.0, %v3281
  %v3283 = vmul.f32 %v3280, %v3282
  %v3284 = vadd.f32 %v3280, %v3283
  %vm3285 = vweird.f32 %v3178
  %vm3286 = vweird.f32 %v3280
  %vm3287 = vmor %vm3285, %vm3286
  %v3288 = vsel %vm3287, %v3280, %v3284
  %v3289 = vand.u32 2147483647, %v3178
  %vm3290 = vcmp.eq.f32.partialorder %v3289, 8.507059e+37
  %v3291 = vand.u32 %v3178, 2147483648
  %v3292 = vor.u32 1.1754944e-38, %v3291
  %v3293 = vsel %vm3290, %v3292, %v3288
  %v3294 = vmul.f32 1.0, %v3293
  %v3295 = vrcp.pop %v3179
  %v3296 = vmul.f32 %v3179, %v3295
  %v3297 = vsub.f32 1.0, %v3296
  %v3298 = vmul.f32 %v3295, %v3297
  %v3299 = vadd.f32 %v3295, %v3298
  %vm3300 = vweird.f32 %v3179
  %vm3301 = vweird.f32 %v3295
  %vm3302 = vmor %vm3300, %vm3301
  %v3303 = vsel %vm3302, %v3295, %v3299
  %v3304 = vand.u32 2147483647, %v3179
  %vm3305 = vcmp.eq.f32.partialorder %v3304, 8.507059e+37
  %v3306 = vand.u32 %v3179, 2147483648
  %v3307 = vor.u32 1.1754944e-38, %v3306
  %v3308 = vsel %vm3305, %v3307, %v3303
  %v3309 = vmul.f32 1.0, %v3308
  %v3310 = vrcp.pop %v3180
  %v3311 = vmul.f32 %v3180, %v3310
  %v3312 = vsub.f32 1.0, %v3311
  %v3313 = vmul.f32 %v3310, %v3312
  %v3314 = vadd.f32 %v3310, %v3313
  %vm3315 = vweird.f32 %v3180
  %vm3316 = vweird.f32 %v3310
  %vm3317 = vmor %vm3315, %vm3316
  %v3318 = vsel %vm3317, %v3310, %v3314
  %v3319 = vand.u32 2147483647, %v3180
  %vm3320 = vcmp.eq.f32.partialorder %v3319, 8.507059e+37
  %v3321 = vand.u32 %v3180, 2147483648
  %v3322 = vor.u32 1.1754944e-38, %v3321
  %v3323 = vsel %vm3320, %v3322, %v3318
  %v3324 = vmul.f32 1.0, %v3323
  %v3325 = vrcp.pop %v3181
  %v3326 = vmul.f32 %v3181, %v3325
  %v3327 = vsub.f32 1.0, %v3326
  %v3328 = vmul.f32 %v3325, %v3327
  %v3329 = vadd.f32 %v3325, %v3328
  %vm3330 = vweird.f32 %v3181
  %vm3331 = vweird.f32 %v3325
  %vm3332 = vmor %vm3330, %vm3331
  %v3333 = vsel %vm3332, %v3325, %v3329
  %v3334 = vand.u32 2147483647, %v3181
  %vm3335 = vcmp.eq.f32.partialorder %v3334, 8.507059e+37
  %v3336 = vand.u32 %v3181, 2147483648
  %v3337 = vor.u32 1.1754944e-38, %v3336
  %v3338 = vsel %vm3335, %v3337, %v3333
  %v3339 = vmul.f32 1.0, %v3338
  %v3340 = vrcp.pop %v3182
  %v3341 = vmul.f32 %v3182, %v3340
  %v3342 = vsub.f32 1.0, %v3341
  %v3343 = vmul.f32 %v3340, %v3342
  %v3344 = vadd.f32 %v3340, %v3343
  %vm3345 = vweird.f32 %v3182
  %vm3346 = vweird.f32 %v3340
  %vm3347 = vmor %vm3345, %vm3346
  %v3348 = vsel %vm3347, %v3340, %v3344
  %v3349 = vand.u32 2147483647, %v3182
  %vm3350 = vcmp.eq.f32.partialorder %v3349, 8.507059e+37
  %v3351 = vand.u32 %v3182, 2147483648
  %v3352 = vor.u32 1.1754944e-38, %v3351
  %v3353 = vsel %vm3350, %v3352, %v3348
  %v3354 = vmul.f32 1.0, %v3353
  %v3355 = vrcp.pop %v3183
  %v3356 = vmul.f32 %v3183, %v3355
  %v3357 = vsub.f32 1.0, %v3356
  %v3358 = vmul.f32 %v3355, %v3357
  %v3359 = vadd.f32 %v3355, %v3358
  %vm3360 = vweird.f32 %v3183
  %vm3361 = vweird.f32 %v3355
  %vm3362 = vmor %vm3360, %vm3361
  %v3363 = vsel %vm3362, %v3355, %v3359
  %v3364 = vand.u32 2147483647, %v3183
  %vm3365 = vcmp.eq.f32.partialorder %v3364, 8.507059e+37
  %v3366 = vand.u32 %v3183, 2147483648
  %v3367 = vor.u32 1.1754944e-38, %v3366
  %v3368 = vsel %vm3365, %v3367, %v3363
  %v3369 = vmul.f32 1.0, %v3368
  %v3370 = vrcp.pop %v3184
  %v3371 = vmul.f32 %v3184, %v3370
  %v3372 = vsub.f32 1.0, %v3371
  %v3373 = vmul.f32 %v3370, %v3372
  %v3374 = vadd.f32 %v3370, %v3373
  %vm3375 = vweird.f32 %v3184
  %vm3376 = vweird.f32 %v3370
  %vm3377 = vmor %vm3375, %vm3376
  %v3378 = vsel %vm3377, %v3370, %v3374
  %v3379 = vand.u32 2147483647, %v3184
  %vm3380 = vcmp.eq.f32.partialorder %v3379, 8.507059e+37
  %v3381 = vand.u32 %v3184, 2147483648
  %v3382 = vor.u32 1.1754944e-38, %v3381
  %v3383 = vsel %vm3380, %v3382, %v3378
  %v3384 = vmul.f32 1.0, %v3383
  %v3385 = vrcp.pop %v3185
  %v3386 = vmul.f32 %v3185, %v3385
  %v3387 = vsub.f32 1.0, %v3386
  %v3388 = vmul.f32 %v3385, %v3387
  %v3389 = vadd.f32 %v3385, %v3388
  %vm3390 = vweird.f32 %v3185
  %vm3391 = vweird.f32 %v3385
  %vm3392 = vmor %vm3390, %vm3391
  %v3393 = vsel %vm3392, %v3385, %v3389
  %v3394 = vand.u32 2147483647, %v3185
  %vm3395 = vcmp.eq.f32.partialorder %v3394, 8.507059e+37
  %v3396 = vand.u32 %v3185, 2147483648
  %v3397 = vor.u32 1.1754944e-38, %v3396
  %v3398 = vsel %vm3395, %v3397, %v3393
  %v3399 = vmul.f32 1.0, %v3398
  %v3400 = vrcp.pop %v3186
  %v3401 = vmul.f32 %v3186, %v3400
  %v3402 = vsub.f32 1.0, %v3401
  %v3403 = vmul.f32 %v3400, %v3402
  %v3404 = vadd.f32 %v3400, %v3403
  %vm3405 = vweird.f32 %v3186
  %vm3406 = vweird.f32 %v3400
  %vm3407 = vmor %vm3405, %vm3406
  %v3408 = vsel %vm3407, %v3400, %v3404
  %v3409 = vand.u32 2147483647, %v3186
  %vm3410 = vcmp.eq.f32.partialorder %v3409, 8.507059e+37
  %v3411 = vand.u32 %v3186, 2147483648
  %v3412 = vor.u32 1.1754944e-38, %v3411
  %v3413 = vsel %vm3410, %v3412, %v3408
  %v3414 = vmul.f32 1.0, %v3413
  %v3415 = vrcp.pop %v3187
  %v3416 = vmul.f32 %v3187, %v3415
  %v3417 = vsub.f32 1.0, %v3416
  %v3418 = vmul.f32 %v3415, %v3417
  %v3419 = vadd.f32 %v3415, %v3418
  %vm3420 = vweird.f32 %v3187
  %vm3421 = vweird.f32 %v3415
  %vm3422 = vmor %vm3420, %vm3421
  %v3423 = vsel %vm3422, %v3415, %v3419
  %v3424 = vand.u32 2147483647, %v3187
  %vm3425 = vcmp.eq.f32.partialorder %v3424, 8.507059e+37
  %v3426 = vand.u32 %v3187, 2147483648
  %v3427 = vor.u32 1.1754944e-38, %v3426
  %v3428 = vsel %vm3425, %v3427, %v3423
  %v3429 = vmul.f32 1.0, %v3428
  %v3430 = vrcp.pop %v3188
  %v3431 = vmul.f32 %v3188, %v3430
  %v3432 = vsub.f32 1.0, %v3431
  %v3433 = vmul.f32 %v3430, %v3432
  %v3434 = vadd.f32 %v3430, %v3433
  %vm3435 = vweird.f32 %v3188
  %vm3436 = vweird.f32 %v3430
  %vm3437 = vmor %vm3435, %vm3436
  %v3438 = vsel %vm3437, %v3430, %v3434
  %v3439 = vand.u32 2147483647, %v3188
  %vm3440 = vcmp.eq.f32.partialorder %v3439, 8.507059e+37
  %v3441 = vand.u32 %v3188, 2147483648
  %v3442 = vor.u32 1.1754944e-38, %v3441
  %v3443 = vsel %vm3440, %v3442, %v3438
  %v3444 = vmul.f32 1.0, %v3443
  %v3445 = vrcp.pop %v3189
  %v3446 = vmul.f32 %v3189, %v3445
  %v3447 = vsub.f32 1.0, %v3446
  %v3448 = vmul.f32 %v3445, %v3447
  %v3449 = vadd.f32 %v3445, %v3448
  %vm3450 = vweird.f32 %v3189
  %vm3451 = vweird.f32 %v3445
  %vm3452 = vmor %vm3450, %vm3451
  %v3453 = vsel %vm3452, %v3445, %v3449
  %v3454 = vand.u32 2147483647, %v3189
  %vm3455 = vcmp.eq.f32.partialorder %v3454, 8.507059e+37
  %v3456 = vand.u32 %v3189, 2147483648
  %v3457 = vor.u32 1.1754944e-38, %v3456
  %v3458 = vsel %vm3455, %v3457, %v3453
  %v3459 = vmul.f32 1.0, %v3458
  %v3460 = vrcp.pop %v3190
  %v3461 = vmul.f32 %v3190, %v3460
  %v3462 = vsub.f32 1.0, %v3461
  %v3463 = vmul.f32 %v3460, %v3462
  %v3464 = vadd.f32 %v3460, %v3463
  %vm3465 = vweird.f32 %v3190
  %vm3466 = vweird.f32 %v3460
  %vm3467 = vmor %vm3465, %vm3466
  %v3468 = vsel %vm3467, %v3460, %v3464
  %v3469 = vand.u32 2147483647, %v3190
  %vm3470 = vcmp.eq.f32.partialorder %v3469, 8.507059e+37
  %v3471 = vand.u32 %v3190, 2147483648
  %v3472 = vor.u32 1.1754944e-38, %v3471
  %v3473 = vsel %vm3470, %v3472, %v3468
  %v3474 = vmul.f32 1.0, %v3473
  %v3475 = vrcp.pop %v3191
  %v3476 = vmul.f32 %v3191, %v3475
  %v3477 = vsub.f32 1.0, %v3476
  %v3478 = vmul.f32 %v3475, %v3477
  %v3479 = vadd.f32 %v3475, %v3478
  %vm3480 = vweird.f32 %v3191
  %vm3481 = vweird.f32 %v3475
  %vm3482 = vmor %vm3480, %vm3481
  %v3483 = vsel %vm3482, %v3475, %v3479
  %v3484 = vand.u32 2147483647, %v3191
  %vm3485 = vcmp.eq.f32.partialorder %v3484, 8.507059e+37
  %v3486 = vand.u32 %v3191, 2147483648
  %v3487 = vor.u32 1.1754944e-38, %v3486
  %v3488 = vsel %vm3485, %v3487, %v3483
  %v3489 = vmul.f32 1.0, %v3488
  %v3490 = vrcp.pop %v3192
  %v3491 = vmul.f32 %v3192, %v3490
  %v3492 = vsub.f32 1.0, %v3491
  %v3493 = vmul.f32 %v3490, %v3492
  %v3494 = vadd.f32 %v3490, %v3493
  %vm3495 = vweird.f32 %v3192
  %vm3496 = vweird.f32 %v3490
  %vm3497 = vmor %vm3495, %vm3496
  %v3498 = vsel %vm3497, %v3490, %v3494
  %v3499 = vand.u32 2147483647, %v3192
  %vm3500 = vcmp.eq.f32.partialorder %v3499, 8.507059e+37
  %v3501 = vand.u32 %v3192, 2147483648
  %v3502 = vor.u32 1.1754944e-38, %v3501
  %v3503 = vsel %vm3500, %v3502, %v3498
  %v3504 = vmul.f32 1.0, %v3503
  %v3505 = vrcp.pop %v3193
  %v3506 = vmul.f32 %v3193, %v3505
  %v3507 = vsub.f32 1.0, %v3506
  %v3508 = vmul.f32 %v3505, %v3507
  %v3509 = vadd.f32 %v3505, %v3508
  %vm3510 = vweird.f32 %v3193
  %vm3511 = vweird.f32 %v3505
  %vm3512 = vmor %vm3510, %vm3511
  %v3513 = vsel %vm3512, %v3505, %v3509
  %v3514 = vand.u32 2147483647, %v3193
  %vm3515 = vcmp.eq.f32.partialorder %v3514, 8.507059e+37
  %v3516 = vand.u32 %v3193, 2147483648
  %v3517 = vor.u32 1.1754944e-38, %v3516
  %v3518 = vsel %vm3515, %v3517, %v3513
  %v3519 = vmul.f32 1.0, %v3518
  %v3520 = vrcp.pop %v3194
  %v3521 = vmul.f32 %v3194, %v3520
  %v3522 = vsub.f32 1.0, %v3521
  %v3523 = vmul.f32 %v3520, %v3522
  %v3524 = vadd.f32 %v3520, %v3523
  %vm3525 = vweird.f32 %v3194
  %vm3526 = vweird.f32 %v3520
  %vm3527 = vmor %vm3525, %vm3526
  %v3528 = vsel %vm3527, %v3520, %v3524
  %v3529 = vand.u32 2147483647, %v3194
  %vm3530 = vcmp.eq.f32.partialorder %v3529, 8.507059e+37
  %v3531 = vand.u32 %v3194, 2147483648
  %v3532 = vor.u32 1.1754944e-38, %v3531
  %v3533 = vsel %vm3530, %v3532, %v3528
  %v3534 = vmul.f32 1.0, %v3533
  %v3535 = vrcp.pop %v3195
  %v3536 = vmul.f32 %v3195, %v3535
  %v3537 = vsub.f32 1.0, %v3536
  %v3538 = vmul.f32 %v3535, %v3537
  %v3539 = vadd.f32 %v3535, %v3538
  %vm3540 = vweird.f32 %v3195
  %vm3541 = vweird.f32 %v3535
  %vm3542 = vmor %vm3540, %vm3541
  %v3543 = vsel %vm3542, %v3535, %v3539
  %v3544 = vand.u32 2147483647, %v3195
  %vm3545 = vcmp.eq.f32.partialorder %v3544, 8.507059e+37
  %v3546 = vand.u32 %v3195, 2147483648
  %v3547 = vor.u32 1.1754944e-38, %v3546
  %v3548 = vsel %vm3545, %v3547, %v3543
  %v3549 = vmul.f32 1.0, %v3548
  %v3550 = vrcp.pop %v3196
  %v3551 = vmul.f32 %v3196, %v3550
  %v3552 = vsub.f32 1.0, %v3551
  %v3553 = vmul.f32 %v3550, %v3552
  %v3554 = vadd.f32 %v3550, %v3553
  %vm3555 = vweird.f32 %v3196
  %vm3556 = vweird.f32 %v3550
  %vm3557 = vmor %vm3555, %vm3556
  %v3558 = vsel %vm3557, %v3550, %v3554
  %v3559 = vand.u32 2147483647, %v3196
  %vm3560 = vcmp.eq.f32.partialorder %v3559, 8.507059e+37
  %v3561 = vand.u32 %v3196, 2147483648
  %v3562 = vor.u32 1.1754944e-38, %v3561
  %v3563 = vsel %vm3560, %v3562, %v3558
  %v3564 = vmul.f32 1.0, %v3563
  %v3565 = vrcp.pop %v3197
  %v3566 = vmul.f32 %v3197, %v3565
  %v3567 = vsub.f32 1.0, %v3566
  %v3568 = vmul.f32 %v3565, %v3567
  %v3569 = vadd.f32 %v3565, %v3568
  %vm3570 = vweird.f32 %v3197
  %vm3571 = vweird.f32 %v3565
  %vm3572 = vmor %vm3570, %vm3571
  %v3573 = vsel %vm3572, %v3565, %v3569
  %v3574 = vand.u32 2147483647, %v3197
  %vm3575 = vcmp.eq.f32.partialorder %v3574, 8.507059e+37
  %v3576 = vand.u32 %v3197, 2147483648
  %v3577 = vor.u32 1.1754944e-38, %v3576
  %v3578 = vsel %vm3575, %v3577, %v3573
  %v3579 = vmul.f32 1.0, %v3578
  %v3580 = vrcp.pop %v3198
  %v3581 = vmul.f32 %v3198, %v3580
  %v3582 = vsub.f32 1.0, %v3581
  %v3583 = vmul.f32 %v3580, %v3582
  %v3584 = vadd.f32 %v3580, %v3583
  %vm3585 = vweird.f32 %v3198
  %vm3586 = vweird.f32 %v3580
  %vm3587 = vmor %vm3585, %vm3586
  %v3588 = vsel %vm3587, %v3580, %v3584
  %v3589 = vand.u32 2147483647, %v3198
  %vm3590 = vcmp.eq.f32.partialorder %v3589, 8.507059e+37
  %v3591 = vand.u32 %v3198, 2147483648
  %v3592 = vor.u32 1.1754944e-38, %v3591
  %v3593 = vsel %vm3590, %v3592, %v3588
  %v3594 = vmul.f32 1.0, %v3593
  %v3595 = vrcp.pop %v3199
  %v3596 = vmul.f32 %v3199, %v3595
  %v3597 = vsub.f32 1.0, %v3596
  %v3598 = vmul.f32 %v3595, %v3597
  %v3599 = vadd.f32 %v3595, %v3598
  %vm3600 = vweird.f32 %v3199
  %vm3601 = vweird.f32 %v3595
  %vm3602 = vmor %vm3600, %vm3601
  %v3603 = vsel %vm3602, %v3595, %v3599
  %v3604 = vand.u32 2147483647, %v3199
  %vm3605 = vcmp.eq.f32.partialorder %v3604, 8.507059e+37
  %v3606 = vand.u32 %v3199, 2147483648
  %v3607 = vor.u32 1.1754944e-38, %v3606
  %v3608 = vsel %vm3605, %v3607, %v3603
  %v3609 = vmul.f32 1.0, %v3608
  %v3610 = vrcp.pop %v3200
  %v3611 = vmul.f32 %v3200, %v3610
  %v3612 = vsub.f32 1.0, %v3611
  %v3613 = vmul.f32 %v3610, %v3612
  %v3614 = vadd.f32 %v3610, %v3613
  %vm3615 = vweird.f32 %v3200
  %vm3616 = vweird.f32 %v3610
  %vm3617 = vmor %vm3615, %vm3616
  %v3618 = vsel %vm3617, %v3610, %v3614
  %v3619 = vand.u32 2147483647, %v3200
  %vm3620 = vcmp.eq.f32.partialorder %v3619, 8.507059e+37
  %v3621 = vand.u32 %v3200, 2147483648
  %v3622 = vor.u32 1.1754944e-38, %v3621
  %v3623 = vsel %vm3620, %v3622, %v3618
  %v3624 = vmul.f32 1.0, %v3623
  %v3625 = vrcp.pop %v3201
  %v3626 = vmul.f32 %v3201, %v3625
  %v3627 = vsub.f32 1.0, %v3626
  %v3628 = vmul.f32 %v3625, %v3627
  %v3629 = vadd.f32 %v3625, %v3628
  %vm3630 = vweird.f32 %v3201
  %vm3631 = vweird.f32 %v3625
  %vm3632 = vmor %vm3630, %vm3631
  %v3633 = vsel %vm3632, %v3625, %v3629
  %v3634 = vand.u32 2147483647, %v3201
  %vm3635 = vcmp.eq.f32.partialorder %v3634, 8.507059e+37
  %v3636 = vand.u32 %v3201, 2147483648
  %v3637 = vor.u32 1.1754944e-38, %v3636
  %v3638 = vsel %vm3635, %v3637, %v3633
  %v3639 = vmul.f32 1.0, %v3638
  %v3640 = vrcp.pop %v3202
  %v3641 = vmul.f32 %v3202, %v3640
  %v3642 = vsub.f32 1.0, %v3641
  %v3643 = vmul.f32 %v3640, %v3642
  %v3644 = vadd.f32 %v3640, %v3643
  %vm3645 = vweird.f32 %v3202
  %vm3646 = vweird.f32 %v3640
  %vm3647 = vmor %vm3645, %vm3646
  %v3648 = vsel %vm3647, %v3640, %v3644
  %v3649 = vand.u32 2147483647, %v3202
  %vm3650 = vcmp.eq.f32.partialorder %v3649, 8.507059e+37
  %v3651 = vand.u32 %v3202, 2147483648
  %v3652 = vor.u32 1.1754944e-38, %v3651
  %v3653 = vsel %vm3650, %v3652, %v3648
  %v3654 = vmul.f32 1.0, %v3653
  %v3655 = vrcp.pop %v3203
  %v3656 = vmul.f32 %v3203, %v3655
  %v3657 = vsub.f32 1.0, %v3656
  %v3658 = vmul.f32 %v3655, %v3657
  %v3659 = vadd.f32 %v3655, %v3658
  %vm3660 = vweird.f32 %v3203
  %vm3661 = vweird.f32 %v3655
  %vm3662 = vmor %vm3660, %vm3661
  %v3663 = vsel %vm3662, %v3655, %v3659
  %v3664 = vand.u32 2147483647, %v3203
  %vm3665 = vcmp.eq.f32.partialorder %v3664, 8.507059e+37
  %v3666 = vand.u32 %v3203, 2147483648
  %v3667 = vor.u32 1.1754944e-38, %v3666
  %v3668 = vsel %vm3665, %v3667, %v3663
  %v3669 = vmul.f32 1.0, %v3668
  %v3670 = vrcp.pop %v3204
  %v3671 = vmul.f32 %v3204, %v3670
  %v3672 = vsub.f32 1.0, %v3671
  %v3673 = vmul.f32 %v3670, %v3672
  %v3674 = vadd.f32 %v3670, %v3673
  %vm3675 = vweird.f32 %v3204
  %vm3676 = vweird.f32 %v3670
  %vm3677 = vmor %vm3675, %vm3676
  %v3678 = vsel %vm3677, %v3670, %v3674
  %v3679 = vand.u32 2147483647, %v3204
  %vm3680 = vcmp.eq.f32.partialorder %v3679, 8.507059e+37
  %v3681 = vand.u32 %v3204, 2147483648
  %v3682 = vor.u32 1.1754944e-38, %v3681
  %v3683 = vsel %vm3680, %v3682, %v3678
  %v3684 = vmul.f32 1.0, %v3683
  %v3685 = vmul.f32 %v3045, %v3219
  %v3686 = vmul.f32 %v3046, %v3234
  %v3687 = vmul.f32 %v3047, %v3249
  %v3688 = vmul.f32 %v3048, %v3264
  %v3689 = vmul.f32 %v3049, %v3279
  %v3690 = vmul.f32 %v3050, %v3294
  %v3691 = vmul.f32 %v3051, %v3309
  %v3692 = vmul.f32 %v3052, %v3324
  %v3693 = vmul.f32 %v3053, %v3339
  %v3694 = vmul.f32 %v3054, %v3354
  %v3695 = vmul.f32 %v3055, %v3369
  %v3696 = vmul.f32 %v3056, %v3384
  %v3697 = vmul.f32 %v3057, %v3399
  %v3698 = vmul.f32 %v3058, %v3414
  %v3699 = vmul.f32 %v3059, %v3429
  %v3700 = vmul.f32 %v3060, %v3444
  %v3701 = vmul.f32 %v3061, %v3459
  %v3702 = vmul.f32 %v3062, %v3474
  %v3703 = vmul.f32 %v3063, %v3489
  %v3704 = vmul.f32 %v3064, %v3504
  %v3705 = vmul.f32 %v3065, %v3519
  %v3706 = vmul.f32 %v3066, %v3534
  %v3707 = vmul.f32 %v3067, %v3549
  %v3708 = vmul.f32 %v3068, %v3564
  %v3709 = vmul.f32 %v3069, %v3579
  %v3710 = vmul.f32 %v3070, %v3594
  %v3711 = vmul.f32 %v3071, %v3609
  %v3712 = vmul.f32 %v3072, %v3624
  %v3713 = vmul.f32 %v3073, %v3639
  %v3714 = vmul.f32 %v3074, %v3654
  %v3715 = vmul.f32 %v3075, %v3669
  %v3716 = vmul.f32 %v3076, %v3684
  %v3717 = vpack.c.bf16 %v3685, %v3685
  %v3718 = vpack.c.bf16 %v3686, %v3686
  %v3719 = vpack.c.bf16 %v3687, %v3687
  %v3720 = vpack.c.bf16 %v3688, %v3688
  %v3721 = vpack.c.bf16 %v3689, %v3689
  %v3722 = vpack.c.bf16 %v3690, %v3690
  %v3723 = vpack.c.bf16 %v3691, %v3691
  %v3724 = vpack.c.bf16 %v3692, %v3692
  %v3725 = vpack.c.bf16 %v3693, %v3693
  %v3726 = vpack.c.bf16 %v3694, %v3694
  %v3727 = vpack.c.bf16 %v3695, %v3695
  %v3728 = vpack.c.bf16 %v3696, %v3696
  %v3729 = vpack.c.bf16 %v3697, %v3697
  %v3730 = vpack.c.bf16 %v3698, %v3698
  %v3731 = vpack.c.bf16 %v3699, %v3699
  %v3732 = vpack.c.bf16 %v3700, %v3700
  %v3733 = vpack.c.bf16 %v3701, %v3701
  %v3734 = vpack.c.bf16 %v3702, %v3702
  %v3735 = vpack.c.bf16 %v3703, %v3703
  %v3736 = vpack.c.bf16 %v3704, %v3704
  %v3737 = vpack.c.bf16 %v3705, %v3705
  %v3738 = vpack.c.bf16 %v3706, %v3706
  %v3739 = vpack.c.bf16 %v3707, %v3707
  %v3740 = vpack.c.bf16 %v3708, %v3708
  %v3741 = vpack.c.bf16 %v3709, %v3709
  %v3742 = vpack.c.bf16 %v3710, %v3710
  %v3743 = vpack.c.bf16 %v3711, %v3711
  %v3744 = vpack.c.bf16 %v3712, %v3712
  %v3745 = vpack.c.bf16 %v3713, %v3713
  %v3746 = vpack.c.bf16 %v3714, %v3714
  %v3747 = vpack.c.bf16 %v3715, %v3715
  %v3748 = vpack.c.bf16 %v3716, %v3716
  %3749 = vst [vmem:[%s3] sm:$0xf] %v3717
  %3750 = vst [vmem:[%s3 + $0x4] sm:$0xf] %v3718
  %3751 = vst [vmem:[%s3 + $0x8] sm:$0xf] %v3719
  %3752 = vst [vmem:[%s3 + $0xc] sm:$0xf] %v3720
  %3753 = vst [vmem:[%s3 + $0x10] sm:$0xf] %v3721
  %3754 = vst [vmem:[%s3 + $0x14] sm:$0xf] %v3722
  %3755 = vst [vmem:[%s3 + $0x18] sm:$0xf] %v3723
  %3756 = vst [vmem:[%s3 + $0x1c] sm:$0xf] %v3724
  %3757 = vst [vmem:[%s3 + $0x20] sm:$0xf] %v3725
  %3758 = vst [vmem:[%s3 + $0x24] sm:$0xf] %v3726
  %3759 = vst [vmem:[%s3 + $0x28] sm:$0xf] %v3727
  %3760 = vst [vmem:[%s3 + $0x2c] sm:$0xf] %v3728
  %3761 = vst [vmem:[%s3 + $0x30] sm:$0xf] %v3729
  %3762 = vst [vmem:[%s3 + $0x34] sm:$0xf] %v3730
  %3763 = vst [vmem:[%s3 + $0x38] sm:$0xf] %v3731
  %3764 = vst [vmem:[%s3 + $0x3c] sm:$0xf] %v3732
  %3765 = vst [vmem:[%s3 + $0x40] sm:$0xf] %v3733
  %3766 = vst [vmem:[%s3 + $0x44] sm:$0xf] %v3734
  %3767 = vst [vmem:[%s3 + $0x48] sm:$0xf] %v3735
  %3768 = vst [vmem:[%s3 + $0x4c] sm:$0xf] %v3736
  %3769 = vst [vmem:[%s3 + $0x50] sm:$0xf] %v3737
  %3770 = vst [vmem:[%s3 + $0x54] sm:$0xf] %v3738
  %3771 = vst [vmem:[%s3 + $0x58] sm:$0xf] %v3739
  %3772 = vst [vmem:[%s3 + $0x5c] sm:$0xf] %v3740
  %3773 = vst [vmem:[%s3 + $0x60] sm:$0xf] %v3741
  %3774 = vst [vmem:[%s3 + $0x64] sm:$0xf] %v3742
  %3775 = vst [vmem:[%s3 + $0x68] sm:$0xf] %v3743
  %3776 = vst [vmem:[%s3 + $0x6c] sm:$0xf] %v3744
  %3777 = vst [vmem:[%s3 + $0x70] sm:$0xf] %v3745
  %3778 = vst [vmem:[%s3 + $0x74] sm:$0xf] %v3746
  %3779 = vst [vmem:[%s3 + $0x78] sm:$0xf] %v3747
  %vm3780 = vcmask 1043456
  %vm3781 = vsmask.f32 3328
  %vm3782 = vmand %vm3780, %vm3781
  %v3783 = vld [vmem:[%s3 + $0x7c] sm:$0xf]
  %v3784 = vsel %vm3782, %v3748, %v3783
  %3785 = vst [vmem:[%s3 + $0x7c] sm:$0xf] %v3784
  %s3786 = scalar_lea.vmem %s0, 156
  %v3787 = vld [vmem:[%s3786] sm:$0xf]
  %v3788 = vld [vmem:[%s3786 + $0x4] sm:$0xf]
  %v3789 = vld [vmem:[%s3786 + $0x8] sm:$0xf]
  %v3790 = vld [vmem:[%s3786 + $0xc] sm:$0xf]
  %v3791 = vld [vmem:[%s3786 + $0x10] sm:$0xf]
  %v3792 = vld [vmem:[%s3786 + $0x14] sm:$0xf]
  %v3793 = vld [vmem:[%s3786 + $0x18] sm:$0xf]
  %v3794 = vld [vmem:[%s3786 + $0x1c] sm:$0xf]
  %v3795 = vld [vmem:[%s3786 + $0x20] sm:$0xf]
  %v3796 = vld [vmem:[%s3786 + $0x24] sm:$0xf]
  %v3797 = vld [vmem:[%s3786 + $0x28] sm:$0xf]
  %v3798 = vld [vmem:[%s3786 + $0x2c] sm:$0xf]
  %v3799 = vld [vmem:[%s3786 + $0x30] sm:$0xf]
  %v3800 = vld [vmem:[%s3786 + $0x34] sm:$0xf]
  %v3801 = vld [vmem:[%s3786 + $0x38] sm:$0xf]
  %v3802 = vld [vmem:[%s3786 + $0x3c] sm:$0xf]
  %v3803 = vld [vmem:[%s3786 + $0x40] sm:$0xf]
  %v3804 = vld [vmem:[%s3786 + $0x44] sm:$0xf]
  %v3805 = vld [vmem:[%s3786 + $0x48] sm:$0xf]
  %v3806 = vld [vmem:[%s3786 + $0x4c] sm:$0xf]
  %v3807 = vld [vmem:[%s3786 + $0x50] sm:$0xf]
  %v3808 = vld [vmem:[%s3786 + $0x54] sm:$0xf]
  %v3809 = vld [vmem:[%s3786 + $0x58] sm:$0xf]
  %v3810 = vld [vmem:[%s3786 + $0x5c] sm:$0xf]
  %v3811 = vld [vmem:[%s3786 + $0x60] sm:$0xf]
  %v3812 = vld [vmem:[%s3786 + $0x64] sm:$0xf]
  %v3813 = vld [vmem:[%s3786 + $0x68] sm:$0xf]
  %v3814 = vld [vmem:[%s3786 + $0x6c] sm:$0xf]
  %v3815 = vld [vmem:[%s3786 + $0x70] sm:$0xf]
  %v3816 = vld [vmem:[%s3786 + $0x74] sm:$0xf]
  %v3817 = vld [vmem:[%s3786 + $0x78] sm:$0xf]
  %v3818 = vld [vmem:[%s3786 + $0x7c] sm:$0xf]
  %v3819 = vld [vmem:[%s1] sm:$0xf]
  %v3820 = vld [vmem:[%s1 + $0x4] sm:$0xf]
  %v3821 = vld [vmem:[%s1 + $0x8] sm:$0xf]
  %v3822 = vld [vmem:[%s1 + $0xc] sm:$0xf]
  %v3823 = vld [vmem:[%s1 + $0x10] sm:$0xf]
  %v3824 = vld [vmem:[%s1 + $0x14] sm:$0xf]
  %v3825 = vld [vmem:[%s1 + $0x18] sm:$0xf]
  %v3826 = vld [vmem:[%s1 + $0x1c] sm:$0xf]
  %v3827 = vld [vmem:[%s1 + $0x20] sm:$0xf]
  %v3828 = vld [vmem:[%s1 + $0x24] sm:$0xf]
  %v3829 = vld [vmem:[%s1 + $0x28] sm:$0xf]
  %v3830 = vld [vmem:[%s1 + $0x2c] sm:$0xf]
  %v3831 = vld [vmem:[%s1 + $0x30] sm:$0xf]
  %v3832 = vld [vmem:[%s1 + $0x34] sm:$0xf]
  %v3833 = vld [vmem:[%s1 + $0x38] sm:$0xf]
  %v3834 = vld [vmem:[%s1 + $0x3c] sm:$0xf]
  %v3835 = vld [vmem:[%s62] sm:$0xf]
  %v3836 = vld [vmem:[%s62 + $0x4] sm:$0xf]
  %v3837 = vld [vmem:[%s62 + $0x8] sm:$0xf]
  %v3838 = vld [vmem:[%s62 + $0xc] sm:$0xf]
  %v3839 = vld [vmem:[%s62 + $0x10] sm:$0xf]
  %v3840 = vld [vmem:[%s62 + $0x14] sm:$0xf]
  %v3841 = vld [vmem:[%s62 + $0x18] sm:$0xf]
  %v3842 = vld [vmem:[%s62 + $0x1c] sm:$0xf]
  %v3843 = vld [vmem:[%s62 + $0x20] sm:$0xf]
  %v3844 = vld [vmem:[%s62 + $0x24] sm:$0xf]
  %v3845 = vld [vmem:[%s62 + $0x28] sm:$0xf]
  %v3846 = vld [vmem:[%s62 + $0x2c] sm:$0xf]
  %v3847 = vld [vmem:[%s62 + $0x30] sm:$0xf]
  %v3848 = vld [vmem:[%s62 + $0x34] sm:$0xf]
  %v3849 = vld [vmem:[%s62 + $0x38] sm:$0xf]
  %v3850 = vld [vmem:[%s62 + $0x3c] sm:$0xf]
  %v3883 = vunpack.c.l.b16 %v3787
  %v3884 = vunpack.c.l.b16 %v3788
  %v3885 = vunpack.c.l.b16 %v3789
  %v3886 = vunpack.c.l.b16 %v3790
  %v3887 = vunpack.c.l.b16 %v3791
  %v3888 = vunpack.c.l.b16 %v3792
  %v3889 = vunpack.c.l.b16 %v3793
  %v3890 = vunpack.c.l.b16 %v3794
  %v3891 = vunpack.c.l.b16 %v3795
  %v3892 = vunpack.c.l.b16 %v3796
  %v3893 = vunpack.c.l.b16 %v3797
  %v3894 = vunpack.c.l.b16 %v3798
  %v3895 = vunpack.c.l.b16 %v3799
  %v3896 = vunpack.c.l.b16 %v3800
  %v3897 = vunpack.c.l.b16 %v3801
  %v3898 = vunpack.c.l.b16 %v3802
  %v3899 = vunpack.c.l.b16 %v3803
  %v3900 = vunpack.c.l.b16 %v3804
  %v3901 = vunpack.c.l.b16 %v3805
  %v3902 = vunpack.c.l.b16 %v3806
  %v3903 = vunpack.c.l.b16 %v3807
  %v3904 = vunpack.c.l.b16 %v3808
  %v3905 = vunpack.c.l.b16 %v3809
  %v3906 = vunpack.c.l.b16 %v3810
  %v3907 = vunpack.c.l.b16 %v3811
  %v3908 = vunpack.c.l.b16 %v3812
  %v3909 = vunpack.c.l.b16 %v3813
  %v3910 = vunpack.c.l.b16 %v3814
  %v3911 = vunpack.c.l.b16 %v3815
  %v3912 = vunpack.c.l.b16 %v3816
  %v3913 = vunpack.c.l.b16 %v3817
  %v3914 = vunpack.c.l.b16 %v3818
  %v3915 = vpack.c.b16 %v3884, %v3883
  %v3916 = vpack.c.b16 %v3886, %v3885
  %v3917 = vpack.c.b16 %v3888, %v3887
  %v3918 = vpack.c.b16 %v3890, %v3889
  %v3919 = vpack.c.b16 %v3892, %v3891
  %v3920 = vpack.c.b16 %v3894, %v3893
  %v3921 = vpack.c.b16 %v3896, %v3895
  %v3922 = vpack.c.b16 %v3898, %v3897
  %v3923 = vpack.c.b16 %v3900, %v3899
  %v3924 = vpack.c.b16 %v3902, %v3901
  %v3925 = vpack.c.b16 %v3904, %v3903
  %v3926 = vpack.c.b16 %v3906, %v3905
  %v3927 = vpack.c.b16 %v3908, %v3907
  %v3928 = vpack.c.b16 %v3910, %v3909
  %v3929 = vpack.c.b16 %v3912, %v3911
  %v3930 = vpack.c.b16 %v3914, %v3913
  %v3932 = vshrl.u32 %v3915, 16
  %v3934 = vshll.u32 %v3915, 16
  %v3936 = vrot.slane %v3934, 1
  %v3937 = vor.u32 %v3932, %v3936
  %v3939 = vshll.u32 %v3916, 16
  %v3941 = vrot.slane %v3939, 1
  %v3942 = vsel %vm159, %v3937, %v3941
  %v3943 = vshrl.u32 %v3916, 16
  %v3945 = vor.u32 %v3943, %v3941
  %v3947 = vshll.u32 %v3917, 16
  %v3949 = vrot.slane %v3947, 1
  %v3950 = vsel %vm159, %v3945, %v3949
  %v3951 = vshrl.u32 %v3917, 16
  %v3953 = vor.u32 %v3951, %v3949
  %v3955 = vshll.u32 %v3918, 16
  %v3957 = vrot.slane %v3955, 1
  %v3958 = vsel %vm159, %v3953, %v3957
  %v3959 = vshrl.u32 %v3918, 16
  %v3961 = vor.u32 %v3959, %v3957
  %v3963 = vshll.u32 %v3919, 16
  %v3965 = vrot.slane %v3963, 1
  %v3966 = vsel %vm159, %v3961, %v3965
  %v3967 = vshrl.u32 %v3919, 16
  %v3969 = vor.u32 %v3967, %v3965
  %v3971 = vshll.u32 %v3920, 16
  %v3973 = vrot.slane %v3971, 1
  %v3974 = vsel %vm159, %v3969, %v3973
  %v3975 = vshrl.u32 %v3920, 16
  %v3977 = vor.u32 %v3975, %v3973
  %v3979 = vshll.u32 %v3921, 16
  %v3981 = vrot.slane %v3979, 1
  %v3982 = vsel %vm159, %v3977, %v3981
  %v3983 = vshrl.u32 %v3921, 16
  %v3985 = vor.u32 %v3983, %v3981
  %v3987 = vshll.u32 %v3922, 16
  %v3989 = vrot.slane %v3987, 1
  %v3990 = vsel %vm159, %v3985, %v3989
  %v3991 = vshrl.u32 %v3922, 16
  %v3993 = vor.u32 %v3991, %v3989
  %v3995 = vshll.u32 %v3923, 16
  %v3997 = vrot.slane %v3995, 1
  %v3998 = vsel %vm159, %v3993, %v3997
  %v3999 = vshrl.u32 %v3923, 16
  %v4001 = vor.u32 %v3999, %v3997
  %v4003 = vshll.u32 %v3924, 16
  %v4005 = vrot.slane %v4003, 1
  %v4006 = vsel %vm159, %v4001, %v4005
  %v4007 = vshrl.u32 %v3924, 16
  %v4009 = vor.u32 %v4007, %v4005
  %v4011 = vshll.u32 %v3925, 16
  %v4013 = vrot.slane %v4011, 1
  %v4014 = vsel %vm159, %v4009, %v4013
  %v4015 = vshrl.u32 %v3925, 16
  %v4017 = vor.u32 %v4015, %v4013
  %v4019 = vshll.u32 %v3926, 16
  %v4021 = vrot.slane %v4019, 1
  %v4022 = vsel %vm159, %v4017, %v4021
  %v4023 = vshrl.u32 %v3926, 16
  %v4025 = vor.u32 %v4023, %v4021
  %v4027 = vshll.u32 %v3927, 16
  %v4029 = vrot.slane %v4027, 1
  %v4030 = vsel %vm159, %v4025, %v4029
  %v4031 = vshrl.u32 %v3927, 16
  %v4033 = vor.u32 %v4031, %v4029
  %v4035 = vshll.u32 %v3928, 16
  %v4037 = vrot.slane %v4035, 1
  %v4038 = vsel %vm159, %v4033, %v4037
  %v4039 = vshrl.u32 %v3928, 16
  %v4041 = vor.u32 %v4039, %v4037
  %v4043 = vshll.u32 %v3929, 16
  %v4045 = vrot.slane %v4043, 1
  %v4046 = vsel %vm159, %v4041, %v4045
  %v4047 = vshrl.u32 %v3929, 16
  %v4049 = vor.u32 %v4047, %v4045
  %v4051 = vshll.u32 %v3930, 16
  %v4053 = vrot.slane %v4051, 1
  %v4054 = vsel %vm159, %v4049, %v4053
  %v4055 = vshrl.u32 %v3930, 16
  %v4057 = vor.u32 %v4055, %v4053
  %v4090 = vunpack.c.l.b16 %v3835
  %v4091 = vunpack.c.l.b16 %v3836
  %v4092 = vunpack.c.l.b16 %v3837
  %v4093 = vunpack.c.l.b16 %v3838
  %v4094 = vunpack.c.l.b16 %v3839
  %v4095 = vunpack.c.l.b16 %v3840
  %v4096 = vunpack.c.l.b16 %v3841
  %v4097 = vunpack.c.l.b16 %v3842
  %v4098 = vunpack.c.l.b16 %v3843
  %v4099 = vunpack.c.l.b16 %v3844
  %v4100 = vunpack.c.l.b16 %v3845
  %v4101 = vunpack.c.l.b16 %v3846
  %v4102 = vunpack.c.l.b16 %v3847
  %v4103 = vunpack.c.l.b16 %v3848
  %v4104 = vunpack.c.l.b16 %v3849
  %v4105 = vunpack.c.l.b16 %v3850
  %v4106 = vpack.c.b16 %v4091, %v4090
  %v4107 = vpack.c.b16 %v4093, %v4092
  %v4108 = vpack.c.b16 %v4095, %v4094
  %v4109 = vpack.c.b16 %v4097, %v4096
  %v4110 = vpack.c.b16 %v4099, %v4098
  %v4111 = vpack.c.b16 %v4101, %v4100
  %v4112 = vpack.c.b16 %v4103, %v4102
  %v4113 = vpack.c.b16 %v4105, %v4104
  %4122 = vmatpush.bf16.msra.mxu0 %v4113
  %4123 = vmatpush.bf16.msra.mxu0 %v4112
  %4124 = vmatpush.bf16.msra.mxu0 %v4111
  %4125 = vmatpush.bf16.msra.mxu0 %v4110
  %4126 = vmatpush.bf16.msra.mxu0 %v4109
  %4127 = vmatpush.bf16.msra.mxu0 %v4108
  %4128 = vmatpush.bf16.msra.mxu0 %v4107
  %4129 = vmatpush.bf16.msra.mxu0 %v4106
  %4130 = vmatmul.bf16.gmra.mxu0 %v3942
  %v4131 = vpop.f32.mrf.mxu0
  %v4132 = vadd.f32 0.0, %v4131
  %v4133 = vpop.f32.mrf.mxu0
  %v4134 = vadd.f32 0.0, %v4133
  %4135 = vmatmul.bf16.gmra.mxu0 %v3950
  %v4136 = vpop.f32.mrf.mxu0
  %v4137 = vadd.f32 0.0, %v4136
  %v4138 = vpop.f32.mrf.mxu0
  %v4139 = vadd.f32 0.0, %v4138
  %4140 = vmatmul.bf16.gmra.mxu0 %v3958
  %v4141 = vpop.f32.mrf.mxu0
  %v4142 = vadd.f32 0.0, %v4141
  %v4143 = vpop.f32.mrf.mxu0
  %v4144 = vadd.f32 0.0, %v4143
  %4145 = vmatmul.bf16.gmra.mxu0 %v3966
  %v4146 = vpop.f32.mrf.mxu0
  %v4147 = vadd.f32 0.0, %v4146
  %v4148 = vpop.f32.mrf.mxu0
  %v4149 = vadd.f32 0.0, %v4148
  %4150 = vmatmul.bf16.gmra.mxu0 %v3974
  %v4151 = vpop.f32.mrf.mxu0
  %v4152 = vadd.f32 0.0, %v4151
  %v4153 = vpop.f32.mrf.mxu0
  %v4154 = vadd.f32 0.0, %v4153
  %4155 = vmatmul.bf16.gmra.mxu0 %v3982
  %v4156 = vpop.f32.mrf.mxu0
  %v4157 = vadd.f32 0.0, %v4156
  %v4158 = vpop.f32.mrf.mxu0
  %v4159 = vadd.f32 0.0, %v4158
  %4160 = vmatmul.bf16.gmra.mxu0 %v3990
  %v4161 = vpop.f32.mrf.mxu0
  %v4162 = vadd.f32 0.0, %v4161
  %v4163 = vpop.f32.mrf.mxu0
  %v4164 = vadd.f32 0.0, %v4163
  %4165 = vmatmul.bf16.gmra.mxu0 %v3998
  %v4166 = vpop.f32.mrf.mxu0
  %v4167 = vadd.f32 0.0, %v4166
  %v4168 = vpop.f32.mrf.mxu0
  %v4169 = vadd.f32 0.0, %v4168
  %4170 = vmatmul.bf16.gmra.mxu0 %v4006
  %v4171 = vpop.f32.mrf.mxu0
  %v4172 = vadd.f32 0.0, %v4171
  %v4173 = vpop.f32.mrf.mxu0
  %v4174 = vadd.f32 0.0, %v4173
  %4175 = vmatmul.bf16.gmra.mxu0 %v4014
  %v4176 = vpop.f32.mrf.mxu0
  %v4177 = vadd.f32 0.0, %v4176
  %v4178 = vpop.f32.mrf.mxu0
  %v4179 = vadd.f32 0.0, %v4178
  %4180 = vmatmul.bf16.gmra.mxu0 %v4022
  %v4181 = vpop.f32.mrf.mxu0
  %v4182 = vadd.f32 0.0, %v4181
  %v4183 = vpop.f32.mrf.mxu0
  %v4184 = vadd.f32 0.0, %v4183
  %4185 = vmatmul.bf16.gmra.mxu0 %v4030
  %v4186 = vpop.f32.mrf.mxu0
  %v4187 = vadd.f32 0.0, %v4186
  %v4188 = vpop.f32.mrf.mxu0
  %v4189 = vadd.f32 0.0, %v4188
  %4190 = vmatmul.bf16.gmra.mxu0 %v4038
  %v4191 = vpop.f32.mrf.mxu0
  %v4192 = vadd.f32 0.0, %v4191
  %v4193 = vpop.f32.mrf.mxu0
  %v4194 = vadd.f32 0.0, %v4193
  %4195 = vmatmul.bf16.gmra.mxu0 %v4046
  %v4196 = vpop.f32.mrf.mxu0
  %v4197 = vadd.f32 0.0, %v4196
  %v4198 = vpop.f32.mrf.mxu0
  %v4199 = vadd.f32 0.0, %v4198
  %4200 = vmatmul.bf16.gmra.mxu0 %v4054
  %v4201 = vpop.f32.mrf.mxu0
  %v4202 = vadd.f32 0.0, %v4201
  %v4203 = vpop.f32.mrf.mxu0
  %v4204 = vadd.f32 0.0, %v4203
  %4205 = vmatmul.bf16.gmra.mxu0 %v4057
  %v4206 = vpop.f32.mrf.mxu0
  %v4207 = vadd.f32 0.0, %v4206
  %v4208 = vpop.f32.mrf.mxu0
  %v4209 = vadd.f32 0.0, %v4208
  %4210 = vdwg.mxu0
  %v4243 = vunpack.c.l.b16 %v3819
  %v4244 = vunpack.c.l.b16 %v3820
  %v4245 = vunpack.c.l.b16 %v3821
  %v4246 = vunpack.c.l.b16 %v3822
  %v4247 = vunpack.c.l.b16 %v3823
  %v4248 = vunpack.c.l.b16 %v3824
  %v4249 = vunpack.c.l.b16 %v3825
  %v4250 = vunpack.c.l.b16 %v3826
  %v4251 = vunpack.c.l.b16 %v3827
  %v4252 = vunpack.c.l.b16 %v3828
  %v4253 = vunpack.c.l.b16 %v3829
  %v4254 = vunpack.c.l.b16 %v3830
  %v4255 = vunpack.c.l.b16 %v3831
  %v4256 = vunpack.c.l.b16 %v3832
  %v4257 = vunpack.c.l.b16 %v3833
  %v4258 = vunpack.c.l.b16 %v3834
  %v4259 = vpack.c.b16 %v4244, %v4243
  %v4260 = vpack.c.b16 %v4246, %v4245
  %v4261 = vpack.c.b16 %v4248, %v4247
  %v4262 = vpack.c.b16 %v4250, %v4249
  %v4263 = vpack.c.b16 %v4252, %v4251
  %v4264 = vpack.c.b16 %v4254, %v4253
  %v4265 = vpack.c.b16 %v4256, %v4255
  %v4266 = vpack.c.b16 %v4258, %v4257
  %4275 = vmatpush.bf16.msra.mxu0 %v4266
  %4276 = vmatpush.bf16.msra.mxu0 %v4265
  %4277 = vmatpush.bf16.msra.mxu0 %v4264
  %4278 = vmatpush.bf16.msra.mxu0 %v4263
  %4279 = vmatpush.bf16.msra.mxu0 %v4262
  %4280 = vmatpush.bf16.msra.mxu0 %v4261
  %4281 = vmatpush.bf16.msra.mxu0 %v4260
  %4282 = vmatpush.bf16.msra.mxu0 %v4259
  %4283 = vmatmul.bf16.gmra.mxu0 %v3915
  %v4284 = vpop.f32.mrf.mxu0
  %v4285 = vadd.f32 %v4132, %v4284
  %v4286 = vpop.f32.mrf.mxu0
  %v4287 = vadd.f32 %v4134, %v4286
  %4288 = vmatmul.bf16.gmra.mxu0 %v3916
  %v4289 = vpop.f32.mrf.mxu0
  %v4290 = vadd.f32 %v4137, %v4289
  %v4291 = vpop.f32.mrf.mxu0
  %v4292 = vadd.f32 %v4139, %v4291
  %4293 = vmatmul.bf16.gmra.mxu0 %v3917
  %v4294 = vpop.f32.mrf.mxu0
  %v4295 = vadd.f32 %v4142, %v4294
  %v4296 = vpop.f32.mrf.mxu0
  %v4297 = vadd.f32 %v4144, %v4296
  %4298 = vmatmul.bf16.gmra.mxu0 %v3918
  %v4299 = vpop.f32.mrf.mxu0
  %v4300 = vadd.f32 %v4147, %v4299
  %v4301 = vpop.f32.mrf.mxu0
  %v4302 = vadd.f32 %v4149, %v4301
  %4303 = vmatmul.bf16.gmra.mxu0 %v3919
  %v4304 = vpop.f32.mrf.mxu0
  %v4305 = vadd.f32 %v4152, %v4304
  %v4306 = vpop.f32.mrf.mxu0
  %v4307 = vadd.f32 %v4154, %v4306
  %4308 = vmatmul.bf16.gmra.mxu0 %v3920
  %v4309 = vpop.f32.mrf.mxu0
  %v4310 = vadd.f32 %v4157, %v4309
  %v4311 = vpop.f32.mrf.mxu0
  %v4312 = vadd.f32 %v4159, %v4311
  %4313 = vmatmul.bf16.gmra.mxu0 %v3921
  %v4314 = vpop.f32.mrf.mxu0
  %v4315 = vadd.f32 %v4162, %v4314
  %v4316 = vpop.f32.mrf.mxu0
  %v4317 = vadd.f32 %v4164, %v4316
  %4318 = vmatmul.bf16.gmra.mxu0 %v3922
  %v4319 = vpop.f32.mrf.mxu0
  %v4320 = vadd.f32 %v4167, %v4319
  %v4321 = vpop.f32.mrf.mxu0
  %v4322 = vadd.f32 %v4169, %v4321
  %4323 = vmatmul.bf16.gmra.mxu0 %v3923
  %v4324 = vpop.f32.mrf.mxu0
  %v4325 = vadd.f32 %v4172, %v4324
  %v4326 = vpop.f32.mrf.mxu0
  %v4327 = vadd.f32 %v4174, %v4326
  %4328 = vmatmul.bf16.gmra.mxu0 %v3924
  %v4329 = vpop.f32.mrf.mxu0
  %v4330 = vadd.f32 %v4177, %v4329
  %v4331 = vpop.f32.mrf.mxu0
  %v4332 = vadd.f32 %v4179, %v4331
  %4333 = vmatmul.bf16.gmra.mxu0 %v3925
  %v4334 = vpop.f32.mrf.mxu0
  %v4335 = vadd.f32 %v4182, %v4334
  %v4336 = vpop.f32.mrf.mxu0
  %v4337 = vadd.f32 %v4184, %v4336
  %4338 = vmatmul.bf16.gmra.mxu0 %v3926
  %v4339 = vpop.f32.mrf.mxu0
  %v4340 = vadd.f32 %v4187, %v4339
  %v4341 = vpop.f32.mrf.mxu0
  %v4342 = vadd.f32 %v4189, %v4341
  %4343 = vmatmul.bf16.gmra.mxu0 %v3927
  %v4344 = vpop.f32.mrf.mxu0
  %v4345 = vadd.f32 %v4192, %v4344
  %v4346 = vpop.f32.mrf.mxu0
  %v4347 = vadd.f32 %v4194, %v4346
  %4348 = vmatmul.bf16.gmra.mxu0 %v3928
  %v4349 = vpop.f32.mrf.mxu0
  %v4350 = vadd.f32 %v4197, %v4349
  %v4351 = vpop.f32.mrf.mxu0
  %v4352 = vadd.f32 %v4199, %v4351
  %4353 = vmatmul.bf16.gmra.mxu0 %v3929
  %v4354 = vpop.f32.mrf.mxu0
  %v4355 = vadd.f32 %v4202, %v4354
  %v4356 = vpop.f32.mrf.mxu0
  %v4357 = vadd.f32 %v4204, %v4356
  %4358 = vmatmul.bf16.gmra.mxu0 %v3930
  %v4359 = vpop.f32.mrf.mxu0
  %v4360 = vadd.f32 %v4207, %v4359
  %v4361 = vpop.f32.mrf.mxu0
  %v4362 = vadd.f32 %v4209, %v4361
  %4363 = vdwg.mxu0
  %v4364 = vld [vmem:[%s3786] sm:$0xe]
  %v4365 = vld [vmem:[%s3786 + $0x4] sm:$0xf]
  %v4366 = vld [vmem:[%s3786 + $0x8] sm:$0xf]
  %v4367 = vld [vmem:[%s3786 + $0xc] sm:$0xf]
  %v4368 = vld [vmem:[%s3786 + $0x10] sm:$0xf]
  %v4369 = vld [vmem:[%s3786 + $0x14] sm:$0xf]
  %v4370 = vld [vmem:[%s3786 + $0x18] sm:$0xf]
  %v4371 = vld [vmem:[%s3786 + $0x1c] sm:$0xf]
  %v4372 = vld [vmem:[%s3786 + $0x20] sm:$0xf]
  %v4373 = vld [vmem:[%s3786 + $0x24] sm:$0xf]
  %v4374 = vld [vmem:[%s3786 + $0x28] sm:$0xf]
  %v4375 = vld [vmem:[%s3786 + $0x2c] sm:$0xf]
  %v4376 = vld [vmem:[%s3786 + $0x30] sm:$0xf]
  %v4377 = vld [vmem:[%s3786 + $0x34] sm:$0xf]
  %v4378 = vld [vmem:[%s3786 + $0x38] sm:$0xf]
  %v4379 = vld [vmem:[%s3786 + $0x3c] sm:$0xf]
  %v4380 = vld [vmem:[%s3786 + $0x40] sm:$0xf]
  %v4381 = vld [vmem:[%s3786 + $0x44] sm:$0xf]
  %v4382 = vld [vmem:[%s3786 + $0x48] sm:$0xf]
  %v4383 = vld [vmem:[%s3786 + $0x4c] sm:$0xf]
  %v4384 = vld [vmem:[%s3786 + $0x50] sm:$0xf]
  %v4385 = vld [vmem:[%s3786 + $0x54] sm:$0xf]
  %v4386 = vld [vmem:[%s3786 + $0x58] sm:$0xf]
  %v4387 = vld [vmem:[%s3786 + $0x5c] sm:$0xf]
  %v4388 = vld [vmem:[%s3786 + $0x60] sm:$0xf]
  %v4389 = vld [vmem:[%s3786 + $0x64] sm:$0xf]
  %v4390 = vld [vmem:[%s3786 + $0x68] sm:$0xf]
  %v4391 = vld [vmem:[%s3786 + $0x6c] sm:$0xf]
  %v4392 = vld [vmem:[%s3786 + $0x70] sm:$0xf]
  %v4393 = vld [vmem:[%s3786 + $0x74] sm:$0xf]
  %v4394 = vld [vmem:[%s3786 + $0x78] sm:$0xf]
  %v4395 = vld [vmem:[%s3786 + $0x7c] sm:$0xf]
  %v4396 = vld [vmem:[%s3786 + $0x80] sm:$0x1]
  %v4397 = vld [vmem:[%s626] sm:$0xf]
  %v4398 = vld [vmem:[%s626 + $0x4] sm:$0xf]
  %v4399 = vld [vmem:[%s626 + $0x8] sm:$0xf]
  %v4400 = vld [vmem:[%s626 + $0xc] sm:$0xf]
  %v4401 = vld [vmem:[%s626 + $0x10] sm:$0xf]
  %v4402 = vld [vmem:[%s626 + $0x14] sm:$0xf]
  %v4403 = vld [vmem:[%s626 + $0x18] sm:$0xf]
  %v4404 = vld [vmem:[%s626 + $0x1c] sm:$0xf]
  %v4405 = vld [vmem:[%s626 + $0x20] sm:$0xf]
  %v4406 = vld [vmem:[%s626 + $0x24] sm:$0xf]
  %v4407 = vld [vmem:[%s626 + $0x28] sm:$0xf]
  %v4408 = vld [vmem:[%s626 + $0x2c] sm:$0xf]
  %v4409 = vld [vmem:[%s626 + $0x30] sm:$0xf]
  %v4410 = vld [vmem:[%s626 + $0x34] sm:$0xf]
  %v4411 = vld [vmem:[%s626 + $0x38] sm:$0xf]
  %v4412 = vld [vmem:[%s626 + $0x3c] sm:$0xf]
  %v4446 = vunpack.c.l.b16 %v4364
  %v4447 = vunpack.c.l.b16 %v4365
  %v4448 = vunpack.c.l.b16 %v4366
  %v4449 = vunpack.c.l.b16 %v4367
  %v4450 = vunpack.c.l.b16 %v4368
  %v4451 = vunpack.c.l.b16 %v4369
  %v4452 = vunpack.c.l.b16 %v4370
  %v4453 = vunpack.c.l.b16 %v4371
  %v4454 = vunpack.c.l.b16 %v4372
  %v4455 = vunpack.c.l.b16 %v4373
  %v4456 = vunpack.c.l.b16 %v4374
  %v4457 = vunpack.c.l.b16 %v4375
  %v4458 = vunpack.c.l.b16 %v4376
  %v4459 = vunpack.c.l.b16 %v4377
  %v4460 = vunpack.c.l.b16 %v4378
  %v4461 = vunpack.c.l.b16 %v4379
  %v4462 = vunpack.c.l.b16 %v4380
  %v4463 = vunpack.c.l.b16 %v4381
  %v4464 = vunpack.c.l.b16 %v4382
  %v4465 = vunpack.c.l.b16 %v4383
  %v4466 = vunpack.c.l.b16 %v4384
  %v4467 = vunpack.c.l.b16 %v4385
  %v4468 = vunpack.c.l.b16 %v4386
  %v4469 = vunpack.c.l.b16 %v4387
  %v4470 = vunpack.c.l.b16 %v4388
  %v4471 = vunpack.c.l.b16 %v4389
  %v4472 = vunpack.c.l.b16 %v4390
  %v4473 = vunpack.c.l.b16 %v4391
  %v4474 = vunpack.c.l.b16 %v4392
  %v4475 = vunpack.c.l.b16 %v4393
  %v4476 = vunpack.c.l.b16 %v4394
  %v4477 = vunpack.c.l.b16 %v4395
  %v4478 = vunpack.c.l.b16 %v4396
  %v4479 = vpack.c.b16 %v4447, %v4446
  %v4480 = vpack.c.b16 %v4449, %v4448
  %v4481 = vpack.c.b16 %v4451, %v4450
  %v4482 = vpack.c.b16 %v4453, %v4452
  %v4483 = vpack.c.b16 %v4455, %v4454
  %v4484 = vpack.c.b16 %v4457, %v4456
  %v4485 = vpack.c.b16 %v4459, %v4458
  %v4486 = vpack.c.b16 %v4461, %v4460
  %v4487 = vpack.c.b16 %v4463, %v4462
  %v4488 = vpack.c.b16 %v4465, %v4464
  %v4489 = vpack.c.b16 %v4467, %v4466
  %v4490 = vpack.c.b16 %v4469, %v4468
  %v4491 = vpack.c.b16 %v4471, %v4470
  %v4492 = vpack.c.b16 %v4473, %v4472
  %v4493 = vpack.c.b16 %v4475, %v4474
  %v4494 = vpack.c.b16 %v4477, %v4476
  %v4495 = vpack.c.b16 %v4478, %v4478
  %v4496 = vrot.slane %v4479, 1
  %v4497 = vrot.slane %v4480, 1
  %v4498 = vsel %vm726, %v4496, %v4497
  %v4499 = vrot.slane %v4481, 1
  %v4500 = vsel %vm726, %v4497, %v4499
  %v4501 = vrot.slane %v4482, 1
  %v4502 = vsel %vm726, %v4499, %v4501
  %v4503 = vrot.slane %v4483, 1
  %v4504 = vsel %vm726, %v4501, %v4503
  %v4505 = vrot.slane %v4484, 1
  %v4506 = vsel %vm726, %v4503, %v4505
  %v4507 = vrot.slane %v4485, 1
  %v4508 = vsel %vm726, %v4505, %v4507
  %v4509 = vrot.slane %v4486, 1
  %v4510 = vsel %vm726, %v4507, %v4509
  %v4511 = vrot.slane %v4487, 1
  %v4512 = vsel %vm726, %v4509, %v4511
  %v4513 = vrot.slane %v4488, 1
  %v4514 = vsel %vm726, %v4511, %v4513
  %v4515 = vrot.slane %v4489, 1
  %v4516 = vsel %vm726, %v4513, %v4515
  %v4517 = vrot.slane %v4490, 1
  %v4518 = vsel %vm726, %v4515, %v4517
  %v4519 = vrot.slane %v4491, 1
  %v4520 = vsel %vm726, %v4517, %v4519
  %v4521 = vrot.slane %v4492, 1
  %v4522 = vsel %vm726, %v4519, %v4521
  %v4523 = vrot.slane %v4493, 1
  %v4524 = vsel %vm726, %v4521, %v4523
  %v4525 = vrot.slane %v4494, 1
  %v4526 = vsel %vm726, %v4523, %v4525
  %v4527 = vrot.slane %v4495, 1
  %v4528 = vsel %vm726, %v4525, %v4527
  %v4561 = vunpack.c.l.b16 %v4397
  %v4562 = vunpack.c.l.b16 %v4398
  %v4563 = vunpack.c.l.b16 %v4399
  %v4564 = vunpack.c.l.b16 %v4400
  %v4565 = vunpack.c.l.b16 %v4401
  %v4566 = vunpack.c.l.b16 %v4402
  %v4567 = vunpack.c.l.b16 %v4403
  %v4568 = vunpack.c.l.b16 %v4404
  %v4569 = vunpack.c.l.b16 %v4405
  %v4570 = vunpack.c.l.b16 %v4406
  %v4571 = vunpack.c.l.b16 %v4407
  %v4572 = vunpack.c.l.b16 %v4408
  %v4573 = vunpack.c.l.b16 %v4409
  %v4574 = vunpack.c.l.b16 %v4410
  %v4575 = vunpack.c.l.b16 %v4411
  %v4576 = vunpack.c.l.b16 %v4412
  %v4577 = vpack.c.b16 %v4562, %v4561
  %v4578 = vpack.c.b16 %v4564, %v4563
  %v4579 = vpack.c.b16 %v4566, %v4565
  %v4580 = vpack.c.b16 %v4568, %v4567
  %v4581 = vpack.c.b16 %v4570, %v4569
  %v4582 = vpack.c.b16 %v4572, %v4571
  %v4583 = vpack.c.b16 %v4574, %v4573
  %v4584 = vpack.c.b16 %v4576, %v4575
  %4593 = vmatpush.bf16.msra.mxu0 %v4584
  %4594 = vmatpush.bf16.msra.mxu0 %v4583
  %4595 = vmatpush.bf16.msra.mxu0 %v4582
  %4596 = vmatpush.bf16.msra.mxu0 %v4581
  %4597 = vmatpush.bf16.msra.mxu0 %v4580
  %4598 = vmatpush.bf16.msra.mxu0 %v4579
  %4599 = vmatpush.bf16.msra.mxu0 %v4578
  %4600 = vmatpush.bf16.msra.mxu0 %v4577
  %4601 = vmatmul.bf16.gmra.mxu0 %v4498
  %v4602 = vpop.f32.mrf.mxu0
  %v4603 = vadd.f32 0.0, %v4602
  %v4604 = vpop.f32.mrf.mxu0
  %v4605 = vadd.f32 0.0, %v4604
  %4606 = vmatmul.bf16.gmra.mxu0 %v4500
  %v4607 = vpop.f32.mrf.mxu0
  %v4608 = vadd.f32 0.0, %v4607
  %v4609 = vpop.f32.mrf.mxu0
  %v4610 = vadd.f32 0.0, %v4609
  %4611 = vmatmul.bf16.gmra.mxu0 %v4502
  %v4612 = vpop.f32.mrf.mxu0
  %v4613 = vadd.f32 0.0, %v4612
  %v4614 = vpop.f32.mrf.mxu0
  %v4615 = vadd.f32 0.0, %v4614
  %4616 = vmatmul.bf16.gmra.mxu0 %v4504
  %v4617 = vpop.f32.mrf.mxu0
  %v4618 = vadd.f32 0.0, %v4617
  %v4619 = vpop.f32.mrf.mxu0
  %v4620 = vadd.f32 0.0, %v4619
  %4621 = vmatmul.bf16.gmra.mxu0 %v4506
  %v4622 = vpop.f32.mrf.mxu0
  %v4623 = vadd.f32 0.0, %v4622
  %v4624 = vpop.f32.mrf.mxu0
  %v4625 = vadd.f32 0.0, %v4624
  %4626 = vmatmul.bf16.gmra.mxu0 %v4508
  %v4627 = vpop.f32.mrf.mxu0
  %v4628 = vadd.f32 0.0, %v4627
  %v4629 = vpop.f32.mrf.mxu0
  %v4630 = vadd.f32 0.0, %v4629
  %4631 = vmatmul.bf16.gmra.mxu0 %v4510
  %v4632 = vpop.f32.mrf.mxu0
  %v4633 = vadd.f32 0.0, %v4632
  %v4634 = vpop.f32.mrf.mxu0
  %v4635 = vadd.f32 0.0, %v4634
  %4636 = vmatmul.bf16.gmra.mxu0 %v4512
  %v4637 = vpop.f32.mrf.mxu0
  %v4638 = vadd.f32 0.0, %v4637
  %v4639 = vpop.f32.mrf.mxu0
  %v4640 = vadd.f32 0.0, %v4639
  %4641 = vmatmul.bf16.gmra.mxu0 %v4514
  %v4642 = vpop.f32.mrf.mxu0
  %v4643 = vadd.f32 0.0, %v4642
  %v4644 = vpop.f32.mrf.mxu0
  %v4645 = vadd.f32 0.0, %v4644
  %4646 = vmatmul.bf16.gmra.mxu0 %v4516
  %v4647 = vpop.f32.mrf.mxu0
  %v4648 = vadd.f32 0.0, %v4647
  %v4649 = vpop.f32.mrf.mxu0
  %v4650 = vadd.f32 0.0, %v4649
  %4651 = vmatmul.bf16.gmra.mxu0 %v4518
  %v4652 = vpop.f32.mrf.mxu0
  %v4653 = vadd.f32 0.0, %v4652
  %v4654 = vpop.f32.mrf.mxu0
  %v4655 = vadd.f32 0.0, %v4654
  %4656 = vmatmul.bf16.gmra.mxu0 %v4520
  %v4657 = vpop.f32.mrf.mxu0
  %v4658 = vadd.f32 0.0, %v4657
  %v4659 = vpop.f32.mrf.mxu0
  %v4660 = vadd.f32 0.0, %v4659
  %4661 = vmatmul.bf16.gmra.mxu0 %v4522
  %v4662 = vpop.f32.mrf.mxu0
  %v4663 = vadd.f32 0.0, %v4662
  %v4664 = vpop.f32.mrf.mxu0
  %v4665 = vadd.f32 0.0, %v4664
  %4666 = vmatmul.bf16.gmra.mxu0 %v4524
  %v4667 = vpop.f32.mrf.mxu0
  %v4668 = vadd.f32 0.0, %v4667
  %v4669 = vpop.f32.mrf.mxu0
  %v4670 = vadd.f32 0.0, %v4669
  %4671 = vmatmul.bf16.gmra.mxu0 %v4526
  %v4672 = vpop.f32.mrf.mxu0
  %v4673 = vadd.f32 0.0, %v4672
  %v4674 = vpop.f32.mrf.mxu0
  %v4675 = vadd.f32 0.0, %v4674
  %4676 = vmatmul.bf16.gmra.mxu0 %v4528
  %v4677 = vpop.f32.mrf.mxu0
  %v4678 = vadd.f32 0.0, %v4677
  %v4679 = vpop.f32.mrf.mxu0
  %v4680 = vadd.f32 0.0, %v4679
  %4681 = vdwg.mxu0
  %v4682 = vadd.f32 %v4285, %v4603
  %v4683 = vadd.f32 %v4287, %v4605
  %v4684 = vadd.f32 %v4290, %v4608
  %v4685 = vadd.f32 %v4292, %v4610
  %v4686 = vadd.f32 %v4295, %v4613
  %v4687 = vadd.f32 %v4297, %v4615
  %v4688 = vadd.f32 %v4300, %v4618
  %v4689 = vadd.f32 %v4302, %v4620
  %v4690 = vadd.f32 %v4305, %v4623
  %v4691 = vadd.f32 %v4307, %v4625
  %v4692 = vadd.f32 %v4310, %v4628
  %v4693 = vadd.f32 %v4312, %v4630
  %v4694 = vadd.f32 %v4315, %v4633
  %v4695 = vadd.f32 %v4317, %v4635
  %v4696 = vadd.f32 %v4320, %v4638
  %v4697 = vadd.f32 %v4322, %v4640
  %v4698 = vadd.f32 %v4325, %v4643
  %v4699 = vadd.f32 %v4327, %v4645
  %v4700 = vadd.f32 %v4330, %v4648
  %v4701 = vadd.f32 %v4332, %v4650
  %v4702 = vadd.f32 %v4335, %v4653
  %v4703 = vadd.f32 %v4337, %v4655
  %v4704 = vadd.f32 %v4340, %v4658
  %v4705 = vadd.f32 %v4342, %v4660
  %v4706 = vadd.f32 %v4345, %v4663
  %v4707 = vadd.f32 %v4347, %v4665
  %v4708 = vadd.f32 %v4350, %v4668
  %v4709 = vadd.f32 %v4352, %v4670
  %v4710 = vadd.f32 %v4355, %v4673
  %v4711 = vadd.f32 %v4357, %v4675
  %v4712 = vadd.f32 %v4360, %v4678
  %v4713 = vadd.f32 %v4362, %v4680
  %v4714 = vld [vmem:[%s3786 + $0x8] sm:$0xf]
  %v4715 = vld [vmem:[%s3786 + $0xc] sm:$0xf]
  %v4716 = vld [vmem:[%s3786 + $0x10] sm:$0xf]
  %v4717 = vld [vmem:[%s3786 + $0x14] sm:$0xf]
  %v4718 = vld [vmem:[%s3786 + $0x18] sm:$0xf]
  %v4719 = vld [vmem:[%s3786 + $0x1c] sm:$0xf]
  %v4720 = vld [vmem:[%s3786 + $0x20] sm:$0xf]
  %v4721 = vld [vmem:[%s3786 + $0x24] sm:$0xf]
  %v4722 = vld [vmem:[%s3786 + $0x28] sm:$0xf]
  %v4723 = vld [vmem:[%s3786 + $0x2c] sm:$0xf]
  %v4724 = vld [vmem:[%s3786 + $0x30] sm:$0xf]
  %v4725 = vld [vmem:[%s3786 + $0x34] sm:$0xf]
  %v4726 = vld [vmem:[%s3786 + $0x38] sm:$0xf]
  %v4727 = vld [vmem:[%s3786 + $0x3c] sm:$0xf]
  %v4728 = vld [vmem:[%s3786 + $0x40] sm:$0xf]
  %v4729 = vld [vmem:[%s3786 + $0x44] sm:$0xf]
  %v4730 = vld [vmem:[%s3786 + $0x48] sm:$0xf]
  %v4731 = vld [vmem:[%s3786 + $0x4c] sm:$0xf]
  %v4732 = vld [vmem:[%s3786 + $0x50] sm:$0xf]
  %v4733 = vld [vmem:[%s3786 + $0x54] sm:$0xf]
  %v4734 = vld [vmem:[%s3786 + $0x58] sm:$0xf]
  %v4735 = vld [vmem:[%s3786 + $0x5c] sm:$0xf]
  %v4736 = vld [vmem:[%s3786 + $0x60] sm:$0xf]
  %v4737 = vld [vmem:[%s3786 + $0x64] sm:$0xf]
  %v4738 = vld [vmem:[%s3786 + $0x68] sm:$0xf]
  %v4739 = vld [vmem:[%s3786 + $0x6c] sm:$0xf]
  %v4740 = vld [vmem:[%s3786 + $0x70] sm:$0xf]
  %v4741 = vld [vmem:[%s3786 + $0x74] sm:$0xf]
  %v4742 = vld [vmem:[%s3786 + $0x78] sm:$0xf]
  %v4743 = vld [vmem:[%s3786 + $0x7c] sm:$0xf]
  %v4744 = vld [vmem:[%s3786 + $0x80] sm:$0xf]
  %v4745 = vld [vmem:[%s3786 + $0x84] sm:$0xf]
  %v4746 = vld [vmem:[%s977] sm:$0xf]
  %v4747 = vld [vmem:[%s977 + $0x4] sm:$0xf]
  %v4748 = vld [vmem:[%s977 + $0x8] sm:$0xf]
  %v4749 = vld [vmem:[%s977 + $0xc] sm:$0xf]
  %v4750 = vld [vmem:[%s977 + $0x10] sm:$0xf]
  %v4751 = vld [vmem:[%s977 + $0x14] sm:$0xf]
  %v4752 = vld [vmem:[%s977 + $0x18] sm:$0xf]
  %v4753 = vld [vmem:[%s977 + $0x1c] sm:$0xf]
  %v4754 = vld [vmem:[%s977 + $0x20] sm:$0xf]
  %v4755 = vld [vmem:[%s977 + $0x24] sm:$0xf]
  %v4756 = vld [vmem:[%s977 + $0x28] sm:$0xf]
  %v4757 = vld [vmem:[%s977 + $0x2c] sm:$0xf]
  %v4758 = vld [vmem:[%s977 + $0x30] sm:$0xf]
  %v4759 = vld [vmem:[%s977 + $0x34] sm:$0xf]
  %v4760 = vld [vmem:[%s977 + $0x38] sm:$0xf]
  %v4761 = vld [vmem:[%s977 + $0x3c] sm:$0xf]
  %v4794 = vunpack.c.l.b16 %v4714
  %v4795 = vunpack.c.l.b16 %v4715
  %v4796 = vunpack.c.l.b16 %v4716
  %v4797 = vunpack.c.l.b16 %v4717
  %v4798 = vunpack.c.l.b16 %v4718
  %v4799 = vunpack.c.l.b16 %v4719
  %v4800 = vunpack.c.l.b16 %v4720
  %v4801 = vunpack.c.l.b16 %v4721
  %v4802 = vunpack.c.l.b16 %v4722
  %v4803 = vunpack.c.l.b16 %v4723
  %v4804 = vunpack.c.l.b16 %v4724
  %v4805 = vunpack.c.l.b16 %v4725
  %v4806 = vunpack.c.l.b16 %v4726
  %v4807 = vunpack.c.l.b16 %v4727
  %v4808 = vunpack.c.l.b16 %v4728
  %v4809 = vunpack.c.l.b16 %v4729
  %v4810 = vunpack.c.l.b16 %v4730
  %v4811 = vunpack.c.l.b16 %v4731
  %v4812 = vunpack.c.l.b16 %v4732
  %v4813 = vunpack.c.l.b16 %v4733
  %v4814 = vunpack.c.l.b16 %v4734
  %v4815 = vunpack.c.l.b16 %v4735
  %v4816 = vunpack.c.l.b16 %v4736
  %v4817 = vunpack.c.l.b16 %v4737
  %v4818 = vunpack.c.l.b16 %v4738
  %v4819 = vunpack.c.l.b16 %v4739
  %v4820 = vunpack.c.l.b16 %v4740
  %v4821 = vunpack.c.l.b16 %v4741
  %v4822 = vunpack.c.l.b16 %v4742
  %v4823 = vunpack.c.l.b16 %v4743
  %v4824 = vunpack.c.l.b16 %v4744
  %v4825 = vunpack.c.l.b16 %v4745
  %v4826 = vpack.c.b16 %v4795, %v4794
  %v4827 = vpack.c.b16 %v4797, %v4796
  %v4828 = vpack.c.b16 %v4799, %v4798
  %v4829 = vpack.c.b16 %v4801, %v4800
  %v4830 = vpack.c.b16 %v4803, %v4802
  %v4831 = vpack.c.b16 %v4805, %v4804
  %v4832 = vpack.c.b16 %v4807, %v4806
  %v4833 = vpack.c.b16 %v4809, %v4808
  %v4834 = vpack.c.b16 %v4811, %v4810
  %v4835 = vpack.c.b16 %v4813, %v4812
  %v4836 = vpack.c.b16 %v4815, %v4814
  %v4837 = vpack.c.b16 %v4817, %v4816
  %v4838 = vpack.c.b16 %v4819, %v4818
  %v4839 = vpack.c.b16 %v4821, %v4820
  %v4840 = vpack.c.b16 %v4823, %v4822
  %v4841 = vpack.c.b16 %v4825, %v4824
  %v4843 = vshrl.u32 %v4826, 16
  %v4845 = vshll.u32 %v4826, 16
  %v4847 = vrot.slane %v4845, 1
  %v4848 = vor.u32 %v4843, %v4847
  %v4850 = vshll.u32 %v4827, 16
  %v4852 = vrot.slane %v4850, 1
  %v4853 = vsel %vm159, %v4848, %v4852
  %v4854 = vshrl.u32 %v4827, 16
  %v4856 = vor.u32 %v4854, %v4852
  %v4858 = vshll.u32 %v4828, 16
  %v4860 = vrot.slane %v4858, 1
  %v4861 = vsel %vm159, %v4856, %v4860
  %v4862 = vshrl.u32 %v4828, 16
  %v4864 = vor.u32 %v4862, %v4860
  %v4866 = vshll.u32 %v4829, 16
  %v4868 = vrot.slane %v4866, 1
  %v4869 = vsel %vm159, %v4864, %v4868
  %v4870 = vshrl.u32 %v4829, 16
  %v4872 = vor.u32 %v4870, %v4868
  %v4874 = vshll.u32 %v4830, 16
  %v4876 = vrot.slane %v4874, 1
  %v4877 = vsel %vm159, %v4872, %v4876
  %v4878 = vshrl.u32 %v4830, 16
  %v4880 = vor.u32 %v4878, %v4876
  %v4882 = vshll.u32 %v4831, 16
  %v4884 = vrot.slane %v4882, 1
  %v4885 = vsel %vm159, %v4880, %v4884
  %v4886 = vshrl.u32 %v4831, 16
  %v4888 = vor.u32 %v4886, %v4884
  %v4890 = vshll.u32 %v4832, 16
  %v4892 = vrot.slane %v4890, 1
  %v4893 = vsel %vm159, %v4888, %v4892
  %v4894 = vshrl.u32 %v4832, 16
  %v4896 = vor.u32 %v4894, %v4892
  %v4898 = vshll.u32 %v4833, 16
  %v4900 = vrot.slane %v4898, 1
  %v4901 = vsel %vm159, %v4896, %v4900
  %v4902 = vshrl.u32 %v4833, 16
  %v4904 = vor.u32 %v4902, %v4900
  %v4906 = vshll.u32 %v4834, 16
  %v4908 = vrot.slane %v4906, 1
  %v4909 = vsel %vm159, %v4904, %v4908
  %v4910 = vshrl.u32 %v4834, 16
  %v4912 = vor.u32 %v4910, %v4908
  %v4914 = vshll.u32 %v4835, 16
  %v4916 = vrot.slane %v4914, 1
  %v4917 = vsel %vm159, %v4912, %v4916
  %v4918 = vshrl.u32 %v4835, 16
  %v4920 = vor.u32 %v4918, %v4916
  %v4922 = vshll.u32 %v4836, 16
  %v4924 = vrot.slane %v4922, 1
  %v4925 = vsel %vm159, %v4920, %v4924
  %v4926 = vshrl.u32 %v4836, 16
  %v4928 = vor.u32 %v4926, %v4924
  %v4930 = vshll.u32 %v4837, 16
  %v4932 = vrot.slane %v4930, 1
  %v4933 = vsel %vm159, %v4928, %v4932
  %v4934 = vshrl.u32 %v4837, 16
  %v4936 = vor.u32 %v4934, %v4932
  %v4938 = vshll.u32 %v4838, 16
  %v4940 = vrot.slane %v4938, 1
  %v4941 = vsel %vm159, %v4936, %v4940
  %v4942 = vshrl.u32 %v4838, 16
  %v4944 = vor.u32 %v4942, %v4940
  %v4946 = vshll.u32 %v4839, 16
  %v4948 = vrot.slane %v4946, 1
  %v4949 = vsel %vm159, %v4944, %v4948
  %v4950 = vshrl.u32 %v4839, 16
  %v4952 = vor.u32 %v4950, %v4948
  %v4954 = vshll.u32 %v4840, 16
  %v4956 = vrot.slane %v4954, 1
  %v4957 = vsel %vm159, %v4952, %v4956
  %v4958 = vshrl.u32 %v4840, 16
  %v4960 = vor.u32 %v4958, %v4956
  %v4962 = vshll.u32 %v4841, 16
  %v4964 = vrot.slane %v4962, 1
  %v4965 = vsel %vm159, %v4960, %v4964
  %v4966 = vshrl.u32 %v4841, 16
  %v4968 = vor.u32 %v4966, %v4964
  %v5001 = vunpack.c.l.b16 %v4746
  %v5002 = vunpack.c.l.b16 %v4747
  %v5003 = vunpack.c.l.b16 %v4748
  %v5004 = vunpack.c.l.b16 %v4749
  %v5005 = vunpack.c.l.b16 %v4750
  %v5006 = vunpack.c.l.b16 %v4751
  %v5007 = vunpack.c.l.b16 %v4752
  %v5008 = vunpack.c.l.b16 %v4753
  %v5009 = vunpack.c.l.b16 %v4754
  %v5010 = vunpack.c.l.b16 %v4755
  %v5011 = vunpack.c.l.b16 %v4756
  %v5012 = vunpack.c.l.b16 %v4757
  %v5013 = vunpack.c.l.b16 %v4758
  %v5014 = vunpack.c.l.b16 %v4759
  %v5015 = vunpack.c.l.b16 %v4760
  %v5016 = vunpack.c.l.b16 %v4761
  %v5017 = vpack.c.b16 %v5002, %v5001
  %v5018 = vpack.c.b16 %v5004, %v5003
  %v5019 = vpack.c.b16 %v5006, %v5005
  %v5020 = vpack.c.b16 %v5008, %v5007
  %v5021 = vpack.c.b16 %v5010, %v5009
  %v5022 = vpack.c.b16 %v5012, %v5011
  %v5023 = vpack.c.b16 %v5014, %v5013
  %v5024 = vpack.c.b16 %v5016, %v5015
  %5033 = vmatpush.bf16.msra.mxu0 %v5024
  %5034 = vmatpush.bf16.msra.mxu0 %v5023
  %5035 = vmatpush.bf16.msra.mxu0 %v5022
  %5036 = vmatpush.bf16.msra.mxu0 %v5021
  %5037 = vmatpush.bf16.msra.mxu0 %v5020
  %5038 = vmatpush.bf16.msra.mxu0 %v5019
  %5039 = vmatpush.bf16.msra.mxu0 %v5018
  %5040 = vmatpush.bf16.msra.mxu0 %v5017
  %5041 = vmatmul.bf16.gmra.mxu0 %v4853
  %v5042 = vpop.f32.mrf.mxu0
  %v5043 = vadd.f32 0.0, %v5042
  %v5044 = vpop.f32.mrf.mxu0
  %v5045 = vadd.f32 0.0, %v5044
  %5046 = vmatmul.bf16.gmra.mxu0 %v4861
  %v5047 = vpop.f32.mrf.mxu0
  %v5048 = vadd.f32 0.0, %v5047
  %v5049 = vpop.f32.mrf.mxu0
  %v5050 = vadd.f32 0.0, %v5049
  %5051 = vmatmul.bf16.gmra.mxu0 %v4869
  %v5052 = vpop.f32.mrf.mxu0
  %v5053 = vadd.f32 0.0, %v5052
  %v5054 = vpop.f32.mrf.mxu0
  %v5055 = vadd.f32 0.0, %v5054
  %5056 = vmatmul.bf16.gmra.mxu0 %v4877
  %v5057 = vpop.f32.mrf.mxu0
  %v5058 = vadd.f32 0.0, %v5057
  %v5059 = vpop.f32.mrf.mxu0
  %v5060 = vadd.f32 0.0, %v5059
  %5061 = vmatmul.bf16.gmra.mxu0 %v4885
  %v5062 = vpop.f32.mrf.mxu0
  %v5063 = vadd.f32 0.0, %v5062
  %v5064 = vpop.f32.mrf.mxu0
  %v5065 = vadd.f32 0.0, %v5064
  %5066 = vmatmul.bf16.gmra.mxu0 %v4893
  %v5067 = vpop.f32.mrf.mxu0
  %v5068 = vadd.f32 0.0, %v5067
  %v5069 = vpop.f32.mrf.mxu0
  %v5070 = vadd.f32 0.0, %v5069
  %5071 = vmatmul.bf16.gmra.mxu0 %v4901
  %v5072 = vpop.f32.mrf.mxu0
  %v5073 = vadd.f32 0.0, %v5072
  %v5074 = vpop.f32.mrf.mxu0
  %v5075 = vadd.f32 0.0, %v5074
  %5076 = vmatmul.bf16.gmra.mxu0 %v4909
  %v5077 = vpop.f32.mrf.mxu0
  %v5078 = vadd.f32 0.0, %v5077
  %v5079 = vpop.f32.mrf.mxu0
  %v5080 = vadd.f32 0.0, %v5079
  %5081 = vmatmul.bf16.gmra.mxu0 %v4917
  %v5082 = vpop.f32.mrf.mxu0
  %v5083 = vadd.f32 0.0, %v5082
  %v5084 = vpop.f32.mrf.mxu0
  %v5085 = vadd.f32 0.0, %v5084
  %5086 = vmatmul.bf16.gmra.mxu0 %v4925
  %v5087 = vpop.f32.mrf.mxu0
  %v5088 = vadd.f32 0.0, %v5087
  %v5089 = vpop.f32.mrf.mxu0
  %v5090 = vadd.f32 0.0, %v5089
  %5091 = vmatmul.bf16.gmra.mxu0 %v4933
  %v5092 = vpop.f32.mrf.mxu0
  %v5093 = vadd.f32 0.0, %v5092
  %v5094 = vpop.f32.mrf.mxu0
  %v5095 = vadd.f32 0.0, %v5094
  %5096 = vmatmul.bf16.gmra.mxu0 %v4941
  %v5097 = vpop.f32.mrf.mxu0
  %v5098 = vadd.f32 0.0, %v5097
  %v5099 = vpop.f32.mrf.mxu0
  %v5100 = vadd.f32 0.0, %v5099
  %5101 = vmatmul.bf16.gmra.mxu0 %v4949
  %v5102 = vpop.f32.mrf.mxu0
  %v5103 = vadd.f32 0.0, %v5102
  %v5104 = vpop.f32.mrf.mxu0
  %v5105 = vadd.f32 0.0, %v5104
  %5106 = vmatmul.bf16.gmra.mxu0 %v4957
  %v5107 = vpop.f32.mrf.mxu0
  %v5108 = vadd.f32 0.0, %v5107
  %v5109 = vpop.f32.mrf.mxu0
  %v5110 = vadd.f32 0.0, %v5109
  %5111 = vmatmul.bf16.gmra.mxu0 %v4965
  %v5112 = vpop.f32.mrf.mxu0
  %v5113 = vadd.f32 0.0, %v5112
  %v5114 = vpop.f32.mrf.mxu0
  %v5115 = vadd.f32 0.0, %v5114
  %5116 = vmatmul.bf16.gmra.mxu0 %v4968
  %v5117 = vpop.f32.mrf.mxu0
  %v5118 = vadd.f32 0.0, %v5117
  %v5119 = vpop.f32.mrf.mxu0
  %v5120 = vadd.f32 0.0, %v5119
  %5121 = vdwg.mxu0
  %v5122 = vadd.f32 %v4682, %v5043
  %v5123 = vadd.f32 %v4683, %v5045
  %v5124 = vadd.f32 %v4684, %v5048
  %v5125 = vadd.f32 %v4685, %v5050
  %v5126 = vadd.f32 %v4686, %v5053
  %v5127 = vadd.f32 %v4687, %v5055
  %v5128 = vadd.f32 %v4688, %v5058
  %v5129 = vadd.f32 %v4689, %v5060
  %v5130 = vadd.f32 %v4690, %v5063
  %v5131 = vadd.f32 %v4691, %v5065
  %v5132 = vadd.f32 %v4692, %v5068
  %v5133 = vadd.f32 %v4693, %v5070
  %v5134 = vadd.f32 %v4694, %v5073
  %v5135 = vadd.f32 %v4695, %v5075
  %v5136 = vadd.f32 %v4696, %v5078
  %v5137 = vadd.f32 %v4697, %v5080
  %v5138 = vadd.f32 %v4698, %v5083
  %v5139 = vadd.f32 %v4699, %v5085
  %v5140 = vadd.f32 %v4700, %v5088
  %v5141 = vadd.f32 %v4701, %v5090
  %v5142 = vadd.f32 %v4702, %v5093
  %v5143 = vadd.f32 %v4703, %v5095
  %v5144 = vadd.f32 %v4704, %v5098
  %v5145 = vadd.f32 %v4705, %v5100
  %v5146 = vadd.f32 %v4706, %v5103
  %v5147 = vadd.f32 %v4707, %v5105
  %v5148 = vadd.f32 %v4708, %v5108
  %v5149 = vadd.f32 %v4709, %v5110
  %v5150 = vadd.f32 %v4710, %v5113
  %v5151 = vadd.f32 %v4711, %v5115
  %v5152 = vadd.f32 %v4712, %v5118
  %v5153 = vadd.f32 %v4713, %v5120
  %v5154 = vld [vmem:[%s3786 + $0x8] sm:$0xe]
  %v5155 = vld [vmem:[%s3786 + $0xc] sm:$0xf]
  %v5156 = vld [vmem:[%s3786 + $0x10] sm:$0xf]
  %v5157 = vld [vmem:[%s3786 + $0x14] sm:$0xf]
  %v5158 = vld [vmem:[%s3786 + $0x18] sm:$0xf]
  %v5159 = vld [vmem:[%s3786 + $0x1c] sm:$0xf]
  %v5160 = vld [vmem:[%s3786 + $0x20] sm:$0xf]
  %v5161 = vld [vmem:[%s3786 + $0x24] sm:$0xf]
  %v5162 = vld [vmem:[%s3786 + $0x28] sm:$0xf]
  %v5163 = vld [vmem:[%s3786 + $0x2c] sm:$0xf]
  %v5164 = vld [vmem:[%s3786 + $0x30] sm:$0xf]
  %v5165 = vld [vmem:[%s3786 + $0x34] sm:$0xf]
  %v5166 = vld [vmem:[%s3786 + $0x38] sm:$0xf]
  %v5167 = vld [vmem:[%s3786 + $0x3c] sm:$0xf]
  %v5168 = vld [vmem:[%s3786 + $0x40] sm:$0xf]
  %v5169 = vld [vmem:[%s3786 + $0x44] sm:$0xf]
  %v5170 = vld [vmem:[%s3786 + $0x48] sm:$0xf]
  %v5171 = vld [vmem:[%s3786 + $0x4c] sm:$0xf]
  %v5172 = vld [vmem:[%s3786 + $0x50] sm:$0xf]
  %v5173 = vld [vmem:[%s3786 + $0x54] sm:$0xf]
  %v5174 = vld [vmem:[%s3786 + $0x58] sm:$0xf]
  %v5175 = vld [vmem:[%s3786 + $0x5c] sm:$0xf]
  %v5176 = vld [vmem:[%s3786 + $0x60] sm:$0xf]
  %v5177 = vld [vmem:[%s3786 + $0x64] sm:$0xf]
  %v5178 = vld [vmem:[%s3786 + $0x68] sm:$0xf]
  %v5179 = vld [vmem:[%s3786 + $0x6c] sm:$0xf]
  %v5180 = vld [vmem:[%s3786 + $0x70] sm:$0xf]
  %v5181 = vld [vmem:[%s3786 + $0x74] sm:$0xf]
  %v5182 = vld [vmem:[%s3786 + $0x78] sm:$0xf]
  %v5183 = vld [vmem:[%s3786 + $0x7c] sm:$0xf]
  %v5184 = vld [vmem:[%s3786 + $0x80] sm:$0xf]
  %v5185 = vld [vmem:[%s3786 + $0x84] sm:$0xf]
  %v5186 = vld [vmem:[%s3786 + $0x88] sm:$0x1]
  %v5187 = vld [vmem:[%s1419] sm:$0xf]
  %v5188 = vld [vmem:[%s1419 + $0x4] sm:$0xf]
  %v5189 = vld [vmem:[%s1419 + $0x8] sm:$0xf]
  %v5190 = vld [vmem:[%s1419 + $0xc] sm:$0xf]
  %v5191 = vld [vmem:[%s1419 + $0x10] sm:$0xf]
  %v5192 = vld [vmem:[%s1419 + $0x14] sm:$0xf]
  %v5193 = vld [vmem:[%s1419 + $0x18] sm:$0xf]
  %v5194 = vld [vmem:[%s1419 + $0x1c] sm:$0xf]
  %v5195 = vld [vmem:[%s1419 + $0x20] sm:$0xf]
  %v5196 = vld [vmem:[%s1419 + $0x24] sm:$0xf]
  %v5197 = vld [vmem:[%s1419 + $0x28] sm:$0xf]
  %v5198 = vld [vmem:[%s1419 + $0x2c] sm:$0xf]
  %v5199 = vld [vmem:[%s1419 + $0x30] sm:$0xf]
  %v5200 = vld [vmem:[%s1419 + $0x34] sm:$0xf]
  %v5201 = vld [vmem:[%s1419 + $0x38] sm:$0xf]
  %v5202 = vld [vmem:[%s1419 + $0x3c] sm:$0xf]
  %v5236 = vunpack.c.l.b16 %v5154
  %v5237 = vunpack.c.l.b16 %v5155
  %v5238 = vunpack.c.l.b16 %v5156
  %v5239 = vunpack.c.l.b16 %v5157
  %v5240 = vunpack.c.l.b16 %v5158
  %v5241 = vunpack.c.l.b16 %v5159
  %v5242 = vunpack.c.l.b16 %v5160
  %v5243 = vunpack.c.l.b16 %v5161
  %v5244 = vunpack.c.l.b16 %v5162
  %v5245 = vunpack.c.l.b16 %v5163
  %v5246 = vunpack.c.l.b16 %v5164
  %v5247 = vunpack.c.l.b16 %v5165
  %v5248 = vunpack.c.l.b16 %v5166
  %v5249 = vunpack.c.l.b16 %v5167
  %v5250 = vunpack.c.l.b16 %v5168
  %v5251 = vunpack.c.l.b16 %v5169
  %v5252 = vunpack.c.l.b16 %v5170
  %v5253 = vunpack.c.l.b16 %v5171
  %v5254 = vunpack.c.l.b16 %v5172
  %v5255 = vunpack.c.l.b16 %v5173
  %v5256 = vunpack.c.l.b16 %v5174
  %v5257 = vunpack.c.l.b16 %v5175
  %v5258 = vunpack.c.l.b16 %v5176
  %v5259 = vunpack.c.l.b16 %v5177
  %v5260 = vunpack.c.l.b16 %v5178
  %v5261 = vunpack.c.l.b16 %v5179
  %v5262 = vunpack.c.l.b16 %v5180
  %v5263 = vunpack.c.l.b16 %v5181
  %v5264 = vunpack.c.l.b16 %v5182
  %v5265 = vunpack.c.l.b16 %v5183
  %v5266 = vunpack.c.l.b16 %v5184
  %v5267 = vunpack.c.l.b16 %v5185
  %v5268 = vunpack.c.l.b16 %v5186
  %v5269 = vpack.c.b16 %v5237, %v5236
  %v5270 = vpack.c.b16 %v5239, %v5238
  %v5271 = vpack.c.b16 %v5241, %v5240
  %v5272 = vpack.c.b16 %v5243, %v5242
  %v5273 = vpack.c.b16 %v5245, %v5244
  %v5274 = vpack.c.b16 %v5247, %v5246
  %v5275 = vpack.c.b16 %v5249, %v5248
  %v5276 = vpack.c.b16 %v5251, %v5250
  %v5277 = vpack.c.b16 %v5253, %v5252
  %v5278 = vpack.c.b16 %v5255, %v5254
  %v5279 = vpack.c.b16 %v5257, %v5256
  %v5280 = vpack.c.b16 %v5259, %v5258
  %v5281 = vpack.c.b16 %v5261, %v5260
  %v5282 = vpack.c.b16 %v5263, %v5262
  %v5283 = vpack.c.b16 %v5265, %v5264
  %v5284 = vpack.c.b16 %v5267, %v5266
  %v5285 = vpack.c.b16 %v5268, %v5268
  %v5286 = vrot.slane %v5269, 1
  %v5287 = vrot.slane %v5270, 1
  %v5288 = vsel %vm726, %v5286, %v5287
  %v5289 = vrot.slane %v5271, 1
  %v5290 = vsel %vm726, %v5287, %v5289
  %v5291 = vrot.slane %v5272, 1
  %v5292 = vsel %vm726, %v5289, %v5291
  %v5293 = vrot.slane %v5273, 1
  %v5294 = vsel %vm726, %v5291, %v5293
  %v5295 = vrot.slane %v5274, 1
  %v5296 = vsel %vm726, %v5293, %v5295
  %v5297 = vrot.slane %v5275, 1
  %v5298 = vsel %vm726, %v5295, %v5297
  %v5299 = vrot.slane %v5276, 1
  %v5300 = vsel %vm726, %v5297, %v5299
  %v5301 = vrot.slane %v5277, 1
  %v5302 = vsel %vm726, %v5299, %v5301
  %v5303 = vrot.slane %v5278, 1
  %v5304 = vsel %vm726, %v5301, %v5303
  %v5305 = vrot.slane %v5279, 1
  %v5306 = vsel %vm726, %v5303, %v5305
  %v5307 = vrot.slane %v5280, 1
  %v5308 = vsel %vm726, %v5305, %v5307
  %v5309 = vrot.slane %v5281, 1
  %v5310 = vsel %vm726, %v5307, %v5309
  %v5311 = vrot.slane %v5282, 1
  %v5312 = vsel %vm726, %v5309, %v5311
  %v5313 = vrot.slane %v5283, 1
  %v5314 = vsel %vm726, %v5311, %v5313
  %v5315 = vrot.slane %v5284, 1
  %v5316 = vsel %vm726, %v5313, %v5315
  %v5317 = vrot.slane %v5285, 1
  %v5318 = vsel %vm726, %v5315, %v5317
  %v5351 = vunpack.c.l.b16 %v5187
  %v5352 = vunpack.c.l.b16 %v5188
  %v5353 = vunpack.c.l.b16 %v5189
  %v5354 = vunpack.c.l.b16 %v5190
  %v5355 = vunpack.c.l.b16 %v5191
  %v5356 = vunpack.c.l.b16 %v5192
  %v5357 = vunpack.c.l.b16 %v5193
  %v5358 = vunpack.c.l.b16 %v5194
  %v5359 = vunpack.c.l.b16 %v5195
  %v5360 = vunpack.c.l.b16 %v5196
  %v5361 = vunpack.c.l.b16 %v5197
  %v5362 = vunpack.c.l.b16 %v5198
  %v5363 = vunpack.c.l.b16 %v5199
  %v5364 = vunpack.c.l.b16 %v5200
  %v5365 = vunpack.c.l.b16 %v5201
  %v5366 = vunpack.c.l.b16 %v5202
  %v5367 = vpack.c.b16 %v5352, %v5351
  %v5368 = vpack.c.b16 %v5354, %v5353
  %v5369 = vpack.c.b16 %v5356, %v5355
  %v5370 = vpack.c.b16 %v5358, %v5357
  %v5371 = vpack.c.b16 %v5360, %v5359
  %v5372 = vpack.c.b16 %v5362, %v5361
  %v5373 = vpack.c.b16 %v5364, %v5363
  %v5374 = vpack.c.b16 %v5366, %v5365
  %5383 = vmatpush.bf16.msra.mxu0 %v5374
  %5384 = vmatpush.bf16.msra.mxu0 %v5373
  %5385 = vmatpush.bf16.msra.mxu0 %v5372
  %5386 = vmatpush.bf16.msra.mxu0 %v5371
  %5387 = vmatpush.bf16.msra.mxu0 %v5370
  %5388 = vmatpush.bf16.msra.mxu0 %v5369
  %5389 = vmatpush.bf16.msra.mxu0 %v5368
  %5390 = vmatpush.bf16.msra.mxu0 %v5367
  %5391 = vmatmul.bf16.gmra.mxu0 %v5288
  %v5392 = vpop.f32.mrf.mxu0
  %v5393 = vadd.f32 0.0, %v5392
  %v5394 = vpop.f32.mrf.mxu0
  %v5395 = vadd.f32 0.0, %v5394
  %5396 = vmatmul.bf16.gmra.mxu0 %v5290
  %v5397 = vpop.f32.mrf.mxu0
  %v5398 = vadd.f32 0.0, %v5397
  %v5399 = vpop.f32.mrf.mxu0
  %v5400 = vadd.f32 0.0, %v5399
  %5401 = vmatmul.bf16.gmra.mxu0 %v5292
  %v5402 = vpop.f32.mrf.mxu0
  %v5403 = vadd.f32 0.0, %v5402
  %v5404 = vpop.f32.mrf.mxu0
  %v5405 = vadd.f32 0.0, %v5404
  %5406 = vmatmul.bf16.gmra.mxu0 %v5294
  %v5407 = vpop.f32.mrf.mxu0
  %v5408 = vadd.f32 0.0, %v5407
  %v5409 = vpop.f32.mrf.mxu0
  %v5410 = vadd.f32 0.0, %v5409
  %5411 = vmatmul.bf16.gmra.mxu0 %v5296
  %v5412 = vpop.f32.mrf.mxu0
  %v5413 = vadd.f32 0.0, %v5412
  %v5414 = vpop.f32.mrf.mxu0
  %v5415 = vadd.f32 0.0, %v5414
  %5416 = vmatmul.bf16.gmra.mxu0 %v5298
  %v5417 = vpop.f32.mrf.mxu0
  %v5418 = vadd.f32 0.0, %v5417
  %v5419 = vpop.f32.mrf.mxu0
  %v5420 = vadd.f32 0.0, %v5419
  %5421 = vmatmul.bf16.gmra.mxu0 %v5300
  %v5422 = vpop.f32.mrf.mxu0
  %v5423 = vadd.f32 0.0, %v5422
  %v5424 = vpop.f32.mrf.mxu0
  %v5425 = vadd.f32 0.0, %v5424
  %5426 = vmatmul.bf16.gmra.mxu0 %v5302
  %v5427 = vpop.f32.mrf.mxu0
  %v5428 = vadd.f32 0.0, %v5427
  %v5429 = vpop.f32.mrf.mxu0
  %v5430 = vadd.f32 0.0, %v5429
  %5431 = vmatmul.bf16.gmra.mxu0 %v5304
  %v5432 = vpop.f32.mrf.mxu0
  %v5433 = vadd.f32 0.0, %v5432
  %v5434 = vpop.f32.mrf.mxu0
  %v5435 = vadd.f32 0.0, %v5434
  %5436 = vmatmul.bf16.gmra.mxu0 %v5306
  %v5437 = vpop.f32.mrf.mxu0
  %v5438 = vadd.f32 0.0, %v5437
  %v5439 = vpop.f32.mrf.mxu0
  %v5440 = vadd.f32 0.0, %v5439
  %5441 = vmatmul.bf16.gmra.mxu0 %v5308
  %v5442 = vpop.f32.mrf.mxu0
  %v5443 = vadd.f32 0.0, %v5442
  %v5444 = vpop.f32.mrf.mxu0
  %v5445 = vadd.f32 0.0, %v5444
  %5446 = vmatmul.bf16.gmra.mxu0 %v5310
  %v5447 = vpop.f32.mrf.mxu0
  %v5448 = vadd.f32 0.0, %v5447
  %v5449 = vpop.f32.mrf.mxu0
  %v5450 = vadd.f32 0.0, %v5449
  %5451 = vmatmul.bf16.gmra.mxu0 %v5312
  %v5452 = vpop.f32.mrf.mxu0
  %v5453 = vadd.f32 0.0, %v5452
  %v5454 = vpop.f32.mrf.mxu0
  %v5455 = vadd.f32 0.0, %v5454
  %5456 = vmatmul.bf16.gmra.mxu0 %v5314
  %v5457 = vpop.f32.mrf.mxu0
  %v5458 = vadd.f32 0.0, %v5457
  %v5459 = vpop.f32.mrf.mxu0
  %v5460 = vadd.f32 0.0, %v5459
  %5461 = vmatmul.bf16.gmra.mxu0 %v5316
  %v5462 = vpop.f32.mrf.mxu0
  %v5463 = vadd.f32 0.0, %v5462
  %v5464 = vpop.f32.mrf.mxu0
  %v5465 = vadd.f32 0.0, %v5464
  %5466 = vmatmul.bf16.gmra.mxu0 %v5318
  %v5467 = vpop.f32.mrf.mxu0
  %v5468 = vadd.f32 0.0, %v5467
  %v5469 = vpop.f32.mrf.mxu0
  %v5470 = vadd.f32 0.0, %v5469
  %5471 = vdwg.mxu0
  %v5472 = vadd.f32 %v5122, %v5393
  %v5473 = vadd.f32 %v5123, %v5395
  %v5474 = vadd.f32 %v5124, %v5398
  %v5475 = vadd.f32 %v5125, %v5400
  %v5476 = vadd.f32 %v5126, %v5403
  %v5477 = vadd.f32 %v5127, %v5405
  %v5478 = vadd.f32 %v5128, %v5408
  %v5479 = vadd.f32 %v5129, %v5410
  %v5480 = vadd.f32 %v5130, %v5413
  %v5481 = vadd.f32 %v5131, %v5415
  %v5482 = vadd.f32 %v5132, %v5418
  %v5483 = vadd.f32 %v5133, %v5420
  %v5484 = vadd.f32 %v5134, %v5423
  %v5485 = vadd.f32 %v5135, %v5425
  %v5486 = vadd.f32 %v5136, %v5428
  %v5487 = vadd.f32 %v5137, %v5430
  %v5488 = vadd.f32 %v5138, %v5433
  %v5489 = vadd.f32 %v5139, %v5435
  %v5490 = vadd.f32 %v5140, %v5438
  %v5491 = vadd.f32 %v5141, %v5440
  %v5492 = vadd.f32 %v5142, %v5443
  %v5493 = vadd.f32 %v5143, %v5445
  %v5494 = vadd.f32 %v5144, %v5448
  %v5495 = vadd.f32 %v5145, %v5450
  %v5496 = vadd.f32 %v5146, %v5453
  %v5497 = vadd.f32 %v5147, %v5455
  %v5498 = vadd.f32 %v5148, %v5458
  %v5499 = vadd.f32 %v5149, %v5460
  %v5500 = vadd.f32 %v5150, %v5463
  %v5501 = vadd.f32 %v5151, %v5465
  %v5502 = vadd.f32 %v5152, %v5468
  %v5503 = vadd.f32 %v5153, %v5470
  %v5504 = vld [vmem:[%s1737] sm:$0xf]
  %v5505 = vld [vmem:[%s1737 + $0x4] sm:$0xf]
  %v5506 = vld [vmem:[%s1737 + $0x8] sm:$0xf]
  %v5507 = vld [vmem:[%s1737 + $0xc] sm:$0xf]
  %v5508 = vld [vmem:[%s1737 + $0x10] sm:$0xf]
  %v5509 = vld [vmem:[%s1737 + $0x14] sm:$0xf]
  %v5510 = vld [vmem:[%s1737 + $0x18] sm:$0xf]
  %v5511 = vld [vmem:[%s1737 + $0x1c] sm:$0xf]
  %v5512 = vld [vmem:[%s1737 + $0x20] sm:$0xf]
  %v5513 = vld [vmem:[%s1737 + $0x24] sm:$0xf]
  %v5514 = vld [vmem:[%s1737 + $0x28] sm:$0xf]
  %v5515 = vld [vmem:[%s1737 + $0x2c] sm:$0xf]
  %v5516 = vld [vmem:[%s1737 + $0x30] sm:$0xf]
  %v5517 = vld [vmem:[%s1737 + $0x34] sm:$0xf]
  %v5518 = vld [vmem:[%s1737 + $0x38] sm:$0xf]
  %v5519 = vld [vmem:[%s1737 + $0x3c] sm:$0xf]
  %v5521 = vshrl.u32 %v5269, 16
  %v5523 = vrot.slane %v5521, 1
  %v5524 = vshll.u32 %v5269, 16
  %v5526 = vrot.slane %v5524, 2
  %v5527 = vor.u32 %v5523, %v5526
  %v5529 = vshrl.u32 %v5270, 16
  %v5531 = vrot.slane %v5529, 1
  %v5532 = vshll.u32 %v5270, 16
  %v5534 = vrot.slane %v5532, 2
  %v5535 = vor.u32 %v5531, %v5534
  %v5536 = vsel %vm1754, %v5527, %v5535
  %v5538 = vshrl.u32 %v5271, 16
  %v5540 = vrot.slane %v5538, 1
  %v5541 = vshll.u32 %v5271, 16
  %v5543 = vrot.slane %v5541, 2
  %v5544 = vor.u32 %v5540, %v5543
  %v5545 = vsel %vm1754, %v5535, %v5544
  %v5547 = vshrl.u32 %v5272, 16
  %v5549 = vrot.slane %v5547, 1
  %v5550 = vshll.u32 %v5272, 16
  %v5552 = vrot.slane %v5550, 2
  %v5553 = vor.u32 %v5549, %v5552
  %v5554 = vsel %vm1754, %v5544, %v5553
  %v5556 = vshrl.u32 %v5273, 16
  %v5558 = vrot.slane %v5556, 1
  %v5559 = vshll.u32 %v5273, 16
  %v5561 = vrot.slane %v5559, 2
  %v5562 = vor.u32 %v5558, %v5561
  %v5563 = vsel %vm1754, %v5553, %v5562
  %v5565 = vshrl.u32 %v5274, 16
  %v5567 = vrot.slane %v5565, 1
  %v5568 = vshll.u32 %v5274, 16
  %v5570 = vrot.slane %v5568, 2
  %v5571 = vor.u32 %v5567, %v5570
  %v5572 = vsel %vm1754, %v5562, %v5571
  %v5574 = vshrl.u32 %v5275, 16
  %v5576 = vrot.slane %v5574, 1
  %v5577 = vshll.u32 %v5275, 16
  %v5579 = vrot.slane %v5577, 2
  %v5580 = vor.u32 %v5576, %v5579
  %v5581 = vsel %vm1754, %v5571, %v5580
  %v5583 = vshrl.u32 %v5276, 16
  %v5585 = vrot.slane %v5583, 1
  %v5586 = vshll.u32 %v5276, 16
  %v5588 = vrot.slane %v5586, 2
  %v5589 = vor.u32 %v5585, %v5588
  %v5590 = vsel %vm1754, %v5580, %v5589
  %v5592 = vshrl.u32 %v5277, 16
  %v5594 = vrot.slane %v5592, 1
  %v5595 = vshll.u32 %v5277, 16
  %v5597 = vrot.slane %v5595, 2
  %v5598 = vor.u32 %v5594, %v5597
  %v5599 = vsel %vm1754, %v5589, %v5598
  %v5601 = vshrl.u32 %v5278, 16
  %v5603 = vrot.slane %v5601, 1
  %v5604 = vshll.u32 %v5278, 16
  %v5606 = vrot.slane %v5604, 2
  %v5607 = vor.u32 %v5603, %v5606
  %v5608 = vsel %vm1754, %v5598, %v5607
  %v5610 = vshrl.u32 %v5279, 16
  %v5612 = vrot.slane %v5610, 1
  %v5613 = vshll.u32 %v5279, 16
  %v5615 = vrot.slane %v5613, 2
  %v5616 = vor.u32 %v5612, %v5615
  %v5617 = vsel %vm1754, %v5607, %v5616
  %v5619 = vshrl.u32 %v5280, 16
  %v5621 = vrot.slane %v5619, 1
  %v5622 = vshll.u32 %v5280, 16
  %v5624 = vrot.slane %v5622, 2
  %v5625 = vor.u32 %v5621, %v5624
  %v5626 = vsel %vm1754, %v5616, %v5625
  %v5628 = vshrl.u32 %v5281, 16
  %v5630 = vrot.slane %v5628, 1
  %v5631 = vshll.u32 %v5281, 16
  %v5633 = vrot.slane %v5631, 2
  %v5634 = vor.u32 %v5630, %v5633
  %v5635 = vsel %vm1754, %v5625, %v5634
  %v5637 = vshrl.u32 %v5282, 16
  %v5639 = vrot.slane %v5637, 1
  %v5640 = vshll.u32 %v5282, 16
  %v5642 = vrot.slane %v5640, 2
  %v5643 = vor.u32 %v5639, %v5642
  %v5644 = vsel %vm1754, %v5634, %v5643
  %v5646 = vshrl.u32 %v5283, 16
  %v5648 = vrot.slane %v5646, 1
  %v5649 = vshll.u32 %v5283, 16
  %v5651 = vrot.slane %v5649, 2
  %v5652 = vor.u32 %v5648, %v5651
  %v5653 = vsel %vm1754, %v5643, %v5652
  %v5655 = vshrl.u32 %v5284, 16
  %v5657 = vrot.slane %v5655, 1
  %v5658 = vshll.u32 %v5284, 16
  %v5660 = vrot.slane %v5658, 2
  %v5661 = vor.u32 %v5657, %v5660
  %v5662 = vsel %vm1754, %v5652, %v5661
  %v5664 = vshrl.u32 %v5285, 16
  %v5666 = vrot.slane %v5664, 1
  %v5667 = vshll.u32 %v5285, 16
  %v5669 = vrot.slane %v5667, 2
  %v5670 = vor.u32 %v5666, %v5669
  %v5671 = vsel %vm1754, %v5661, %v5670
  %v5704 = vunpack.c.l.b16 %v5504
  %v5705 = vunpack.c.l.b16 %v5505
  %v5706 = vunpack.c.l.b16 %v5506
  %v5707 = vunpack.c.l.b16 %v5507
  %v5708 = vunpack.c.l.b16 %v5508
  %v5709 = vunpack.c.l.b16 %v5509
  %v5710 = vunpack.c.l.b16 %v5510
  %v5711 = vunpack.c.l.b16 %v5511
  %v5712 = vunpack.c.l.b16 %v5512
  %v5713 = vunpack.c.l.b16 %v5513
  %v5714 = vunpack.c.l.b16 %v5514
  %v5715 = vunpack.c.l.b16 %v5515
  %v5716 = vunpack.c.l.b16 %v5516
  %v5717 = vunpack.c.l.b16 %v5517
  %v5718 = vunpack.c.l.b16 %v5518
  %v5719 = vunpack.c.l.b16 %v5519
  %v5720 = vpack.c.b16 %v5705, %v5704
  %v5721 = vpack.c.b16 %v5707, %v5706
  %v5722 = vpack.c.b16 %v5709, %v5708
  %v5723 = vpack.c.b16 %v5711, %v5710
  %v5724 = vpack.c.b16 %v5713, %v5712
  %v5725 = vpack.c.b16 %v5715, %v5714
  %v5726 = vpack.c.b16 %v5717, %v5716
  %v5727 = vpack.c.b16 %v5719, %v5718
  %5736 = vmatpush.bf16.msra.mxu0 %v5727
  %5737 = vmatpush.bf16.msra.mxu0 %v5726
  %5738 = vmatpush.bf16.msra.mxu0 %v5725
  %5739 = vmatpush.bf16.msra.mxu0 %v5724
  %5740 = vmatpush.bf16.msra.mxu0 %v5723
  %5741 = vmatpush.bf16.msra.mxu0 %v5722
  %5742 = vmatpush.bf16.msra.mxu0 %v5721
  %5743 = vmatpush.bf16.msra.mxu0 %v5720
  %5744 = vmatmul.bf16.gmra.mxu0 %v5536
  %v5745 = vpop.f32.mrf.mxu0
  %v5746 = vadd.f32 0.0, %v5745
  %v5747 = vpop.f32.mrf.mxu0
  %v5748 = vadd.f32 0.0, %v5747
  %5749 = vmatmul.bf16.gmra.mxu0 %v5545
  %v5750 = vpop.f32.mrf.mxu0
  %v5751 = vadd.f32 0.0, %v5750
  %v5752 = vpop.f32.mrf.mxu0
  %v5753 = vadd.f32 0.0, %v5752
  %5754 = vmatmul.bf16.gmra.mxu0 %v5554
  %v5755 = vpop.f32.mrf.mxu0
  %v5756 = vadd.f32 0.0, %v5755
  %v5757 = vpop.f32.mrf.mxu0
  %v5758 = vadd.f32 0.0, %v5757
  %5759 = vmatmul.bf16.gmra.mxu0 %v5563
  %v5760 = vpop.f32.mrf.mxu0
  %v5761 = vadd.f32 0.0, %v5760
  %v5762 = vpop.f32.mrf.mxu0
  %v5763 = vadd.f32 0.0, %v5762
  %5764 = vmatmul.bf16.gmra.mxu0 %v5572
  %v5765 = vpop.f32.mrf.mxu0
  %v5766 = vadd.f32 0.0, %v5765
  %v5767 = vpop.f32.mrf.mxu0
  %v5768 = vadd.f32 0.0, %v5767
  %5769 = vmatmul.bf16.gmra.mxu0 %v5581
  %v5770 = vpop.f32.mrf.mxu0
  %v5771 = vadd.f32 0.0, %v5770
  %v5772 = vpop.f32.mrf.mxu0
  %v5773 = vadd.f32 0.0, %v5772
  %5774 = vmatmul.bf16.gmra.mxu0 %v5590
  %v5775 = vpop.f32.mrf.mxu0
  %v5776 = vadd.f32 0.0, %v5775
  %v5777 = vpop.f32.mrf.mxu0
  %v5778 = vadd.f32 0.0, %v5777
  %5779 = vmatmul.bf16.gmra.mxu0 %v5599
  %v5780 = vpop.f32.mrf.mxu0
  %v5781 = vadd.f32 0.0, %v5780
  %v5782 = vpop.f32.mrf.mxu0
  %v5783 = vadd.f32 0.0, %v5782
  %5784 = vmatmul.bf16.gmra.mxu0 %v5608
  %v5785 = vpop.f32.mrf.mxu0
  %v5786 = vadd.f32 0.0, %v5785
  %v5787 = vpop.f32.mrf.mxu0
  %v5788 = vadd.f32 0.0, %v5787
  %5789 = vmatmul.bf16.gmra.mxu0 %v5617
  %v5790 = vpop.f32.mrf.mxu0
  %v5791 = vadd.f32 0.0, %v5790
  %v5792 = vpop.f32.mrf.mxu0
  %v5793 = vadd.f32 0.0, %v5792
  %5794 = vmatmul.bf16.gmra.mxu0 %v5626
  %v5795 = vpop.f32.mrf.mxu0
  %v5796 = vadd.f32 0.0, %v5795
  %v5797 = vpop.f32.mrf.mxu0
  %v5798 = vadd.f32 0.0, %v5797
  %5799 = vmatmul.bf16.gmra.mxu0 %v5635
  %v5800 = vpop.f32.mrf.mxu0
  %v5801 = vadd.f32 0.0, %v5800
  %v5802 = vpop.f32.mrf.mxu0
  %v5803 = vadd.f32 0.0, %v5802
  %5804 = vmatmul.bf16.gmra.mxu0 %v5644
  %v5805 = vpop.f32.mrf.mxu0
  %v5806 = vadd.f32 0.0, %v5805
  %v5807 = vpop.f32.mrf.mxu0
  %v5808 = vadd.f32 0.0, %v5807
  %5809 = vmatmul.bf16.gmra.mxu0 %v5653
  %v5810 = vpop.f32.mrf.mxu0
  %v5811 = vadd.f32 0.0, %v5810
  %v5812 = vpop.f32.mrf.mxu0
  %v5813 = vadd.f32 0.0, %v5812
  %5814 = vmatmul.bf16.gmra.mxu0 %v5662
  %v5815 = vpop.f32.mrf.mxu0
  %v5816 = vadd.f32 0.0, %v5815
  %v5817 = vpop.f32.mrf.mxu0
  %v5818 = vadd.f32 0.0, %v5817
  %5819 = vmatmul.bf16.gmra.mxu0 %v5671
  %v5820 = vpop.f32.mrf.mxu0
  %v5821 = vadd.f32 0.0, %v5820
  %v5822 = vpop.f32.mrf.mxu0
  %v5823 = vadd.f32 0.0, %v5822
  %5824 = vdwg.mxu0
  %v5825 = vadd.f32 %v5472, %v5746
  %v5826 = vadd.f32 %v5473, %v5748
  %v5827 = vadd.f32 %v5474, %v5751
  %v5828 = vadd.f32 %v5475, %v5753
  %v5829 = vadd.f32 %v5476, %v5756
  %v5830 = vadd.f32 %v5477, %v5758
  %v5831 = vadd.f32 %v5478, %v5761
  %v5832 = vadd.f32 %v5479, %v5763
  %v5833 = vadd.f32 %v5480, %v5766
  %v5834 = vadd.f32 %v5481, %v5768
  %v5835 = vadd.f32 %v5482, %v5771
  %v5836 = vadd.f32 %v5483, %v5773
  %v5837 = vadd.f32 %v5484, %v5776
  %v5838 = vadd.f32 %v5485, %v5778
  %v5839 = vadd.f32 %v5486, %v5781
  %v5840 = vadd.f32 %v5487, %v5783
  %v5841 = vadd.f32 %v5488, %v5786
  %v5842 = vadd.f32 %v5489, %v5788
  %v5843 = vadd.f32 %v5490, %v5791
  %v5844 = vadd.f32 %v5491, %v5793
  %v5845 = vadd.f32 %v5492, %v5796
  %v5846 = vadd.f32 %v5493, %v5798
  %v5847 = vadd.f32 %v5494, %v5801
  %v5848 = vadd.f32 %v5495, %v5803
  %v5849 = vadd.f32 %v5496, %v5806
  %v5850 = vadd.f32 %v5497, %v5808
  %v5851 = vadd.f32 %v5498, %v5811
  %v5852 = vadd.f32 %v5499, %v5813
  %v5853 = vadd.f32 %v5500, %v5816
  %v5854 = vadd.f32 %v5501, %v5818
  %v5855 = vadd.f32 %v5502, %v5821
  %v5856 = vadd.f32 %v5503, %v5823
  %v5857 = vld [vmem:[%s3786 + $0x10] sm:$0xe]
  %v5858 = vld [vmem:[%s3786 + $0x14] sm:$0xf]
  %v5859 = vld [vmem:[%s3786 + $0x18] sm:$0xf]
  %v5860 = vld [vmem:[%s3786 + $0x1c] sm:$0xf]
  %v5861 = vld [vmem:[%s3786 + $0x20] sm:$0xf]
  %v5862 = vld [vmem:[%s3786 + $0x24] sm:$0xf]
  %v5863 = vld [vmem:[%s3786 + $0x28] sm:$0xf]
  %v5864 = vld [vmem:[%s3786 + $0x2c] sm:$0xf]
  %v5865 = vld [vmem:[%s3786 + $0x30] sm:$0xf]
  %v5866 = vld [vmem:[%s3786 + $0x34] sm:$0xf]
  %v5867 = vld [vmem:[%s3786 + $0x38] sm:$0xf]
  %v5868 = vld [vmem:[%s3786 + $0x3c] sm:$0xf]
  %v5869 = vld [vmem:[%s3786 + $0x40] sm:$0xf]
  %v5870 = vld [vmem:[%s3786 + $0x44] sm:$0xf]
  %v5871 = vld [vmem:[%s3786 + $0x48] sm:$0xf]
  %v5872 = vld [vmem:[%s3786 + $0x4c] sm:$0xf]
  %v5873 = vld [vmem:[%s3786 + $0x50] sm:$0xf]
  %v5874 = vld [vmem:[%s3786 + $0x54] sm:$0xf]
  %v5875 = vld [vmem:[%s3786 + $0x58] sm:$0xf]
  %v5876 = vld [vmem:[%s3786 + $0x5c] sm:$0xf]
  %v5877 = vld [vmem:[%s3786 + $0x60] sm:$0xf]
  %v5878 = vld [vmem:[%s3786 + $0x64] sm:$0xf]
  %v5879 = vld [vmem:[%s3786 + $0x68] sm:$0xf]
  %v5880 = vld [vmem:[%s3786 + $0x6c] sm:$0xf]
  %v5881 = vld [vmem:[%s3786 + $0x70] sm:$0xf]
  %v5882 = vld [vmem:[%s3786 + $0x74] sm:$0xf]
  %v5883 = vld [vmem:[%s3786 + $0x78] sm:$0xf]
  %v5884 = vld [vmem:[%s3786 + $0x7c] sm:$0xf]
  %v5885 = vld [vmem:[%s3786 + $0x80] sm:$0xf]
  %v5886 = vld [vmem:[%s3786 + $0x84] sm:$0xf]
  %v5887 = vld [vmem:[%s3786 + $0x88] sm:$0xf]
  %v5888 = vld [vmem:[%s3786 + $0x8c] sm:$0xf]
  %v5889 = vld [vmem:[%s3786 + $0x90] sm:$0x1]
  %v5890 = vld [vmem:[%s2125] sm:$0xf]
  %v5891 = vld [vmem:[%s2125 + $0x4] sm:$0xf]
  %v5892 = vld [vmem:[%s2125 + $0x8] sm:$0xf]
  %v5893 = vld [vmem:[%s2125 + $0xc] sm:$0xf]
  %v5894 = vld [vmem:[%s2125 + $0x10] sm:$0xf]
  %v5895 = vld [vmem:[%s2125 + $0x14] sm:$0xf]
  %v5896 = vld [vmem:[%s2125 + $0x18] sm:$0xf]
  %v5897 = vld [vmem:[%s2125 + $0x1c] sm:$0xf]
  %v5898 = vld [vmem:[%s2125 + $0x20] sm:$0xf]
  %v5899 = vld [vmem:[%s2125 + $0x24] sm:$0xf]
  %v5900 = vld [vmem:[%s2125 + $0x28] sm:$0xf]
  %v5901 = vld [vmem:[%s2125 + $0x2c] sm:$0xf]
  %v5902 = vld [vmem:[%s2125 + $0x30] sm:$0xf]
  %v5903 = vld [vmem:[%s2125 + $0x34] sm:$0xf]
  %v5904 = vld [vmem:[%s2125 + $0x38] sm:$0xf]
  %v5905 = vld [vmem:[%s2125 + $0x3c] sm:$0xf]
  %v5939 = vunpack.c.l.b16 %v5857
  %v5940 = vunpack.c.l.b16 %v5858
  %v5941 = vunpack.c.l.b16 %v5859
  %v5942 = vunpack.c.l.b16 %v5860
  %v5943 = vunpack.c.l.b16 %v5861
  %v5944 = vunpack.c.l.b16 %v5862
  %v5945 = vunpack.c.l.b16 %v5863
  %v5946 = vunpack.c.l.b16 %v5864
  %v5947 = vunpack.c.l.b16 %v5865
  %v5948 = vunpack.c.l.b16 %v5866
  %v5949 = vunpack.c.l.b16 %v5867
  %v5950 = vunpack.c.l.b16 %v5868
  %v5951 = vunpack.c.l.b16 %v5869
  %v5952 = vunpack.c.l.b16 %v5870
  %v5953 = vunpack.c.l.b16 %v5871
  %v5954 = vunpack.c.l.b16 %v5872
  %v5955 = vunpack.c.l.b16 %v5873
  %v5956 = vunpack.c.l.b16 %v5874
  %v5957 = vunpack.c.l.b16 %v5875
  %v5958 = vunpack.c.l.b16 %v5876
  %v5959 = vunpack.c.l.b16 %v5877
  %v5960 = vunpack.c.l.b16 %v5878
  %v5961 = vunpack.c.l.b16 %v5879
  %v5962 = vunpack.c.l.b16 %v5880
  %v5963 = vunpack.c.l.b16 %v5881
  %v5964 = vunpack.c.l.b16 %v5882
  %v5965 = vunpack.c.l.b16 %v5883
  %v5966 = vunpack.c.l.b16 %v5884
  %v5967 = vunpack.c.l.b16 %v5885
  %v5968 = vunpack.c.l.b16 %v5886
  %v5969 = vunpack.c.l.b16 %v5887
  %v5970 = vunpack.c.l.b16 %v5888
  %v5971 = vunpack.c.l.b16 %v5889
  %v5972 = vpack.c.b16 %v5940, %v5939
  %v5973 = vpack.c.b16 %v5942, %v5941
  %v5974 = vpack.c.b16 %v5944, %v5943
  %v5975 = vpack.c.b16 %v5946, %v5945
  %v5976 = vpack.c.b16 %v5948, %v5947
  %v5977 = vpack.c.b16 %v5950, %v5949
  %v5978 = vpack.c.b16 %v5952, %v5951
  %v5979 = vpack.c.b16 %v5954, %v5953
  %v5980 = vpack.c.b16 %v5956, %v5955
  %v5981 = vpack.c.b16 %v5958, %v5957
  %v5982 = vpack.c.b16 %v5960, %v5959
  %v5983 = vpack.c.b16 %v5962, %v5961
  %v5984 = vpack.c.b16 %v5964, %v5963
  %v5985 = vpack.c.b16 %v5966, %v5965
  %v5986 = vpack.c.b16 %v5968, %v5967
  %v5987 = vpack.c.b16 %v5970, %v5969
  %v5988 = vpack.c.b16 %v5971, %v5971
  %v5989 = vrot.slane %v5972, 1
  %v5990 = vrot.slane %v5973, 1
  %v5991 = vsel %vm726, %v5989, %v5990
  %v5992 = vrot.slane %v5974, 1
  %v5993 = vsel %vm726, %v5990, %v5992
  %v5994 = vrot.slane %v5975, 1
  %v5995 = vsel %vm726, %v5992, %v5994
  %v5996 = vrot.slane %v5976, 1
  %v5997 = vsel %vm726, %v5994, %v5996
  %v5998 = vrot.slane %v5977, 1
  %v5999 = vsel %vm726, %v5996, %v5998
  %v6000 = vrot.slane %v5978, 1
  %v6001 = vsel %vm726, %v5998, %v6000
  %v6002 = vrot.slane %v5979, 1
  %v6003 = vsel %vm726, %v6000, %v6002
  %v6004 = vrot.slane %v5980, 1
  %v6005 = vsel %vm726, %v6002, %v6004
  %v6006 = vrot.slane %v5981, 1
  %v6007 = vsel %vm726, %v6004, %v6006
  %v6008 = vrot.slane %v5982, 1
  %v6009 = vsel %vm726, %v6006, %v6008
  %v6010 = vrot.slane %v5983, 1
  %v6011 = vsel %vm726, %v6008, %v6010
  %v6012 = vrot.slane %v5984, 1
  %v6013 = vsel %vm726, %v6010, %v6012
  %v6014 = vrot.slane %v5985, 1
  %v6015 = vsel %vm726, %v6012, %v6014
  %v6016 = vrot.slane %v5986, 1
  %v6017 = vsel %vm726, %v6014, %v6016
  %v6018 = vrot.slane %v5987, 1
  %v6019 = vsel %vm726, %v6016, %v6018
  %v6020 = vrot.slane %v5988, 1
  %v6021 = vsel %vm726, %v6018, %v6020
  %v6054 = vunpack.c.l.b16 %v5890
  %v6055 = vunpack.c.l.b16 %v5891
  %v6056 = vunpack.c.l.b16 %v5892
  %v6057 = vunpack.c.l.b16 %v5893
  %v6058 = vunpack.c.l.b16 %v5894
  %v6059 = vunpack.c.l.b16 %v5895
  %v6060 = vunpack.c.l.b16 %v5896
  %v6061 = vunpack.c.l.b16 %v5897
  %v6062 = vunpack.c.l.b16 %v5898
  %v6063 = vunpack.c.l.b16 %v5899
  %v6064 = vunpack.c.l.b16 %v5900
  %v6065 = vunpack.c.l.b16 %v5901
  %v6066 = vunpack.c.l.b16 %v5902
  %v6067 = vunpack.c.l.b16 %v5903
  %v6068 = vunpack.c.l.b16 %v5904
  %v6069 = vunpack.c.l.b16 %v5905
  %v6070 = vpack.c.b16 %v6055, %v6054
  %v6071 = vpack.c.b16 %v6057, %v6056
  %v6072 = vpack.c.b16 %v6059, %v6058
  %v6073 = vpack.c.b16 %v6061, %v6060
  %v6074 = vpack.c.b16 %v6063, %v6062
  %v6075 = vpack.c.b16 %v6065, %v6064
  %v6076 = vpack.c.b16 %v6067, %v6066
  %v6077 = vpack.c.b16 %v6069, %v6068
  %6086 = vmatpush.bf16.msra.mxu0 %v6077
  %6087 = vmatpush.bf16.msra.mxu0 %v6076
  %6088 = vmatpush.bf16.msra.mxu0 %v6075
  %6089 = vmatpush.bf16.msra.mxu0 %v6074
  %6090 = vmatpush.bf16.msra.mxu0 %v6073
  %6091 = vmatpush.bf16.msra.mxu0 %v6072
  %6092 = vmatpush.bf16.msra.mxu0 %v6071
  %6093 = vmatpush.bf16.msra.mxu0 %v6070
  %6094 = vmatmul.bf16.gmra.mxu0 %v5991
  %v6095 = vpop.f32.mrf.mxu0
  %v6096 = vadd.f32 0.0, %v6095
  %v6097 = vpop.f32.mrf.mxu0
  %v6098 = vadd.f32 0.0, %v6097
  %6099 = vmatmul.bf16.gmra.mxu0 %v5993
  %v6100 = vpop.f32.mrf.mxu0
  %v6101 = vadd.f32 0.0, %v6100
  %v6102 = vpop.f32.mrf.mxu0
  %v6103 = vadd.f32 0.0, %v6102
  %6104 = vmatmul.bf16.gmra.mxu0 %v5995
  %v6105 = vpop.f32.mrf.mxu0
  %v6106 = vadd.f32 0.0, %v6105
  %v6107 = vpop.f32.mrf.mxu0
  %v6108 = vadd.f32 0.0, %v6107
  %6109 = vmatmul.bf16.gmra.mxu0 %v5997
  %v6110 = vpop.f32.mrf.mxu0
  %v6111 = vadd.f32 0.0, %v6110
  %v6112 = vpop.f32.mrf.mxu0
  %v6113 = vadd.f32 0.0, %v6112
  %6114 = vmatmul.bf16.gmra.mxu0 %v5999
  %v6115 = vpop.f32.mrf.mxu0
  %v6116 = vadd.f32 0.0, %v6115
  %v6117 = vpop.f32.mrf.mxu0
  %v6118 = vadd.f32 0.0, %v6117
  %6119 = vmatmul.bf16.gmra.mxu0 %v6001
  %v6120 = vpop.f32.mrf.mxu0
  %v6121 = vadd.f32 0.0, %v6120
  %v6122 = vpop.f32.mrf.mxu0
  %v6123 = vadd.f32 0.0, %v6122
  %6124 = vmatmul.bf16.gmra.mxu0 %v6003
  %v6125 = vpop.f32.mrf.mxu0
  %v6126 = vadd.f32 0.0, %v6125
  %v6127 = vpop.f32.mrf.mxu0
  %v6128 = vadd.f32 0.0, %v6127
  %6129 = vmatmul.bf16.gmra.mxu0 %v6005
  %v6130 = vpop.f32.mrf.mxu0
  %v6131 = vadd.f32 0.0, %v6130
  %v6132 = vpop.f32.mrf.mxu0
  %v6133 = vadd.f32 0.0, %v6132
  %6134 = vmatmul.bf16.gmra.mxu0 %v6007
  %v6135 = vpop.f32.mrf.mxu0
  %v6136 = vadd.f32 0.0, %v6135
  %v6137 = vpop.f32.mrf.mxu0
  %v6138 = vadd.f32 0.0, %v6137
  %6139 = vmatmul.bf16.gmra.mxu0 %v6009
  %v6140 = vpop.f32.mrf.mxu0
  %v6141 = vadd.f32 0.0, %v6140
  %v6142 = vpop.f32.mrf.mxu0
  %v6143 = vadd.f32 0.0, %v6142
  %6144 = vmatmul.bf16.gmra.mxu0 %v6011
  %v6145 = vpop.f32.mrf.mxu0
  %v6146 = vadd.f32 0.0, %v6145
  %v6147 = vpop.f32.mrf.mxu0
  %v6148 = vadd.f32 0.0, %v6147
  %6149 = vmatmul.bf16.gmra.mxu0 %v6013
  %v6150 = vpop.f32.mrf.mxu0
  %v6151 = vadd.f32 0.0, %v6150
  %v6152 = vpop.f32.mrf.mxu0
  %v6153 = vadd.f32 0.0, %v6152
  %6154 = vmatmul.bf16.gmra.mxu0 %v6015
  %v6155 = vpop.f32.mrf.mxu0
  %v6156 = vadd.f32 0.0, %v6155
  %v6157 = vpop.f32.mrf.mxu0
  %v6158 = vadd.f32 0.0, %v6157
  %6159 = vmatmul.bf16.gmra.mxu0 %v6017
  %v6160 = vpop.f32.mrf.mxu0
  %v6161 = vadd.f32 0.0, %v6160
  %v6162 = vpop.f32.mrf.mxu0
  %v6163 = vadd.f32 0.0, %v6162
  %6164 = vmatmul.bf16.gmra.mxu0 %v6019
  %v6165 = vpop.f32.mrf.mxu0
  %v6166 = vadd.f32 0.0, %v6165
  %v6167 = vpop.f32.mrf.mxu0
  %v6168 = vadd.f32 0.0, %v6167
  %6169 = vmatmul.bf16.gmra.mxu0 %v6021
  %v6170 = vpop.f32.mrf.mxu0
  %v6171 = vadd.f32 0.0, %v6170
  %v6172 = vpop.f32.mrf.mxu0
  %v6173 = vadd.f32 0.0, %v6172
  %6174 = vdwg.mxu0
  %v6175 = vadd.f32 %v5825, %v6096
  %v6176 = vadd.f32 %v5826, %v6098
  %v6177 = vadd.f32 %v5827, %v6101
  %v6178 = vadd.f32 %v5828, %v6103
  %v6179 = vadd.f32 %v5829, %v6106
  %v6180 = vadd.f32 %v5830, %v6108
  %v6181 = vadd.f32 %v5831, %v6111
  %v6182 = vadd.f32 %v5832, %v6113
  %v6183 = vadd.f32 %v5833, %v6116
  %v6184 = vadd.f32 %v5834, %v6118
  %v6185 = vadd.f32 %v5835, %v6121
  %v6186 = vadd.f32 %v5836, %v6123
  %v6187 = vadd.f32 %v5837, %v6126
  %v6188 = vadd.f32 %v5838, %v6128
  %v6189 = vadd.f32 %v5839, %v6131
  %v6190 = vadd.f32 %v5840, %v6133
  %v6191 = vadd.f32 %v5841, %v6136
  %v6192 = vadd.f32 %v5842, %v6138
  %v6193 = vadd.f32 %v5843, %v6141
  %v6194 = vadd.f32 %v5844, %v6143
  %v6195 = vadd.f32 %v5845, %v6146
  %v6196 = vadd.f32 %v5846, %v6148
  %v6197 = vadd.f32 %v5847, %v6151
  %v6198 = vadd.f32 %v5848, %v6153
  %v6199 = vadd.f32 %v5849, %v6156
  %v6200 = vadd.f32 %v5850, %v6158
  %v6201 = vadd.f32 %v5851, %v6161
  %v6202 = vadd.f32 %v5852, %v6163
  %v6203 = vadd.f32 %v5853, %v6166
  %v6204 = vadd.f32 %v5854, %v6168
  %v6205 = vadd.f32 %v5855, %v6171
  %v6206 = vadd.f32 %v5856, %v6173
  %v6207 = vld [vmem:[%s2443] sm:$0xf]
  %v6208 = vld [vmem:[%s2443 + $0x4] sm:$0xf]
  %v6209 = vld [vmem:[%s2443 + $0x8] sm:$0xf]
  %v6210 = vld [vmem:[%s2443 + $0xc] sm:$0xf]
  %v6211 = vld [vmem:[%s2443 + $0x10] sm:$0xf]
  %v6212 = vld [vmem:[%s2443 + $0x14] sm:$0xf]
  %v6213 = vld [vmem:[%s2443 + $0x18] sm:$0xf]
  %v6214 = vld [vmem:[%s2443 + $0x1c] sm:$0xf]
  %v6215 = vld [vmem:[%s2443 + $0x20] sm:$0xf]
  %v6216 = vld [vmem:[%s2443 + $0x24] sm:$0xf]
  %v6217 = vld [vmem:[%s2443 + $0x28] sm:$0xf]
  %v6218 = vld [vmem:[%s2443 + $0x2c] sm:$0xf]
  %v6219 = vld [vmem:[%s2443 + $0x30] sm:$0xf]
  %v6220 = vld [vmem:[%s2443 + $0x34] sm:$0xf]
  %v6221 = vld [vmem:[%s2443 + $0x38] sm:$0xf]
  %v6222 = vld [vmem:[%s2443 + $0x3c] sm:$0xf]
  %v6224 = vshrl.u32 %v5972, 16
  %v6226 = vrot.slane %v6224, 1
  %v6227 = vshll.u32 %v5972, 16
  %v6229 = vrot.slane %v6227, 2
  %v6230 = vor.u32 %v6226, %v6229
  %v6232 = vshrl.u32 %v5973, 16
  %v6234 = vrot.slane %v6232, 1
  %v6235 = vshll.u32 %v5973, 16
  %v6237 = vrot.slane %v6235, 2
  %v6238 = vor.u32 %v6234, %v6237
  %v6239 = vsel %vm1754, %v6230, %v6238
  %v6241 = vshrl.u32 %v5974, 16
  %v6243 = vrot.slane %v6241, 1
  %v6244 = vshll.u32 %v5974, 16
  %v6246 = vrot.slane %v6244, 2
  %v6247 = vor.u32 %v6243, %v6246
  %v6248 = vsel %vm1754, %v6238, %v6247
  %v6250 = vshrl.u32 %v5975, 16
  %v6252 = vrot.slane %v6250, 1
  %v6253 = vshll.u32 %v5975, 16
  %v6255 = vrot.slane %v6253, 2
  %v6256 = vor.u32 %v6252, %v6255
  %v6257 = vsel %vm1754, %v6247, %v6256
  %v6259 = vshrl.u32 %v5976, 16
  %v6261 = vrot.slane %v6259, 1
  %v6262 = vshll.u32 %v5976, 16
  %v6264 = vrot.slane %v6262, 2
  %v6265 = vor.u32 %v6261, %v6264
  %v6266 = vsel %vm1754, %v6256, %v6265
  %v6268 = vshrl.u32 %v5977, 16
  %v6270 = vrot.slane %v6268, 1
  %v6271 = vshll.u32 %v5977, 16
  %v6273 = vrot.slane %v6271, 2
  %v6274 = vor.u32 %v6270, %v6273
  %v6275 = vsel %vm1754, %v6265, %v6274
  %v6277 = vshrl.u32 %v5978, 16
  %v6279 = vrot.slane %v6277, 1
  %v6280 = vshll.u32 %v5978, 16
  %v6282 = vrot.slane %v6280, 2
  %v6283 = vor.u32 %v6279, %v6282
  %v6284 = vsel %vm1754, %v6274, %v6283
  %v6286 = vshrl.u32 %v5979, 16
  %v6288 = vrot.slane %v6286, 1
  %v6289 = vshll.u32 %v5979, 16
  %v6291 = vrot.slane %v6289, 2
  %v6292 = vor.u32 %v6288, %v6291
  %v6293 = vsel %vm1754, %v6283, %v6292
  %v6295 = vshrl.u32 %v5980, 16
  %v6297 = vrot.slane %v6295, 1
  %v6298 = vshll.u32 %v5980, 16
  %v6300 = vrot.slane %v6298, 2
  %v6301 = vor.u32 %v6297, %v6300
  %v6302 = vsel %vm1754, %v6292, %v6301
  %v6304 = vshrl.u32 %v5981, 16
  %v6306 = vrot.slane %v6304, 1
  %v6307 = vshll.u32 %v5981, 16
  %v6309 = vrot.slane %v6307, 2
  %v6310 = vor.u32 %v6306, %v6309
  %v6311 = vsel %vm1754, %v6301, %v6310
  %v6313 = vshrl.u32 %v5982, 16
  %v6315 = vrot.slane %v6313, 1
  %v6316 = vshll.u32 %v5982, 16
  %v6318 = vrot.slane %v6316, 2
  %v6319 = vor.u32 %v6315, %v6318
  %v6320 = vsel %vm1754, %v6310, %v6319
  %v6322 = vshrl.u32 %v5983, 16
  %v6324 = vrot.slane %v6322, 1
  %v6325 = vshll.u32 %v5983, 16
  %v6327 = vrot.slane %v6325, 2
  %v6328 = vor.u32 %v6324, %v6327
  %v6329 = vsel %vm1754, %v6319, %v6328
  %v6331 = vshrl.u32 %v5984, 16
  %v6333 = vrot.slane %v6331, 1
  %v6334 = vshll.u32 %v5984, 16
  %v6336 = vrot.slane %v6334, 2
  %v6337 = vor.u32 %v6333, %v6336
  %v6338 = vsel %vm1754, %v6328, %v6337
  %v6340 = vshrl.u32 %v5985, 16
  %v6342 = vrot.slane %v6340, 1
  %v6343 = vshll.u32 %v5985, 16
  %v6345 = vrot.slane %v6343, 2
  %v6346 = vor.u32 %v6342, %v6345
  %v6347 = vsel %vm1754, %v6337, %v6346
  %v6349 = vshrl.u32 %v5986, 16
  %v6351 = vrot.slane %v6349, 1
  %v6352 = vshll.u32 %v5986, 16
  %v6354 = vrot.slane %v6352, 2
  %v6355 = vor.u32 %v6351, %v6354
  %v6356 = vsel %vm1754, %v6346, %v6355
  %v6358 = vshrl.u32 %v5987, 16
  %v6360 = vrot.slane %v6358, 1
  %v6361 = vshll.u32 %v5987, 16
  %v6363 = vrot.slane %v6361, 2
  %v6364 = vor.u32 %v6360, %v6363
  %v6365 = vsel %vm1754, %v6355, %v6364
  %v6367 = vshrl.u32 %v5988, 16
  %v6369 = vrot.slane %v6367, 1
  %v6370 = vshll.u32 %v5988, 16
  %v6372 = vrot.slane %v6370, 2
  %v6373 = vor.u32 %v6369, %v6372
  %v6374 = vsel %vm1754, %v6364, %v6373
  %v6407 = vunpack.c.l.b16 %v6207
  %v6408 = vunpack.c.l.b16 %v6208
  %v6409 = vunpack.c.l.b16 %v6209
  %v6410 = vunpack.c.l.b16 %v6210
  %v6411 = vunpack.c.l.b16 %v6211
  %v6412 = vunpack.c.l.b16 %v6212
  %v6413 = vunpack.c.l.b16 %v6213
  %v6414 = vunpack.c.l.b16 %v6214
  %v6415 = vunpack.c.l.b16 %v6215
  %v6416 = vunpack.c.l.b16 %v6216
  %v6417 = vunpack.c.l.b16 %v6217
  %v6418 = vunpack.c.l.b16 %v6218
  %v6419 = vunpack.c.l.b16 %v6219
  %v6420 = vunpack.c.l.b16 %v6220
  %v6421 = vunpack.c.l.b16 %v6221
  %v6422 = vunpack.c.l.b16 %v6222
  %v6423 = vpack.c.b16 %v6408, %v6407
  %v6424 = vpack.c.b16 %v6410, %v6409
  %v6425 = vpack.c.b16 %v6412, %v6411
  %v6426 = vpack.c.b16 %v6414, %v6413
  %v6427 = vpack.c.b16 %v6416, %v6415
  %v6428 = vpack.c.b16 %v6418, %v6417
  %v6429 = vpack.c.b16 %v6420, %v6419
  %v6430 = vpack.c.b16 %v6422, %v6421
  %6439 = vmatpush.bf16.msra.mxu0 %v6430
  %6440 = vmatpush.bf16.msra.mxu0 %v6429
  %6441 = vmatpush.bf16.msra.mxu0 %v6428
  %6442 = vmatpush.bf16.msra.mxu0 %v6427
  %6443 = vmatpush.bf16.msra.mxu0 %v6426
  %6444 = vmatpush.bf16.msra.mxu0 %v6425
  %6445 = vmatpush.bf16.msra.mxu0 %v6424
  %6446 = vmatpush.bf16.msra.mxu0 %v6423
  %6447 = vmatmul.bf16.gmra.mxu0 %v6239
  %v6448 = vpop.f32.mrf.mxu0
  %v6449 = vadd.f32 0.0, %v6448
  %v6450 = vpop.f32.mrf.mxu0
  %v6451 = vadd.f32 0.0, %v6450
  %6452 = vmatmul.bf16.gmra.mxu0 %v6248
  %v6453 = vpop.f32.mrf.mxu0
  %v6454 = vadd.f32 0.0, %v6453
  %v6455 = vpop.f32.mrf.mxu0
  %v6456 = vadd.f32 0.0, %v6455
  %6457 = vmatmul.bf16.gmra.mxu0 %v6257
  %v6458 = vpop.f32.mrf.mxu0
  %v6459 = vadd.f32 0.0, %v6458
  %v6460 = vpop.f32.mrf.mxu0
  %v6461 = vadd.f32 0.0, %v6460
  %6462 = vmatmul.bf16.gmra.mxu0 %v6266
  %v6463 = vpop.f32.mrf.mxu0
  %v6464 = vadd.f32 0.0, %v6463
  %v6465 = vpop.f32.mrf.mxu0
  %v6466 = vadd.f32 0.0, %v6465
  %6467 = vmatmul.bf16.gmra.mxu0 %v6275
  %v6468 = vpop.f32.mrf.mxu0
  %v6469 = vadd.f32 0.0, %v6468
  %v6470 = vpop.f32.mrf.mxu0
  %v6471 = vadd.f32 0.0, %v6470
  %6472 = vmatmul.bf16.gmra.mxu0 %v6284
  %v6473 = vpop.f32.mrf.mxu0
  %v6474 = vadd.f32 0.0, %v6473
  %v6475 = vpop.f32.mrf.mxu0
  %v6476 = vadd.f32 0.0, %v6475
  %6477 = vmatmul.bf16.gmra.mxu0 %v6293
  %v6478 = vpop.f32.mrf.mxu0
  %v6479 = vadd.f32 0.0, %v6478
  %v6480 = vpop.f32.mrf.mxu0
  %v6481 = vadd.f32 0.0, %v6480
  %6482 = vmatmul.bf16.gmra.mxu0 %v6302
  %v6483 = vpop.f32.mrf.mxu0
  %v6484 = vadd.f32 0.0, %v6483
  %v6485 = vpop.f32.mrf.mxu0
  %v6486 = vadd.f32 0.0, %v6485
  %6487 = vmatmul.bf16.gmra.mxu0 %v6311
  %v6488 = vpop.f32.mrf.mxu0
  %v6489 = vadd.f32 0.0, %v6488
  %v6490 = vpop.f32.mrf.mxu0
  %v6491 = vadd.f32 0.0, %v6490
  %6492 = vmatmul.bf16.gmra.mxu0 %v6320
  %v6493 = vpop.f32.mrf.mxu0
  %v6494 = vadd.f32 0.0, %v6493
  %v6495 = vpop.f32.mrf.mxu0
  %v6496 = vadd.f32 0.0, %v6495
  %6497 = vmatmul.bf16.gmra.mxu0 %v6329
  %v6498 = vpop.f32.mrf.mxu0
  %v6499 = vadd.f32 0.0, %v6498
  %v6500 = vpop.f32.mrf.mxu0
  %v6501 = vadd.f32 0.0, %v6500
  %6502 = vmatmul.bf16.gmra.mxu0 %v6338
  %v6503 = vpop.f32.mrf.mxu0
  %v6504 = vadd.f32 0.0, %v6503
  %v6505 = vpop.f32.mrf.mxu0
  %v6506 = vadd.f32 0.0, %v6505
  %6507 = vmatmul.bf16.gmra.mxu0 %v6347
  %v6508 = vpop.f32.mrf.mxu0
  %v6509 = vadd.f32 0.0, %v6508
  %v6510 = vpop.f32.mrf.mxu0
  %v6511 = vadd.f32 0.0, %v6510
  %6512 = vmatmul.bf16.gmra.mxu0 %v6356
  %v6513 = vpop.f32.mrf.mxu0
  %v6514 = vadd.f32 0.0, %v6513
  %v6515 = vpop.f32.mrf.mxu0
  %v6516 = vadd.f32 0.0, %v6515
  %6517 = vmatmul.bf16.gmra.mxu0 %v6365
  %v6518 = vpop.f32.mrf.mxu0
  %v6519 = vadd.f32 0.0, %v6518
  %v6520 = vpop.f32.mrf.mxu0
  %v6521 = vadd.f32 0.0, %v6520
  %6522 = vmatmul.bf16.gmra.mxu0 %v6374
  %v6523 = vpop.f32.mrf.mxu0
  %v6524 = vadd.f32 0.0, %v6523
  %v6525 = vpop.f32.mrf.mxu0
  %v6526 = vadd.f32 0.0, %v6525
  %6527 = vdwg.mxu0
  %v6528 = vadd.f32 %v6175, %v6449
  %v6529 = vadd.f32 %v6176, %v6451
  %v6530 = vadd.f32 %v6177, %v6454
  %v6531 = vadd.f32 %v6178, %v6456
  %v6532 = vadd.f32 %v6179, %v6459
  %v6533 = vadd.f32 %v6180, %v6461
  %v6534 = vadd.f32 %v6181, %v6464
  %v6535 = vadd.f32 %v6182, %v6466
  %v6536 = vadd.f32 %v6183, %v6469
  %v6537 = vadd.f32 %v6184, %v6471
  %v6538 = vadd.f32 %v6185, %v6474
  %v6539 = vadd.f32 %v6186, %v6476
  %v6540 = vadd.f32 %v6187, %v6479
  %v6541 = vadd.f32 %v6188, %v6481
  %v6542 = vadd.f32 %v6189, %v6484
  %v6543 = vadd.f32 %v6190, %v6486
  %v6544 = vadd.f32 %v6191, %v6489
  %v6545 = vadd.f32 %v6192, %v6491
  %v6546 = vadd.f32 %v6193, %v6494
  %v6547 = vadd.f32 %v6194, %v6496
  %v6548 = vadd.f32 %v6195, %v6499
  %v6549 = vadd.f32 %v6196, %v6501
  %v6550 = vadd.f32 %v6197, %v6504
  %v6551 = vadd.f32 %v6198, %v6506
  %v6552 = vadd.f32 %v6199, %v6509
  %v6553 = vadd.f32 %v6200, %v6511
  %v6554 = vadd.f32 %v6201, %v6514
  %v6555 = vadd.f32 %v6202, %v6516
  %v6556 = vadd.f32 %v6203, %v6519
  %v6557 = vadd.f32 %v6204, %v6521
  %v6558 = vadd.f32 %v6205, %v6524
  %v6559 = vadd.f32 %v6206, %v6526
  %v6560 = vld [vmem:[%s3786 + $0x10] sm:$0xc]
  %v6561 = vld [vmem:[%s3786 + $0x90] sm:$0x3]
  %v6562 = vld [vmem:[%s2799] sm:$0xf]
  %v6563 = vld [vmem:[%s2799 + $0x4] sm:$0xf]
  %v6564 = vld [vmem:[%s2799 + $0x8] sm:$0xf]
  %v6565 = vld [vmem:[%s2799 + $0xc] sm:$0xf]
  %v6566 = vld [vmem:[%s2799 + $0x10] sm:$0xf]
  %v6567 = vld [vmem:[%s2799 + $0x14] sm:$0xf]
  %v6568 = vld [vmem:[%s2799 + $0x18] sm:$0xf]
  %v6569 = vld [vmem:[%s2799 + $0x1c] sm:$0xf]
  %v6570 = vld [vmem:[%s2799 + $0x20] sm:$0xf]
  %v6571 = vld [vmem:[%s2799 + $0x24] sm:$0xf]
  %v6572 = vld [vmem:[%s2799 + $0x28] sm:$0xf]
  %v6573 = vld [vmem:[%s2799 + $0x2c] sm:$0xf]
  %v6574 = vld [vmem:[%s2799 + $0x30] sm:$0xf]
  %v6575 = vld [vmem:[%s2799 + $0x34] sm:$0xf]
  %v6576 = vld [vmem:[%s2799 + $0x38] sm:$0xf]
  %v6577 = vld [vmem:[%s2799 + $0x3c] sm:$0xf]
  %v6580 = vunpack.c.l.b16 %v6560
  %v6581 = vunpack.c.l.b16 %v6561
  %v6582 = vpack.c.b16 %v5940, %v6580
  %v6583 = vpack.c.b16 %v6581, %v6581
  %v6584 = vrot.slane %v6582, 2
  %v6585 = vrot.slane %v5973, 2
  %v6586 = vsel %vm2822, %v6584, %v6585
  %v6587 = vrot.slane %v5974, 2
  %v6588 = vsel %vm2822, %v6585, %v6587
  %v6589 = vrot.slane %v5975, 2
  %v6590 = vsel %vm2822, %v6587, %v6589
  %v6591 = vrot.slane %v5976, 2
  %v6592 = vsel %vm2822, %v6589, %v6591
  %v6593 = vrot.slane %v5977, 2
  %v6594 = vsel %vm2822, %v6591, %v6593
  %v6595 = vrot.slane %v5978, 2
  %v6596 = vsel %vm2822, %v6593, %v6595
  %v6597 = vrot.slane %v5979, 2
  %v6598 = vsel %vm2822, %v6595, %v6597
  %v6599 = vrot.slane %v5980, 2
  %v6600 = vsel %vm2822, %v6597, %v6599
  %v6601 = vrot.slane %v5981, 2
  %v6602 = vsel %vm2822, %v6599, %v6601
  %v6603 = vrot.slane %v5982, 2
  %v6604 = vsel %vm2822, %v6601, %v6603
  %v6605 = vrot.slane %v5983, 2
  %v6606 = vsel %vm2822, %v6603, %v6605
  %v6607 = vrot.slane %v5984, 2
  %v6608 = vsel %vm2822, %v6605, %v6607
  %v6609 = vrot.slane %v5985, 2
  %v6610 = vsel %vm2822, %v6607, %v6609
  %v6611 = vrot.slane %v5986, 2
  %v6612 = vsel %vm2822, %v6609, %v6611
  %v6613 = vrot.slane %v5987, 2
  %v6614 = vsel %vm2822, %v6611, %v6613
  %v6615 = vrot.slane %v6583, 2
  %v6616 = vsel %vm2822, %v6613, %v6615
  %v6649 = vunpack.c.l.b16 %v6562
  %v6650 = vunpack.c.l.b16 %v6563
  %v6651 = vunpack.c.l.b16 %v6564
  %v6652 = vunpack.c.l.b16 %v6565
  %v6653 = vunpack.c.l.b16 %v6566
  %v6654 = vunpack.c.l.b16 %v6567
  %v6655 = vunpack.c.l.b16 %v6568
  %v6656 = vunpack.c.l.b16 %v6569
  %v6657 = vunpack.c.l.b16 %v6570
  %v6658 = vunpack.c.l.b16 %v6571
  %v6659 = vunpack.c.l.b16 %v6572
  %v6660 = vunpack.c.l.b16 %v6573
  %v6661 = vunpack.c.l.b16 %v6574
  %v6662 = vunpack.c.l.b16 %v6575
  %v6663 = vunpack.c.l.b16 %v6576
  %v6664 = vunpack.c.l.b16 %v6577
  %v6665 = vpack.c.b16 %v6650, %v6649
  %v6666 = vpack.c.b16 %v6652, %v6651
  %v6667 = vpack.c.b16 %v6654, %v6653
  %v6668 = vpack.c.b16 %v6656, %v6655
  %v6669 = vpack.c.b16 %v6658, %v6657
  %v6670 = vpack.c.b16 %v6660, %v6659
  %v6671 = vpack.c.b16 %v6662, %v6661
  %v6672 = vpack.c.b16 %v6664, %v6663
  %6681 = vmatpush.bf16.msra.mxu0 %v6672
  %6682 = vmatpush.bf16.msra.mxu0 %v6671
  %6683 = vmatpush.bf16.msra.mxu0 %v6670
  %6684 = vmatpush.bf16.msra.mxu0 %v6669
  %6685 = vmatpush.bf16.msra.mxu0 %v6668
  %6686 = vmatpush.bf16.msra.mxu0 %v6667
  %6687 = vmatpush.bf16.msra.mxu0 %v6666
  %6688 = vmatpush.bf16.msra.mxu0 %v6665
  %6689 = vmatmul.bf16.gmra.mxu0 %v6586
  %v6690 = vpop.f32.mrf.mxu0
  %v6691 = vadd.f32 0.0, %v6690
  %v6692 = vpop.f32.mrf.mxu0
  %v6693 = vadd.f32 0.0, %v6692
  %6694 = vmatmul.bf16.gmra.mxu0 %v6588
  %v6695 = vpop.f32.mrf.mxu0
  %v6696 = vadd.f32 0.0, %v6695
  %v6697 = vpop.f32.mrf.mxu0
  %v6698 = vadd.f32 0.0, %v6697
  %6699 = vmatmul.bf16.gmra.mxu0 %v6590
  %v6700 = vpop.f32.mrf.mxu0
  %v6701 = vadd.f32 0.0, %v6700
  %v6702 = vpop.f32.mrf.mxu0
  %v6703 = vadd.f32 0.0, %v6702
  %6704 = vmatmul.bf16.gmra.mxu0 %v6592
  %v6705 = vpop.f32.mrf.mxu0
  %v6706 = vadd.f32 0.0, %v6705
  %v6707 = vpop.f32.mrf.mxu0
  %v6708 = vadd.f32 0.0, %v6707
  %6709 = vmatmul.bf16.gmra.mxu0 %v6594
  %v6710 = vpop.f32.mrf.mxu0
  %v6711 = vadd.f32 0.0, %v6710
  %v6712 = vpop.f32.mrf.mxu0
  %v6713 = vadd.f32 0.0, %v6712
  %6714 = vmatmul.bf16.gmra.mxu0 %v6596
  %v6715 = vpop.f32.mrf.mxu0
  %v6716 = vadd.f32 0.0, %v6715
  %v6717 = vpop.f32.mrf.mxu0
  %v6718 = vadd.f32 0.0, %v6717
  %6719 = vmatmul.bf16.gmra.mxu0 %v6598
  %v6720 = vpop.f32.mrf.mxu0
  %v6721 = vadd.f32 0.0, %v6720
  %v6722 = vpop.f32.mrf.mxu0
  %v6723 = vadd.f32 0.0, %v6722
  %6724 = vmatmul.bf16.gmra.mxu0 %v6600
  %v6725 = vpop.f32.mrf.mxu0
  %v6726 = vadd.f32 0.0, %v6725
  %v6727 = vpop.f32.mrf.mxu0
  %v6728 = vadd.f32 0.0, %v6727
  %6729 = vmatmul.bf16.gmra.mxu0 %v6602
  %v6730 = vpop.f32.mrf.mxu0
  %v6731 = vadd.f32 0.0, %v6730
  %v6732 = vpop.f32.mrf.mxu0
  %v6733 = vadd.f32 0.0, %v6732
  %6734 = vmatmul.bf16.gmra.mxu0 %v6604
  %v6735 = vpop.f32.mrf.mxu0
  %v6736 = vadd.f32 0.0, %v6735
  %v6737 = vpop.f32.mrf.mxu0
  %v6738 = vadd.f32 0.0, %v6737
  %6739 = vmatmul.bf16.gmra.mxu0 %v6606
  %v6740 = vpop.f32.mrf.mxu0
  %v6741 = vadd.f32 0.0, %v6740
  %v6742 = vpop.f32.mrf.mxu0
  %v6743 = vadd.f32 0.0, %v6742
  %6744 = vmatmul.bf16.gmra.mxu0 %v6608
  %v6745 = vpop.f32.mrf.mxu0
  %v6746 = vadd.f32 0.0, %v6745
  %v6747 = vpop.f32.mrf.mxu0
  %v6748 = vadd.f32 0.0, %v6747
  %6749 = vmatmul.bf16.gmra.mxu0 %v6610
  %v6750 = vpop.f32.mrf.mxu0
  %v6751 = vadd.f32 0.0, %v6750
  %v6752 = vpop.f32.mrf.mxu0
  %v6753 = vadd.f32 0.0, %v6752
  %6754 = vmatmul.bf16.gmra.mxu0 %v6612
  %v6755 = vpop.f32.mrf.mxu0
  %v6756 = vadd.f32 0.0, %v6755
  %v6757 = vpop.f32.mrf.mxu0
  %v6758 = vadd.f32 0.0, %v6757
  %6759 = vmatmul.bf16.gmra.mxu0 %v6614
  %v6760 = vpop.f32.mrf.mxu0
  %v6761 = vadd.f32 0.0, %v6760
  %v6762 = vpop.f32.mrf.mxu0
  %v6763 = vadd.f32 0.0, %v6762
  %6764 = vmatmul.bf16.gmra.mxu0 %v6616
  %v6765 = vpop.f32.mrf.mxu0
  %v6766 = vadd.f32 0.0, %v6765
  %v6767 = vpop.f32.mrf.mxu0
  %v6768 = vadd.f32 0.0, %v6767
  %6769 = vdwg.mxu0
  %v6770 = vadd.f32 %v6528, %v6691
  %v6771 = vadd.f32 %v6529, %v6693
  %v6772 = vadd.f32 %v6530, %v6696
  %v6773 = vadd.f32 %v6531, %v6698
  %v6774 = vadd.f32 %v6532, %v6701
  %v6775 = vadd.f32 %v6533, %v6703
  %v6776 = vadd.f32 %v6534, %v6706
  %v6777 = vadd.f32 %v6535, %v6708
  %v6778 = vadd.f32 %v6536, %v6711
  %v6779 = vadd.f32 %v6537, %v6713
  %v6780 = vadd.f32 %v6538, %v6716
  %v6781 = vadd.f32 %v6539, %v6718
  %v6782 = vadd.f32 %v6540, %v6721
  %v6783 = vadd.f32 %v6541, %v6723
  %v6784 = vadd.f32 %v6542, %v6726
  %v6785 = vadd.f32 %v6543, %v6728
  %v6786 = vadd.f32 %v6544, %v6731
  %v6787 = vadd.f32 %v6545, %v6733
  %v6788 = vadd.f32 %v6546, %v6736
  %v6789 = vadd.f32 %v6547, %v6738
  %v6790 = vadd.f32 %v6548, %v6741
  %v6791 = vadd.f32 %v6549, %v6743
  %v6792 = vadd.f32 %v6550, %v6746
  %v6793 = vadd.f32 %v6551, %v6748
  %v6794 = vadd.f32 %v6552, %v6751
  %v6795 = vadd.f32 %v6553, %v6753
  %v6796 = vadd.f32 %v6554, %v6756
  %v6797 = vadd.f32 %v6555, %v6758
  %v6798 = vadd.f32 %v6556, %v6761
  %v6799 = vadd.f32 %v6557, %v6763
  %v6800 = vadd.f32 %v6558, %v6766
  %v6801 = vadd.f32 %v6559, %v6768
  %v6802 = vld [vmem:[%s2] sm:$0x1]
  %v6804 = vperm.slane %v6802, 0
  %v6806 = vadd.f32 %v6770, %v6804
  %v6807 = vadd.f32 %v6771, %v6804
  %v6808 = vadd.f32 %v6772, %v6804
  %v6809 = vadd.f32 %v6773, %v6804
  %v6810 = vadd.f32 %v6774, %v6804
  %v6811 = vadd.f32 %v6775, %v6804
  %v6812 = vadd.f32 %v6776, %v6804
  %v6813 = vadd.f32 %v6777, %v6804
  %v6814 = vadd.f32 %v6778, %v6804
  %v6815 = vadd.f32 %v6779, %v6804
  %v6816 = vadd.f32 %v6780, %v6804
  %v6817 = vadd.f32 %v6781, %v6804
  %v6818 = vadd.f32 %v6782, %v6804
  %v6819 = vadd.f32 %v6783, %v6804
  %v6820 = vadd.f32 %v6784, %v6804
  %v6821 = vadd.f32 %v6785, %v6804
  %v6822 = vadd.f32 %v6786, %v6804
  %v6823 = vadd.f32 %v6787, %v6804
  %v6824 = vadd.f32 %v6788, %v6804
  %v6825 = vadd.f32 %v6789, %v6804
  %v6826 = vadd.f32 %v6790, %v6804
  %v6827 = vadd.f32 %v6791, %v6804
  %v6828 = vadd.f32 %v6792, %v6804
  %v6829 = vadd.f32 %v6793, %v6804
  %v6830 = vadd.f32 %v6794, %v6804
  %v6831 = vadd.f32 %v6795, %v6804
  %v6832 = vadd.f32 %v6796, %v6804
  %v6833 = vadd.f32 %v6797, %v6804
  %v6834 = vadd.f32 %v6798, %v6804
  %v6835 = vadd.f32 %v6799, %v6804
  %v6836 = vadd.f32 %v6800, %v6804
  %v6837 = vadd.f32 %v6801, %v6804
  %v6838 = vxor.u32 %v6806, 2147483648
  %v6839 = vxor.u32 %v6807, 2147483648
  %v6840 = vxor.u32 %v6808, 2147483648
  %v6841 = vxor.u32 %v6809, 2147483648
  %v6842 = vxor.u32 %v6810, 2147483648
  %v6843 = vxor.u32 %v6811, 2147483648
  %v6844 = vxor.u32 %v6812, 2147483648
  %v6845 = vxor.u32 %v6813, 2147483648
  %v6846 = vxor.u32 %v6814, 2147483648
  %v6847 = vxor.u32 %v6815, 2147483648
  %v6848 = vxor.u32 %v6816, 2147483648
  %v6849 = vxor.u32 %v6817, 2147483648
  %v6850 = vxor.u32 %v6818, 2147483648
  %v6851 = vxor.u32 %v6819, 2147483648
  %v6852 = vxor.u32 %v6820, 2147483648
  %v6853 = vxor.u32 %v6821, 2147483648
  %v6854 = vxor.u32 %v6822, 2147483648
  %v6855 = vxor.u32 %v6823, 2147483648
  %v6856 = vxor.u32 %v6824, 2147483648
  %v6857 = vxor.u32 %v6825, 2147483648
  %v6858 = vxor.u32 %v6826, 2147483648
  %v6859 = vxor.u32 %v6827, 2147483648
  %v6860 = vxor.u32 %v6828, 2147483648
  %v6861 = vxor.u32 %v6829, 2147483648
  %v6862 = vxor.u32 %v6830, 2147483648
  %v6863 = vxor.u32 %v6831, 2147483648
  %v6864 = vxor.u32 %v6832, 2147483648
  %v6865 = vxor.u32 %v6833, 2147483648
  %v6866 = vxor.u32 %v6834, 2147483648
  %v6867 = vxor.u32 %v6835, 2147483648
  %v6868 = vxor.u32 %v6836, 2147483648
  %v6869 = vxor.u32 %v6837, 2147483648
  %v6870 = vmul.f32 %v6838, 1.442695
  %v6871 = vpow.pop %v6870
  %v6872 = vmul.f32 %v6839, 1.442695
  %v6873 = vpow.pop %v6872
  %v6874 = vmul.f32 %v6840, 1.442695
  %v6875 = vpow.pop %v6874
  %v6876 = vmul.f32 %v6841, 1.442695
  %v6877 = vpow.pop %v6876
  %v6878 = vmul.f32 %v6842, 1.442695
  %v6879 = vpow.pop %v6878
  %v6880 = vmul.f32 %v6843, 1.442695
  %v6881 = vpow.pop %v6880
  %v6882 = vmul.f32 %v6844, 1.442695
  %v6883 = vpow.pop %v6882
  %v6884 = vmul.f32 %v6845, 1.442695
  %v6885 = vpow.pop %v6884
  %v6886 = vmul.f32 %v6846, 1.442695
  %v6887 = vpow.pop %v6886
  %v6888 = vmul.f32 %v6847, 1.442695
  %v6889 = vpow.pop %v6888
  %v6890 = vmul.f32 %v6848, 1.442695
  %v6891 = vpow.pop %v6890
  %v6892 = vmul.f32 %v6849, 1.442695
  %v6893 = vpow.pop %v6892
  %v6894 = vmul.f32 %v6850, 1.442695
  %v6895 = vpow.pop %v6894
  %v6896 = vmul.f32 %v6851, 1.442695
  %v6897 = vpow.pop %v6896
  %v6898 = vmul.f32 %v6852, 1.442695
  %v6899 = vpow.pop %v6898
  %v6900 = vmul.f32 %v6853, 1.442695
  %v6901 = vpow.pop %v6900
  %v6902 = vmul.f32 %v6854, 1.442695
  %v6903 = vpow.pop %v6902
  %v6904 = vmul.f32 %v6855, 1.442695
  %v6905 = vpow.pop %v6904
  %v6906 = vmul.f32 %v6856, 1.442695
  %v6907 = vpow.pop %v6906
  %v6908 = vmul.f32 %v6857, 1.442695
  %v6909 = vpow.pop %v6908
  %v6910 = vmul.f32 %v6858, 1.442695
  %v6911 = vpow.pop %v6910
  %v6912 = vmul.f32 %v6859, 1.442695
  %v6913 = vpow.pop %v6912
  %v6914 = vmul.f32 %v6860, 1.442695
  %v6915 = vpow.pop %v6914
  %v6916 = vmul.f32 %v6861, 1.442695
  %v6917 = vpow.pop %v6916
  %v6918 = vmul.f32 %v6862, 1.442695
  %v6919 = vpow.pop %v6918
  %v6920 = vmul.f32 %v6863, 1.442695
  %v6921 = vpow.pop %v6920
  %v6922 = vmul.f32 %v6864, 1.442695
  %v6923 = vpow.pop %v6922
  %v6924 = vmul.f32 %v6865, 1.442695
  %v6925 = vpow.pop %v6924
  %v6926 = vmul.f32 %v6866, 1.442695
  %v6927 = vpow.pop %v6926
  %v6928 = vmul.f32 %v6867, 1.442695
  %v6929 = vpow.pop %v6928
  %v6930 = vmul.f32 %v6868, 1.442695
  %v6931 = vpow.pop %v6930
  %v6932 = vmul.f32 %v6869, 1.442695
  %v6933 = vpow.pop %v6932
  %v6934 = vadd.f32 %v6871, 1.0
  %v6935 = vadd.f32 %v6873, 1.0
  %v6936 = vadd.f32 %v6875, 1.0
  %v6937 = vadd.f32 %v6877, 1.0
  %v6938 = vadd.f32 %v6879, 1.0
  %v6939 = vadd.f32 %v6881, 1.0
  %v6940 = vadd.f32 %v6883, 1.0
  %v6941 = vadd.f32 %v6885, 1.0
  %v6942 = vadd.f32 %v6887, 1.0
  %v6943 = vadd.f32 %v6889, 1.0
  %v6944 = vadd.f32 %v6891, 1.0
  %v6945 = vadd.f32 %v6893, 1.0
  %v6946 = vadd.f32 %v6895, 1.0
  %v6947 = vadd.f32 %v6897, 1.0
  %v6948 = vadd.f32 %v6899, 1.0
  %v6949 = vadd.f32 %v6901, 1.0
  %v6950 = vadd.f32 %v6903, 1.0
  %v6951 = vadd.f32 %v6905, 1.0
  %v6952 = vadd.f32 %v6907, 1.0
  %v6953 = vadd.f32 %v6909, 1.0
  %v6954 = vadd.f32 %v6911, 1.0
  %v6955 = vadd.f32 %v6913, 1.0
  %v6956 = vadd.f32 %v6915, 1.0
  %v6957 = vadd.f32 %v6917, 1.0
  %v6958 = vadd.f32 %v6919, 1.0
  %v6959 = vadd.f32 %v6921, 1.0
  %v6960 = vadd.f32 %v6923, 1.0
  %v6961 = vadd.f32 %v6925, 1.0
  %v6962 = vadd.f32 %v6927, 1.0
  %v6963 = vadd.f32 %v6929, 1.0
  %v6964 = vadd.f32 %v6931, 1.0
  %v6965 = vadd.f32 %v6933, 1.0
  %v6966 = vrcp.pop %v6934
  %v6967 = vmul.f32 %v6934, %v6966
  %v6968 = vsub.f32 1.0, %v6967
  %v6969 = vmul.f32 %v6966, %v6968
  %v6970 = vadd.f32 %v6966, %v6969
  %vm6971 = vweird.f32 %v6934
  %vm6972 = vweird.f32 %v6966
  %vm6973 = vmor %vm6971, %vm6972
  %v6974 = vsel %vm6973, %v6966, %v6970
  %v6975 = vand.u32 2147483647, %v6934
  %vm6976 = vcmp.eq.f32.partialorder %v6975, 8.507059e+37
  %v6977 = vand.u32 %v6934, 2147483648
  %v6978 = vor.u32 1.1754944e-38, %v6977
  %v6979 = vsel %vm6976, %v6978, %v6974
  %v6980 = vmul.f32 1.0, %v6979
  %v6981 = vrcp.pop %v6935
  %v6982 = vmul.f32 %v6935, %v6981
  %v6983 = vsub.f32 1.0, %v6982
  %v6984 = vmul.f32 %v6981, %v6983
  %v6985 = vadd.f32 %v6981, %v6984
  %vm6986 = vweird.f32 %v6935
  %vm6987 = vweird.f32 %v6981
  %vm6988 = vmor %vm6986, %vm6987
  %v6989 = vsel %vm6988, %v6981, %v6985
  %v6990 = vand.u32 2147483647, %v6935
  %vm6991 = vcmp.eq.f32.partialorder %v6990, 8.507059e+37
  %v6992 = vand.u32 %v6935, 2147483648
  %v6993 = vor.u32 1.1754944e-38, %v6992
  %v6994 = vsel %vm6991, %v6993, %v6989
  %v6995 = vmul.f32 1.0, %v6994
  %v6996 = vrcp.pop %v6936
  %v6997 = vmul.f32 %v6936, %v6996
  %v6998 = vsub.f32 1.0, %v6997
  %v6999 = vmul.f32 %v6996, %v6998
  %v7000 = vadd.f32 %v6996, %v6999
  %vm7001 = vweird.f32 %v6936
  %vm7002 = vweird.f32 %v6996
  %vm7003 = vmor %vm7001, %vm7002
  %v7004 = vsel %vm7003, %v6996, %v7000
  %v7005 = vand.u32 2147483647, %v6936
  %vm7006 = vcmp.eq.f32.partialorder %v7005, 8.507059e+37
  %v7007 = vand.u32 %v6936, 2147483648
  %v7008 = vor.u32 1.1754944e-38, %v7007
  %v7009 = vsel %vm7006, %v7008, %v7004
  %v7010 = vmul.f32 1.0, %v7009
  %v7011 = vrcp.pop %v6937
  %v7012 = vmul.f32 %v6937, %v7011
  %v7013 = vsub.f32 1.0, %v7012
  %v7014 = vmul.f32 %v7011, %v7013
  %v7015 = vadd.f32 %v7011, %v7014
  %vm7016 = vweird.f32 %v6937
  %vm7017 = vweird.f32 %v7011
  %vm7018 = vmor %vm7016, %vm7017
  %v7019 = vsel %vm7018, %v7011, %v7015
  %v7020 = vand.u32 2147483647, %v6937
  %vm7021 = vcmp.eq.f32.partialorder %v7020, 8.507059e+37
  %v7022 = vand.u32 %v6937, 2147483648
  %v7023 = vor.u32 1.1754944e-38, %v7022
  %v7024 = vsel %vm7021, %v7023, %v7019
  %v7025 = vmul.f32 1.0, %v7024
  %v7026 = vrcp.pop %v6938
  %v7027 = vmul.f32 %v6938, %v7026
  %v7028 = vsub.f32 1.0, %v7027
  %v7029 = vmul.f32 %v7026, %v7028
  %v7030 = vadd.f32 %v7026, %v7029
  %vm7031 = vweird.f32 %v6938
  %vm7032 = vweird.f32 %v7026
  %vm7033 = vmor %vm7031, %vm7032
  %v7034 = vsel %vm7033, %v7026, %v7030
  %v7035 = vand.u32 2147483647, %v6938
  %vm7036 = vcmp.eq.f32.partialorder %v7035, 8.507059e+37
  %v7037 = vand.u32 %v6938, 2147483648
  %v7038 = vor.u32 1.1754944e-38, %v7037
  %v7039 = vsel %vm7036, %v7038, %v7034
  %v7040 = vmul.f32 1.0, %v7039
  %v7041 = vrcp.pop %v6939
  %v7042 = vmul.f32 %v6939, %v7041
  %v7043 = vsub.f32 1.0, %v7042
  %v7044 = vmul.f32 %v7041, %v7043
  %v7045 = vadd.f32 %v7041, %v7044
  %vm7046 = vweird.f32 %v6939
  %vm7047 = vweird.f32 %v7041
  %vm7048 = vmor %vm7046, %vm7047
  %v7049 = vsel %vm7048, %v7041, %v7045
  %v7050 = vand.u32 2147483647, %v6939
  %vm7051 = vcmp.eq.f32.partialorder %v7050, 8.507059e+37
  %v7052 = vand.u32 %v6939, 2147483648
  %v7053 = vor.u32 1.1754944e-38, %v7052
  %v7054 = vsel %vm7051, %v7053, %v7049
  %v7055 = vmul.f32 1.0, %v7054
  %v7056 = vrcp.pop %v6940
  %v7057 = vmul.f32 %v6940, %v7056
  %v7058 = vsub.f32 1.0, %v7057
  %v7059 = vmul.f32 %v7056, %v7058
  %v7060 = vadd.f32 %v7056, %v7059
  %vm7061 = vweird.f32 %v6940
  %vm7062 = vweird.f32 %v7056
  %vm7063 = vmor %vm7061, %vm7062
  %v7064 = vsel %vm7063, %v7056, %v7060
  %v7065 = vand.u32 2147483647, %v6940
  %vm7066 = vcmp.eq.f32.partialorder %v7065, 8.507059e+37
  %v7067 = vand.u32 %v6940, 2147483648
  %v7068 = vor.u32 1.1754944e-38, %v7067
  %v7069 = vsel %vm7066, %v7068, %v7064
  %v7070 = vmul.f32 1.0, %v7069
  %v7071 = vrcp.pop %v6941
  %v7072 = vmul.f32 %v6941, %v7071
  %v7073 = vsub.f32 1.0, %v7072
  %v7074 = vmul.f32 %v7071, %v7073
  %v7075 = vadd.f32 %v7071, %v7074
  %vm7076 = vweird.f32 %v6941
  %vm7077 = vweird.f32 %v7071
  %vm7078 = vmor %vm7076, %vm7077
  %v7079 = vsel %vm7078, %v7071, %v7075
  %v7080 = vand.u32 2147483647, %v6941
  %vm7081 = vcmp.eq.f32.partialorder %v7080, 8.507059e+37
  %v7082 = vand.u32 %v6941, 2147483648
  %v7083 = vor.u32 1.1754944e-38, %v7082
  %v7084 = vsel %vm7081, %v7083, %v7079
  %v7085 = vmul.f32 1.0, %v7084
  %v7086 = vrcp.pop %v6942
  %v7087 = vmul.f32 %v6942, %v7086
  %v7088 = vsub.f32 1.0, %v7087
  %v7089 = vmul.f32 %v7086, %v7088
  %v7090 = vadd.f32 %v7086, %v7089
  %vm7091 = vweird.f32 %v6942
  %vm7092 = vweird.f32 %v7086
  %vm7093 = vmor %vm7091, %vm7092
  %v7094 = vsel %vm7093, %v7086, %v7090
  %v7095 = vand.u32 2147483647, %v6942
  %vm7096 = vcmp.eq.f32.partialorder %v7095, 8.507059e+37
  %v7097 = vand.u32 %v6942, 2147483648
  %v7098 = vor.u32 1.1754944e-38, %v7097
  %v7099 = vsel %vm7096, %v7098, %v7094
  %v7100 = vmul.f32 1.0, %v7099
  %v7101 = vrcp.pop %v6943
  %v7102 = vmul.f32 %v6943, %v7101
  %v7103 = vsub.f32 1.0, %v7102
  %v7104 = vmul.f32 %v7101, %v7103
  %v7105 = vadd.f32 %v7101, %v7104
  %vm7106 = vweird.f32 %v6943
  %vm7107 = vweird.f32 %v7101
  %vm7108 = vmor %vm7106, %vm7107
  %v7109 = vsel %vm7108, %v7101, %v7105
  %v7110 = vand.u32 2147483647, %v6943
  %vm7111 = vcmp.eq.f32.partialorder %v7110, 8.507059e+37
  %v7112 = vand.u32 %v6943, 2147483648
  %v7113 = vor.u32 1.1754944e-38, %v7112
  %v7114 = vsel %vm7111, %v7113, %v7109
  %v7115 = vmul.f32 1.0, %v7114
  %v7116 = vrcp.pop %v6944
  %v7117 = vmul.f32 %v6944, %v7116
  %v7118 = vsub.f32 1.0, %v7117
  %v7119 = vmul.f32 %v7116, %v7118
  %v7120 = vadd.f32 %v7116, %v7119
  %vm7121 = vweird.f32 %v6944
  %vm7122 = vweird.f32 %v7116
  %vm7123 = vmor %vm7121, %vm7122
  %v7124 = vsel %vm7123, %v7116, %v7120
  %v7125 = vand.u32 2147483647, %v6944
  %vm7126 = vcmp.eq.f32.partialorder %v7125, 8.507059e+37
  %v7127 = vand.u32 %v6944, 2147483648
  %v7128 = vor.u32 1.1754944e-38, %v7127
  %v7129 = vsel %vm7126, %v7128, %v7124
  %v7130 = vmul.f32 1.0, %v7129
  %v7131 = vrcp.pop %v6945
  %v7132 = vmul.f32 %v6945, %v7131
  %v7133 = vsub.f32 1.0, %v7132
  %v7134 = vmul.f32 %v7131, %v7133
  %v7135 = vadd.f32 %v7131, %v7134
  %vm7136 = vweird.f32 %v6945
  %vm7137 = vweird.f32 %v7131
  %vm7138 = vmor %vm7136, %vm7137
  %v7139 = vsel %vm7138, %v7131, %v7135
  %v7140 = vand.u32 2147483647, %v6945
  %vm7141 = vcmp.eq.f32.partialorder %v7140, 8.507059e+37
  %v7142 = vand.u32 %v6945, 2147483648
  %v7143 = vor.u32 1.1754944e-38, %v7142
  %v7144 = vsel %vm7141, %v7143, %v7139
  %v7145 = vmul.f32 1.0, %v7144
  %v7146 = vrcp.pop %v6946
  %v7147 = vmul.f32 %v6946, %v7146
  %v7148 = vsub.f32 1.0, %v7147
  %v7149 = vmul.f32 %v7146, %v7148
  %v7150 = vadd.f32 %v7146, %v7149
  %vm7151 = vweird.f32 %v6946
  %vm7152 = vweird.f32 %v7146
  %vm7153 = vmor %vm7151, %vm7152
  %v7154 = vsel %vm7153, %v7146, %v7150
  %v7155 = vand.u32 2147483647, %v6946
  %vm7156 = vcmp.eq.f32.partialorder %v7155, 8.507059e+37
  %v7157 = vand.u32 %v6946, 2147483648
  %v7158 = vor.u32 1.1754944e-38, %v7157
  %v7159 = vsel %vm7156, %v7158, %v7154
  %v7160 = vmul.f32 1.0, %v7159
  %v7161 = vrcp.pop %v6947
  %v7162 = vmul.f32 %v6947, %v7161
  %v7163 = vsub.f32 1.0, %v7162
  %v7164 = vmul.f32 %v7161, %v7163
  %v7165 = vadd.f32 %v7161, %v7164
  %vm7166 = vweird.f32 %v6947
  %vm7167 = vweird.f32 %v7161
  %vm7168 = vmor %vm7166, %vm7167
  %v7169 = vsel %vm7168, %v7161, %v7165
  %v7170 = vand.u32 2147483647, %v6947
  %vm7171 = vcmp.eq.f32.partialorder %v7170, 8.507059e+37
  %v7172 = vand.u32 %v6947, 2147483648
  %v7173 = vor.u32 1.1754944e-38, %v7172
  %v7174 = vsel %vm7171, %v7173, %v7169
  %v7175 = vmul.f32 1.0, %v7174
  %v7176 = vrcp.pop %v6948
  %v7177 = vmul.f32 %v6948, %v7176
  %v7178 = vsub.f32 1.0, %v7177
  %v7179 = vmul.f32 %v7176, %v7178
  %v7180 = vadd.f32 %v7176, %v7179
  %vm7181 = vweird.f32 %v6948
  %vm7182 = vweird.f32 %v7176
  %vm7183 = vmor %vm7181, %vm7182
  %v7184 = vsel %vm7183, %v7176, %v7180
  %v7185 = vand.u32 2147483647, %v6948
  %vm7186 = vcmp.eq.f32.partialorder %v7185, 8.507059e+37
  %v7187 = vand.u32 %v6948, 2147483648
  %v7188 = vor.u32 1.1754944e-38, %v7187
  %v7189 = vsel %vm7186, %v7188, %v7184
  %v7190 = vmul.f32 1.0, %v7189
  %v7191 = vrcp.pop %v6949
  %v7192 = vmul.f32 %v6949, %v7191
  %v7193 = vsub.f32 1.0, %v7192
  %v7194 = vmul.f32 %v7191, %v7193
  %v7195 = vadd.f32 %v7191, %v7194
  %vm7196 = vweird.f32 %v6949
  %vm7197 = vweird.f32 %v7191
  %vm7198 = vmor %vm7196, %vm7197
  %v7199 = vsel %vm7198, %v7191, %v7195
  %v7200 = vand.u32 2147483647, %v6949
  %vm7201 = vcmp.eq.f32.partialorder %v7200, 8.507059e+37
  %v7202 = vand.u32 %v6949, 2147483648
  %v7203 = vor.u32 1.1754944e-38, %v7202
  %v7204 = vsel %vm7201, %v7203, %v7199
  %v7205 = vmul.f32 1.0, %v7204
  %v7206 = vrcp.pop %v6950
  %v7207 = vmul.f32 %v6950, %v7206
  %v7208 = vsub.f32 1.0, %v7207
  %v7209 = vmul.f32 %v7206, %v7208
  %v7210 = vadd.f32 %v7206, %v7209
  %vm7211 = vweird.f32 %v6950
  %vm7212 = vweird.f32 %v7206
  %vm7213 = vmor %vm7211, %vm7212
  %v7214 = vsel %vm7213, %v7206, %v7210
  %v7215 = vand.u32 2147483647, %v6950
  %vm7216 = vcmp.eq.f32.partialorder %v7215, 8.507059e+37
  %v7217 = vand.u32 %v6950, 2147483648
  %v7218 = vor.u32 1.1754944e-38, %v7217
  %v7219 = vsel %vm7216, %v7218, %v7214
  %v7220 = vmul.f32 1.0, %v7219
  %v7221 = vrcp.pop %v6951
  %v7222 = vmul.f32 %v6951, %v7221
  %v7223 = vsub.f32 1.0, %v7222
  %v7224 = vmul.f32 %v7221, %v7223
  %v7225 = vadd.f32 %v7221, %v7224
  %vm7226 = vweird.f32 %v6951
  %vm7227 = vweird.f32 %v7221
  %vm7228 = vmor %vm7226, %vm7227
  %v7229 = vsel %vm7228, %v7221, %v7225
  %v7230 = vand.u32 2147483647, %v6951
  %vm7231 = vcmp.eq.f32.partialorder %v7230, 8.507059e+37
  %v7232 = vand.u32 %v6951, 2147483648
  %v7233 = vor.u32 1.1754944e-38, %v7232
  %v7234 = vsel %vm7231, %v7233, %v7229
  %v7235 = vmul.f32 1.0, %v7234
  %v7236 = vrcp.pop %v6952
  %v7237 = vmul.f32 %v6952, %v7236
  %v7238 = vsub.f32 1.0, %v7237
  %v7239 = vmul.f32 %v7236, %v7238
  %v7240 = vadd.f32 %v7236, %v7239
  %vm7241 = vweird.f32 %v6952
  %vm7242 = vweird.f32 %v7236
  %vm7243 = vmor %vm7241, %vm7242
  %v7244 = vsel %vm7243, %v7236, %v7240
  %v7245 = vand.u32 2147483647, %v6952
  %vm7246 = vcmp.eq.f32.partialorder %v7245, 8.507059e+37
  %v7247 = vand.u32 %v6952, 2147483648
  %v7248 = vor.u32 1.1754944e-38, %v7247
  %v7249 = vsel %vm7246, %v7248, %v7244
  %v7250 = vmul.f32 1.0, %v7249
  %v7251 = vrcp.pop %v6953
  %v7252 = vmul.f32 %v6953, %v7251
  %v7253 = vsub.f32 1.0, %v7252
  %v7254 = vmul.f32 %v7251, %v7253
  %v7255 = vadd.f32 %v7251, %v7254
  %vm7256 = vweird.f32 %v6953
  %vm7257 = vweird.f32 %v7251
  %vm7258 = vmor %vm7256, %vm7257
  %v7259 = vsel %vm7258, %v7251, %v7255
  %v7260 = vand.u32 2147483647, %v6953
  %vm7261 = vcmp.eq.f32.partialorder %v7260, 8.507059e+37
  %v7262 = vand.u32 %v6953, 2147483648
  %v7263 = vor.u32 1.1754944e-38, %v7262
  %v7264 = vsel %vm7261, %v7263, %v7259
  %v7265 = vmul.f32 1.0, %v7264
  %v7266 = vrcp.pop %v6954
  %v7267 = vmul.f32 %v6954, %v7266
  %v7268 = vsub.f32 1.0, %v7267
  %v7269 = vmul.f32 %v7266, %v7268
  %v7270 = vadd.f32 %v7266, %v7269
  %vm7271 = vweird.f32 %v6954
  %vm7272 = vweird.f32 %v7266
  %vm7273 = vmor %vm7271, %vm7272
  %v7274 = vsel %vm7273, %v7266, %v7270
  %v7275 = vand.u32 2147483647, %v6954
  %vm7276 = vcmp.eq.f32.partialorder %v7275, 8.507059e+37
  %v7277 = vand.u32 %v6954, 2147483648
  %v7278 = vor.u32 1.1754944e-38, %v7277
  %v7279 = vsel %vm7276, %v7278, %v7274
  %v7280 = vmul.f32 1.0, %v7279
  %v7281 = vrcp.pop %v6955
  %v7282 = vmul.f32 %v6955, %v7281
  %v7283 = vsub.f32 1.0, %v7282
  %v7284 = vmul.f32 %v7281, %v7283
  %v7285 = vadd.f32 %v7281, %v7284
  %vm7286 = vweird.f32 %v6955
  %vm7287 = vweird.f32 %v7281
  %vm7288 = vmor %vm7286, %vm7287
  %v7289 = vsel %vm7288, %v7281, %v7285
  %v7290 = vand.u32 2147483647, %v6955
  %vm7291 = vcmp.eq.f32.partialorder %v7290, 8.507059e+37
  %v7292 = vand.u32 %v6955, 2147483648
  %v7293 = vor.u32 1.1754944e-38, %v7292
  %v7294 = vsel %vm7291, %v7293, %v7289
  %v7295 = vmul.f32 1.0, %v7294
  %v7296 = vrcp.pop %v6956
  %v7297 = vmul.f32 %v6956, %v7296
  %v7298 = vsub.f32 1.0, %v7297
  %v7299 = vmul.f32 %v7296, %v7298
  %v7300 = vadd.f32 %v7296, %v7299
  %vm7301 = vweird.f32 %v6956
  %vm7302 = vweird.f32 %v7296
  %vm7303 = vmor %vm7301, %vm7302
  %v7304 = vsel %vm7303, %v7296, %v7300
  %v7305 = vand.u32 2147483647, %v6956
  %vm7306 = vcmp.eq.f32.partialorder %v7305, 8.507059e+37
  %v7307 = vand.u32 %v6956, 2147483648
  %v7308 = vor.u32 1.1754944e-38, %v7307
  %v7309 = vsel %vm7306, %v7308, %v7304
  %v7310 = vmul.f32 1.0, %v7309
  %v7311 = vrcp.pop %v6957
  %v7312 = vmul.f32 %v6957, %v7311
  %v7313 = vsub.f32 1.0, %v7312
  %v7314 = vmul.f32 %v7311, %v7313
  %v7315 = vadd.f32 %v7311, %v7314
  %vm7316 = vweird.f32 %v6957
  %vm7317 = vweird.f32 %v7311
  %vm7318 = vmor %vm7316, %vm7317
  %v7319 = vsel %vm7318, %v7311, %v7315
  %v7320 = vand.u32 2147483647, %v6957
  %vm7321 = vcmp.eq.f32.partialorder %v7320, 8.507059e+37
  %v7322 = vand.u32 %v6957, 2147483648
  %v7323 = vor.u32 1.1754944e-38, %v7322
  %v7324 = vsel %vm7321, %v7323, %v7319
  %v7325 = vmul.f32 1.0, %v7324
  %v7326 = vrcp.pop %v6958
  %v7327 = vmul.f32 %v6958, %v7326
  %v7328 = vsub.f32 1.0, %v7327
  %v7329 = vmul.f32 %v7326, %v7328
  %v7330 = vadd.f32 %v7326, %v7329
  %vm7331 = vweird.f32 %v6958
  %vm7332 = vweird.f32 %v7326
  %vm7333 = vmor %vm7331, %vm7332
  %v7334 = vsel %vm7333, %v7326, %v7330
  %v7335 = vand.u32 2147483647, %v6958
  %vm7336 = vcmp.eq.f32.partialorder %v7335, 8.507059e+37
  %v7337 = vand.u32 %v6958, 2147483648
  %v7338 = vor.u32 1.1754944e-38, %v7337
  %v7339 = vsel %vm7336, %v7338, %v7334
  %v7340 = vmul.f32 1.0, %v7339
  %v7341 = vrcp.pop %v6959
  %v7342 = vmul.f32 %v6959, %v7341
  %v7343 = vsub.f32 1.0, %v7342
  %v7344 = vmul.f32 %v7341, %v7343
  %v7345 = vadd.f32 %v7341, %v7344
  %vm7346 = vweird.f32 %v6959
  %vm7347 = vweird.f32 %v7341
  %vm7348 = vmor %vm7346, %vm7347
  %v7349 = vsel %vm7348, %v7341, %v7345
  %v7350 = vand.u32 2147483647, %v6959
  %vm7351 = vcmp.eq.f32.partialorder %v7350, 8.507059e+37
  %v7352 = vand.u32 %v6959, 2147483648
  %v7353 = vor.u32 1.1754944e-38, %v7352
  %v7354 = vsel %vm7351, %v7353, %v7349
  %v7355 = vmul.f32 1.0, %v7354
  %v7356 = vrcp.pop %v6960
  %v7357 = vmul.f32 %v6960, %v7356
  %v7358 = vsub.f32 1.0, %v7357
  %v7359 = vmul.f32 %v7356, %v7358
  %v7360 = vadd.f32 %v7356, %v7359
  %vm7361 = vweird.f32 %v6960
  %vm7362 = vweird.f32 %v7356
  %vm7363 = vmor %vm7361, %vm7362
  %v7364 = vsel %vm7363, %v7356, %v7360
  %v7365 = vand.u32 2147483647, %v6960
  %vm7366 = vcmp.eq.f32.partialorder %v7365, 8.507059e+37
  %v7367 = vand.u32 %v6960, 2147483648
  %v7368 = vor.u32 1.1754944e-38, %v7367
  %v7369 = vsel %vm7366, %v7368, %v7364
  %v7370 = vmul.f32 1.0, %v7369
  %v7371 = vrcp.pop %v6961
  %v7372 = vmul.f32 %v6961, %v7371
  %v7373 = vsub.f32 1.0, %v7372
  %v7374 = vmul.f32 %v7371, %v7373
  %v7375 = vadd.f32 %v7371, %v7374
  %vm7376 = vweird.f32 %v6961
  %vm7377 = vweird.f32 %v7371
  %vm7378 = vmor %vm7376, %vm7377
  %v7379 = vsel %vm7378, %v7371, %v7375
  %v7380 = vand.u32 2147483647, %v6961
  %vm7381 = vcmp.eq.f32.partialorder %v7380, 8.507059e+37
  %v7382 = vand.u32 %v6961, 2147483648
  %v7383 = vor.u32 1.1754944e-38, %v7382
  %v7384 = vsel %vm7381, %v7383, %v7379
  %v7385 = vmul.f32 1.0, %v7384
  %v7386 = vrcp.pop %v6962
  %v7387 = vmul.f32 %v6962, %v7386
  %v7388 = vsub.f32 1.0, %v7387
  %v7389 = vmul.f32 %v7386, %v7388
  %v7390 = vadd.f32 %v7386, %v7389
  %vm7391 = vweird.f32 %v6962
  %vm7392 = vweird.f32 %v7386
  %vm7393 = vmor %vm7391, %vm7392
  %v7394 = vsel %vm7393, %v7386, %v7390
  %v7395 = vand.u32 2147483647, %v6962
  %vm7396 = vcmp.eq.f32.partialorder %v7395, 8.507059e+37
  %v7397 = vand.u32 %v6962, 2147483648
  %v7398 = vor.u32 1.1754944e-38, %v7397
  %v7399 = vsel %vm7396, %v7398, %v7394
  %v7400 = vmul.f32 1.0, %v7399
  %v7401 = vrcp.pop %v6963
  %v7402 = vmul.f32 %v6963, %v7401
  %v7403 = vsub.f32 1.0, %v7402
  %v7404 = vmul.f32 %v7401, %v7403
  %v7405 = vadd.f32 %v7401, %v7404
  %vm7406 = vweird.f32 %v6963
  %vm7407 = vweird.f32 %v7401
  %vm7408 = vmor %vm7406, %vm7407
  %v7409 = vsel %vm7408, %v7401, %v7405
  %v7410 = vand.u32 2147483647, %v6963
  %vm7411 = vcmp.eq.f32.partialorder %v7410, 8.507059e+37
  %v7412 = vand.u32 %v6963, 2147483648
  %v7413 = vor.u32 1.1754944e-38, %v7412
  %v7414 = vsel %vm7411, %v7413, %v7409
  %v7415 = vmul.f32 1.0, %v7414
  %v7416 = vrcp.pop %v6964
  %v7417 = vmul.f32 %v6964, %v7416
  %v7418 = vsub.f32 1.0, %v7417
  %v7419 = vmul.f32 %v7416, %v7418
  %v7420 = vadd.f32 %v7416, %v7419
  %vm7421 = vweird.f32 %v6964
  %vm7422 = vweird.f32 %v7416
  %vm7423 = vmor %vm7421, %vm7422
  %v7424 = vsel %vm7423, %v7416, %v7420
  %v7425 = vand.u32 2147483647, %v6964
  %vm7426 = vcmp.eq.f32.partialorder %v7425, 8.507059e+37
  %v7427 = vand.u32 %v6964, 2147483648
  %v7428 = vor.u32 1.1754944e-38, %v7427
  %v7429 = vsel %vm7426, %v7428, %v7424
  %v7430 = vmul.f32 1.0, %v7429
  %v7431 = vrcp.pop %v6965
  %v7432 = vmul.f32 %v6965, %v7431
  %v7433 = vsub.f32 1.0, %v7432
  %v7434 = vmul.f32 %v7431, %v7433
  %v7435 = vadd.f32 %v7431, %v7434
  %vm7436 = vweird.f32 %v6965
  %vm7437 = vweird.f32 %v7431
  %vm7438 = vmor %vm7436, %vm7437
  %v7439 = vsel %vm7438, %v7431, %v7435
  %v7440 = vand.u32 2147483647, %v6965
  %vm7441 = vcmp.eq.f32.partialorder %v7440, 8.507059e+37
  %v7442 = vand.u32 %v6965, 2147483648
  %v7443 = vor.u32 1.1754944e-38, %v7442
  %v7444 = vsel %vm7441, %v7443, %v7439
  %v7445 = vmul.f32 1.0, %v7444
  %v7446 = vmul.f32 %v6806, %v6980
  %v7447 = vmul.f32 %v6807, %v6995
  %v7448 = vmul.f32 %v6808, %v7010
  %v7449 = vmul.f32 %v6809, %v7025
  %v7450 = vmul.f32 %v6810, %v7040
  %v7451 = vmul.f32 %v6811, %v7055
  %v7452 = vmul.f32 %v6812, %v7070
  %v7453 = vmul.f32 %v6813, %v7085
  %v7454 = vmul.f32 %v6814, %v7100
  %v7455 = vmul.f32 %v6815, %v7115
  %v7456 = vmul.f32 %v6816, %v7130
  %v7457 = vmul.f32 %v6817, %v7145
  %v7458 = vmul.f32 %v6818, %v7160
  %v7459 = vmul.f32 %v6819, %v7175
  %v7460 = vmul.f32 %v6820, %v7190
  %v7461 = vmul.f32 %v6821, %v7205
  %v7462 = vmul.f32 %v6822, %v7220
  %v7463 = vmul.f32 %v6823, %v7235
  %v7464 = vmul.f32 %v6824, %v7250
  %v7465 = vmul.f32 %v6825, %v7265
  %v7466 = vmul.f32 %v6826, %v7280
  %v7467 = vmul.f32 %v6827, %v7295
  %v7468 = vmul.f32 %v6828, %v7310
  %v7469 = vmul.f32 %v6829, %v7325
  %v7470 = vmul.f32 %v6830, %v7340
  %v7471 = vmul.f32 %v6831, %v7355
  %v7472 = vmul.f32 %v6832, %v7370
  %v7473 = vmul.f32 %v6833, %v7385
  %v7474 = vmul.f32 %v6834, %v7400
  %v7475 = vmul.f32 %v6835, %v7415
  %v7476 = vmul.f32 %v6836, %v7430
  %v7477 = vmul.f32 %v6837, %v7445
  %v7478 = vpack.c.bf16 %v7446, %v7446
  %v7479 = vpack.c.bf16 %v7447, %v7447
  %v7480 = vpack.c.bf16 %v7448, %v7448
  %v7481 = vpack.c.bf16 %v7449, %v7449
  %v7482 = vpack.c.bf16 %v7450, %v7450
  %v7483 = vpack.c.bf16 %v7451, %v7451
  %v7484 = vpack.c.bf16 %v7452, %v7452
  %v7485 = vpack.c.bf16 %v7453, %v7453
  %v7486 = vpack.c.bf16 %v7454, %v7454
  %v7487 = vpack.c.bf16 %v7455, %v7455
  %v7488 = vpack.c.bf16 %v7456, %v7456
  %v7489 = vpack.c.bf16 %v7457, %v7457
  %v7490 = vpack.c.bf16 %v7458, %v7458
  %v7491 = vpack.c.bf16 %v7459, %v7459
  %v7492 = vpack.c.bf16 %v7460, %v7460
  %v7493 = vpack.c.bf16 %v7461, %v7461
  %v7494 = vpack.c.bf16 %v7462, %v7462
  %v7495 = vpack.c.bf16 %v7463, %v7463
  %v7496 = vpack.c.bf16 %v7464, %v7464
  %v7497 = vpack.c.bf16 %v7465, %v7465
  %v7498 = vpack.c.bf16 %v7466, %v7466
  %v7499 = vpack.c.bf16 %v7467, %v7467
  %v7500 = vpack.c.bf16 %v7468, %v7468
  %v7501 = vpack.c.bf16 %v7469, %v7469
  %v7502 = vpack.c.bf16 %v7470, %v7470
  %v7503 = vpack.c.bf16 %v7471, %v7471
  %v7504 = vpack.c.bf16 %v7472, %v7472
  %v7505 = vpack.c.bf16 %v7473, %v7473
  %v7506 = vpack.c.bf16 %v7474, %v7474
  %v7507 = vpack.c.bf16 %v7475, %v7475
  %v7508 = vpack.c.bf16 %v7476, %v7476
  %v7509 = vpack.c.bf16 %v7477, %v7477
  %s7510 = scalar_lea.vmem %s3, 128
  %7511 = vst [vmem:[%s7510] sm:$0xf] %v7478
  %7512 = vst [vmem:[%s7510 + $0x4] sm:$0xf] %v7479
  %7513 = vst [vmem:[%s7510 + $0x8] sm:$0xf] %v7480
  %7514 = vst [vmem:[%s7510 + $0xc] sm:$0xf] %v7481
  %7515 = vst [vmem:[%s7510 + $0x10] sm:$0xf] %v7482
  %7516 = vst [vmem:[%s7510 + $0x14] sm:$0xf] %v7483
  %7517 = vst [vmem:[%s7510 + $0x18] sm:$0xf] %v7484
  %7518 = vst [vmem:[%s7510 + $0x1c] sm:$0xf] %v7485
  %7519 = vst [vmem:[%s7510 + $0x20] sm:$0xf] %v7486
  %7520 = vst [vmem:[%s7510 + $0x24] sm:$0xf] %v7487
  %7521 = vst [vmem:[%s7510 + $0x28] sm:$0xf] %v7488
  %7522 = vst [vmem:[%s7510 + $0x2c] sm:$0xf] %v7489
  %7523 = vst [vmem:[%s7510 + $0x30] sm:$0xf] %v7490
  %7524 = vst [vmem:[%s7510 + $0x34] sm:$0xf] %v7491
  %7525 = vst [vmem:[%s7510 + $0x38] sm:$0xf] %v7492
  %7526 = vst [vmem:[%s7510 + $0x3c] sm:$0xf] %v7493
  %7527 = vst [vmem:[%s7510 + $0x40] sm:$0xf] %v7494
  %7528 = vst [vmem:[%s7510 + $0x44] sm:$0xf] %v7495
  %7529 = vst [vmem:[%s7510 + $0x48] sm:$0xf] %v7496
  %7530 = vst [vmem:[%s7510 + $0x4c] sm:$0xf] %v7497
  %7531 = vst [vmem:[%s7510 + $0x50] sm:$0xf] %v7498
  %7532 = vst [vmem:[%s7510 + $0x54] sm:$0xf] %v7499
  %7533 = vst [vmem:[%s7510 + $0x58] sm:$0xf] %v7500
  %7534 = vst [vmem:[%s7510 + $0x5c] sm:$0xf] %v7501
  %7535 = vst [vmem:[%s7510 + $0x60] sm:$0xf] %v7502
  %7536 = vst [vmem:[%s7510 + $0x64] sm:$0xf] %v7503
  %7537 = vst [vmem:[%s7510 + $0x68] sm:$0xf] %v7504
  %7538 = vst [vmem:[%s7510 + $0x6c] sm:$0xf] %v7505
  %7539 = vst [vmem:[%s7510 + $0x70] sm:$0xf] %v7506
  %7540 = vst [vmem:[%s7510 + $0x74] sm:$0xf] %v7507
  %7541 = vst [vmem:[%s7510 + $0x78] sm:$0xf] %v7508
  %v7542 = vld [vmem:[%s7510 + $0x7c] sm:$0xf]
  %v7543 = vsel %vm3782, %v7509, %v7542
  %7544 = vst [vmem:[%s7510 + $0x7c] sm:$0xf] %v7543
  // Predicated region
  $region14: #{tpu_custom_call.1} parent=0 // pred_check
    _
  $region15: #{tpu_custom_call.1} parent=0 // pred_check_branch
    %7546 = sbr.rel (0) target = $region17
  $region16: #{tpu_custom_call.1} parent=0 // pred_region
    _
  $region17: #{tpu_custom_call.1} parent=0 // pred_fallthru
    _
  // Predicated region
  $region18: #{tpu_custom_call.1} parent=0 // pred_check
    _
  $region19: #{tpu_custom_call.1} parent=0 // pred_check_branch
    %7548 = sbr.rel (0) target = $region21
  $region20: #{tpu_custom_call.1} parent=0 // pred_region
    _
  $region21: #{tpu_custom_call.1} parent=0 // pred_fallthru
    _

</llo_original>
